<compile_context>
chip_gen: v7x
topology: tpu7x:2x2x1
jax: 0.10.0
libtpu: 0.0.40
codegen_flags: <defaults>
</compile_context>

<pallas_src>
import math
from functools import partial

import jax
import jax.numpy as jnp
from jax.experimental import pallas as pl
from jax.experimental.pallas import tpu as pltpu

BN_EPS = 1e-5


# ------------------------------ tiling helper ---------------------------------

def _p_tiling(P):
    """Pick a lane tile along P. Returns (tile, grid_steps*tile == P)."""
    if P % 128 != 0:
        # small / odd slab (FFT widths): one full block, no padding copies.
        return P
    tp = 128
    for cand in (512, 384, 256, 128):
        if cand <= P and P % cand == 0:
            tp = cand
            break
    if P // tp < 2 and P >= 256 and (P // 2) % 128 == 0:
        tp = P // 2          # keep >=2 parallel grid steps for v7x's two TensorCores
    return tp


# ------------------------------ Pallas kernels --------------------------------

def _mm1_kernel(*refs, nx, relu):
    # out = maybe_relu((W @ sum(X_i)) * scale + shift)   — fused 1x1 conv (+BN)(+ReLU)
    x = refs[0][...]
    for r in refs[1:nx]:
        x = x + r[...]
    w_ref, scale_ref, shift_ref, o_ref = refs[nx], refs[nx + 1], refs[nx + 2], refs[nx + 3]
    acc = jnp.dot(w_ref[...], x.astype(jnp.bfloat16),
                  preferred_element_type=jnp.float32)
    y = acc * scale_ref[...] + shift_ref[...]
    if relu:
        y = jnp.maximum(y, 0.0)
    o_ref[...] = y.astype(o_ref.dtype)


def _conv3_kernel(x_ref, w_ref, scale_ref, shift_ref, *rest, has_res):
    # fused 3x3x3 conv on an im2col slab; local rows get BN+ReLU (+residual),
    # global (l2g) rows are passed through for the later global combine.
    if has_res:
        res_ref, ol_ref, og_ref = rest
    else:
        ol_ref, og_ref = rest
    acc = jnp.dot(w_ref[...], x_ref[...], preferred_element_type=jnp.float32)
    cl = ol_ref.shape[0]
    y_l = acc[:cl] * scale_ref[...] + shift_ref[...]
    y_l = jnp.maximum(y_l, 0.0)
    if has_res:
        y_l = y_l + res_ref[...]
    ol_ref[...] = y_l.astype(ol_ref.dtype)
    og_ref[...] = acc[cl:].astype(og_ref.dtype)


def _combine_g_kernel(a_ref, b_ref, scale_ref, shift_ref, *rest, has_res):
    # out_g = relu((cl2g + cg2g) * scale + shift) (+ residual)
    if has_res:
        res_ref, o_ref = rest
    else:
        (o_ref,) = rest
    y = (a_ref[...] + b_ref[...]) * scale_ref[...] + shift_ref[...]
    y = jnp.maximum(y, 0.0)
    if has_res:
        y = y + res_ref[...]
    o_ref[...] = y.astype(o_ref.dtype)


# ------------------------------ kernel wrappers --------------------------------

def conv1x1_fused(xs, w_bf16, scale, shift, relu):
    """xs: list of (Cin, P) f32 slabs summed in-kernel; returns (Cout, P) f32."""
    cin, P = xs[0].shape
    cout = w_bf16.shape[0]
    tp = _p_tiling(P)
    in_specs = [pl.BlockSpec((cin, tp), lambda i: (0, i)) for _ in xs] + [
        pl.BlockSpec((cout, cin), lambda i: (0, 0)),
        pl.BlockSpec((cout, 1), lambda i: (0, 0)),
        pl.BlockSpec((cout, 1), lambda i: (0, 0)),
    ]
    return pl.pallas_call(
        partial(_mm1_kernel, nx=len(xs), relu=relu),
        out_shape=jax.ShapeDtypeStruct((cout, P), jnp.float32),
        grid=(P // tp,),
        in_specs=in_specs,
        out_specs=pl.BlockSpec((cout, tp), lambda i: (0, i)),
        compiler_params=pltpu.CompilerParams(dimension_semantics=("parallel",)),
    )(*xs, w_bf16,
      scale.reshape(cout, 1).astype(jnp.float32),
      shift.reshape(cout, 1).astype(jnp.float32))


def conv3x3_fused(x2d, w3_bf16, scale_l, shift_l, out_cl, residual=None):
    """x2d: (Cin*27, P) bf16 im2col slab. Returns (out_l, cl2g) as (rows, P) f32."""
    K, P = x2d.shape
    cout = w3_bf16.shape[0]
    out_cg = cout - out_cl
    tp = _p_tiling(P)
    in_specs = [
        pl.BlockSpec((K, tp), lambda i: (0, i)),
        pl.BlockSpec((cout, K), lambda i: (0, 0)),
        pl.BlockSpec((out_cl, 1), lambda i: (0, 0)),
        pl.BlockSpec((out_cl, 1), lambda i: (0, 0)),
    ]
    args = [x2d, w3_bf16,
            scale_l.reshape(out_cl, 1).astype(jnp.float32),
            shift_l.reshape(out_cl, 1).astype(jnp.float32)]
    has_res = residual is not None
    if has_res:
        in_specs.append(pl.BlockSpec((out_cl, tp), lambda i: (0, i)))
        args.append(residual)
    return pl.pallas_call(
        partial(_conv3_kernel, has_res=has_res),
        out_shape=(jax.ShapeDtypeStruct((out_cl, P), jnp.float32),
                   jax.ShapeDtypeStruct((out_cg, P), jnp.float32)),
        grid=(P // tp,),
        in_specs=in_specs,
        out_specs=(pl.BlockSpec((out_cl, tp), lambda i: (0, i)),
                   pl.BlockSpec((out_cg, tp), lambda i: (0, i))),
        compiler_params=pltpu.CompilerParams(dimension_semantics=("parallel",)),
    )(*args)


def combine_global(a2d, b2d, scale, shift, residual=None):
    cg, P = a2d.shape
    tp = _p_tiling(P)
    in_specs = [pl.BlockSpec((cg, tp), lambda i: (0, i)),
                pl.BlockSpec((cg, tp), lambda i: (0, i)),
                pl.BlockSpec((cg, 1), lambda i: (0, 0)),
                pl.BlockSpec((cg, 1), lambda i: (0, 0))]
    args = [a2d, b2d,
            scale.reshape(cg, 1).astype(jnp.float32),
            shift.reshape(cg, 1).astype(jnp.float32)]
    has_res = residual is not None
    if has_res:
        in_specs.append(pl.BlockSpec((cg, tp), lambda i: (0, i)))
        args.append(residual)
    return pl.pallas_call(
        partial(_combine_g_kernel, has_res=has_res),
        out_shape=jax.ShapeDtypeStruct((cg, P), jnp.float32),
        grid=(P // tp,),
        in_specs=in_specs,
        out_specs=pl.BlockSpec((cg, tp), lambda i: (0, i)),
        compiler_params=pltpu.CompilerParams(dimension_semantics=("parallel",)),
    )(*args)


# ------------------------------ layout glue (JAX) -------------------------------

def _im2col_cf(x):
    # x: (Cin, N, D, H, W) f32 -> (Cin*27, N*D*H*W) bf16 im2col slab for a
    # reflect-padded 3x3x3 conv.  K row order = ci*27 + (kd*9 + kh*3 + kw), matching
    # the (Cout, Cin, 3,3,3) -> (Cout, Cin*27) weight flattening.  Built in bf16 and
    # with channels-first reshapes only (no big transposes).
    c, n, d, h, w = x.shape
    xp = jnp.pad(x, ((0, 0), (0, 0), (1, 1), (1, 1), (1, 1)),
                 mode="reflect").astype(jnp.bfloat16)
    taps = [xp[:, :, kd:kd + d, kh:kh + h, kw:kw + w]
            for kd in range(3) for kh in range(3) for kw in range(3)]
    pat = jnp.stack(taps, axis=1)                     # (Cin, 27, N, D, H, W)
    return pat.reshape(c * 27, n * d * h * w)
    # TODO(synk): form the 27 taps inside the kernel from a haloed VMEM tile
    # (manual DMA from HBM) to avoid materializing the 27x im2col slab in HBM.


# ------------------------------ forward modules --------------------------------

def fourier_unit_cf(x, conv_w_bf16, bn_scale, bn_shift):
    # TODO(synk): rfftn/irfftn have no Pallas primitive; FFT stays in jnp (XLA FFT).
    c, n, d, h, w = x.shape
    fft = jnp.fft.rfftn(x, axes=(-3, -2, -1), norm="ortho")
    wf = fft.shape[-1]
    # channel index = c*2 + {0:real, 1:imag} (matches torch stack+permute+view)
    y = jnp.stack([jnp.real(fft), jnp.imag(fft)], axis=1).reshape(2 * c, n, d, h, wf)
    P = n * d * h * wf
    y2d = conv1x1_fused([y.reshape(2 * c, P)], conv_w_bf16, bn_scale, bn_shift, relu=True)
    co = y2d.shape[0] // 2
    yr = y2d.reshape(co, 2, n, d, h, wf)
    cplx = jax.lax.complex(yr[:, 0], yr[:, 1])
    return jnp.fft.irfftn(cplx, s=(d, h, w), axes=(-3, -2, -1), norm="ortho")


def spectral_transform_cf(x_g, p):
    cg, n, d, h, w = x_g.shape
    P = n * d * h * w
    hc = p["st_conv1_w"].shape[0]
    # conv1: 1x1 + BN + ReLU, fused
    h1_2d = conv1x1_fused([x_g.reshape(cg, P)], p["st_conv1_w"],
                          p["st_bn1_scale"], p["st_bn1_shift"], relu=True)
    h1 = h1_2d.reshape(hc, n, d, h, w)
    fu_out = fourier_unit_cf(h1, p["fu_conv_w"], p["fu_bn_scale"], p["fu_bn_shift"])
    # LFU (enable_lfu=True): split H and W into 2, concat on channels, FU, tile back
    c4 = hc // 4
    s = h // 2
    top = h1[:c4]
    xs = jnp.concatenate([top[:, :, :, :s, :], top[:, :, :, s:, :]], axis=0)
    xs = jnp.concatenate([xs[..., :s], xs[..., s:]], axis=0)
    xs = fourier_unit_cf(xs, p["lfu_conv_w"], p["lfu_bn_scale"], p["lfu_bn_shift"])
    xs = jnp.tile(xs, (1, 1, 1, 2, 2))
    # conv2: plain 1x1; the (h1 + fu_out + xs) sum is fused into the matmul kernel
    return conv1x1_fused([h1_2d, fu_out.reshape(hc, P), xs.reshape(hc, P)],
                         p["st_conv2_w"], p["id_scale_g"], p["id_shift_g"], relu=False)


def ffc_bn_act_cf(x_l, x_g, p, id_l=None, id_g=None):
    _, n, d, h, w = x_l.shape
    P = n * d * h * w
    out_cl = p["bnl_scale"].shape[0]
    out_cg = p["bng_scale"].shape[0]

    # fused [convl2l + convg2l | convl2g] 3x3x3 conv, BN_l+ReLU (+residual) in epilogue
    x_full = jnp.concatenate([x_l, x_g], axis=0)
    x2d = _im2col_cf(x_full)
    res_l = None if id_l is None else id_l.reshape(out_cl, P)
    out_l2d, cl2g_2d = conv3x3_fused(x2d, p["w3"], p["bnl_scale"], p["bnl_shift"],
                                     out_cl, res_l)

    # global branch: spectral transform, then (cl2g + cg2g) + BN_g + ReLU (+residual)
    cg2g_2d = spectral_transform_cf(x_g, p)
    res_g = None if id_g is None else id_g.reshape(out_cg, P)
    out_g2d = combine_global(cl2g_2d, cg2g_2d, p["bng_scale"], p["bng_shift"], res_g)

    return (out_l2d.reshape(out_cl, n, d, h, w),
            out_g2d.reshape(out_cg, n, d, h, w))


def ffc_resnet_block_cf(x_l, x_g, p):
    id_l, id_g = x_l, x_g
    x_l, x_g = ffc_bn_act_cf(x_l, x_g, p["conv1"])
    # drop_path_rate=0 -> identity; residual adds fused into conv2's kernels
    x_l, x_g = ffc_bn_act_cf(x_l, x_g, p["conv2"], id_l=id_l, id_g=id_g)
    return x_l, x_g


def bottleneck_forward(params, x_l, x_g):
    # NCDHW -> channels-first (C, N, D, H, W) once at entry, back once at exit
    xl = jnp.transpose(x_l, (1, 0, 2, 3, 4))
    xg = jnp.transpose(x_g, (1, 0, 2, 3, 4))
    for bp in params["blocks"]:
        xl, xg = ffc_resnet_block_cf(xl, xg, bp)
    out = jnp.concatenate([xl, xg], axis=0)      # ConcatTupleLayer (inline=False)
    return jnp.transpose(out, (1, 0, 2, 3, 4))


# ------------------------------------ init --------------------------------------

def _conv_init(key, shape):
    fan_in = shape[1] * math.prod(shape[2:])
    bound = 1.0 / math.sqrt(fan_in)
    return jax.random.uniform(key, shape, jnp.float32, -bound, bound)


def _bn_eval_params(num_features):
    # eval-mode BatchNorm, PyTorch defaults: y = x / sqrt(1 + eps)
    scale = jnp.full((num_features,), 1.0 / math.sqrt(1.0 + BN_EPS), jnp.float32)
    shift = jnp.zeros((num_features,), jnp.float32)
    return scale, shift


def init_ffc_bn_act(key, in_cl, in_cg, out_cl, out_cg):
    ks = jax.random.split(key, 7)
    hc = out_cg // 2
    w_l2l = _conv_init(ks[0], (out_cl, in_cl, 3, 3, 3))
    w_g2l = _conv_init(ks[1], (out_cl, in_cg, 3, 3, 3))
    w_l2g = _conv_init(ks[2], (out_cg, in_cl, 3, 3, 3))
    # fuse the three spatial convs into one weight (g2g slot zero), flatten to
    # (Cout, Cin*27) and pre-cast to bf16 once at init (no per-forward weight glue)
    w3 = jnp.zeros((out_cl + out_cg, in_cl + in_cg, 3, 3, 3), jnp.float32)
    w3 = w3.at[:out_cl, :in_cl].set(w_l2l)
    w3 = w3.at[:out_cl, in_cl:].set(w_g2l)
    w3 = w3.at[out_cl:, :in_cl].set(w_l2g)
    p = {
        "w3": w3.reshape(out_cl + out_cg, (in_cl + in_cg) * 27).astype(jnp.bfloat16),
        "st_conv1_w": _conv_init(ks[3], (hc, in_cg, 1, 1, 1)).reshape(hc, in_cg).astype(jnp.bfloat16),
        "st_conv2_w": _conv_init(ks[4], (out_cg, hc, 1, 1, 1)).reshape(out_cg, hc).astype(jnp.bfloat16),
        "fu_conv_w": _conv_init(ks[5], (2 * hc, 2 * hc, 1, 1, 1)).reshape(2 * hc, 2 * hc).astype(jnp.bfloat16),
        "lfu_conv_w": _conv_init(ks[6], (2 * hc, 2 * hc, 1, 1, 1)).reshape(2 * hc, 2 * hc).astype(jnp.bfloat16),
    }
    p["st_bn1_scale"], p["st_bn1_shift"] = _bn_eval_params(hc)
    p["fu_bn_scale"], p["fu_bn_shift"] = _bn_eval_params(2 * hc)
    p["lfu_bn_scale"], p["lfu_bn_shift"] = _bn_eval_params(2 * hc)
    p["bnl_scale"], p["bnl_shift"] = _bn_eval_params(out_cl)
    p["bng_scale"], p["bng_shift"] = _bn_eval_params(out_cg)
    p["id_scale_g"] = jnp.ones((out_cg,), jnp.float32)
    p["id_shift_g"] = jnp.zeros((out_cg,), jnp.float32)
    return p


def init_bottleneck(key, dim, ratio=0.5, n_blocks=3):
    cg = int(dim * ratio)
    cl = dim - cg
    blocks = []
    for _ in range(n_blocks):
        k1, k2, key = jax.random.split(key, 3)
        blocks.append({
            "conv1": init_ffc_bn_act(k1, cl, cg, cl, cg),
            "conv2": init_ffc_bn_act(k2, cl, cg, cl, cg),
        })
    return {"blocks": blocks}


# ------------------------------------ main ---------------------------------------

if __name__ == "__main__":
    key = jax.random.PRNGKey(0)
    kp, kl, kg = jax.random.split(key, 3)

    dim = 16                     # feats_num_bottleneck (>=16 so the LFU channel split works)
    ratio = 0.5                  # ratio_gin = ratio_gout
    cg = int(dim * ratio)
    cl = dim - cg
    N, D, H, W = 2, 4, 8, 8      # small 3D volume; H == W and even (LFU split)

    params = init_bottleneck(kp, dim, ratio=ratio, n_blocks=3)
    x_l = jax.random.normal(kl, (N, cl, D, H, W), jnp.float32)
    x_g = jax.random.normal(kg, (N, cg, D, H, W), jnp.float32)

    out = jax.jit(bottleneck_forward)(params, x_l, x_g)
    out = jax.block_until_ready(out)

    assert out.shape == (N, dim, D, H, W), out.shape
    assert bool(jnp.all(jnp.isfinite(out)))
    print("KERNEL_OK")
</pallas_src>

<mosaic_0001>
module attributes {stable_mosaic.version = 11 : i64} {
  func.func @_mm1_kernel(%arg0: i32, %arg1: memref<8x256xf32, #tpu.memory_space<vmem>>, %arg2: memref<4x8xbf16, #tpu.memory_space<vmem>>, %arg3: memref<4x1xf32, #tpu.memory_space<vmem>>, %arg4: memref<4x1xf32, #tpu.memory_space<vmem>>, %arg5: memref<4x256xf32, #tpu.memory_space<vmem>>) attributes {dimension_semantics = [#tpu.dimension_semantics<parallel>], iteration_bounds = array<i64: 2>, scalar_prefetch = 0 : i64, scratch_operands = 0 : i64, tpu.core_type = #tpu.core_type<tc>, window_params = [{transform_indices = @transform_0, window_bounds = array<i64: 8, 256>}, {pipeline_mode = #tpu.pipeline_mode<synchronous>, transform_indices = @transform_1, window_bounds = array<i64: 4, 8>}, {pipeline_mode = #tpu.pipeline_mode<synchronous>, transform_indices = @transform_2, window_bounds = array<i64: 4, 1>}, {pipeline_mode = #tpu.pipeline_mode<synchronous>, transform_indices = @transform_3, window_bounds = array<i64: 4, 1>}, {transform_indices = @transform_4, window_bounds = array<i64: 4, 256>}]} {
    %c0 = arith.constant 0 : index
    %c0_0 = arith.constant 0 : index
    %0 = vector.load %arg1[%c0, %c0_0] : memref<8x256xf32, #tpu.memory_space<vmem>>, vector<8x256xf32>
    %c0_1 = arith.constant 0 : index
    %c0_2 = arith.constant 0 : index
    %1 = vector.load %arg2[%c0_1, %c0_2] : memref<4x8xbf16, #tpu.memory_space<vmem>>, vector<4x8xbf16>
    %2 = arith.truncf %0 : vector<8x256xf32> to vector<8x256xbf16>
    %cst = arith.constant dense<0.000000e+00> : vector<4x256xf32>
    %3 = tpu.matmul %1, %2, %cst {dimension_numbers = #tpu.dot_dimension_numbers<[1], [0], [0], [1], [0, 0, 1, 1], [], []>} : vector<4x8xbf16>, vector<8x256xbf16>, vector<4x256xf32> -> vector<4x256xf32>
    %c0_3 = arith.constant 0 : index
    %c0_4 = arith.constant 0 : index
    %4 = vector.load %arg3[%c0_3, %c0_4] : memref<4x1xf32, #tpu.memory_space<vmem>>, vector<4x1xf32>
    %5 = vector.broadcast %4 : vector<4x1xf32> to vector<4x256xf32>
    %6 = arith.mulf %3, %5 : vector<4x256xf32>
    %c0_5 = arith.constant 0 : index
    %c0_6 = arith.constant 0 : index
    %7 = vector.load %arg4[%c0_5, %c0_6] : memref<4x1xf32, #tpu.memory_space<vmem>>, vector<4x1xf32>
    %8 = vector.broadcast %7 : vector<4x1xf32> to vector<4x256xf32>
    %9 = arith.addf %6, %8 : vector<4x256xf32>
    %cst_7 = arith.constant 0.000000e+00 : f32
    %10 = vector.broadcast %cst_7 : f32 to vector<4x256xf32>
    %11 = arith.maximumf %9, %10 : vector<4x256xf32>
    %c0_8 = arith.constant 0 : index
    %c0_9 = arith.constant 0 : index
    %12 = vector.load %arg5[%c0_8, %c0_9] : memref<4x256xf32, #tpu.memory_space<vmem>>, vector<4x256xf32>
    tpu.vector_store %arg5[%c0_8, %c0_9], %11 {strides = array<i32>} : memref<4x256xf32, #tpu.memory_space<vmem>>, vector<4x256xf32>,
    return
  }
  func.func @transform_0(%arg0: i32) -> (i32, i32) {
    %c0_i32 = arith.constant 0 : i32
    %c0_i32_0 = arith.constant 0 : i32
    return %c0_i32, %arg0 : i32, i32
  }
  func.func @transform_1(%arg0: i32) -> (i32, i32) {
    %c0_i32 = arith.constant 0 : i32
    %c0_i32_0 = arith.constant 0 : i32
    %c0_i32_1 = arith.constant 0 : i32
    return %c0_i32, %c0_i32_0 : i32, i32
  }
  func.func @transform_2(%arg0: i32) -> (i32, i32) {
    %c0_i32 = arith.constant 0 : i32
    %c0_i32_0 = arith.constant 0 : i32
    %c0_i32_1 = arith.constant 0 : i32
    return %c0_i32, %c0_i32_0 : i32, i32
  }
  func.func @transform_3(%arg0: i32) -> (i32, i32) {
    %c0_i32 = arith.constant 0 : i32
    %c0_i32_0 = arith.constant 0 : i32
    %c0_i32_1 = arith.constant 0 : i32
    return %c0_i32, %c0_i32_0 : i32, i32
  }
  func.func @transform_4(%arg0: i32) -> (i32, i32) {
    %c0_i32 = arith.constant 0 : i32
    %c0_i32_0 = arith.constant 0 : i32
    return %c0_i32, %arg0 : i32, i32
  }
}

module attributes {stable_mosaic.version = 11 : i64} {
  func.func @_mm1_kernel(%arg0: i32, %arg1: memref<8x96xf32, #tpu.memory_space<vmem>>, %arg2: memref<8x8xbf16, #tpu.memory_space<vmem>>, %arg3: memref<8x1xf32, #tpu.memory_space<vmem>>, %arg4: memref<8x1xf32, #tpu.memory_space<vmem>>, %arg5: memref<8x96xf32, #tpu.memory_space<vmem>>) attributes {dimension_semantics = [#tpu.dimension_semantics<parallel>], iteration_bounds = array<i64: 1>, scalar_prefetch = 0 : i64, scratch_operands = 0 : i64, tpu.core_type = #tpu.core_type<tc>, window_params = [{transform_indices = @transform_0, window_bounds = array<i64: 8, 96>}, {pipeline_mode = #tpu.pipeline_mode<synchronous>, transform_indices = @transform_1, window_bounds = array<i64: 8, 8>}, {pipeline_mode = #tpu.pipeline_mode<synchronous>, transform_indices = @transform_2, window_bounds = array<i64: 8, 1>}, {pipeline_mode = #tpu.pipeline_mode<synchronous>, transform_indices = @transform_3, window_bounds = array<i64: 8, 1>}, {transform_indices = @transform_4, window_bounds = array<i64: 8, 96>}]} {
    %c0 = arith.constant 0 : index
    %c0_0 = arith.constant 0 : index
    %0 = vector.load %arg1[%c0, %c0_0] : memref<8x96xf32, #tpu.memory_space<vmem>>, vector<8x96xf32>
    %c0_1 = arith.constant 0 : index
    %c0_2 = arith.constant 0 : index
    %1 = vector.load %arg2[%c0_1, %c0_2] : memref<8x8xbf16, #tpu.memory_space<vmem>>, vector<8x8xbf16>
    %2 = arith.truncf %0 : vector<8x96xf32> to vector<8x96xbf16>
    %cst = arith.constant dense<0.000000e+00> : vector<8x96xf32>
    %3 = tpu.matmul %1, %2, %cst {dimension_numbers = #tpu.dot_dimension_numbers<[1], [0], [0], [1], [0, 0, 1, 1], [], []>} : vector<8x8xbf16>, vector<8x96xbf16>, vector<8x96xf32> -> vector<8x96xf32>
    %c0_3 = arith.constant 0 : index
    %c0_4 = arith.constant 0 : index
    %4 = vector.load %arg3[%c0_3, %c0_4] : memref<8x1xf32, #tpu.memory_space<vmem>>, vector<8x1xf32>
    %5 = vector.broadcast %4 : vector<8x1xf32> to vector<8x96xf32>
    %6 = arith.mulf %3, %5 : vector<8x96xf32>
    %c0_5 = arith.constant 0 : index
    %c0_6 = arith.constant 0 : index
    %7 = vector.load %arg4[%c0_5, %c0_6] : memref<8x1xf32, #tpu.memory_space<vmem>>, vector<8x1xf32>
    %8 = vector.broadcast %7 : vector<8x1xf32> to vector<8x96xf32>
    %9 = arith.addf %6, %8 : vector<8x96xf32>
    %cst_7 = arith.constant 0.000000e+00 : f32
    %10 = vector.broadcast %cst_7 : f32 to vector<8x96xf32>
    %11 = arith.maximumf %9, %10 : vector<8x96xf32>
    %c0_8 = arith.constant 0 : index
    %c0_9 = arith.constant 0 : index
    %12 = vector.load %arg5[%c0_8, %c0_9] : memref<8x96xf32, #tpu.memory_space<vmem>>, vector<8x96xf32>
    tpu.vector_store %arg5[%c0_8, %c0_9], %11 {strides = array<i32>} : memref<8x96xf32, #tpu.memory_space<vmem>>, vector<8x96xf32>,
    return
  }
  func.func @transform_0(%arg0: i32) -> (i32, i32) {
    %c0_i32 = arith.constant 0 : i32
    %c0_i32_0 = arith.constant 0 : i32
    return %c0_i32, %arg0 : i32, i32
  }
  func.func @transform_1(%arg0: i32) -> (i32, i32) {
    %c0_i32 = arith.constant 0 : i32
    %c0_i32_0 = arith.constant 0 : i32
    %c0_i32_1 = arith.constant 0 : i32
    return %c0_i32, %c0_i32_0 : i32, i32
  }
  func.func @transform_2(%arg0: i32) -> (i32, i32) {
    %c0_i32 = arith.constant 0 : i32
    %c0_i32_0 = arith.constant 0 : i32
    %c0_i32_1 = arith.constant 0 : i32
    return %c0_i32, %c0_i32_0 : i32, i32
  }
  func.func @transform_3(%arg0: i32) -> (i32, i32) {
    %c0_i32 = arith.constant 0 : i32
    %c0_i32_0 = arith.constant 0 : i32
    %c0_i32_1 = arith.constant 0 : i32
    return %c0_i32, %c0_i32_0 : i32, i32
  }
  func.func @transform_4(%arg0: i32) -> (i32, i32) {
    %c0_i32 = arith.constant 0 : i32
    %c0_i32_0 = arith.constant 0 : i32
    return %c0_i32, %arg0 : i32, i32
  }
}

module attributes {stable_mosaic.version = 11 : i64} {
  func.func @_mm1_kernel(%arg0: i32, %arg1: memref<8x320xf32, #tpu.memory_space<vmem>>, %arg2: memref<8x8xbf16, #tpu.memory_space<vmem>>, %arg3: memref<8x1xf32, #tpu.memory_space<vmem>>, %arg4: memref<8x1xf32, #tpu.memory_space<vmem>>, %arg5: memref<8x320xf32, #tpu.memory_space<vmem>>) attributes {dimension_semantics = [#tpu.dimension_semantics<parallel>], iteration_bounds = array<i64: 1>, scalar_prefetch = 0 : i64, scratch_operands = 0 : i64, tpu.core_type = #tpu.core_type<tc>, window_params = [{transform_indices = @transform_0, window_bounds = array<i64: 8, 320>}, {pipeline_mode = #tpu.pipeline_mode<synchronous>, transform_indices = @transform_1, window_bounds = array<i64: 8, 8>}, {pipeline_mode = #tpu.pipeline_mode<synchronous>, transform_indices = @transform_2, window_bounds = array<i64: 8, 1>}, {pipeline_mode = #tpu.pipeline_mode<synchronous>, transform_indices = @transform_3, window_bounds = array<i64: 8, 1>}, {transform_indices = @transform_4, window_bounds = array<i64: 8, 320>}]} {
    %c0 = arith.constant 0 : index
    %c0_0 = arith.constant 0 : index
    %0 = vector.load %arg1[%c0, %c0_0] : memref<8x320xf32, #tpu.memory_space<vmem>>, vector<8x320xf32>
    %c0_1 = arith.constant 0 : index
    %c0_2 = arith.constant 0 : index
    %1 = vector.load %arg2[%c0_1, %c0_2] : memref<8x8xbf16, #tpu.memory_space<vmem>>, vector<8x8xbf16>
    %2 = arith.truncf %0 : vector<8x320xf32> to vector<8x320xbf16>
    %cst = arith.constant dense<0.000000e+00> : vector<8x320xf32>
    %3 = tpu.matmul %1, %2, %cst {dimension_numbers = #tpu.dot_dimension_numbers<[1], [0], [0], [1], [0, 0, 1, 1], [], []>} : vector<8x8xbf16>, vector<8x320xbf16>, vector<8x320xf32> -> vector<8x320xf32>
    %c0_3 = arith.constant 0 : index
    %c0_4 = arith.constant 0 : index
    %4 = vector.load %arg3[%c0_3, %c0_4] : memref<8x1xf32, #tpu.memory_space<vmem>>, vector<8x1xf32>
    %5 = vector.broadcast %4 : vector<8x1xf32> to vector<8x320xf32>
    %6 = arith.mulf %3, %5 : vector<8x320xf32>
    %c0_5 = arith.constant 0 : index
    %c0_6 = arith.constant 0 : index
    %7 = vector.load %arg4[%c0_5, %c0_6] : memref<8x1xf32, #tpu.memory_space<vmem>>, vector<8x1xf32>
    %8 = vector.broadcast %7 : vector<8x1xf32> to vector<8x320xf32>
    %9 = arith.addf %6, %8 : vector<8x320xf32>
    %cst_7 = arith.constant 0.000000e+00 : f32
    %10 = vector.broadcast %cst_7 : f32 to vector<8x320xf32>
    %11 = arith.maximumf %9, %10 : vector<8x320xf32>
    %c0_8 = arith.constant 0 : index
    %c0_9 = arith.constant 0 : index
    %12 = vector.load %arg5[%c0_8, %c0_9] : memref<8x320xf32, #tpu.memory_space<vmem>>, vector<8x320xf32>
    tpu.vector_store %arg5[%c0_8, %c0_9], %11 {strides = array<i32>} : memref<8x320xf32, #tpu.memory_space<vmem>>, vector<8x320xf32>,
    return
  }
  func.func @transform_0(%arg0: i32) -> (i32, i32) {
    %c0_i32 = arith.constant 0 : i32
    %c0_i32_0 = arith.constant 0 : i32
    return %c0_i32, %arg0 : i32, i32
  }
  func.func @transform_1(%arg0: i32) -> (i32, i32) {
    %c0_i32 = arith.constant 0 : i32
    %c0_i32_0 = arith.constant 0 : i32
    %c0_i32_1 = arith.constant 0 : i32
    return %c0_i32, %c0_i32_0 : i32, i32
  }
  func.func @transform_2(%arg0: i32) -> (i32, i32) {
    %c0_i32 = arith.constant 0 : i32
    %c0_i32_0 = arith.constant 0 : i32
    %c0_i32_1 = arith.constant 0 : i32
    return %c0_i32, %c0_i32_0 : i32, i32
  }
  func.func @transform_3(%arg0: i32) -> (i32, i32) {
    %c0_i32 = arith.constant 0 : i32
    %c0_i32_0 = arith.constant 0 : i32
    %c0_i32_1 = arith.constant 0 : i32
    return %c0_i32, %c0_i32_0 : i32, i32
  }
  func.func @transform_4(%arg0: i32) -> (i32, i32) {
    %c0_i32 = arith.constant 0 : i32
    %c0_i32_0 = arith.constant 0 : i32
    return %c0_i32, %arg0 : i32, i32
  }
}

module attributes {stable_mosaic.version = 11 : i64} {
  func.func @_mm1_kernel(%arg0: i32, %arg1: memref<4x256xf32, #tpu.memory_space<vmem>>, %arg2: memref<4x256xf32, #tpu.memory_space<vmem>>, %arg3: memref<4x256xf32, #tpu.memory_space<vmem>>, %arg4: memref<8x4xbf16, #tpu.memory_space<vmem>>, %arg5: memref<8x1xf32, #tpu.memory_space<vmem>>, %arg6: memref<8x1xf32, #tpu.memory_space<vmem>>, %arg7: memref<8x256xf32, #tpu.memory_space<vmem>>) attributes {dimension_semantics = [#tpu.dimension_semantics<parallel>], iteration_bounds = array<i64: 2>, scalar_prefetch = 0 : i64, scratch_operands = 0 : i64, tpu.core_type = #tpu.core_type<tc>, window_params = [{transform_indices = @transform_0, window_bounds = array<i64: 4, 256>}, {transform_indices = @transform_1, window_bounds = array<i64: 4, 256>}, {transform_indices = @transform_2, window_bounds = array<i64: 4, 256>}, {pipeline_mode = #tpu.pipeline_mode<synchronous>, transform_indices = @transform_3, window_bounds = array<i64: 8, 4>}, {pipeline_mode = #tpu.pipeline_mode<synchronous>, transform_indices = @transform_4, window_bounds = array<i64: 8, 1>}, {pipeline_mode = #tpu.pipeline_mode<synchronous>, transform_indices = @transform_5, window_bounds = array<i64: 8, 1>}, {transform_indices = @transform_6, window_bounds = array<i64: 8, 256>}]} {
    %c0 = arith.constant 0 : index
    %c0_0 = arith.constant 0 : index
    %0 = vector.load %arg1[%c0, %c0_0] : memref<4x256xf32, #tpu.memory_space<vmem>>, vector<4x256xf32>
    %c0_1 = arith.constant 0 : index
    %c0_2 = arith.constant 0 : index
    %1 = vector.load %arg2[%c0_1, %c0_2] : memref<4x256xf32, #tpu.memory_space<vmem>>, vector<4x256xf32>
    %2 = arith.addf %0, %1 : vector<4x256xf32>
    %c0_3 = arith.constant 0 : index
    %c0_4 = arith.constant 0 : index
    %3 = vector.load %arg3[%c0_3, %c0_4] : memref<4x256xf32, #tpu.memory_space<vmem>>, vector<4x256xf32>
    %4 = arith.addf %2, %3 : vector<4x256xf32>
    %c0_5 = arith.constant 0 : index
    %c0_6 = arith.constant 0 : index
    %5 = vector.load %arg4[%c0_5, %c0_6] : memref<8x4xbf16, #tpu.memory_space<vmem>>, vector<8x4xbf16>
    %6 = arith.truncf %4 : vector<4x256xf32> to vector<4x256xbf16>
    %cst = arith.constant dense<0.000000e+00> : vector<8x256xf32>
    %7 = tpu.matmul %5, %6, %cst {dimension_numbers = #tpu.dot_dimension_numbers<[1], [0], [0], [1], [0, 0, 1, 1], [], []>} : vector<8x4xbf16>, vector<4x256xbf16>, vector<8x256xf32> -> vector<8x256xf32>
    %c0_7 = arith.constant 0 : index
    %c0_8 = arith.constant 0 : index
    %8 = vector.load %arg5[%c0_7, %c0_8] : memref<8x1xf32, #tpu.memory_space<vmem>>, vector<8x1xf32>
    %9 = vector.broadcast %8 : vector<8x1xf32> to vector<8x256xf32>
    %10 = arith.mulf %7, %9 : vector<8x256xf32>
    %c0_9 = arith.constant 0 : index
    %c0_10 = arith.constant 0 : index
    %11 = vector.load %arg6[%c0_9, %c0_10] : memref<8x1xf32, #tpu.memory_space<vmem>>, vector<8x1xf32>
    %12 = vector.broadcast %11 : vector<8x1xf32> to vector<8x256xf32>
    %13 = arith.addf %10, %12 : vector<8x256xf32>
    %c0_11 = arith.constant 0 : index
    %c0_12 = arith.constant 0 : index
    %14 = vector.load %arg7[%c0_11, %c0_12] : memref<8x256xf32, #tpu.memory_space<vmem>>, vector<8x256xf32>
    tpu.vector_store %arg7[%c0_11, %c0_12], %13 {strides = array<i32>} : memref<8x256xf32, #tpu.memory_space<vmem>>, vector<8x256xf32>,
    return
  }
  func.func @transform_0(%arg0: i32) -> (i32, i32) {
    %c0_i32 = arith.constant 0 : i32
    %c0_i32_0 = arith.constant 0 : i32
    return %c0_i32, %arg0 : i32, i32
  }
  func.func @transform_1(%arg0: i32) -> (i32, i32) {
    %c0_i32 = arith.constant 0 : i32
    %c0_i32_0 = arith.constant 0 : i32
    return %c0_i32, %arg0 : i32, i32
  }
  func.func @transform_2(%arg0: i32) -> (i32, i32) {
    %c0_i32 = arith.constant 0 : i32
    %c0_i32_0 = arith.constant 0 : i32
    return %c0_i32, %arg0 : i32, i32
  }
  func.func @transform_3(%arg0: i32) -> (i32, i32) {
    %c0_i32 = arith.constant 0 : i32
    %c0_i32_0 = arith.constant 0 : i32
    %c0_i32_1 = arith.constant 0 : i32
    return %c0_i32, %c0_i32_0 : i32, i32
  }
  func.func @transform_4(%arg0: i32) -> (i32, i32) {
    %c0_i32 = arith.constant 0 : i32
    %c0_i32_0 = arith.constant 0 : i32
    %c0_i32_1 = arith.constant 0 : i32
    return %c0_i32, %c0_i32_0 : i32, i32
  }
  func.func @transform_5(%arg0: i32) -> (i32, i32) {
    %c0_i32 = arith.constant 0 : i32
    %c0_i32_0 = arith.constant 0 : i32
    %c0_i32_1 = arith.constant 0 : i32
    return %c0_i32, %c0_i32_0 : i32, i32
  }
  func.func @transform_6(%arg0: i32) -> (i32, i32) {
    %c0_i32 = arith.constant 0 : i32
    %c0_i32_0 = arith.constant 0 : i32
    return %c0_i32, %arg0 : i32, i32
  }
}

module attributes {stable_mosaic.version = 11 : i64} {
  func.func @_conv3_kernel(%arg0: i32, %arg1: memref<432x256xbf16, #tpu.memory_space<vmem>>, %arg2: memref<16x432xbf16, #tpu.memory_space<vmem>>, %arg3: memref<8x1xf32, #tpu.memory_space<vmem>>, %arg4: memref<8x1xf32, #tpu.memory_space<vmem>>, %arg5: memref<8x256xf32, #tpu.memory_space<vmem>>, %arg6: memref<8x256xf32, #tpu.memory_space<vmem>>) attributes {dimension_semantics = [#tpu.dimension_semantics<parallel>], iteration_bounds = array<i64: 2>, scalar_prefetch = 0 : i64, scratch_operands = 0 : i64, tpu.core_type = #tpu.core_type<tc>, window_params = [{transform_indices = @transform_0, window_bounds = array<i64: 432, 256>}, {pipeline_mode = #tpu.pipeline_mode<synchronous>, transform_indices = @transform_1, window_bounds = array<i64: 16, 432>}, {pipeline_mode = #tpu.pipeline_mode<synchronous>, transform_indices = @transform_2, window_bounds = array<i64: 8, 1>}, {pipeline_mode = #tpu.pipeline_mode<synchronous>, transform_indices = @transform_3, window_bounds = array<i64: 8, 1>}, {transform_indices = @transform_4, window_bounds = array<i64: 8, 256>}, {transform_indices = @transform_5, window_bounds = array<i64: 8, 256>}]} {
    %c0 = arith.constant 0 : index
    %c0_0 = arith.constant 0 : index
    %0 = vector.load %arg2[%c0, %c0_0] : memref<16x432xbf16, #tpu.memory_space<vmem>>, vector<16x432xbf16>
    %c0_1 = arith.constant 0 : index
    %c0_2 = arith.constant 0 : index
    %1 = vector.load %arg1[%c0_1, %c0_2] : memref<432x256xbf16, #tpu.memory_space<vmem>>, vector<432x256xbf16>
    %cst = arith.constant dense<0.000000e+00> : vector<16x256xf32>
    %2 = tpu.matmul %0, %1, %cst {dimension_numbers = #tpu.dot_dimension_numbers<[1], [0], [0], [1], [0, 0, 1, 1], [], []>} : vector<16x432xbf16>, vector<432x256xbf16>, vector<16x256xf32> -> vector<16x256xf32>
    %3 = vector.extract_strided_slice %2 {offsets = [0, 0], sizes = [8, 256], strides = [1, 1]} : vector<16x256xf32> to vector<8x256xf32>
    %c0_3 = arith.constant 0 : index
    %c0_4 = arith.constant 0 : index
    %4 = vector.load %arg3[%c0_3, %c0_4] : memref<8x1xf32, #tpu.memory_space<vmem>>, vector<8x1xf32>
    %5 = vector.broadcast %4 : vector<8x1xf32> to vector<8x256xf32>
    %6 = arith.mulf %3, %5 : vector<8x256xf32>
    %c0_5 = arith.constant 0 : index
    %c0_6 = arith.constant 0 : index
    %7 = vector.load %arg4[%c0_5, %c0_6] : memref<8x1xf32, #tpu.memory_space<vmem>>, vector<8x1xf32>
    %8 = vector.broadcast %7 : vector<8x1xf32> to vector<8x256xf32>
    %9 = arith.addf %6, %8 : vector<8x256xf32>
    %cst_7 = arith.constant 0.000000e+00 : f32
    %10 = vector.broadcast %cst_7 : f32 to vector<8x256xf32>
    %11 = arith.maximumf %9, %10 : vector<8x256xf32>
    %c0_8 = arith.constant 0 : index
    %c0_9 = arith.constant 0 : index
    %12 = vector.load %arg5[%c0_8, %c0_9] : memref<8x256xf32, #tpu.memory_space<vmem>>, vector<8x256xf32>
    tpu.vector_store %arg5[%c0_8, %c0_9], %11 {strides = array<i32>} : memref<8x256xf32, #tpu.memory_space<vmem>>, vector<8x256xf32>,
    %13 = vector.extract_strided_slice %2 {offsets = [8, 0], sizes = [8, 256], strides = [1, 1]} : vector<16x256xf32> to vector<8x256xf32>
    %c0_10 = arith.constant 0 : index
    %c0_11 = arith.constant 0 : index
    %14 = vector.load %arg6[%c0_10, %c0_11] : memref<8x256xf32, #tpu.memory_space<vmem>>, vector<8x256xf32>
    tpu.vector_store %arg6[%c0_10, %c0_11], %13 {strides = array<i32>} : memref<8x256xf32, #tpu.memory_space<vmem>>, vector<8x256xf32>,
    return
  }
  func.func @transform_0(%arg0: i32) -> (i32, i32) {
    %c0_i32 = arith.constant 0 : i32
    %c0_i32_0 = arith.constant 0 : i32
    return %c0_i32, %arg0 : i32, i32
  }
  func.func @transform_1(%arg0: i32) -> (i32, i32) {
    %c0_i32 = arith.constant 0 : i32
    %c0_i32_0 = arith.constant 0 : i32
    %c0_i32_1 = arith.constant 0 : i32
    return %c0_i32, %c0_i32_0 : i32, i32
  }
  func.func @transform_2(%arg0: i32) -> (i32, i32) {
    %c0_i32 = arith.constant 0 : i32
    %c0_i32_0 = arith.constant 0 : i32
    %c0_i32_1 = arith.constant 0 : i32
    return %c0_i32, %c0_i32_0 : i32, i32
  }
  func.func @transform_3(%arg0: i32) -> (i32, i32) {
    %c0_i32 = arith.constant 0 : i32
    %c0_i32_0 = arith.constant 0 : i32
    %c0_i32_1 = arith.constant 0 : i32
    return %c0_i32, %c0_i32_0 : i32, i32
  }
  func.func @transform_4(%arg0: i32) -> (i32, i32) {
    %c0_i32 = arith.constant 0 : i32
    %c0_i32_0 = arith.constant 0 : i32
    return %c0_i32, %arg0 : i32, i32
  }
  func.func @transform_5(%arg0: i32) -> (i32, i32) {
    %c0_i32 = arith.constant 0 : i32
    %c0_i32_0 = arith.constant 0 : i32
    return %c0_i32, %arg0 : i32, i32
  }
}

module attributes {stable_mosaic.version = 11 : i64} {
  func.func @_combine_g_kernel(%arg0: i32, %arg1: memref<8x256xf32, #tpu.memory_space<vmem>>, %arg2: memref<8x256xf32, #tpu.memory_space<vmem>>, %arg3: memref<8x1xf32, #tpu.memory_space<vmem>>, %arg4: memref<8x1xf32, #tpu.memory_space<vmem>>, %arg5: memref<8x256xf32, #tpu.memory_space<vmem>>) attributes {dimension_semantics = [#tpu.dimension_semantics<parallel>], iteration_bounds = array<i64: 2>, scalar_prefetch = 0 : i64, scratch_operands = 0 : i64, tpu.core_type = #tpu.core_type<tc>, window_params = [{transform_indices = @transform_0, window_bounds = array<i64: 8, 256>}, {transform_indices = @transform_1, window_bounds = array<i64: 8, 256>}, {pipeline_mode = #tpu.pipeline_mode<synchronous>, transform_indices = @transform_2, window_bounds = array<i64: 8, 1>}, {pipeline_mode = #tpu.pipeline_mode<synchronous>, transform_indices = @transform_3, window_bounds = array<i64: 8, 1>}, {transform_indices = @transform_4, window_bounds = array<i64: 8, 256>}]} {
    %c0 = arith.constant 0 : index
    %c0_0 = arith.constant 0 : index
    %0 = vector.load %arg1[%c0, %c0_0] : memref<8x256xf32, #tpu.memory_space<vmem>>, vector<8x256xf32>
    %c0_1 = arith.constant 0 : index
    %c0_2 = arith.constant 0 : index
    %1 = vector.load %arg2[%c0_1, %c0_2] : memref<8x256xf32, #tpu.memory_space<vmem>>, vector<8x256xf32>
    %2 = arith.addf %0, %1 : vector<8x256xf32>
    %c0_3 = arith.constant 0 : index
    %c0_4 = arith.constant 0 : index
    %3 = vector.load %arg3[%c0_3, %c0_4] : memref<8x1xf32, #tpu.memory_space<vmem>>, vector<8x1xf32>
    %4 = vector.broadcast %3 : vector<8x1xf32> to vector<8x256xf32>
    %5 = arith.mulf %2, %4 : vector<8x256xf32>
    %c0_5 = arith.constant 0 : index
    %c0_6 = arith.constant 0 : index
    %6 = vector.load %arg4[%c0_5, %c0_6] : memref<8x1xf32, #tpu.memory_space<vmem>>, vector<8x1xf32>
    %7 = vector.broadcast %6 : vector<8x1xf32> to vector<8x256xf32>
    %8 = arith.addf %5, %7 : vector<8x256xf32>
    %cst = arith.constant 0.000000e+00 : f32
    %9 = vector.broadcast %cst : f32 to vector<8x256xf32>
    %10 = arith.maximumf %8, %9 : vector<8x256xf32>
    %c0_7 = arith.constant 0 : index
    %c0_8 = arith.constant 0 : index
    %11 = vector.load %arg5[%c0_7, %c0_8] : memref<8x256xf32, #tpu.memory_space<vmem>>, vector<8x256xf32>
    tpu.vector_store %arg5[%c0_7, %c0_8], %10 {strides = array<i32>} : memref<8x256xf32, #tpu.memory_space<vmem>>, vector<8x256xf32>,
    return
  }
  func.func @transform_0(%arg0: i32) -> (i32, i32) {
    %c0_i32 = arith.constant 0 : i32
    %c0_i32_0 = arith.constant 0 : i32
    return %c0_i32, %arg0 : i32, i32
  }
  func.func @transform_1(%arg0: i32) -> (i32, i32) {
    %c0_i32 = arith.constant 0 : i32
    %c0_i32_0 = arith.constant 0 : i32
    return %c0_i32, %arg0 : i32, i32
  }
  func.func @transform_2(%arg0: i32) -> (i32, i32) {
    %c0_i32 = arith.constant 0 : i32
    %c0_i32_0 = arith.constant 0 : i32
    %c0_i32_1 = arith.constant 0 : i32
    return %c0_i32, %c0_i32_0 : i32, i32
  }
  func.func @transform_3(%arg0: i32) -> (i32, i32) {
    %c0_i32 = arith.constant 0 : i32
    %c0_i32_0 = arith.constant 0 : i32
    %c0_i32_1 = arith.constant 0 : i32
    return %c0_i32, %c0_i32_0 : i32, i32
  }
  func.func @transform_4(%arg0: i32) -> (i32, i32) {
    %c0_i32 = arith.constant 0 : i32
    %c0_i32_0 = arith.constant 0 : i32
    return %c0_i32, %arg0 : i32, i32
  }
}

module attributes {stable_mosaic.version = 11 : i64} {
  func.func @_mm1_kernel(%arg0: i32, %arg1: memref<8x256xf32, #tpu.memory_space<vmem>>, %arg2: memref<4x8xbf16, #tpu.memory_space<vmem>>, %arg3: memref<4x1xf32, #tpu.memory_space<vmem>>, %arg4: memref<4x1xf32, #tpu.memory_space<vmem>>, %arg5: memref<4x256xf32, #tpu.memory_space<vmem>>) attributes {dimension_semantics = [#tpu.dimension_semantics<parallel>], iteration_bounds = array<i64: 2>, scalar_prefetch = 0 : i64, scratch_operands = 0 : i64, tpu.core_type = #tpu.core_type<tc>, window_params = [{transform_indices = @transform_0, window_bounds = array<i64: 8, 256>}, {pipeline_mode = #tpu.pipeline_mode<synchronous>, transform_indices = @transform_1, window_bounds = array<i64: 4, 8>}, {pipeline_mode = #tpu.pipeline_mode<synchronous>, transform_indices = @transform_2, window_bounds = array<i64: 4, 1>}, {pipeline_mode = #tpu.pipeline_mode<synchronous>, transform_indices = @transform_3, window_bounds = array<i64: 4, 1>}, {transform_indices = @transform_4, window_bounds = array<i64: 4, 256>}]} {
    %c0 = arith.constant 0 : index
    %c0_0 = arith.constant 0 : index
    %0 = vector.load %arg1[%c0, %c0_0] : memref<8x256xf32, #tpu.memory_space<vmem>>, vector<8x256xf32>
    %c0_1 = arith.constant 0 : index
    %c0_2 = arith.constant 0 : index
    %1 = vector.load %arg2[%c0_1, %c0_2] : memref<4x8xbf16, #tpu.memory_space<vmem>>, vector<4x8xbf16>
    %2 = arith.truncf %0 : vector<8x256xf32> to vector<8x256xbf16>
    %cst = arith.constant dense<0.000000e+00> : vector<4x256xf32>
    %3 = tpu.matmul %1, %2, %cst {dimension_numbers = #tpu.dot_dimension_numbers<[1], [0], [0], [1], [0, 0, 1, 1], [], []>} : vector<4x8xbf16>, vector<8x256xbf16>, vector<4x256xf32> -> vector<4x256xf32>
    %c0_3 = arith.constant 0 : index
    %c0_4 = arith.constant 0 : index
    %4 = vector.load %arg3[%c0_3, %c0_4] : memref<4x1xf32, #tpu.memory_space<vmem>>, vector<4x1xf32>
    %5 = vector.broadcast %4 : vector<4x1xf32> to vector<4x256xf32>
    %6 = arith.mulf %3, %5 : vector<4x256xf32>
    %c0_5 = arith.constant 0 : index
    %c0_6 = arith.constant 0 : index
    %7 = vector.load %arg4[%c0_5, %c0_6] : memref<4x1xf32, #tpu.memory_space<vmem>>, vector<4x1xf32>
    %8 = vector.broadcast %7 : vector<4x1xf32> to vector<4x256xf32>
    %9 = arith.addf %6, %8 : vector<4x256xf32>
    %cst_7 = arith.constant 0.000000e+00 : f32
    %10 = vector.broadcast %cst_7 : f32 to vector<4x256xf32>
    %11 = arith.maximumf %9, %10 : vector<4x256xf32>
    %c0_8 = arith.constant 0 : index
    %c0_9 = arith.constant 0 : index
    %12 = vector.load %arg5[%c0_8, %c0_9] : memref<4x256xf32, #tpu.memory_space<vmem>>, vector<4x256xf32>
    tpu.vector_store %arg5[%c0_8, %c0_9], %11 {strides = array<i32>} : memref<4x256xf32, #tpu.memory_space<vmem>>, vector<4x256xf32>,
    return
  }
  func.func @transform_0(%arg0: i32) -> (i32, i32) {
    %c0_i32 = arith.constant 0 : i32
    %c0_i32_0 = arith.constant 0 : i32
    return %c0_i32, %arg0 : i32, i32
  }
  func.func @transform_1(%arg0: i32) -> (i32, i32) {
    %c0_i32 = arith.constant 0 : i32
    %c0_i32_0 = arith.constant 0 : i32
    %c0_i32_1 = arith.constant 0 : i32
    return %c0_i32, %c0_i32_0 : i32, i32
  }
  func.func @transform_2(%arg0: i32) -> (i32, i32) {
    %c0_i32 = arith.constant 0 : i32
    %c0_i32_0 = arith.constant 0 : i32
    %c0_i32_1 = arith.constant 0 : i32
    return %c0_i32, %c0_i32_0 : i32, i32
  }
  func.func @transform_3(%arg0: i32) -> (i32, i32) {
    %c0_i32 = arith.constant 0 : i32
    %c0_i32_0 = arith.constant 0 : i32
    %c0_i32_1 = arith.constant 0 : i32
    return %c0_i32, %c0_i32_0 : i32, i32
  }
  func.func @transform_4(%arg0: i32) -> (i32, i32) {
    %c0_i32 = arith.constant 0 : i32
    %c0_i32_0 = arith.constant 0 : i32
    return %c0_i32, %arg0 : i32, i32
  }
}

module attributes {stable_mosaic.version = 11 : i64} {
  func.func @_mm1_kernel(%arg0: i32, %arg1: memref<8x96xf32, #tpu.memory_space<vmem>>, %arg2: memref<8x8xbf16, #tpu.memory_space<vmem>>, %arg3: memref<8x1xf32, #tpu.memory_space<vmem>>, %arg4: memref<8x1xf32, #tpu.memory_space<vmem>>, %arg5: memref<8x96xf32, #tpu.memory_space<vmem>>) attributes {dimension_semantics = [#tpu.dimension_semantics<parallel>], iteration_bounds = array<i64: 1>, scalar_prefetch = 0 : i64, scratch_operands = 0 : i64, tpu.core_type = #tpu.core_type<tc>, window_params = [{transform_indices = @transform_0, window_bounds = array<i64: 8, 96>}, {pipeline_mode = #tpu.pipeline_mode<synchronous>, transform_indices = @transform_1, window_bounds = array<i64: 8, 8>}, {pipeline_mode = #tpu.pipeline_mode<synchronous>, transform_indices = @transform_2, window_bounds = array<i64: 8, 1>}, {pipeline_mode = #tpu.pipeline_mode<synchronous>, transform_indices = @transform_3, window_bounds = array<i64: 8, 1>}, {transform_indices = @transform_4, window_bounds = array<i64: 8, 96>}]} {
    %c0 = arith.constant 0 : index
    %c0_0 = arith.constant 0 : index
    %0 = vector.load %arg1[%c0, %c0_0] : memref<8x96xf32, #tpu.memory_space<vmem>>, vector<8x96xf32>
    %c0_1 = arith.constant 0 : index
    %c0_2 = arith.constant 0 : index
    %1 = vector.load %arg2[%c0_1, %c0_2] : memref<8x8xbf16, #tpu.memory_space<vmem>>, vector<8x8xbf16>
    %2 = arith.truncf %0 : vector<8x96xf32> to vector<8x96xbf16>
    %cst = arith.constant dense<0.000000e+00> : vector<8x96xf32>
    %3 = tpu.matmul %1, %2, %cst {dimension_numbers = #tpu.dot_dimension_numbers<[1], [0], [0], [1], [0, 0, 1, 1], [], []>} : vector<8x8xbf16>, vector<8x96xbf16>, vector<8x96xf32> -> vector<8x96xf32>
    %c0_3 = arith.constant 0 : index
    %c0_4 = arith.constant 0 : index
    %4 = vector.load %arg3[%c0_3, %c0_4] : memref<8x1xf32, #tpu.memory_space<vmem>>, vector<8x1xf32>
    %5 = vector.broadcast %4 : vector<8x1xf32> to vector<8x96xf32>
    %6 = arith.mulf %3, %5 : vector<8x96xf32>
    %c0_5 = arith.constant 0 : index
    %c0_6 = arith.constant 0 : index
    %7 = vector.load %arg4[%c0_5, %c0_6] : memref<8x1xf32, #tpu.memory_space<vmem>>, vector<8x1xf32>
    %8 = vector.broadcast %7 : vector<8x1xf32> to vector<8x96xf32>
    %9 = arith.addf %6, %8 : vector<8x96xf32>
    %cst_7 = arith.constant 0.000000e+00 : f32
    %10 = vector.broadcast %cst_7 : f32 to vector<8x96xf32>
    %11 = arith.maximumf %9, %10 : vector<8x96xf32>
    %c0_8 = arith.constant 0 : index
    %c0_9 = arith.constant 0 : index
    %12 = vector.load %arg5[%c0_8, %c0_9] : memref<8x96xf32, #tpu.memory_space<vmem>>, vector<8x96xf32>
    tpu.vector_store %arg5[%c0_8, %c0_9], %11 {strides = array<i32>} : memref<8x96xf32, #tpu.memory_space<vmem>>, vector<8x96xf32>,
    return
  }
  func.func @transform_0(%arg0: i32) -> (i32, i32) {
    %c0_i32 = arith.constant 0 : i32
    %c0_i32_0 = arith.constant 0 : i32
    return %c0_i32, %arg0 : i32, i32
  }
  func.func @transform_1(%arg0: i32) -> (i32, i32) {
    %c0_i32 = arith.constant 0 : i32
    %c0_i32_0 = arith.constant 0 : i32
    %c0_i32_1 = arith.constant 0 : i32
    return %c0_i32, %c0_i32_0 : i32, i32
  }
  func.func @transform_2(%arg0: i32) -> (i32, i32) {
    %c0_i32 = arith.constant 0 : i32
    %c0_i32_0 = arith.constant 0 : i32
    %c0_i32_1 = arith.constant 0 : i32
    return %c0_i32, %c0_i32_0 : i32, i32
  }
  func.func @transform_3(%arg0: i32) -> (i32, i32) {
    %c0_i32 = arith.constant 0 : i32
    %c0_i32_0 = arith.constant 0 : i32
    %c0_i32_1 = arith.constant 0 : i32
    return %c0_i32, %c0_i32_0 : i32, i32
  }
  func.func @transform_4(%arg0: i32) -> (i32, i32) {
    %c0_i32 = arith.constant 0 : i32
    %c0_i32_0 = arith.constant 0 : i32
    return %c0_i32, %arg0 : i32, i32
  }
}

module attributes {stable_mosaic.version = 11 : i64} {
  func.func @_conv3_kernel(%arg0: i32, %arg1: memref<432x256xbf16, #tpu.memory_space<vmem>>, %arg2: memref<16x432xbf16, #tpu.memory_space<vmem>>, %arg3: memref<8x1xf32, #tpu.memory_space<vmem>>, %arg4: memref<8x1xf32, #tpu.memory_space<vmem>>, %arg5: memref<8x256xf32, #tpu.memory_space<vmem>>, %arg6: memref<8x256xf32, #tpu.memory_space<vmem>>, %arg7: memref<8x256xf32, #tpu.memory_space<vmem>>) attributes {dimension_semantics = [#tpu.dimension_semantics<parallel>], iteration_bounds = array<i64: 2>, scalar_prefetch = 0 : i64, scratch_operands = 0 : i64, tpu.core_type = #tpu.core_type<tc>, window_params = [{transform_indices = @transform_0, window_bounds = array<i64: 432, 256>}, {pipeline_mode = #tpu.pipeline_mode<synchronous>, transform_indices = @transform_1, window_bounds = array<i64: 16, 432>}, {pipeline_mode = #tpu.pipeline_mode<synchronous>, transform_indices = @transform_2, window_bounds = array<i64: 8, 1>}, {pipeline_mode = #tpu.pipeline_mode<synchronous>, transform_indices = @transform_3, window_bounds = array<i64: 8, 1>}, {transform_indices = @transform_4, window_bounds = array<i64: 8, 256>}, {transform_indices = @transform_5, window_bounds = array<i64: 8, 256>}, {transform_indices = @transform_6, window_bounds = array<i64: 8, 256>}]} {
    %c0 = arith.constant 0 : index
    %c0_0 = arith.constant 0 : index
    %0 = vector.load %arg2[%c0, %c0_0] : memref<16x432xbf16, #tpu.memory_space<vmem>>, vector<16x432xbf16>
    %c0_1 = arith.constant 0 : index
    %c0_2 = arith.constant 0 : index
    %1 = vector.load %arg1[%c0_1, %c0_2] : memref<432x256xbf16, #tpu.memory_space<vmem>>, vector<432x256xbf16>
    %cst = arith.constant dense<0.000000e+00> : vector<16x256xf32>
    %2 = tpu.matmul %0, %1, %cst {dimension_numbers = #tpu.dot_dimension_numbers<[1], [0], [0], [1], [0, 0, 1, 1], [], []>} : vector<16x432xbf16>, vector<432x256xbf16>, vector<16x256xf32> -> vector<16x256xf32>
    %3 = vector.extract_strided_slice %2 {offsets = [0, 0], sizes = [8, 256], strides = [1, 1]} : vector<16x256xf32> to vector<8x256xf32>
    %c0_3 = arith.constant 0 : index
    %c0_4 = arith.constant 0 : index
    %4 = vector.load %arg3[%c0_3, %c0_4] : memref<8x1xf32, #tpu.memory_space<vmem>>, vector<8x1xf32>
    %5 = vector.broadcast %4 : vector<8x1xf32> to vector<8x256xf32>
    %6 = arith.mulf %3, %5 : vector<8x256xf32>
    %c0_5 = arith.constant 0 : index
    %c0_6 = arith.constant 0 : index
    %7 = vector.load %arg4[%c0_5, %c0_6] : memref<8x1xf32, #tpu.memory_space<vmem>>, vector<8x1xf32>
    %8 = vector.broadcast %7 : vector<8x1xf32> to vector<8x256xf32>
    %9 = arith.addf %6, %8 : vector<8x256xf32>
    %cst_7 = arith.constant 0.000000e+00 : f32
    %10 = vector.broadcast %cst_7 : f32 to vector<8x256xf32>
    %11 = arith.maximumf %9, %10 : vector<8x256xf32>
    %c0_8 = arith.constant 0 : index
    %c0_9 = arith.constant 0 : index
    %12 = vector.load %arg5[%c0_8, %c0_9] : memref<8x256xf32, #tpu.memory_space<vmem>>, vector<8x256xf32>
    %13 = arith.addf %11, %12 : vector<8x256xf32>
    %c0_10 = arith.constant 0 : index
    %c0_11 = arith.constant 0 : index
    %14 = vector.load %arg6[%c0_10, %c0_11] : memref<8x256xf32, #tpu.memory_space<vmem>>, vector<8x256xf32>
    tpu.vector_store %arg6[%c0_10, %c0_11], %13 {strides = array<i32>} : memref<8x256xf32, #tpu.memory_space<vmem>>, vector<8x256xf32>,
    %15 = vector.extract_strided_slice %2 {offsets = [8, 0], sizes = [8, 256], strides = [1, 1]} : vector<16x256xf32> to vector<8x256xf32>
    %c0_12 = arith.constant 0 : index
    %c0_13 = arith.constant 0 : index
    %16 = vector.load %arg7[%c0_12, %c0_13] : memref<8x256xf32, #tpu.memory_space<vmem>>, vector<8x256xf32>
    tpu.vector_store %arg7[%c0_12, %c0_13], %15 {strides = array<i32>} : memref<8x256xf32, #tpu.memory_space<vmem>>, vector<8x256xf32>,
    return
  }
  func.func @transform_0(%arg0: i32) -> (i32, i32) {
    %c0_i32 = arith.constant 0 : i32
    %c0_i32_0 = arith.constant 0 : i32
    return %c0_i32, %arg0 : i32, i32
  }
  func.func @transform_1(%arg0: i32) -> (i32, i32) {
    %c0_i32 = arith.constant 0 : i32
    %c0_i32_0 = arith.constant 0 : i32
    %c0_i32_1 = arith.constant 0 : i32
    return %c0_i32, %c0_i32_0 : i32, i32
  }
  func.func @transform_2(%arg0: i32) -> (i32, i32) {
    %c0_i32 = arith.constant 0 : i32
    %c0_i32_0 = arith.constant 0 : i32
    %c0_i32_1 = arith.constant 0 : i32
    return %c0_i32, %c0_i32_0 : i32, i32
  }
  func.func @transform_3(%arg0: i32) -> (i32, i32) {
    %c0_i32 = arith.constant 0 : i32
    %c0_i32_0 = arith.constant 0 : i32
    %c0_i32_1 = arith.constant 0 : i32
    return %c0_i32, %c0_i32_0 : i32, i32
  }
  func.func @transform_4(%arg0: i32) -> (i32, i32) {
    %c0_i32 = arith.constant 0 : i32
    %c0_i32_0 = arith.constant 0 : i32
    return %c0_i32, %arg0 : i32, i32
  }
  func.func @transform_5(%arg0: i32) -> (i32, i32) {
    %c0_i32 = arith.constant 0 : i32
    %c0_i32_0 = arith.constant 0 : i32
    return %c0_i32, %arg0 : i32, i32
  }
  func.func @transform_6(%arg0: i32) -> (i32, i32) {
    %c0_i32 = arith.constant 0 : i32
    %c0_i32_0 = arith.constant 0 : i32
    return %c0_i32, %arg0 : i32, i32
  }
}

module attributes {stable_mosaic.version = 11 : i64} {
  func.func @_combine_g_kernel(%arg0: i32, %arg1: memref<8x256xf32, #tpu.memory_space<vmem>>, %arg2: memref<8x256xf32, #tpu.memory_space<vmem>>, %arg3: memref<8x1xf32, #tpu.memory_space<vmem>>, %arg4: memref<8x1xf32, #tpu.memory_space<vmem>>, %arg5: memref<8x256xf32, #tpu.memory_space<vmem>>, %arg6: memref<8x256xf32, #tpu.memory_space<vmem>>) attributes {dimension_semantics = [#tpu.dimension_semantics<parallel>], iteration_bounds = array<i64: 2>, scalar_prefetch = 0 : i64, scratch_operands = 0 : i64, tpu.core_type = #tpu.core_type<tc>, window_params = [{transform_indices = @transform_0, window_bounds = array<i64: 8, 256>}, {transform_indices = @transform_1, window_bounds = array<i64: 8, 256>}, {pipeline_mode = #tpu.pipeline_mode<synchronous>, transform_indices = @transform_2, window_bounds = array<i64: 8, 1>}, {pipeline_mode = #tpu.pipeline_mode<synchronous>, transform_indices = @transform_3, window_bounds = array<i64: 8, 1>}, {transform_indices = @transform_4, window_bounds = array<i64: 8, 256>}, {transform_indices = @transform_5, window_bounds = array<i64: 8, 256>}]} {
    %c0 = arith.constant 0 : index
    %c0_0 = arith.constant 0 : index
    %0 = vector.load %arg1[%c0, %c0_0] : memref<8x256xf32, #tpu.memory_space<vmem>>, vector<8x256xf32>
    %c0_1 = arith.constant 0 : index
    %c0_2 = arith.constant 0 : index
    %1 = vector.load %arg2[%c0_1, %c0_2] : memref<8x256xf32, #tpu.memory_space<vmem>>, vector<8x256xf32>
    %2 = arith.addf %0, %1 : vector<8x256xf32>
    %c0_3 = arith.constant 0 : index
    %c0_4 = arith.constant 0 : index
    %3 = vector.load %arg3[%c0_3, %c0_4] : memref<8x1xf32, #tpu.memory_space<vmem>>, vector<8x1xf32>
    %4 = vector.broadcast %3 : vector<8x1xf32> to vector<8x256xf32>
    %5 = arith.mulf %2, %4 : vector<8x256xf32>
    %c0_5 = arith.constant 0 : index
    %c0_6 = arith.constant 0 : index
    %6 = vector.load %arg4[%c0_5, %c0_6] : memref<8x1xf32, #tpu.memory_space<vmem>>, vector<8x1xf32>
    %7 = vector.broadcast %6 : vector<8x1xf32> to vector<8x256xf32>
    %8 = arith.addf %5, %7 : vector<8x256xf32>
    %cst = arith.constant 0.000000e+00 : f32
    %9 = vector.broadcast %cst : f32 to vector<8x256xf32>
    %10 = arith.maximumf %8, %9 : vector<8x256xf32>
    %c0_7 = arith.constant 0 : index
    %c0_8 = arith.constant 0 : index
    %11 = vector.load %arg5[%c0_7, %c0_8] : memref<8x256xf32, #tpu.memory_space<vmem>>, vector<8x256xf32>
    %12 = arith.addf %10, %11 : vector<8x256xf32>
    %c0_9 = arith.constant 0 : index
    %c0_10 = arith.constant 0 : index
    %13 = vector.load %arg6[%c0_9, %c0_10] : memref<8x256xf32, #tpu.memory_space<vmem>>, vector<8x256xf32>
    tpu.vector_store %arg6[%c0_9, %c0_10], %12 {strides = array<i32>} : memref<8x256xf32, #tpu.memory_space<vmem>>, vector<8x256xf32>,
    return
  }
  func.func @transform_0(%arg0: i32) -> (i32, i32) {
    %c0_i32 = arith.constant 0 : i32
    %c0_i32_0 = arith.constant 0 : i32
    return %c0_i32, %arg0 : i32, i32
  }
  func.func @transform_1(%arg0: i32) -> (i32, i32) {
    %c0_i32 = arith.constant 0 : i32
    %c0_i32_0 = arith.constant 0 : i32
    return %c0_i32, %arg0 : i32, i32
  }
  func.func @transform_2(%arg0: i32) -> (i32, i32) {
    %c0_i32 = arith.constant 0 : i32
    %c0_i32_0 = arith.constant 0 : i32
    %c0_i32_1 = arith.constant 0 : i32
    return %c0_i32, %c0_i32_0 : i32, i32
  }
  func.func @transform_3(%arg0: i32) -> (i32, i32) {
    %c0_i32 = arith.constant 0 : i32
    %c0_i32_0 = arith.constant 0 : i32
    %c0_i32_1 = arith.constant 0 : i32
    return %c0_i32, %c0_i32_0 : i32, i32
  }
  func.func @transform_4(%arg0: i32) -> (i32, i32) {
    %c0_i32 = arith.constant 0 : i32
    %c0_i32_0 = arith.constant 0 : i32
    return %c0_i32, %arg0 : i32, i32
  }
  func.func @transform_5(%arg0: i32) -> (i32, i32) {
    %c0_i32 = arith.constant 0 : i32
    %c0_i32_0 = arith.constant 0 : i32
    return %c0_i32, %arg0 : i32, i32
  }
}

</mosaic_0001>

<llo_original>
// kernel: bottleneck_forward.37
$region0: #{bottleneck_forward.37}
  #allocation0 [shape = 'u32[]', space=smem, size = 0x4, offset = 0x4, fixed_abs, tag = 'smem constant byte address 0x4 - core index']
  #allocation1 [shape = 'u32[144,128]{1,0:T(1,128)}', space=vmem, size = 0x12000, scoped, tag = 'internal scratch']
  %s0 = inlined_call_operand.vmem [shape: f32[8,512], index: 0, kind: input, shape index: {}]
  %s1 = inlined_call_operand.hbm [shape: bf16[4,8], index: 1, kind: input, shape index: {}]
  %s2 = inlined_call_operand.vmem [shape: f32[4,1], index: 2, kind: input, shape index: {}]
  %s3 = inlined_call_operand.vmem [shape: f32[4,1], index: 3, kind: input, shape index: {}]
  %s4 = inlined_call_operand.vmem [shape: f32[4,512], index: 4, kind: output, shape index: {}]
  %s5 = sld [smem:[#allocation0]]
  $region53: #{bottleneck_forward.37} parent=0
    _
  %s7 = ssub.s32 1, %s5
  %s8 = scalar_select 0, %s7, %s5
  $region1: #{bottleneck_forward.37} parent=0
    #allocation2 [shape = 'u8[1024]{0}', space=vmem, size = 0x400, scoped, tag = 'input window, operand 1, single buffered']
    #allocation3 [shape = 's32[2]{0}', space=sflag, size = 0x8, scoped, tag = 'scoped memory for bottleneck_forward.37']
    %9 = vsyncpa [#allocation3], 0
    loop: start=0, step=1, limit=4
    $region2: #{bottleneck_forward.37} parent=1 // loop_pre_header
      _
    $region3: #{bottleneck_forward.37} parent=1 // loop_header
      %s11 = sphi 0, %s15
      %p12 = scmp.ge.s32.totalorder %s11, 4
      %s21 = sphi 0, %s23
      %s24 = sphi 0, %s21
      %s25 = sphi 0, %s24
      %s41 = sphi 0, %s25
      %s45 = sphi 0, %s45
      %s47 = sphi 0, %s45
      %s48 = sphi 0, %s47
      %s62 = sphi 0, %s48
      %s66 = sphi 0, %s66
      %s68 = sphi 0, %s66
      %s69 = sphi 0, %s68
      %s83 = sphi 0, %s69
      %s87 = sphi 0, %s87
      %s89 = sphi 0, %s87
      %s90 = sphi 0, %s89
      %s104 = sphi 0, %s90
      %s110 = sphi 0, %s112
      %s113 = sphi 0, %s110
      %s114 = sphi 0, %s113
      %s130 = sphi 0, %s114
    $region4: #{bottleneck_forward.37} parent=1 // loop_header_branch
      %14 = sbr.rel (%p12) target = $region8
    $region5: #{bottleneck_forward.37} parent=1 // loop_body
      %s16 = ssub.s32 %s11, 1
      %s17 = ssub.s32 %s11, 2
      %s18 = sadd.s32 %s11, 1
      %s19 = ssub.s32 %s11, %s18
      %p20 = scmp.eq.s32.totalorder %s19, 0
      %s22 = sadd.s32 %s21, 1
      %s23 = scalar_select %p20, %s21, %s22
      %p26 = pneg %p20
      %p27 = scmp.eq.s32.totalorder %s11, 1
      %p28 = por %p26, %p27
      %p29 = scmp.ne.s32.totalorder %s21, %s24
      %p30 = scmp.eq.s32.totalorder %s11, 0
      %p31 = por %p29, %p30
      %p32 = scmp.ne.s32.totalorder %s21, %s24
      %p33 = scmp.eq.s32.totalorder %s16, 1
      %p34 = por %p32, %p33
      %p35 = scmp.ne.s32.totalorder %s24, %s25
      %p36 = scmp.eq.s32.totalorder %s16, 0
      %p37 = por %p35, %p36
      %p38 = scmp.ne.s32.totalorder %s24, %s25
      %p39 = scmp.eq.s32.totalorder %s17, 1
      %p40 = por %p38, %p39
      %p42 = scmp.ne.s32.totalorder %s25, %s41
      %p43 = scmp.eq.s32.totalorder %s17, 0
      %p44 = por %p42, %p43
      %s46 = sadd.s32 %s45, 1
      %p49 = scmp.eq.s32.totalorder %s11, 1
      %p50 = scmp.ne.s32.totalorder %s45, %s47
      %p51 = scmp.eq.s32.totalorder %s11, 0
      %p52 = por %p50, %p51
      %p53 = scmp.ne.s32.totalorder %s45, %s47
      %p54 = scmp.eq.s32.totalorder %s16, 1
      %p55 = por %p53, %p54
      %p56 = scmp.ne.s32.totalorder %s47, %s48
      %p57 = scmp.eq.s32.totalorder %s16, 0
      %p58 = por %p56, %p57
      %p59 = scmp.ne.s32.totalorder %s47, %s48
      %p60 = scmp.eq.s32.totalorder %s17, 1
      %p61 = por %p59, %p60
      %p63 = scmp.ne.s32.totalorder %s48, %s62
      %p64 = scmp.eq.s32.totalorder %s17, 0
      %p65 = por %p63, %p64
      %s67 = sadd.s32 %s66, 1
      %p70 = scmp.eq.s32.totalorder %s11, 1
      %p71 = scmp.ne.s32.totalorder %s66, %s68
      %p72 = scmp.eq.s32.totalorder %s11, 0
      %p73 = por %p71, %p72
      %p74 = scmp.ne.s32.totalorder %s66, %s68
      %p75 = scmp.eq.s32.totalorder %s16, 1
      %p76 = por %p74, %p75
      %p77 = scmp.ne.s32.totalorder %s68, %s69
      %p78 = scmp.eq.s32.totalorder %s16, 0
      %p79 = por %p77, %p78
      %p80 = scmp.ne.s32.totalorder %s68, %s69
      %p81 = scmp.eq.s32.totalorder %s17, 1
      %p82 = por %p80, %p81
      %p84 = scmp.ne.s32.totalorder %s69, %s83
      %p85 = scmp.eq.s32.totalorder %s17, 0
      %p86 = por %p84, %p85
      %s88 = sadd.s32 %s87, 1
      %p91 = scmp.eq.s32.totalorder %s11, 1
      %p92 = scmp.ne.s32.totalorder %s87, %s89
      %p93 = scmp.eq.s32.totalorder %s11, 0
      %p94 = por %p92, %p93
      %p95 = scmp.ne.s32.totalorder %s87, %s89
      %p96 = scmp.eq.s32.totalorder %s16, 1
      %p97 = por %p95, %p96
      %p98 = scmp.ne.s32.totalorder %s89, %s90
      %p99 = scmp.eq.s32.totalorder %s16, 0
      %p100 = por %p98, %p99
      %p101 = scmp.ne.s32.totalorder %s89, %s90
      %p102 = scmp.eq.s32.totalorder %s17, 1
      %p103 = por %p101, %p102
      %p105 = scmp.ne.s32.totalorder %s90, %s104
      %p106 = scmp.eq.s32.totalorder %s17, 0
      %p107 = por %p105, %p106
      %s108 = ssub.s32 %s11, %s18
      %p109 = scmp.eq.s32.totalorder %s108, 0
      %s111 = sadd.s32 %s110, 1
      %s112 = scalar_select %p109, %s110, %s111
      %p115 = pneg %p109
      %p116 = scmp.eq.s32.totalorder %s11, 1
      %p117 = por %p115, %p116
      %p118 = scmp.ne.s32.totalorder %s110, %s113
      %p119 = scmp.eq.s32.totalorder %s11, 0
      %p120 = por %p118, %p119
      %p121 = scmp.ne.s32.totalorder %s110, %s113
      %p122 = scmp.eq.s32.totalorder %s16, 1
      %p123 = por %p121, %p122
      %p124 = scmp.ne.s32.totalorder %s113, %s114
      %p125 = scmp.eq.s32.totalorder %s16, 0
      %p126 = por %p124, %p125
      %p127 = scmp.ne.s32.totalorder %s113, %s114
      %p128 = scmp.eq.s32.totalorder %s17, 1
      %p129 = por %p127, %p128
      %p131 = scmp.ne.s32.totalorder %s114, %s130
      %p132 = scmp.eq.s32.totalorder %s17, 0
      %p133 = por %p131, %p132
      %p134 = scmp.le.s32.totalorder 1, %s11
      %p135 = scmp.lt.s32.totalorder %s11, 3
      %p136 = pnand %p134, %p135
      %p137 = pneg %p136
      // Predicated region
      $region9: #{bottleneck_forward.37} parent=5 // pred_check
        _
      $region10: #{bottleneck_forward.37} parent=5 // pred_check_branch
        %139 = sbr.rel (%p136) target = $region12
      $region11: #{bottleneck_forward.37} parent=5 // pred_region
        %s140 = ssub.s32 %s11, 1
        // Predicated region
        $region13: #{bottleneck_forward.37} parent=11 // pred_check
          %p141 = pneg %p58
        $region14: #{bottleneck_forward.37} parent=11 // pred_check_branch
          %143 = sbr.rel (%p141) target = $region16
        $region15: #{bottleneck_forward.37} parent=11 // pred_region
          %s145 = ssub.s32 32, 32
          %146 = vsyncadd [#allocation3], %s145
          %s148 = sshll.u32 [#allocation2], 4
          %s149 = int_to_ptr.vmem [resolvable:$true] %s148
          %151 = dma.hbm_to_vmem [thread:$0]  %s1, 32, %s149, [#allocation3]
        $region16: #{bottleneck_forward.37} parent=11 // pred_fallthru
          _
        // Predicated region
        $region17: #{bottleneck_forward.37} parent=11 // pred_check
          %p152 = pneg %p79
        $region18: #{bottleneck_forward.37} parent=11 // pred_check_branch
          %154 = sbr.rel (%p152) target = $region20
        $region19: #{bottleneck_forward.37} parent=11 // pred_region
          _
        $region20: #{bottleneck_forward.37} parent=11 // pred_fallthru
          _
        // Predicated region
        $region21: #{bottleneck_forward.37} parent=11 // pred_check
          %p155 = pneg %p100
        $region22: #{bottleneck_forward.37} parent=11 // pred_check_branch
          %157 = sbr.rel (%p155) target = $region24
        $region23: #{bottleneck_forward.37} parent=11 // pred_region
          _
        $region24: #{bottleneck_forward.37} parent=11 // pred_fallthru
          _
      $region12: #{bottleneck_forward.37} parent=5 // pred_fallthru
        _
      %p158 = scmp.lt.s32.totalorder %s11, 2
      // Predicated region
      $region25: #{bottleneck_forward.37} parent=5 // pred_check
        %p159 = pneg %p158
      $region26: #{bottleneck_forward.37} parent=5 // pred_check_branch
        %161 = sbr.rel (%p159) target = $region28
      $region27: #{bottleneck_forward.37} parent=5 // pred_region
        // Predicated region
        $region29: #{bottleneck_forward.37} parent=27 // pred_check
          %p162 = pneg %p31
        $region30: #{bottleneck_forward.37} parent=27 // pred_check_branch
          %164 = sbr.rel (%p162) target = $region32
        $region31: #{bottleneck_forward.37} parent=27 // pred_region
          %s165 = smul.u32 2, %s11
          %p166 = scmp.lt.s32.totalorder %s165, 3
          %s167 = scalar_select %p166, %s165, 3
          %s168 = smul.addr %s167, 8
          %s169 = scalar_lea.vmem %s0, %s168
          %s170 = smul.u32 2, %s11
        $region32: #{bottleneck_forward.37} parent=27 // pred_fallthru
          _
      $region28: #{bottleneck_forward.37} parent=5 // pred_fallthru
        _
      %p171 = scmp.le.s32.totalorder 1, %s11
      %p172 = scmp.lt.s32.totalorder %s11, 3
      %p173 = pnand %p171, %p172
      %p174 = pneg %p173
      // Predicated region
      $region33: #{bottleneck_forward.37} parent=5 // pred_check
        _
      $region34: #{bottleneck_forward.37} parent=5 // pred_check_branch
        %176 = sbr.rel (%p173) target = $region36
      $region35: #{bottleneck_forward.37} parent=5 // pred_region
        %s177 = ssub.s32 %s11, 1
        // Predicated region
        $region37: #{bottleneck_forward.37} parent=35 // pred_check
          %p178 = pneg %p58
        $region38: #{bottleneck_forward.37} parent=35 // pred_check_branch
          %180 = sbr.rel (%p178) target = $region40
        $region39: #{bottleneck_forward.37} parent=35 // pred_region
          %181 = dma.done [#allocation3], 32
        $region40: #{bottleneck_forward.37} parent=35 // pred_fallthru
          _
        %s182 = smul.u32 2, %s16
        %p183 = scmp.lt.s32.totalorder %s182, 3
        %s184 = scalar_select %p183, %s182, 3
        %s185 = smul.addr %s184, 8
        %s186 = scalar_lea.vmem %s0, %s185
        %p187 = pneg %p37
        %p188 = pneg %p34
        %p189 = pneg %p58
        %p190 = pneg %p55
        %p191 = pneg %p79
        %p192 = pneg %p76
        %p193 = pneg %p100
        %p194 = pneg %p97
        %p195 = pneg %p126
        %p196 = pneg %p123
        %s197 = smul.u32 2, %s16
        %p198 = scmp.lt.s32.totalorder %s197, 3
        %s199 = scalar_select %p198, %s197, 3
        %s200 = smul.addr %s199, 4
        %s201 = scalar_lea.vmem %s4, %s200
        %s202 = smul.u32 2, %s16
        %p203 = scmp.lt.s32.totalorder %s202, 3
        %s204 = scalar_select %p203, %s202, 3
        %s205 = smul.addr %s204, 8
        %s206 = scalar_lea.vmem %s0, %s205
        %s207 = smul.u32 2, %s16
        %s208 = smul.u32 2, %s16
        %p209 = scmp.lt.s32.totalorder %s208, 3
        %s210 = scalar_select %p209, %s208, 3
        %s211 = smul.addr %s210, 4
        %s212 = scalar_lea.vmem %s4, %s211
        %s213 = smul.u32 2, %s16
        %v215 = vld [vmem:[%s206] sm:$0xff]
        %v216 = vld [vmem:[%s206 + $0x8] sm:$0xff]
        %v217 = vld [vmem:[#allocation2] sm:$0x3]
        %v218 = vpack.c.bf16 %v215, %v215
        %v219 = vpack.c.bf16 %v216, %v216
        %vm220 = vcmask 64512
        %v222 = vsel %vm220, %v217, 0
        %vm224 = vcmask 1043456
        %v226 = vsel %vm224, %v218, 0
        %v229 = vsel %vm224, %v219, 0
        %231 = vmatprep.subr.bf16.mxu0 %v229
        %232 = vmatpush1.bf16.msra.mxu0 %v226
        %233 = vmatprep.subr.bf16.mxu0 0
        %234 = vmatpush1.bf16.msra.mxu0 0
        %235 = vmatprep.subr.bf16.mxu0 0
        %236 = vmatpush1.bf16.msra.mxu0 0
        %237 = vmatprep.subr.bf16.mxu0 0
        %238 = vmatpush1.bf16.msra.mxu0 0
        %239 = vmatprep.subr.bf16.mxu0 0
        %240 = vmatpush1.bf16.msra.mxu0 0
        %241 = vmatprep.subr.bf16.mxu0 0
        %242 = vmatpush1.bf16.msra.mxu0 0
        %243 = vmatprep.subr.bf16.mxu0 0
        %244 = vmatpush1.bf16.msra.mxu0 0
        %245 = vmatprep.subr.bf16.mxu0 0
        %246 = vmatpush1.bf16.msra.mxu0 0
        %247 = vmatprep.subr.bf16.mxu0 0
        %248 = vmatpush1.bf16.msra.mxu0 0
        %249 = vmatprep.subr.bf16.mxu0 0
        %250 = vmatpush1.bf16.msra.mxu0 0
        %251 = vmatprep.subr.bf16.mxu0 0
        %252 = vmatpush1.bf16.msra.mxu0 0
        %253 = vmatprep.subr.bf16.mxu0 0
        %254 = vmatpush1.bf16.msra.mxu0 0
        %255 = vmatprep.subr.bf16.mxu0 0
        %256 = vmatpush1.bf16.msra.mxu0 0
        %257 = vmatprep.subr.bf16.mxu0 0
        %258 = vmatpush1.bf16.msra.mxu0 0
        %259 = vmatprep.subr.bf16.mxu0 0
        %260 = vmatpush1.bf16.msra.mxu0 0
        %261 = vmatprep.subr.bf16.mxu0 0
        %262 = vmatpush1.bf16.msra.mxu0 0
        %263 = vmatprep.mubr.bf16.mxu0 0
        %264 = vmatmul.mubr.bf16.gmra.mrb[0].mxu0 %v222
        %v265 = vpop.f32.mrb[0].mxu0
        %v266 = vadd.f32 0.0, %v265
        %v267 = vpop.f32.mrb[0].mxu0
        %v268 = vadd.f32 0.0, %v267
        %v269 = vpop.f32.mrb[0].mxu0
        %v270 = vpop.f32.mrb[0].mxu0
        %271 = vdwg.mxu0
        %v272 = vld [vmem:[%s2] sm:$0xf]
        %274 = vset.pattern.permute.xlu0 0
        %275 = vperm.xlu0 %274, %v272
        %v276 = vpop.permute.xlu0 %275
        %v278 = vmul.f32 %v266, %v276
        %v279 = vmul.f32 %v268, %v276
        %v280 = vld [vmem:[%s3] sm:$0xf]
        %282 = vset.pattern.permute.xlu0 0
        %283 = vperm.xlu0 %282, %v280
        %v284 = vpop.permute.xlu0 %283
        %v286 = vadd.f32 %v278, %v284
        %v287 = vadd.f32 %v279, %v284
        %v288 = vmax.f32 %v286, 0.0
        %v289 = vmax.f32 %v287, 0.0
        %v292 = vcombine.low %v288, %v289
        %294 = vst [vmem:[%s212] sm:$0xff] %v292
        %s295 = smul.u32 2, %s16
        %p296 = scmp.lt.s32.totalorder %s295, 3
        %s297 = scalar_select %p296, %s295, 3
        %s298 = smul.addr %s297, 4
        %s299 = scalar_lea.vmem %s4, %s298
        // Predicated region
        $region41: #{bottleneck_forward.37} parent=35 // pred_check
          %p300 = pneg %p123
        $region42: #{bottleneck_forward.37} parent=35 // pred_check_branch
          %302 = sbr.rel (%p300) target = $region44
        $region43: #{bottleneck_forward.37} parent=35 // pred_region
          %s303 = smul.u32 2, %s16
        $region44: #{bottleneck_forward.37} parent=35 // pred_fallthru
          _
      $region36: #{bottleneck_forward.37} parent=5 // pred_fallthru
        _
      %p304 = scmp.le.s32.totalorder 2, %s11
      // Predicated region
      $region45: #{bottleneck_forward.37} parent=5 // pred_check
        %p305 = pneg %p304
      $region46: #{bottleneck_forward.37} parent=5 // pred_check_branch
        %307 = sbr.rel (%p305) target = $region48
      $region47: #{bottleneck_forward.37} parent=5 // pred_region
        %s308 = ssub.s32 %s11, 2
        // Predicated region
        $region49: #{bottleneck_forward.37} parent=47 // pred_check
          %p309 = pneg %p129
        $region50: #{bottleneck_forward.37} parent=47 // pred_check_branch
          %311 = sbr.rel (%p309) target = $region52
        $region51: #{bottleneck_forward.37} parent=47 // pred_region
          %s312 = smul.u32 2, %s17
          %p313 = scmp.lt.s32.totalorder %s312, 3
          %s314 = scalar_select %p313, %s312, 3
          %s315 = smul.addr %s314, 4
          %s316 = scalar_lea.vmem %s4, %s315
        $region52: #{bottleneck_forward.37} parent=47 // pred_fallthru
          _
      $region48: #{bottleneck_forward.37} parent=5 // pred_fallthru
        _
    $region6: #{bottleneck_forward.37} parent=1 // loop_footer
      %s15 = sadd.s32 1, %s11
    $region7: #{bottleneck_forward.37} parent=1 // loop_footer_branch
      %10 = sbr.rel target = $region3
    $region8: #{bottleneck_forward.37} parent=1 // loop_exit
      _
    %317 = vsyncpa [#allocation3], 1
    %s318 = scalar_lea.sflag [#allocation3], 1
    %319 = vsyncpa %s318, 1

// kernel: bottleneck_forward.39
$region0: #{bottleneck_forward.39}
  #allocation0 [shape = 'u32[]', space=smem, size = 0x4, offset = 0x4, fixed_abs, tag = 'smem constant byte address 0x4 - core index']
  #allocation1 [shape = 'u32[144,128]{1,0:T(1,128)}', space=vmem, size = 0x12000, scoped, tag = 'internal scratch']
  %s0 = inlined_call_operand.vmem [shape: f32[8,96], index: 0, kind: input, shape index: {}]
  %s1 = inlined_call_operand.hbm [shape: bf16[8,8], index: 1, kind: input, shape index: {}]
  %s2 = inlined_call_operand.vmem [shape: f32[8,1], index: 2, kind: input, shape index: {}]
  %s3 = inlined_call_operand.vmem [shape: f32[8,1], index: 3, kind: input, shape index: {}]
  %s4 = inlined_call_operand.vmem [shape: f32[8,96], index: 4, kind: output, shape index: {}]
  %s5 = sld [smem:[#allocation0]]
  $region30: #{bottleneck_forward.39} parent=0
    _
  %s7 = ssub.s32 1, %s5
  %s8 = scalar_select 0, %s7, %s5
  $region1: #{bottleneck_forward.39} parent=0
    #allocation2 [shape = 'u8[2048]{0}', space=vmem, size = 0x800, scoped, tag = 'input window, operand 1, single buffered']
    #allocation3 [shape = 's32[1]{0}', space=sflag, size = 0x4, scoped, tag = 'scoped memory for bottleneck_forward.39']
    %9 = vsyncpa [#allocation3], 0
    // Predicated region
    $region2: #{bottleneck_forward.39} parent=1 // pred_check
      _
    $region3: #{bottleneck_forward.39} parent=1 // pred_check_branch
      %11 = sbr.rel (0) target = $region5
    $region4: #{bottleneck_forward.39} parent=1 // pred_region
      _
    $region5: #{bottleneck_forward.39} parent=1 // pred_fallthru
      _
    // Predicated region
    $region6: #{bottleneck_forward.39} parent=1 // pred_check
      _
    $region7: #{bottleneck_forward.39} parent=1 // pred_check_branch
      %13 = sbr.rel (0) target = $region9
    $region8: #{bottleneck_forward.39} parent=1 // pred_region
      %s15 = ssub.s32 64, 64
      %16 = vsyncadd [#allocation3], %s15
      %s18 = sshll.u32 [#allocation2], 4
      %s19 = int_to_ptr.vmem [resolvable:$true] %s18
      %21 = dma.hbm_to_vmem [thread:$0]  %s1, 64, %s19, [#allocation3]
    $region9: #{bottleneck_forward.39} parent=1 // pred_fallthru
      _
    // Predicated region
    $region10: #{bottleneck_forward.39} parent=1 // pred_check
      _
    $region11: #{bottleneck_forward.39} parent=1 // pred_check_branch
      %23 = sbr.rel (0) target = $region13
    $region12: #{bottleneck_forward.39} parent=1 // pred_region
      _
    $region13: #{bottleneck_forward.39} parent=1 // pred_fallthru
      _
    // Predicated region
    $region14: #{bottleneck_forward.39} parent=1 // pred_check
      _
    $region15: #{bottleneck_forward.39} parent=1 // pred_check_branch
      %25 = sbr.rel (0) target = $region17
    $region16: #{bottleneck_forward.39} parent=1 // pred_region
      _
    $region17: #{bottleneck_forward.39} parent=1 // pred_fallthru
      _
    // Predicated region
    $region18: #{bottleneck_forward.39} parent=1 // pred_check
      _
    $region19: #{bottleneck_forward.39} parent=1 // pred_check_branch
      %27 = sbr.rel (0) target = $region21
    $region20: #{bottleneck_forward.39} parent=1 // pred_region
      %28 = dma.done [#allocation3], 64
    $region21: #{bottleneck_forward.39} parent=1 // pred_fallthru
      _
    %v30 = vld [vmem:[%s0] sm:$0xff]
    %v31 = vld [vmem:[#allocation2] sm:$0xf]
    %v32 = vpack.c.bf16 %v30, %v30
    %vm33 = vcmask 64512
    %v35 = vsel %vm33, %v31, 0
    %vm37 = vcmask 1043456
    %v39 = vsel %vm37, %v32, 0
    %41 = vmatprep.subr.bf16.mxu0 0
    %42 = vmatpush1.bf16.msra.mxu0 %v39
    %43 = vmatprep.subr.bf16.mxu0 0
    %44 = vmatpush1.bf16.msra.mxu0 0
    %45 = vmatprep.subr.bf16.mxu0 0
    %46 = vmatpush1.bf16.msra.mxu0 0
    %47 = vmatprep.subr.bf16.mxu0 0
    %48 = vmatpush1.bf16.msra.mxu0 0
    %49 = vmatprep.subr.bf16.mxu0 0
    %50 = vmatpush1.bf16.msra.mxu0 0
    %51 = vmatprep.subr.bf16.mxu0 0
    %52 = vmatpush1.bf16.msra.mxu0 0
    %53 = vmatprep.subr.bf16.mxu0 0
    %54 = vmatpush1.bf16.msra.mxu0 0
    %55 = vmatprep.subr.bf16.mxu0 0
    %56 = vmatpush1.bf16.msra.mxu0 0
    %57 = vmatprep.subr.bf16.mxu0 0
    %58 = vmatpush1.bf16.msra.mxu0 0
    %59 = vmatprep.subr.bf16.mxu0 0
    %60 = vmatpush1.bf16.msra.mxu0 0
    %61 = vmatprep.subr.bf16.mxu0 0
    %62 = vmatpush1.bf16.msra.mxu0 0
    %63 = vmatprep.subr.bf16.mxu0 0
    %64 = vmatpush1.bf16.msra.mxu0 0
    %65 = vmatprep.subr.bf16.mxu0 0
    %66 = vmatpush1.bf16.msra.mxu0 0
    %67 = vmatprep.subr.bf16.mxu0 0
    %68 = vmatpush1.bf16.msra.mxu0 0
    %69 = vmatprep.subr.bf16.mxu0 0
    %70 = vmatpush1.bf16.msra.mxu0 0
    %71 = vmatprep.subr.bf16.mxu0 0
    %72 = vmatpush1.bf16.msra.mxu0 0
    %73 = vmatprep.mubr.bf16.mxu0 0
    %74 = vmatmul.mubr.bf16.gmra.mrb[0].mxu0 %v35
    %v75 = vpop.f32.mrb[0].mxu0
    %v76 = vadd.f32 0.0, %v75
    %v77 = vpop.f32.mrb[0].mxu0
    %v78 = vpop.f32.mrb[0].mxu0
    %v79 = vpop.f32.mrb[0].mxu0
    %80 = vdwg.mxu0
    %v81 = vld [vmem:[%s2] sm:$0xff]
    %83 = vset.pattern.permute.xlu0 0
    %84 = vperm.xlu0 %83, %v81
    %v85 = vpop.permute.xlu0 %84
    %v87 = vmul.f32 %v76, %v85
    %v88 = vld [vmem:[%s3] sm:$0xff]
    %90 = vset.pattern.permute.xlu0 0
    %91 = vperm.xlu0 %90, %v88
    %v92 = vpop.permute.xlu0 %91
    %v94 = vadd.f32 %v87, %v92
    %v95 = vmax.f32 %v94, 0.0
    %vm96 = vcmask 785408
    %97 = vst.msk [vmem:[%s4] sm:$0xff] %vm96, %v95
    // Predicated region
    $region22: #{bottleneck_forward.39} parent=1 // pred_check
      _
    $region23: #{bottleneck_forward.39} parent=1 // pred_check_branch
      %99 = sbr.rel (0) target = $region25
    $region24: #{bottleneck_forward.39} parent=1 // pred_region
      _
    $region25: #{bottleneck_forward.39} parent=1 // pred_fallthru
      _
    // Predicated region
    $region26: #{bottleneck_forward.39} parent=1 // pred_check
      _
    $region27: #{bottleneck_forward.39} parent=1 // pred_check_branch
      %101 = sbr.rel (0) target = $region29
    $region28: #{bottleneck_forward.39} parent=1 // pred_region
      _
    $region29: #{bottleneck_forward.39} parent=1 // pred_fallthru
      _
    %102 = vsyncpa [#allocation3], 1

// kernel: tile.34
$region0: #{tile.34}
  %s0 = inlined_call_operand.vmem [shape: f32[4,2,1,4,2,4,2,4], index: 0, kind: input, shape index: {}]
  %s1 = inlined_call_operand.vmem [shape: f32[4,512], index: 1, kind: output, shape index: {}]
  $region1: #{tile.34} parent=0
    #allocation0 [shape = 'u8[16384]{0}', space=vmem, size = 0x4000, scoped, tag = 'scoped mem for output reshape']
    #allocation1 [shape = 'u8[1048576]{0}', space=vmem, size = 0x100000, scoped, tag = 'scoped mem for input reshape']
    %s3 = sshllo.u32 0, 2
    %s4 = smul.addr 2, 255
    %s5 = scalar_lea.vmem %s0, %s4
    %v6 = vld [vmem:[%s5] sm:%s3]
    %s7 = scalar_lea.vmem [#allocation1], 2040
    %8 = vst [vmem:[%s7] sm:%s3] %v6
    %s9 = smul.addr 2, 254
    %s10 = scalar_lea.vmem %s0, %s9
    %v11 = vld [vmem:[%s10] sm:%s3]
    %s12 = scalar_lea.vmem [#allocation1], 2032
    %13 = vst [vmem:[%s12] sm:%s3] %v11
    %s14 = smul.addr 2, 253
    %s15 = scalar_lea.vmem %s0, %s14
    %v16 = vld [vmem:[%s15] sm:%s3]
    %s17 = scalar_lea.vmem [#allocation1], 2024
    %18 = vst [vmem:[%s17] sm:%s3] %v16
    %s19 = smul.addr 2, 252
    %s20 = scalar_lea.vmem %s0, %s19
    %v21 = vld [vmem:[%s20] sm:%s3]
    %s22 = scalar_lea.vmem [#allocation1], 2016
    %23 = vst [vmem:[%s22] sm:%s3] %v21
    %s24 = smul.addr 2, 251
    %s25 = scalar_lea.vmem %s0, %s24
    %v26 = vld [vmem:[%s25] sm:%s3]
    %s27 = scalar_lea.vmem [#allocation1], 2008
    %28 = vst [vmem:[%s27] sm:%s3] %v26
    %s29 = smul.addr 2, 250
    %s30 = scalar_lea.vmem %s0, %s29
    %v31 = vld [vmem:[%s30] sm:%s3]
    %s32 = scalar_lea.vmem [#allocation1], 2000
    %33 = vst [vmem:[%s32] sm:%s3] %v31
    %s34 = smul.addr 2, 249
    %s35 = scalar_lea.vmem %s0, %s34
    %v36 = vld [vmem:[%s35] sm:%s3]
    %s37 = scalar_lea.vmem [#allocation1], 1992
    %38 = vst [vmem:[%s37] sm:%s3] %v36
    %s39 = smul.addr 2, 248
    %s40 = scalar_lea.vmem %s0, %s39
    %v41 = vld [vmem:[%s40] sm:%s3]
    %s42 = scalar_lea.vmem [#allocation1], 1984
    %43 = vst [vmem:[%s42] sm:%s3] %v41
    %s44 = smul.addr 2, 247
    %s45 = scalar_lea.vmem %s0, %s44
    %v46 = vld [vmem:[%s45] sm:%s3]
    %s47 = scalar_lea.vmem [#allocation1], 1976
    %48 = vst [vmem:[%s47] sm:%s3] %v46
    %s49 = smul.addr 2, 246
    %s50 = scalar_lea.vmem %s0, %s49
    %v51 = vld [vmem:[%s50] sm:%s3]
    %s52 = scalar_lea.vmem [#allocation1], 1968
    %53 = vst [vmem:[%s52] sm:%s3] %v51
    %s54 = smul.addr 2, 245
    %s55 = scalar_lea.vmem %s0, %s54
    %v56 = vld [vmem:[%s55] sm:%s3]
    %s57 = scalar_lea.vmem [#allocation1], 1960
    %58 = vst [vmem:[%s57] sm:%s3] %v56
    %s59 = smul.addr 2, 244
    %s60 = scalar_lea.vmem %s0, %s59
    %v61 = vld [vmem:[%s60] sm:%s3]
    %s62 = scalar_lea.vmem [#allocation1], 1952
    %63 = vst [vmem:[%s62] sm:%s3] %v61
    %s64 = smul.addr 2, 243
    %s65 = scalar_lea.vmem %s0, %s64
    %v66 = vld [vmem:[%s65] sm:%s3]
    %s67 = scalar_lea.vmem [#allocation1], 1944
    %68 = vst [vmem:[%s67] sm:%s3] %v66
    %s69 = smul.addr 2, 242
    %s70 = scalar_lea.vmem %s0, %s69
    %v71 = vld [vmem:[%s70] sm:%s3]
    %s72 = scalar_lea.vmem [#allocation1], 1936
    %73 = vst [vmem:[%s72] sm:%s3] %v71
    %s74 = smul.addr 2, 241
    %s75 = scalar_lea.vmem %s0, %s74
    %v76 = vld [vmem:[%s75] sm:%s3]
    %s77 = scalar_lea.vmem [#allocation1], 1928
    %78 = vst [vmem:[%s77] sm:%s3] %v76
    %s79 = smul.addr 2, 240
    %s80 = scalar_lea.vmem %s0, %s79
    %v81 = vld [vmem:[%s80] sm:%s3]
    %s82 = scalar_lea.vmem [#allocation1], 1920
    %83 = vst [vmem:[%s82] sm:%s3] %v81
    %s84 = smul.addr 2, 239
    %s85 = scalar_lea.vmem %s0, %s84
    %v86 = vld [vmem:[%s85] sm:%s3]
    %s87 = scalar_lea.vmem [#allocation1], 1912
    %88 = vst [vmem:[%s87] sm:%s3] %v86
    %s89 = smul.addr 2, 238
    %s90 = scalar_lea.vmem %s0, %s89
    %v91 = vld [vmem:[%s90] sm:%s3]
    %s92 = scalar_lea.vmem [#allocation1], 1904
    %93 = vst [vmem:[%s92] sm:%s3] %v91
    %s94 = smul.addr 2, 237
    %s95 = scalar_lea.vmem %s0, %s94
    %v96 = vld [vmem:[%s95] sm:%s3]
    %s97 = scalar_lea.vmem [#allocation1], 1896
    %98 = vst [vmem:[%s97] sm:%s3] %v96
    %s99 = smul.addr 2, 236
    %s100 = scalar_lea.vmem %s0, %s99
    %v101 = vld [vmem:[%s100] sm:%s3]
    %s102 = scalar_lea.vmem [#allocation1], 1888
    %103 = vst [vmem:[%s102] sm:%s3] %v101
    %s104 = smul.addr 2, 235
    %s105 = scalar_lea.vmem %s0, %s104
    %v106 = vld [vmem:[%s105] sm:%s3]
    %s107 = scalar_lea.vmem [#allocation1], 1880
    %108 = vst [vmem:[%s107] sm:%s3] %v106
    %s109 = smul.addr 2, 234
    %s110 = scalar_lea.vmem %s0, %s109
    %v111 = vld [vmem:[%s110] sm:%s3]
    %s112 = scalar_lea.vmem [#allocation1], 1872
    %113 = vst [vmem:[%s112] sm:%s3] %v111
    %s114 = smul.addr 2, 233
    %s115 = scalar_lea.vmem %s0, %s114
    %v116 = vld [vmem:[%s115] sm:%s3]
    %s117 = scalar_lea.vmem [#allocation1], 1864
    %118 = vst [vmem:[%s117] sm:%s3] %v116
    %s119 = smul.addr 2, 232
    %s120 = scalar_lea.vmem %s0, %s119
    %v121 = vld [vmem:[%s120] sm:%s3]
    %s122 = scalar_lea.vmem [#allocation1], 1856
    %123 = vst [vmem:[%s122] sm:%s3] %v121
    %s124 = smul.addr 2, 231
    %s125 = scalar_lea.vmem %s0, %s124
    %v126 = vld [vmem:[%s125] sm:%s3]
    %s127 = scalar_lea.vmem [#allocation1], 1848
    %128 = vst [vmem:[%s127] sm:%s3] %v126
    %s129 = smul.addr 2, 230
    %s130 = scalar_lea.vmem %s0, %s129
    %v131 = vld [vmem:[%s130] sm:%s3]
    %s132 = scalar_lea.vmem [#allocation1], 1840
    %133 = vst [vmem:[%s132] sm:%s3] %v131
    %s134 = smul.addr 2, 229
    %s135 = scalar_lea.vmem %s0, %s134
    %v136 = vld [vmem:[%s135] sm:%s3]
    %s137 = scalar_lea.vmem [#allocation1], 1832
    %138 = vst [vmem:[%s137] sm:%s3] %v136
    %s139 = smul.addr 2, 228
    %s140 = scalar_lea.vmem %s0, %s139
    %v141 = vld [vmem:[%s140] sm:%s3]
    %s142 = scalar_lea.vmem [#allocation1], 1824
    %143 = vst [vmem:[%s142] sm:%s3] %v141
    %s144 = smul.addr 2, 227
    %s145 = scalar_lea.vmem %s0, %s144
    %v146 = vld [vmem:[%s145] sm:%s3]
    %s147 = scalar_lea.vmem [#allocation1], 1816
    %148 = vst [vmem:[%s147] sm:%s3] %v146
    %s149 = smul.addr 2, 226
    %s150 = scalar_lea.vmem %s0, %s149
    %v151 = vld [vmem:[%s150] sm:%s3]
    %s152 = scalar_lea.vmem [#allocation1], 1808
    %153 = vst [vmem:[%s152] sm:%s3] %v151
    %s154 = smul.addr 2, 225
    %s155 = scalar_lea.vmem %s0, %s154
    %v156 = vld [vmem:[%s155] sm:%s3]
    %s157 = scalar_lea.vmem [#allocation1], 1800
    %158 = vst [vmem:[%s157] sm:%s3] %v156
    %s159 = smul.addr 2, 224
    %s160 = scalar_lea.vmem %s0, %s159
    %v161 = vld [vmem:[%s160] sm:%s3]
    %s162 = scalar_lea.vmem [#allocation1], 1792
    %163 = vst [vmem:[%s162] sm:%s3] %v161
    %s164 = smul.addr 2, 223
    %s165 = scalar_lea.vmem %s0, %s164
    %v166 = vld [vmem:[%s165] sm:%s3]
    %s167 = scalar_lea.vmem [#allocation1], 1784
    %168 = vst [vmem:[%s167] sm:%s3] %v166
    %s169 = smul.addr 2, 222
    %s170 = scalar_lea.vmem %s0, %s169
    %v171 = vld [vmem:[%s170] sm:%s3]
    %s172 = scalar_lea.vmem [#allocation1], 1776
    %173 = vst [vmem:[%s172] sm:%s3] %v171
    %s174 = smul.addr 2, 221
    %s175 = scalar_lea.vmem %s0, %s174
    %v176 = vld [vmem:[%s175] sm:%s3]
    %s177 = scalar_lea.vmem [#allocation1], 1768
    %178 = vst [vmem:[%s177] sm:%s3] %v176
    %s179 = smul.addr 2, 220
    %s180 = scalar_lea.vmem %s0, %s179
    %v181 = vld [vmem:[%s180] sm:%s3]
    %s182 = scalar_lea.vmem [#allocation1], 1760
    %183 = vst [vmem:[%s182] sm:%s3] %v181
    %s184 = smul.addr 2, 219
    %s185 = scalar_lea.vmem %s0, %s184
    %v186 = vld [vmem:[%s185] sm:%s3]
    %s187 = scalar_lea.vmem [#allocation1], 1752
    %188 = vst [vmem:[%s187] sm:%s3] %v186
    %s189 = smul.addr 2, 218
    %s190 = scalar_lea.vmem %s0, %s189
    %v191 = vld [vmem:[%s190] sm:%s3]
    %s192 = scalar_lea.vmem [#allocation1], 1744
    %193 = vst [vmem:[%s192] sm:%s3] %v191
    %s194 = smul.addr 2, 217
    %s195 = scalar_lea.vmem %s0, %s194
    %v196 = vld [vmem:[%s195] sm:%s3]
    %s197 = scalar_lea.vmem [#allocation1], 1736
    %198 = vst [vmem:[%s197] sm:%s3] %v196
    %s199 = smul.addr 2, 216
    %s200 = scalar_lea.vmem %s0, %s199
    %v201 = vld [vmem:[%s200] sm:%s3]
    %s202 = scalar_lea.vmem [#allocation1], 1728
    %203 = vst [vmem:[%s202] sm:%s3] %v201
    %s204 = smul.addr 2, 215
    %s205 = scalar_lea.vmem %s0, %s204
    %v206 = vld [vmem:[%s205] sm:%s3]
    %s207 = scalar_lea.vmem [#allocation1], 1720
    %208 = vst [vmem:[%s207] sm:%s3] %v206
    %s209 = smul.addr 2, 214
    %s210 = scalar_lea.vmem %s0, %s209
    %v211 = vld [vmem:[%s210] sm:%s3]
    %s212 = scalar_lea.vmem [#allocation1], 1712
    %213 = vst [vmem:[%s212] sm:%s3] %v211
    %s214 = smul.addr 2, 213
    %s215 = scalar_lea.vmem %s0, %s214
    %v216 = vld [vmem:[%s215] sm:%s3]
    %s217 = scalar_lea.vmem [#allocation1], 1704
    %218 = vst [vmem:[%s217] sm:%s3] %v216
    %s219 = smul.addr 2, 212
    %s220 = scalar_lea.vmem %s0, %s219
    %v221 = vld [vmem:[%s220] sm:%s3]
    %s222 = scalar_lea.vmem [#allocation1], 1696
    %223 = vst [vmem:[%s222] sm:%s3] %v221
    %s224 = smul.addr 2, 211
    %s225 = scalar_lea.vmem %s0, %s224
    %v226 = vld [vmem:[%s225] sm:%s3]
    %s227 = scalar_lea.vmem [#allocation1], 1688
    %228 = vst [vmem:[%s227] sm:%s3] %v226
    %s229 = smul.addr 2, 210
    %s230 = scalar_lea.vmem %s0, %s229
    %v231 = vld [vmem:[%s230] sm:%s3]
    %s232 = scalar_lea.vmem [#allocation1], 1680
    %233 = vst [vmem:[%s232] sm:%s3] %v231
    %s234 = smul.addr 2, 209
    %s235 = scalar_lea.vmem %s0, %s234
    %v236 = vld [vmem:[%s235] sm:%s3]
    %s237 = scalar_lea.vmem [#allocation1], 1672
    %238 = vst [vmem:[%s237] sm:%s3] %v236
    %s239 = smul.addr 2, 208
    %s240 = scalar_lea.vmem %s0, %s239
    %v241 = vld [vmem:[%s240] sm:%s3]
    %s242 = scalar_lea.vmem [#allocation1], 1664
    %243 = vst [vmem:[%s242] sm:%s3] %v241
    %s244 = smul.addr 2, 207
    %s245 = scalar_lea.vmem %s0, %s244
    %v246 = vld [vmem:[%s245] sm:%s3]
    %s247 = scalar_lea.vmem [#allocation1], 1656
    %248 = vst [vmem:[%s247] sm:%s3] %v246
    %s249 = smul.addr 2, 206
    %s250 = scalar_lea.vmem %s0, %s249
    %v251 = vld [vmem:[%s250] sm:%s3]
    %s252 = scalar_lea.vmem [#allocation1], 1648
    %253 = vst [vmem:[%s252] sm:%s3] %v251
    %s254 = smul.addr 2, 205
    %s255 = scalar_lea.vmem %s0, %s254
    %v256 = vld [vmem:[%s255] sm:%s3]
    %s257 = scalar_lea.vmem [#allocation1], 1640
    %258 = vst [vmem:[%s257] sm:%s3] %v256
    %s259 = smul.addr 2, 204
    %s260 = scalar_lea.vmem %s0, %s259
    %v261 = vld [vmem:[%s260] sm:%s3]
    %s262 = scalar_lea.vmem [#allocation1], 1632
    %263 = vst [vmem:[%s262] sm:%s3] %v261
    %s264 = smul.addr 2, 203
    %s265 = scalar_lea.vmem %s0, %s264
    %v266 = vld [vmem:[%s265] sm:%s3]
    %s267 = scalar_lea.vmem [#allocation1], 1624
    %268 = vst [vmem:[%s267] sm:%s3] %v266
    %s269 = smul.addr 2, 202
    %s270 = scalar_lea.vmem %s0, %s269
    %v271 = vld [vmem:[%s270] sm:%s3]
    %s272 = scalar_lea.vmem [#allocation1], 1616
    %273 = vst [vmem:[%s272] sm:%s3] %v271
    %s274 = smul.addr 2, 201
    %s275 = scalar_lea.vmem %s0, %s274
    %v276 = vld [vmem:[%s275] sm:%s3]
    %s277 = scalar_lea.vmem [#allocation1], 1608
    %278 = vst [vmem:[%s277] sm:%s3] %v276
    %s279 = smul.addr 2, 200
    %s280 = scalar_lea.vmem %s0, %s279
    %v281 = vld [vmem:[%s280] sm:%s3]
    %s282 = scalar_lea.vmem [#allocation1], 1600
    %283 = vst [vmem:[%s282] sm:%s3] %v281
    %s284 = smul.addr 2, 199
    %s285 = scalar_lea.vmem %s0, %s284
    %v286 = vld [vmem:[%s285] sm:%s3]
    %s287 = scalar_lea.vmem [#allocation1], 1592
    %288 = vst [vmem:[%s287] sm:%s3] %v286
    %s289 = smul.addr 2, 198
    %s290 = scalar_lea.vmem %s0, %s289
    %v291 = vld [vmem:[%s290] sm:%s3]
    %s292 = scalar_lea.vmem [#allocation1], 1584
    %293 = vst [vmem:[%s292] sm:%s3] %v291
    %s294 = smul.addr 2, 197
    %s295 = scalar_lea.vmem %s0, %s294
    %v296 = vld [vmem:[%s295] sm:%s3]
    %s297 = scalar_lea.vmem [#allocation1], 1576
    %298 = vst [vmem:[%s297] sm:%s3] %v296
    %s299 = smul.addr 2, 196
    %s300 = scalar_lea.vmem %s0, %s299
    %v301 = vld [vmem:[%s300] sm:%s3]
    %s302 = scalar_lea.vmem [#allocation1], 1568
    %303 = vst [vmem:[%s302] sm:%s3] %v301
    %s304 = smul.addr 2, 195
    %s305 = scalar_lea.vmem %s0, %s304
    %v306 = vld [vmem:[%s305] sm:%s3]
    %s307 = scalar_lea.vmem [#allocation1], 1560
    %308 = vst [vmem:[%s307] sm:%s3] %v306
    %s309 = smul.addr 2, 194
    %s310 = scalar_lea.vmem %s0, %s309
    %v311 = vld [vmem:[%s310] sm:%s3]
    %s312 = scalar_lea.vmem [#allocation1], 1552
    %313 = vst [vmem:[%s312] sm:%s3] %v311
    %s314 = smul.addr 2, 193
    %s315 = scalar_lea.vmem %s0, %s314
    %v316 = vld [vmem:[%s315] sm:%s3]
    %s317 = scalar_lea.vmem [#allocation1], 1544
    %318 = vst [vmem:[%s317] sm:%s3] %v316
    %s319 = smul.addr 2, 192
    %s320 = scalar_lea.vmem %s0, %s319
    %v321 = vld [vmem:[%s320] sm:%s3]
    %s322 = scalar_lea.vmem [#allocation1], 1536
    %323 = vst [vmem:[%s322] sm:%s3] %v321
    %s324 = smul.addr 2, 191
    %s325 = scalar_lea.vmem %s0, %s324
    %v326 = vld [vmem:[%s325] sm:%s3]
    %s327 = scalar_lea.vmem [#allocation1], 1528
    %328 = vst [vmem:[%s327] sm:%s3] %v326
    %s329 = smul.addr 2, 190
    %s330 = scalar_lea.vmem %s0, %s329
    %v331 = vld [vmem:[%s330] sm:%s3]
    %s332 = scalar_lea.vmem [#allocation1], 1520
    %333 = vst [vmem:[%s332] sm:%s3] %v331
    %s334 = smul.addr 2, 189
    %s335 = scalar_lea.vmem %s0, %s334
    %v336 = vld [vmem:[%s335] sm:%s3]
    %s337 = scalar_lea.vmem [#allocation1], 1512
    %338 = vst [vmem:[%s337] sm:%s3] %v336
    %s339 = smul.addr 2, 188
    %s340 = scalar_lea.vmem %s0, %s339
    %v341 = vld [vmem:[%s340] sm:%s3]
    %s342 = scalar_lea.vmem [#allocation1], 1504
    %343 = vst [vmem:[%s342] sm:%s3] %v341
    %s344 = smul.addr 2, 187
    %s345 = scalar_lea.vmem %s0, %s344
    %v346 = vld [vmem:[%s345] sm:%s3]
    %s347 = scalar_lea.vmem [#allocation1], 1496
    %348 = vst [vmem:[%s347] sm:%s3] %v346
    %s349 = smul.addr 2, 186
    %s350 = scalar_lea.vmem %s0, %s349
    %v351 = vld [vmem:[%s350] sm:%s3]
    %s352 = scalar_lea.vmem [#allocation1], 1488
    %353 = vst [vmem:[%s352] sm:%s3] %v351
    %s354 = smul.addr 2, 185
    %s355 = scalar_lea.vmem %s0, %s354
    %v356 = vld [vmem:[%s355] sm:%s3]
    %s357 = scalar_lea.vmem [#allocation1], 1480
    %358 = vst [vmem:[%s357] sm:%s3] %v356
    %s359 = smul.addr 2, 184
    %s360 = scalar_lea.vmem %s0, %s359
    %v361 = vld [vmem:[%s360] sm:%s3]
    %s362 = scalar_lea.vmem [#allocation1], 1472
    %363 = vst [vmem:[%s362] sm:%s3] %v361
    %s364 = smul.addr 2, 183
    %s365 = scalar_lea.vmem %s0, %s364
    %v366 = vld [vmem:[%s365] sm:%s3]
    %s367 = scalar_lea.vmem [#allocation1], 1464
    %368 = vst [vmem:[%s367] sm:%s3] %v366
    %s369 = smul.addr 2, 182
    %s370 = scalar_lea.vmem %s0, %s369
    %v371 = vld [vmem:[%s370] sm:%s3]
    %s372 = scalar_lea.vmem [#allocation1], 1456
    %373 = vst [vmem:[%s372] sm:%s3] %v371
    %s374 = smul.addr 2, 181
    %s375 = scalar_lea.vmem %s0, %s374
    %v376 = vld [vmem:[%s375] sm:%s3]
    %s377 = scalar_lea.vmem [#allocation1], 1448
    %378 = vst [vmem:[%s377] sm:%s3] %v376
    %s379 = smul.addr 2, 180
    %s380 = scalar_lea.vmem %s0, %s379
    %v381 = vld [vmem:[%s380] sm:%s3]
    %s382 = scalar_lea.vmem [#allocation1], 1440
    %383 = vst [vmem:[%s382] sm:%s3] %v381
    %s384 = smul.addr 2, 179
    %s385 = scalar_lea.vmem %s0, %s384
    %v386 = vld [vmem:[%s385] sm:%s3]
    %s387 = scalar_lea.vmem [#allocation1], 1432
    %388 = vst [vmem:[%s387] sm:%s3] %v386
    %s389 = smul.addr 2, 178
    %s390 = scalar_lea.vmem %s0, %s389
    %v391 = vld [vmem:[%s390] sm:%s3]
    %s392 = scalar_lea.vmem [#allocation1], 1424
    %393 = vst [vmem:[%s392] sm:%s3] %v391
    %s394 = smul.addr 2, 177
    %s395 = scalar_lea.vmem %s0, %s394
    %v396 = vld [vmem:[%s395] sm:%s3]
    %s397 = scalar_lea.vmem [#allocation1], 1416
    %398 = vst [vmem:[%s397] sm:%s3] %v396
    %s399 = smul.addr 2, 176
    %s400 = scalar_lea.vmem %s0, %s399
    %v401 = vld [vmem:[%s400] sm:%s3]
    %s402 = scalar_lea.vmem [#allocation1], 1408
    %403 = vst [vmem:[%s402] sm:%s3] %v401
    %s404 = smul.addr 2, 175
    %s405 = scalar_lea.vmem %s0, %s404
    %v406 = vld [vmem:[%s405] sm:%s3]
    %s407 = scalar_lea.vmem [#allocation1], 1400
    %408 = vst [vmem:[%s407] sm:%s3] %v406
    %s409 = smul.addr 2, 174
    %s410 = scalar_lea.vmem %s0, %s409
    %v411 = vld [vmem:[%s410] sm:%s3]
    %s412 = scalar_lea.vmem [#allocation1], 1392
    %413 = vst [vmem:[%s412] sm:%s3] %v411
    %s414 = smul.addr 2, 173
    %s415 = scalar_lea.vmem %s0, %s414
    %v416 = vld [vmem:[%s415] sm:%s3]
    %s417 = scalar_lea.vmem [#allocation1], 1384
    %418 = vst [vmem:[%s417] sm:%s3] %v416
    %s419 = smul.addr 2, 172
    %s420 = scalar_lea.vmem %s0, %s419
    %v421 = vld [vmem:[%s420] sm:%s3]
    %s422 = scalar_lea.vmem [#allocation1], 1376
    %423 = vst [vmem:[%s422] sm:%s3] %v421
    %s424 = smul.addr 2, 171
    %s425 = scalar_lea.vmem %s0, %s424
    %v426 = vld [vmem:[%s425] sm:%s3]
    %s427 = scalar_lea.vmem [#allocation1], 1368
    %428 = vst [vmem:[%s427] sm:%s3] %v426
    %s429 = smul.addr 2, 170
    %s430 = scalar_lea.vmem %s0, %s429
    %v431 = vld [vmem:[%s430] sm:%s3]
    %s432 = scalar_lea.vmem [#allocation1], 1360
    %433 = vst [vmem:[%s432] sm:%s3] %v431
    %s434 = smul.addr 2, 169
    %s435 = scalar_lea.vmem %s0, %s434
    %v436 = vld [vmem:[%s435] sm:%s3]
    %s437 = scalar_lea.vmem [#allocation1], 1352
    %438 = vst [vmem:[%s437] sm:%s3] %v436
    %s439 = smul.addr 2, 168
    %s440 = scalar_lea.vmem %s0, %s439
    %v441 = vld [vmem:[%s440] sm:%s3]
    %s442 = scalar_lea.vmem [#allocation1], 1344
    %443 = vst [vmem:[%s442] sm:%s3] %v441
    %s444 = smul.addr 2, 167
    %s445 = scalar_lea.vmem %s0, %s444
    %v446 = vld [vmem:[%s445] sm:%s3]
    %s447 = scalar_lea.vmem [#allocation1], 1336
    %448 = vst [vmem:[%s447] sm:%s3] %v446
    %s449 = smul.addr 2, 166
    %s450 = scalar_lea.vmem %s0, %s449
    %v451 = vld [vmem:[%s450] sm:%s3]
    %s452 = scalar_lea.vmem [#allocation1], 1328
    %453 = vst [vmem:[%s452] sm:%s3] %v451
    %s454 = smul.addr 2, 165
    %s455 = scalar_lea.vmem %s0, %s454
    %v456 = vld [vmem:[%s455] sm:%s3]
    %s457 = scalar_lea.vmem [#allocation1], 1320
    %458 = vst [vmem:[%s457] sm:%s3] %v456
    %s459 = smul.addr 2, 164
    %s460 = scalar_lea.vmem %s0, %s459
    %v461 = vld [vmem:[%s460] sm:%s3]
    %s462 = scalar_lea.vmem [#allocation1], 1312
    %463 = vst [vmem:[%s462] sm:%s3] %v461
    %s464 = smul.addr 2, 163
    %s465 = scalar_lea.vmem %s0, %s464
    %v466 = vld [vmem:[%s465] sm:%s3]
    %s467 = scalar_lea.vmem [#allocation1], 1304
    %468 = vst [vmem:[%s467] sm:%s3] %v466
    %s469 = smul.addr 2, 162
    %s470 = scalar_lea.vmem %s0, %s469
    %v471 = vld [vmem:[%s470] sm:%s3]
    %s472 = scalar_lea.vmem [#allocation1], 1296
    %473 = vst [vmem:[%s472] sm:%s3] %v471
    %s474 = smul.addr 2, 161
    %s475 = scalar_lea.vmem %s0, %s474
    %v476 = vld [vmem:[%s475] sm:%s3]
    %s477 = scalar_lea.vmem [#allocation1], 1288
    %478 = vst [vmem:[%s477] sm:%s3] %v476
    %s479 = smul.addr 2, 160
    %s480 = scalar_lea.vmem %s0, %s479
    %v481 = vld [vmem:[%s480] sm:%s3]
    %s482 = scalar_lea.vmem [#allocation1], 1280
    %483 = vst [vmem:[%s482] sm:%s3] %v481
    %s484 = smul.addr 2, 159
    %s485 = scalar_lea.vmem %s0, %s484
    %v486 = vld [vmem:[%s485] sm:%s3]
    %s487 = scalar_lea.vmem [#allocation1], 1272
    %488 = vst [vmem:[%s487] sm:%s3] %v486
    %s489 = smul.addr 2, 158
    %s490 = scalar_lea.vmem %s0, %s489
    %v491 = vld [vmem:[%s490] sm:%s3]
    %s492 = scalar_lea.vmem [#allocation1], 1264
    %493 = vst [vmem:[%s492] sm:%s3] %v491
    %s494 = smul.addr 2, 157
    %s495 = scalar_lea.vmem %s0, %s494
    %v496 = vld [vmem:[%s495] sm:%s3]
    %s497 = scalar_lea.vmem [#allocation1], 1256
    %498 = vst [vmem:[%s497] sm:%s3] %v496
    %s499 = smul.addr 2, 156
    %s500 = scalar_lea.vmem %s0, %s499
    %v501 = vld [vmem:[%s500] sm:%s3]
    %s502 = scalar_lea.vmem [#allocation1], 1248
    %503 = vst [vmem:[%s502] sm:%s3] %v501
    %s504 = smul.addr 2, 155
    %s505 = scalar_lea.vmem %s0, %s504
    %v506 = vld [vmem:[%s505] sm:%s3]
    %s507 = scalar_lea.vmem [#allocation1], 1240
    %508 = vst [vmem:[%s507] sm:%s3] %v506
    %s509 = smul.addr 2, 154
    %s510 = scalar_lea.vmem %s0, %s509
    %v511 = vld [vmem:[%s510] sm:%s3]
    %s512 = scalar_lea.vmem [#allocation1], 1232
    %513 = vst [vmem:[%s512] sm:%s3] %v511
    %s514 = smul.addr 2, 153
    %s515 = scalar_lea.vmem %s0, %s514
    %v516 = vld [vmem:[%s515] sm:%s3]
    %s517 = scalar_lea.vmem [#allocation1], 1224
    %518 = vst [vmem:[%s517] sm:%s3] %v516
    %s519 = smul.addr 2, 152
    %s520 = scalar_lea.vmem %s0, %s519
    %v521 = vld [vmem:[%s520] sm:%s3]
    %s522 = scalar_lea.vmem [#allocation1], 1216
    %523 = vst [vmem:[%s522] sm:%s3] %v521
    %s524 = smul.addr 2, 151
    %s525 = scalar_lea.vmem %s0, %s524
    %v526 = vld [vmem:[%s525] sm:%s3]
    %s527 = scalar_lea.vmem [#allocation1], 1208
    %528 = vst [vmem:[%s527] sm:%s3] %v526
    %s529 = smul.addr 2, 150
    %s530 = scalar_lea.vmem %s0, %s529
    %v531 = vld [vmem:[%s530] sm:%s3]
    %s532 = scalar_lea.vmem [#allocation1], 1200
    %533 = vst [vmem:[%s532] sm:%s3] %v531
    %s534 = smul.addr 2, 149
    %s535 = scalar_lea.vmem %s0, %s534
    %v536 = vld [vmem:[%s535] sm:%s3]
    %s537 = scalar_lea.vmem [#allocation1], 1192
    %538 = vst [vmem:[%s537] sm:%s3] %v536
    %s539 = smul.addr 2, 148
    %s540 = scalar_lea.vmem %s0, %s539
    %v541 = vld [vmem:[%s540] sm:%s3]
    %s542 = scalar_lea.vmem [#allocation1], 1184
    %543 = vst [vmem:[%s542] sm:%s3] %v541
    %s544 = smul.addr 2, 147
    %s545 = scalar_lea.vmem %s0, %s544
    %v546 = vld [vmem:[%s545] sm:%s3]
    %s547 = scalar_lea.vmem [#allocation1], 1176
    %548 = vst [vmem:[%s547] sm:%s3] %v546
    %s549 = smul.addr 2, 146
    %s550 = scalar_lea.vmem %s0, %s549
    %v551 = vld [vmem:[%s550] sm:%s3]
    %s552 = scalar_lea.vmem [#allocation1], 1168
    %553 = vst [vmem:[%s552] sm:%s3] %v551
    %s554 = smul.addr 2, 145
    %s555 = scalar_lea.vmem %s0, %s554
    %v556 = vld [vmem:[%s555] sm:%s3]
    %s557 = scalar_lea.vmem [#allocation1], 1160
    %558 = vst [vmem:[%s557] sm:%s3] %v556
    %s559 = smul.addr 2, 144
    %s560 = scalar_lea.vmem %s0, %s559
    %v561 = vld [vmem:[%s560] sm:%s3]
    %s562 = scalar_lea.vmem [#allocation1], 1152
    %563 = vst [vmem:[%s562] sm:%s3] %v561
    %s564 = smul.addr 2, 143
    %s565 = scalar_lea.vmem %s0, %s564
    %v566 = vld [vmem:[%s565] sm:%s3]
    %s567 = scalar_lea.vmem [#allocation1], 1144
    %568 = vst [vmem:[%s567] sm:%s3] %v566
    %s569 = smul.addr 2, 142
    %s570 = scalar_lea.vmem %s0, %s569
    %v571 = vld [vmem:[%s570] sm:%s3]
    %s572 = scalar_lea.vmem [#allocation1], 1136
    %573 = vst [vmem:[%s572] sm:%s3] %v571
    %s574 = smul.addr 2, 141
    %s575 = scalar_lea.vmem %s0, %s574
    %v576 = vld [vmem:[%s575] sm:%s3]
    %s577 = scalar_lea.vmem [#allocation1], 1128
    %578 = vst [vmem:[%s577] sm:%s3] %v576
    %s579 = smul.addr 2, 140
    %s580 = scalar_lea.vmem %s0, %s579
    %v581 = vld [vmem:[%s580] sm:%s3]
    %s582 = scalar_lea.vmem [#allocation1], 1120
    %583 = vst [vmem:[%s582] sm:%s3] %v581
    %s584 = smul.addr 2, 139
    %s585 = scalar_lea.vmem %s0, %s584
    %v586 = vld [vmem:[%s585] sm:%s3]
    %s587 = scalar_lea.vmem [#allocation1], 1112
    %588 = vst [vmem:[%s587] sm:%s3] %v586
    %s589 = smul.addr 2, 138
    %s590 = scalar_lea.vmem %s0, %s589
    %v591 = vld [vmem:[%s590] sm:%s3]
    %s592 = scalar_lea.vmem [#allocation1], 1104
    %593 = vst [vmem:[%s592] sm:%s3] %v591
    %s594 = smul.addr 2, 137
    %s595 = scalar_lea.vmem %s0, %s594
    %v596 = vld [vmem:[%s595] sm:%s3]
    %s597 = scalar_lea.vmem [#allocation1], 1096
    %598 = vst [vmem:[%s597] sm:%s3] %v596
    %s599 = smul.addr 2, 136
    %s600 = scalar_lea.vmem %s0, %s599
    %v601 = vld [vmem:[%s600] sm:%s3]
    %s602 = scalar_lea.vmem [#allocation1], 1088
    %603 = vst [vmem:[%s602] sm:%s3] %v601
    %s604 = smul.addr 2, 135
    %s605 = scalar_lea.vmem %s0, %s604
    %v606 = vld [vmem:[%s605] sm:%s3]
    %s607 = scalar_lea.vmem [#allocation1], 1080
    %608 = vst [vmem:[%s607] sm:%s3] %v606
    %s609 = smul.addr 2, 134
    %s610 = scalar_lea.vmem %s0, %s609
    %v611 = vld [vmem:[%s610] sm:%s3]
    %s612 = scalar_lea.vmem [#allocation1], 1072
    %613 = vst [vmem:[%s612] sm:%s3] %v611
    %s614 = smul.addr 2, 133
    %s615 = scalar_lea.vmem %s0, %s614
    %v616 = vld [vmem:[%s615] sm:%s3]
    %s617 = scalar_lea.vmem [#allocation1], 1064
    %618 = vst [vmem:[%s617] sm:%s3] %v616
    %s619 = smul.addr 2, 132
    %s620 = scalar_lea.vmem %s0, %s619
    %v621 = vld [vmem:[%s620] sm:%s3]
    %s622 = scalar_lea.vmem [#allocation1], 1056
    %623 = vst [vmem:[%s622] sm:%s3] %v621
    %s624 = smul.addr 2, 131
    %s625 = scalar_lea.vmem %s0, %s624
    %v626 = vld [vmem:[%s625] sm:%s3]
    %s627 = scalar_lea.vmem [#allocation1], 1048
    %628 = vst [vmem:[%s627] sm:%s3] %v626
    %s629 = smul.addr 2, 130
    %s630 = scalar_lea.vmem %s0, %s629
    %v631 = vld [vmem:[%s630] sm:%s3]
    %s632 = scalar_lea.vmem [#allocation1], 1040
    %633 = vst [vmem:[%s632] sm:%s3] %v631
    %s634 = smul.addr 2, 129
    %s635 = scalar_lea.vmem %s0, %s634
    %v636 = vld [vmem:[%s635] sm:%s3]
    %s637 = scalar_lea.vmem [#allocation1], 1032
    %638 = vst [vmem:[%s637] sm:%s3] %v636
    %s639 = smul.addr 2, 128
    %s640 = scalar_lea.vmem %s0, %s639
    %v641 = vld [vmem:[%s640] sm:%s3]
    %s642 = scalar_lea.vmem [#allocation1], 1024
    %643 = vst [vmem:[%s642] sm:%s3] %v641
    %s644 = smul.addr 2, 127
    %s645 = scalar_lea.vmem %s0, %s644
    %v646 = vld [vmem:[%s645] sm:%s3]
    %s647 = scalar_lea.vmem [#allocation1], 1016
    %648 = vst [vmem:[%s647] sm:%s3] %v646
    %s649 = smul.addr 2, 126
    %s650 = scalar_lea.vmem %s0, %s649
    %v651 = vld [vmem:[%s650] sm:%s3]
    %s652 = scalar_lea.vmem [#allocation1], 1008
    %653 = vst [vmem:[%s652] sm:%s3] %v651
    %s654 = smul.addr 2, 125
    %s655 = scalar_lea.vmem %s0, %s654
    %v656 = vld [vmem:[%s655] sm:%s3]
    %s657 = scalar_lea.vmem [#allocation1], 1000
    %658 = vst [vmem:[%s657] sm:%s3] %v656
    %s659 = smul.addr 2, 124
    %s660 = scalar_lea.vmem %s0, %s659
    %v661 = vld [vmem:[%s660] sm:%s3]
    %s662 = scalar_lea.vmem [#allocation1], 992
    %663 = vst [vmem:[%s662] sm:%s3] %v661
    %s664 = smul.addr 2, 123
    %s665 = scalar_lea.vmem %s0, %s664
    %v666 = vld [vmem:[%s665] sm:%s3]
    %s667 = scalar_lea.vmem [#allocation1], 984
    %668 = vst [vmem:[%s667] sm:%s3] %v666
    %s669 = smul.addr 2, 122
    %s670 = scalar_lea.vmem %s0, %s669
    %v671 = vld [vmem:[%s670] sm:%s3]
    %s672 = scalar_lea.vmem [#allocation1], 976
    %673 = vst [vmem:[%s672] sm:%s3] %v671
    %s674 = smul.addr 2, 121
    %s675 = scalar_lea.vmem %s0, %s674
    %v676 = vld [vmem:[%s675] sm:%s3]
    %s677 = scalar_lea.vmem [#allocation1], 968
    %678 = vst [vmem:[%s677] sm:%s3] %v676
    %s679 = smul.addr 2, 120
    %s680 = scalar_lea.vmem %s0, %s679
    %v681 = vld [vmem:[%s680] sm:%s3]
    %s682 = scalar_lea.vmem [#allocation1], 960
    %683 = vst [vmem:[%s682] sm:%s3] %v681
    %s684 = smul.addr 2, 119
    %s685 = scalar_lea.vmem %s0, %s684
    %v686 = vld [vmem:[%s685] sm:%s3]
    %s687 = scalar_lea.vmem [#allocation1], 952
    %688 = vst [vmem:[%s687] sm:%s3] %v686
    %s689 = smul.addr 2, 118
    %s690 = scalar_lea.vmem %s0, %s689
    %v691 = vld [vmem:[%s690] sm:%s3]
    %s692 = scalar_lea.vmem [#allocation1], 944
    %693 = vst [vmem:[%s692] sm:%s3] %v691
    %s694 = smul.addr 2, 117
    %s695 = scalar_lea.vmem %s0, %s694
    %v696 = vld [vmem:[%s695] sm:%s3]
    %s697 = scalar_lea.vmem [#allocation1], 936
    %698 = vst [vmem:[%s697] sm:%s3] %v696
    %s699 = smul.addr 2, 116
    %s700 = scalar_lea.vmem %s0, %s699
    %v701 = vld [vmem:[%s700] sm:%s3]
    %s702 = scalar_lea.vmem [#allocation1], 928
    %703 = vst [vmem:[%s702] sm:%s3] %v701
    %s704 = smul.addr 2, 115
    %s705 = scalar_lea.vmem %s0, %s704
    %v706 = vld [vmem:[%s705] sm:%s3]
    %s707 = scalar_lea.vmem [#allocation1], 920
    %708 = vst [vmem:[%s707] sm:%s3] %v706
    %s709 = smul.addr 2, 114
    %s710 = scalar_lea.vmem %s0, %s709
    %v711 = vld [vmem:[%s710] sm:%s3]
    %s712 = scalar_lea.vmem [#allocation1], 912
    %713 = vst [vmem:[%s712] sm:%s3] %v711
    %s714 = smul.addr 2, 113
    %s715 = scalar_lea.vmem %s0, %s714
    %v716 = vld [vmem:[%s715] sm:%s3]
    %s717 = scalar_lea.vmem [#allocation1], 904
    %718 = vst [vmem:[%s717] sm:%s3] %v716
    %s719 = smul.addr 2, 112
    %s720 = scalar_lea.vmem %s0, %s719
    %v721 = vld [vmem:[%s720] sm:%s3]
    %s722 = scalar_lea.vmem [#allocation1], 896
    %723 = vst [vmem:[%s722] sm:%s3] %v721
    %s724 = smul.addr 2, 111
    %s725 = scalar_lea.vmem %s0, %s724
    %v726 = vld [vmem:[%s725] sm:%s3]
    %s727 = scalar_lea.vmem [#allocation1], 888
    %728 = vst [vmem:[%s727] sm:%s3] %v726
    %s729 = smul.addr 2, 110
    %s730 = scalar_lea.vmem %s0, %s729
    %v731 = vld [vmem:[%s730] sm:%s3]
    %s732 = scalar_lea.vmem [#allocation1], 880
    %733 = vst [vmem:[%s732] sm:%s3] %v731
    %s734 = smul.addr 2, 109
    %s735 = scalar_lea.vmem %s0, %s734
    %v736 = vld [vmem:[%s735] sm:%s3]
    %s737 = scalar_lea.vmem [#allocation1], 872
    %738 = vst [vmem:[%s737] sm:%s3] %v736
    %s739 = smul.addr 2, 108
    %s740 = scalar_lea.vmem %s0, %s739
    %v741 = vld [vmem:[%s740] sm:%s3]
    %s742 = scalar_lea.vmem [#allocation1], 864
    %743 = vst [vmem:[%s742] sm:%s3] %v741
    %s744 = smul.addr 2, 107
    %s745 = scalar_lea.vmem %s0, %s744
    %v746 = vld [vmem:[%s745] sm:%s3]
    %s747 = scalar_lea.vmem [#allocation1], 856
    %748 = vst [vmem:[%s747] sm:%s3] %v746
    %s749 = smul.addr 2, 106
    %s750 = scalar_lea.vmem %s0, %s749
    %v751 = vld [vmem:[%s750] sm:%s3]
    %s752 = scalar_lea.vmem [#allocation1], 848
    %753 = vst [vmem:[%s752] sm:%s3] %v751
    %s754 = smul.addr 2, 105
    %s755 = scalar_lea.vmem %s0, %s754
    %v756 = vld [vmem:[%s755] sm:%s3]
    %s757 = scalar_lea.vmem [#allocation1], 840
    %758 = vst [vmem:[%s757] sm:%s3] %v756
    %s759 = smul.addr 2, 104
    %s760 = scalar_lea.vmem %s0, %s759
    %v761 = vld [vmem:[%s760] sm:%s3]
    %s762 = scalar_lea.vmem [#allocation1], 832
    %763 = vst [vmem:[%s762] sm:%s3] %v761
    %s764 = smul.addr 2, 103
    %s765 = scalar_lea.vmem %s0, %s764
    %v766 = vld [vmem:[%s765] sm:%s3]
    %s767 = scalar_lea.vmem [#allocation1], 824
    %768 = vst [vmem:[%s767] sm:%s3] %v766
    %s769 = smul.addr 2, 102
    %s770 = scalar_lea.vmem %s0, %s769
    %v771 = vld [vmem:[%s770] sm:%s3]
    %s772 = scalar_lea.vmem [#allocation1], 816
    %773 = vst [vmem:[%s772] sm:%s3] %v771
    %s774 = smul.addr 2, 101
    %s775 = scalar_lea.vmem %s0, %s774
    %v776 = vld [vmem:[%s775] sm:%s3]
    %s777 = scalar_lea.vmem [#allocation1], 808
    %778 = vst [vmem:[%s777] sm:%s3] %v776
    %s779 = smul.addr 2, 100
    %s780 = scalar_lea.vmem %s0, %s779
    %v781 = vld [vmem:[%s780] sm:%s3]
    %s782 = scalar_lea.vmem [#allocation1], 800
    %783 = vst [vmem:[%s782] sm:%s3] %v781
    %s784 = smul.addr 2, 99
    %s785 = scalar_lea.vmem %s0, %s784
    %v786 = vld [vmem:[%s785] sm:%s3]
    %s787 = scalar_lea.vmem [#allocation1], 792
    %788 = vst [vmem:[%s787] sm:%s3] %v786
    %s789 = smul.addr 2, 98
    %s790 = scalar_lea.vmem %s0, %s789
    %v791 = vld [vmem:[%s790] sm:%s3]
    %s792 = scalar_lea.vmem [#allocation1], 784
    %793 = vst [vmem:[%s792] sm:%s3] %v791
    %s794 = smul.addr 2, 97
    %s795 = scalar_lea.vmem %s0, %s794
    %v796 = vld [vmem:[%s795] sm:%s3]
    %s797 = scalar_lea.vmem [#allocation1], 776
    %798 = vst [vmem:[%s797] sm:%s3] %v796
    %s799 = smul.addr 2, 96
    %s800 = scalar_lea.vmem %s0, %s799
    %v801 = vld [vmem:[%s800] sm:%s3]
    %s802 = scalar_lea.vmem [#allocation1], 768
    %803 = vst [vmem:[%s802] sm:%s3] %v801
    %s804 = smul.addr 2, 95
    %s805 = scalar_lea.vmem %s0, %s804
    %v806 = vld [vmem:[%s805] sm:%s3]
    %s807 = scalar_lea.vmem [#allocation1], 760
    %808 = vst [vmem:[%s807] sm:%s3] %v806
    %s809 = smul.addr 2, 94
    %s810 = scalar_lea.vmem %s0, %s809
    %v811 = vld [vmem:[%s810] sm:%s3]
    %s812 = scalar_lea.vmem [#allocation1], 752
    %813 = vst [vmem:[%s812] sm:%s3] %v811
    %s814 = smul.addr 2, 93
    %s815 = scalar_lea.vmem %s0, %s814
    %v816 = vld [vmem:[%s815] sm:%s3]
    %s817 = scalar_lea.vmem [#allocation1], 744
    %818 = vst [vmem:[%s817] sm:%s3] %v816
    %s819 = smul.addr 2, 92
    %s820 = scalar_lea.vmem %s0, %s819
    %v821 = vld [vmem:[%s820] sm:%s3]
    %s822 = scalar_lea.vmem [#allocation1], 736
    %823 = vst [vmem:[%s822] sm:%s3] %v821
    %s824 = smul.addr 2, 91
    %s825 = scalar_lea.vmem %s0, %s824
    %v826 = vld [vmem:[%s825] sm:%s3]
    %s827 = scalar_lea.vmem [#allocation1], 728
    %828 = vst [vmem:[%s827] sm:%s3] %v826
    %s829 = smul.addr 2, 90
    %s830 = scalar_lea.vmem %s0, %s829
    %v831 = vld [vmem:[%s830] sm:%s3]
    %s832 = scalar_lea.vmem [#allocation1], 720
    %833 = vst [vmem:[%s832] sm:%s3] %v831
    %s834 = smul.addr 2, 89
    %s835 = scalar_lea.vmem %s0, %s834
    %v836 = vld [vmem:[%s835] sm:%s3]
    %s837 = scalar_lea.vmem [#allocation1], 712
    %838 = vst [vmem:[%s837] sm:%s3] %v836
    %s839 = smul.addr 2, 88
    %s840 = scalar_lea.vmem %s0, %s839
    %v841 = vld [vmem:[%s840] sm:%s3]
    %s842 = scalar_lea.vmem [#allocation1], 704
    %843 = vst [vmem:[%s842] sm:%s3] %v841
    %s844 = smul.addr 2, 87
    %s845 = scalar_lea.vmem %s0, %s844
    %v846 = vld [vmem:[%s845] sm:%s3]
    %s847 = scalar_lea.vmem [#allocation1], 696
    %848 = vst [vmem:[%s847] sm:%s3] %v846
    %s849 = smul.addr 2, 86
    %s850 = scalar_lea.vmem %s0, %s849
    %v851 = vld [vmem:[%s850] sm:%s3]
    %s852 = scalar_lea.vmem [#allocation1], 688
    %853 = vst [vmem:[%s852] sm:%s3] %v851
    %s854 = smul.addr 2, 85
    %s855 = scalar_lea.vmem %s0, %s854
    %v856 = vld [vmem:[%s855] sm:%s3]
    %s857 = scalar_lea.vmem [#allocation1], 680
    %858 = vst [vmem:[%s857] sm:%s3] %v856
    %s859 = smul.addr 2, 84
    %s860 = scalar_lea.vmem %s0, %s859
    %v861 = vld [vmem:[%s860] sm:%s3]
    %s862 = scalar_lea.vmem [#allocation1], 672
    %863 = vst [vmem:[%s862] sm:%s3] %v861
    %s864 = smul.addr 2, 83
    %s865 = scalar_lea.vmem %s0, %s864
    %v866 = vld [vmem:[%s865] sm:%s3]
    %s867 = scalar_lea.vmem [#allocation1], 664
    %868 = vst [vmem:[%s867] sm:%s3] %v866
    %s869 = smul.addr 2, 82
    %s870 = scalar_lea.vmem %s0, %s869
    %v871 = vld [vmem:[%s870] sm:%s3]
    %s872 = scalar_lea.vmem [#allocation1], 656
    %873 = vst [vmem:[%s872] sm:%s3] %v871
    %s874 = smul.addr 2, 81
    %s875 = scalar_lea.vmem %s0, %s874
    %v876 = vld [vmem:[%s875] sm:%s3]
    %s877 = scalar_lea.vmem [#allocation1], 648
    %878 = vst [vmem:[%s877] sm:%s3] %v876
    %s879 = smul.addr 2, 80
    %s880 = scalar_lea.vmem %s0, %s879
    %v881 = vld [vmem:[%s880] sm:%s3]
    %s882 = scalar_lea.vmem [#allocation1], 640
    %883 = vst [vmem:[%s882] sm:%s3] %v881
    %s884 = smul.addr 2, 79
    %s885 = scalar_lea.vmem %s0, %s884
    %v886 = vld [vmem:[%s885] sm:%s3]
    %s887 = scalar_lea.vmem [#allocation1], 632
    %888 = vst [vmem:[%s887] sm:%s3] %v886
    %s889 = smul.addr 2, 78
    %s890 = scalar_lea.vmem %s0, %s889
    %v891 = vld [vmem:[%s890] sm:%s3]
    %s892 = scalar_lea.vmem [#allocation1], 624
    %893 = vst [vmem:[%s892] sm:%s3] %v891
    %s894 = smul.addr 2, 77
    %s895 = scalar_lea.vmem %s0, %s894
    %v896 = vld [vmem:[%s895] sm:%s3]
    %s897 = scalar_lea.vmem [#allocation1], 616
    %898 = vst [vmem:[%s897] sm:%s3] %v896
    %s899 = smul.addr 2, 76
    %s900 = scalar_lea.vmem %s0, %s899
    %v901 = vld [vmem:[%s900] sm:%s3]
    %s902 = scalar_lea.vmem [#allocation1], 608
    %903 = vst [vmem:[%s902] sm:%s3] %v901
    %s904 = smul.addr 2, 75
    %s905 = scalar_lea.vmem %s0, %s904
    %v906 = vld [vmem:[%s905] sm:%s3]
    %s907 = scalar_lea.vmem [#allocation1], 600
    %908 = vst [vmem:[%s907] sm:%s3] %v906
    %s909 = smul.addr 2, 74
    %s910 = scalar_lea.vmem %s0, %s909
    %v911 = vld [vmem:[%s910] sm:%s3]
    %s912 = scalar_lea.vmem [#allocation1], 592
    %913 = vst [vmem:[%s912] sm:%s3] %v911
    %s914 = smul.addr 2, 73
    %s915 = scalar_lea.vmem %s0, %s914
    %v916 = vld [vmem:[%s915] sm:%s3]
    %s917 = scalar_lea.vmem [#allocation1], 584
    %918 = vst [vmem:[%s917] sm:%s3] %v916
    %s919 = smul.addr 2, 72
    %s920 = scalar_lea.vmem %s0, %s919
    %v921 = vld [vmem:[%s920] sm:%s3]
    %s922 = scalar_lea.vmem [#allocation1], 576
    %923 = vst [vmem:[%s922] sm:%s3] %v921
    %s924 = smul.addr 2, 71
    %s925 = scalar_lea.vmem %s0, %s924
    %v926 = vld [vmem:[%s925] sm:%s3]
    %s927 = scalar_lea.vmem [#allocation1], 568
    %928 = vst [vmem:[%s927] sm:%s3] %v926
    %s929 = smul.addr 2, 70
    %s930 = scalar_lea.vmem %s0, %s929
    %v931 = vld [vmem:[%s930] sm:%s3]
    %s932 = scalar_lea.vmem [#allocation1], 560
    %933 = vst [vmem:[%s932] sm:%s3] %v931
    %s934 = smul.addr 2, 69
    %s935 = scalar_lea.vmem %s0, %s934
    %v936 = vld [vmem:[%s935] sm:%s3]
    %s937 = scalar_lea.vmem [#allocation1], 552
    %938 = vst [vmem:[%s937] sm:%s3] %v936
    %s939 = smul.addr 2, 68
    %s940 = scalar_lea.vmem %s0, %s939
    %v941 = vld [vmem:[%s940] sm:%s3]
    %s942 = scalar_lea.vmem [#allocation1], 544
    %943 = vst [vmem:[%s942] sm:%s3] %v941
    %s944 = smul.addr 2, 67
    %s945 = scalar_lea.vmem %s0, %s944
    %v946 = vld [vmem:[%s945] sm:%s3]
    %s947 = scalar_lea.vmem [#allocation1], 536
    %948 = vst [vmem:[%s947] sm:%s3] %v946
    %s949 = smul.addr 2, 66
    %s950 = scalar_lea.vmem %s0, %s949
    %v951 = vld [vmem:[%s950] sm:%s3]
    %s952 = scalar_lea.vmem [#allocation1], 528
    %953 = vst [vmem:[%s952] sm:%s3] %v951
    %s954 = smul.addr 2, 65
    %s955 = scalar_lea.vmem %s0, %s954
    %v956 = vld [vmem:[%s955] sm:%s3]
    %s957 = scalar_lea.vmem [#allocation1], 520
    %958 = vst [vmem:[%s957] sm:%s3] %v956
    %s959 = smul.addr 2, 64
    %s960 = scalar_lea.vmem %s0, %s959
    %v961 = vld [vmem:[%s960] sm:%s3]
    %s962 = scalar_lea.vmem [#allocation1], 512
    %963 = vst [vmem:[%s962] sm:%s3] %v961
    %s964 = smul.addr 2, 63
    %s965 = scalar_lea.vmem %s0, %s964
    %v966 = vld [vmem:[%s965] sm:%s3]
    %s967 = scalar_lea.vmem [#allocation1], 504
    %968 = vst [vmem:[%s967] sm:%s3] %v966
    %s969 = smul.addr 2, 62
    %s970 = scalar_lea.vmem %s0, %s969
    %v971 = vld [vmem:[%s970] sm:%s3]
    %s972 = scalar_lea.vmem [#allocation1], 496
    %973 = vst [vmem:[%s972] sm:%s3] %v971
    %s974 = smul.addr 2, 61
    %s975 = scalar_lea.vmem %s0, %s974
    %v976 = vld [vmem:[%s975] sm:%s3]
    %s977 = scalar_lea.vmem [#allocation1], 488
    %978 = vst [vmem:[%s977] sm:%s3] %v976
    %s979 = smul.addr 2, 60
    %s980 = scalar_lea.vmem %s0, %s979
    %v981 = vld [vmem:[%s980] sm:%s3]
    %s982 = scalar_lea.vmem [#allocation1], 480
    %983 = vst [vmem:[%s982] sm:%s3] %v981
    %s984 = smul.addr 2, 59
    %s985 = scalar_lea.vmem %s0, %s984
    %v986 = vld [vmem:[%s985] sm:%s3]
    %s987 = scalar_lea.vmem [#allocation1], 472
    %988 = vst [vmem:[%s987] sm:%s3] %v986
    %s989 = smul.addr 2, 58
    %s990 = scalar_lea.vmem %s0, %s989
    %v991 = vld [vmem:[%s990] sm:%s3]
    %s992 = scalar_lea.vmem [#allocation1], 464
    %993 = vst [vmem:[%s992] sm:%s3] %v991
    %s994 = smul.addr 2, 57
    %s995 = scalar_lea.vmem %s0, %s994
    %v996 = vld [vmem:[%s995] sm:%s3]
    %s997 = scalar_lea.vmem [#allocation1], 456
    %998 = vst [vmem:[%s997] sm:%s3] %v996
    %s999 = smul.addr 2, 56
    %s1000 = scalar_lea.vmem %s0, %s999
    %v1001 = vld [vmem:[%s1000] sm:%s3]
    %s1002 = scalar_lea.vmem [#allocation1], 448
    %1003 = vst [vmem:[%s1002] sm:%s3] %v1001
    %s1004 = smul.addr 2, 55
    %s1005 = scalar_lea.vmem %s0, %s1004
    %v1006 = vld [vmem:[%s1005] sm:%s3]
    %s1007 = scalar_lea.vmem [#allocation1], 440
    %1008 = vst [vmem:[%s1007] sm:%s3] %v1006
    %s1009 = smul.addr 2, 54
    %s1010 = scalar_lea.vmem %s0, %s1009
    %v1011 = vld [vmem:[%s1010] sm:%s3]
    %s1012 = scalar_lea.vmem [#allocation1], 432
    %1013 = vst [vmem:[%s1012] sm:%s3] %v1011
    %s1014 = smul.addr 2, 53
    %s1015 = scalar_lea.vmem %s0, %s1014
    %v1016 = vld [vmem:[%s1015] sm:%s3]
    %s1017 = scalar_lea.vmem [#allocation1], 424
    %1018 = vst [vmem:[%s1017] sm:%s3] %v1016
    %s1019 = smul.addr 2, 52
    %s1020 = scalar_lea.vmem %s0, %s1019
    %v1021 = vld [vmem:[%s1020] sm:%s3]
    %s1022 = scalar_lea.vmem [#allocation1], 416
    %1023 = vst [vmem:[%s1022] sm:%s3] %v1021
    %s1024 = smul.addr 2, 51
    %s1025 = scalar_lea.vmem %s0, %s1024
    %v1026 = vld [vmem:[%s1025] sm:%s3]
    %s1027 = scalar_lea.vmem [#allocation1], 408
    %1028 = vst [vmem:[%s1027] sm:%s3] %v1026
    %s1029 = smul.addr 2, 50
    %s1030 = scalar_lea.vmem %s0, %s1029
    %v1031 = vld [vmem:[%s1030] sm:%s3]
    %s1032 = scalar_lea.vmem [#allocation1], 400
    %1033 = vst [vmem:[%s1032] sm:%s3] %v1031
    %s1034 = smul.addr 2, 49
    %s1035 = scalar_lea.vmem %s0, %s1034
    %v1036 = vld [vmem:[%s1035] sm:%s3]
    %s1037 = scalar_lea.vmem [#allocation1], 392
    %1038 = vst [vmem:[%s1037] sm:%s3] %v1036
    %s1039 = smul.addr 2, 48
    %s1040 = scalar_lea.vmem %s0, %s1039
    %v1041 = vld [vmem:[%s1040] sm:%s3]
    %s1042 = scalar_lea.vmem [#allocation1], 384
    %1043 = vst [vmem:[%s1042] sm:%s3] %v1041
    %s1044 = smul.addr 2, 47
    %s1045 = scalar_lea.vmem %s0, %s1044
    %v1046 = vld [vmem:[%s1045] sm:%s3]
    %s1047 = scalar_lea.vmem [#allocation1], 376
    %1048 = vst [vmem:[%s1047] sm:%s3] %v1046
    %s1049 = smul.addr 2, 46
    %s1050 = scalar_lea.vmem %s0, %s1049
    %v1051 = vld [vmem:[%s1050] sm:%s3]
    %s1052 = scalar_lea.vmem [#allocation1], 368
    %1053 = vst [vmem:[%s1052] sm:%s3] %v1051
    %s1054 = smul.addr 2, 45
    %s1055 = scalar_lea.vmem %s0, %s1054
    %v1056 = vld [vmem:[%s1055] sm:%s3]
    %s1057 = scalar_lea.vmem [#allocation1], 360
    %1058 = vst [vmem:[%s1057] sm:%s3] %v1056
    %s1059 = smul.addr 2, 44
    %s1060 = scalar_lea.vmem %s0, %s1059
    %v1061 = vld [vmem:[%s1060] sm:%s3]
    %s1062 = scalar_lea.vmem [#allocation1], 352
    %1063 = vst [vmem:[%s1062] sm:%s3] %v1061
    %s1064 = smul.addr 2, 43
    %s1065 = scalar_lea.vmem %s0, %s1064
    %v1066 = vld [vmem:[%s1065] sm:%s3]
    %s1067 = scalar_lea.vmem [#allocation1], 344
    %1068 = vst [vmem:[%s1067] sm:%s3] %v1066
    %s1069 = smul.addr 2, 42
    %s1070 = scalar_lea.vmem %s0, %s1069
    %v1071 = vld [vmem:[%s1070] sm:%s3]
    %s1072 = scalar_lea.vmem [#allocation1], 336
    %1073 = vst [vmem:[%s1072] sm:%s3] %v1071
    %s1074 = smul.addr 2, 41
    %s1075 = scalar_lea.vmem %s0, %s1074
    %v1076 = vld [vmem:[%s1075] sm:%s3]
    %s1077 = scalar_lea.vmem [#allocation1], 328
    %1078 = vst [vmem:[%s1077] sm:%s3] %v1076
    %s1079 = smul.addr 2, 40
    %s1080 = scalar_lea.vmem %s0, %s1079
    %v1081 = vld [vmem:[%s1080] sm:%s3]
    %s1082 = scalar_lea.vmem [#allocation1], 320
    %1083 = vst [vmem:[%s1082] sm:%s3] %v1081
    %s1084 = smul.addr 2, 39
    %s1085 = scalar_lea.vmem %s0, %s1084
    %v1086 = vld [vmem:[%s1085] sm:%s3]
    %s1087 = scalar_lea.vmem [#allocation1], 312
    %1088 = vst [vmem:[%s1087] sm:%s3] %v1086
    %s1089 = smul.addr 2, 38
    %s1090 = scalar_lea.vmem %s0, %s1089
    %v1091 = vld [vmem:[%s1090] sm:%s3]
    %s1092 = scalar_lea.vmem [#allocation1], 304
    %1093 = vst [vmem:[%s1092] sm:%s3] %v1091
    %s1094 = smul.addr 2, 37
    %s1095 = scalar_lea.vmem %s0, %s1094
    %v1096 = vld [vmem:[%s1095] sm:%s3]
    %s1097 = scalar_lea.vmem [#allocation1], 296
    %1098 = vst [vmem:[%s1097] sm:%s3] %v1096
    %s1099 = smul.addr 2, 36
    %s1100 = scalar_lea.vmem %s0, %s1099
    %v1101 = vld [vmem:[%s1100] sm:%s3]
    %s1102 = scalar_lea.vmem [#allocation1], 288
    %1103 = vst [vmem:[%s1102] sm:%s3] %v1101
    %s1104 = smul.addr 2, 35
    %s1105 = scalar_lea.vmem %s0, %s1104
    %v1106 = vld [vmem:[%s1105] sm:%s3]
    %s1107 = scalar_lea.vmem [#allocation1], 280
    %1108 = vst [vmem:[%s1107] sm:%s3] %v1106
    %s1109 = smul.addr 2, 34
    %s1110 = scalar_lea.vmem %s0, %s1109
    %v1111 = vld [vmem:[%s1110] sm:%s3]
    %s1112 = scalar_lea.vmem [#allocation1], 272
    %1113 = vst [vmem:[%s1112] sm:%s3] %v1111
    %s1114 = smul.addr 2, 33
    %s1115 = scalar_lea.vmem %s0, %s1114
    %v1116 = vld [vmem:[%s1115] sm:%s3]
    %s1117 = scalar_lea.vmem [#allocation1], 264
    %1118 = vst [vmem:[%s1117] sm:%s3] %v1116
    %s1119 = smul.addr 2, 32
    %s1120 = scalar_lea.vmem %s0, %s1119
    %v1121 = vld [vmem:[%s1120] sm:%s3]
    %s1122 = scalar_lea.vmem [#allocation1], 256
    %1123 = vst [vmem:[%s1122] sm:%s3] %v1121
    %s1124 = smul.addr 2, 31
    %s1125 = scalar_lea.vmem %s0, %s1124
    %v1126 = vld [vmem:[%s1125] sm:%s3]
    %s1127 = scalar_lea.vmem [#allocation1], 248
    %1128 = vst [vmem:[%s1127] sm:%s3] %v1126
    %s1129 = smul.addr 2, 30
    %s1130 = scalar_lea.vmem %s0, %s1129
    %v1131 = vld [vmem:[%s1130] sm:%s3]
    %s1132 = scalar_lea.vmem [#allocation1], 240
    %1133 = vst [vmem:[%s1132] sm:%s3] %v1131
    %s1134 = smul.addr 2, 29
    %s1135 = scalar_lea.vmem %s0, %s1134
    %v1136 = vld [vmem:[%s1135] sm:%s3]
    %s1137 = scalar_lea.vmem [#allocation1], 232
    %1138 = vst [vmem:[%s1137] sm:%s3] %v1136
    %s1139 = smul.addr 2, 28
    %s1140 = scalar_lea.vmem %s0, %s1139
    %v1141 = vld [vmem:[%s1140] sm:%s3]
    %s1142 = scalar_lea.vmem [#allocation1], 224
    %1143 = vst [vmem:[%s1142] sm:%s3] %v1141
    %s1144 = smul.addr 2, 27
    %s1145 = scalar_lea.vmem %s0, %s1144
    %v1146 = vld [vmem:[%s1145] sm:%s3]
    %s1147 = scalar_lea.vmem [#allocation1], 216
    %1148 = vst [vmem:[%s1147] sm:%s3] %v1146
    %s1149 = smul.addr 2, 26
    %s1150 = scalar_lea.vmem %s0, %s1149
    %v1151 = vld [vmem:[%s1150] sm:%s3]
    %s1152 = scalar_lea.vmem [#allocation1], 208
    %1153 = vst [vmem:[%s1152] sm:%s3] %v1151
    %s1154 = smul.addr 2, 25
    %s1155 = scalar_lea.vmem %s0, %s1154
    %v1156 = vld [vmem:[%s1155] sm:%s3]
    %s1157 = scalar_lea.vmem [#allocation1], 200
    %1158 = vst [vmem:[%s1157] sm:%s3] %v1156
    %s1159 = smul.addr 2, 24
    %s1160 = scalar_lea.vmem %s0, %s1159
    %v1161 = vld [vmem:[%s1160] sm:%s3]
    %s1162 = scalar_lea.vmem [#allocation1], 192
    %1163 = vst [vmem:[%s1162] sm:%s3] %v1161
    %s1164 = smul.addr 2, 23
    %s1165 = scalar_lea.vmem %s0, %s1164
    %v1166 = vld [vmem:[%s1165] sm:%s3]
    %s1167 = scalar_lea.vmem [#allocation1], 184
    %1168 = vst [vmem:[%s1167] sm:%s3] %v1166
    %s1169 = smul.addr 2, 22
    %s1170 = scalar_lea.vmem %s0, %s1169
    %v1171 = vld [vmem:[%s1170] sm:%s3]
    %s1172 = scalar_lea.vmem [#allocation1], 176
    %1173 = vst [vmem:[%s1172] sm:%s3] %v1171
    %s1174 = smul.addr 2, 21
    %s1175 = scalar_lea.vmem %s0, %s1174
    %v1176 = vld [vmem:[%s1175] sm:%s3]
    %s1177 = scalar_lea.vmem [#allocation1], 168
    %1178 = vst [vmem:[%s1177] sm:%s3] %v1176
    %s1179 = smul.addr 2, 20
    %s1180 = scalar_lea.vmem %s0, %s1179
    %v1181 = vld [vmem:[%s1180] sm:%s3]
    %s1182 = scalar_lea.vmem [#allocation1], 160
    %1183 = vst [vmem:[%s1182] sm:%s3] %v1181
    %s1184 = smul.addr 2, 19
    %s1185 = scalar_lea.vmem %s0, %s1184
    %v1186 = vld [vmem:[%s1185] sm:%s3]
    %s1187 = scalar_lea.vmem [#allocation1], 152
    %1188 = vst [vmem:[%s1187] sm:%s3] %v1186
    %s1189 = smul.addr 2, 18
    %s1190 = scalar_lea.vmem %s0, %s1189
    %v1191 = vld [vmem:[%s1190] sm:%s3]
    %s1192 = scalar_lea.vmem [#allocation1], 144
    %1193 = vst [vmem:[%s1192] sm:%s3] %v1191
    %s1194 = smul.addr 2, 17
    %s1195 = scalar_lea.vmem %s0, %s1194
    %v1196 = vld [vmem:[%s1195] sm:%s3]
    %s1197 = scalar_lea.vmem [#allocation1], 136
    %1198 = vst [vmem:[%s1197] sm:%s3] %v1196
    %s1199 = smul.addr 2, 16
    %s1200 = scalar_lea.vmem %s0, %s1199
    %v1201 = vld [vmem:[%s1200] sm:%s3]
    %s1202 = scalar_lea.vmem [#allocation1], 128
    %1203 = vst [vmem:[%s1202] sm:%s3] %v1201
    %s1204 = smul.addr 2, 15
    %s1205 = scalar_lea.vmem %s0, %s1204
    %v1206 = vld [vmem:[%s1205] sm:%s3]
    %s1207 = scalar_lea.vmem [#allocation1], 120
    %1208 = vst [vmem:[%s1207] sm:%s3] %v1206
    %s1209 = smul.addr 2, 14
    %s1210 = scalar_lea.vmem %s0, %s1209
    %v1211 = vld [vmem:[%s1210] sm:%s3]
    %s1212 = scalar_lea.vmem [#allocation1], 112
    %1213 = vst [vmem:[%s1212] sm:%s3] %v1211
    %s1214 = smul.addr 2, 13
    %s1215 = scalar_lea.vmem %s0, %s1214
    %v1216 = vld [vmem:[%s1215] sm:%s3]
    %s1217 = scalar_lea.vmem [#allocation1], 104
    %1218 = vst [vmem:[%s1217] sm:%s3] %v1216
    %s1219 = smul.addr 2, 12
    %s1220 = scalar_lea.vmem %s0, %s1219
    %v1221 = vld [vmem:[%s1220] sm:%s3]
    %s1222 = scalar_lea.vmem [#allocation1], 96
    %1223 = vst [vmem:[%s1222] sm:%s3] %v1221
    %s1224 = smul.addr 2, 11
    %s1225 = scalar_lea.vmem %s0, %s1224
    %v1226 = vld [vmem:[%s1225] sm:%s3]
    %s1227 = scalar_lea.vmem [#allocation1], 88
    %1228 = vst [vmem:[%s1227] sm:%s3] %v1226
    %s1229 = smul.addr 2, 10
    %s1230 = scalar_lea.vmem %s0, %s1229
    %v1231 = vld [vmem:[%s1230] sm:%s3]
    %s1232 = scalar_lea.vmem [#allocation1], 80
    %1233 = vst [vmem:[%s1232] sm:%s3] %v1231
    %s1234 = smul.addr 2, 9
    %s1235 = scalar_lea.vmem %s0, %s1234
    %v1236 = vld [vmem:[%s1235] sm:%s3]
    %s1237 = scalar_lea.vmem [#allocation1], 72
    %1238 = vst [vmem:[%s1237] sm:%s3] %v1236
    %s1239 = smul.addr 2, 8
    %s1240 = scalar_lea.vmem %s0, %s1239
    %v1241 = vld [vmem:[%s1240] sm:%s3]
    %s1242 = scalar_lea.vmem [#allocation1], 64
    %1243 = vst [vmem:[%s1242] sm:%s3] %v1241
    %s1244 = smul.addr 2, 7
    %s1245 = scalar_lea.vmem %s0, %s1244
    %v1246 = vld [vmem:[%s1245] sm:%s3]
    %s1247 = scalar_lea.vmem [#allocation1], 56
    %1248 = vst [vmem:[%s1247] sm:%s3] %v1246
    %s1249 = smul.addr 2, 6
    %s1250 = scalar_lea.vmem %s0, %s1249
    %v1251 = vld [vmem:[%s1250] sm:%s3]
    %s1252 = scalar_lea.vmem [#allocation1], 48
    %1253 = vst [vmem:[%s1252] sm:%s3] %v1251
    %s1254 = smul.addr 2, 5
    %s1255 = scalar_lea.vmem %s0, %s1254
    %v1256 = vld [vmem:[%s1255] sm:%s3]
    %s1257 = scalar_lea.vmem [#allocation1], 40
    %1258 = vst [vmem:[%s1257] sm:%s3] %v1256
    %s1259 = smul.addr 2, 4
    %s1260 = scalar_lea.vmem %s0, %s1259
    %v1261 = vld [vmem:[%s1260] sm:%s3]
    %s1262 = scalar_lea.vmem [#allocation1], 32
    %1263 = vst [vmem:[%s1262] sm:%s3] %v1261
    %s1264 = smul.addr 2, 3
    %s1265 = scalar_lea.vmem %s0, %s1264
    %v1266 = vld [vmem:[%s1265] sm:%s3]
    %s1267 = scalar_lea.vmem [#allocation1], 24
    %1268 = vst [vmem:[%s1267] sm:%s3] %v1266
    %s1269 = smul.addr 2, 2
    %s1270 = scalar_lea.vmem %s0, %s1269
    %v1271 = vld [vmem:[%s1270] sm:%s3]
    %s1272 = scalar_lea.vmem [#allocation1], 16
    %1273 = vst [vmem:[%s1272] sm:%s3] %v1271
    %s1274 = scalar_lea.vmem %s0, 2
    %v1275 = vld [vmem:[%s1274] sm:%s3]
    %s1276 = scalar_lea.vmem [#allocation1], 8
    %1277 = vst [vmem:[%s1276] sm:%s3] %v1275
    %v1278 = vld [vmem:[%s0] sm:%s3]
    %1279 = vst [vmem:[#allocation1] sm:%s3] %v1278
    %v1280 = vld [vmem:[#allocation1] sm:$0x1]
    %s1281 = scalar_lea.vmem [#allocation1], 127
    %v1282 = vld [vmem:[%s1281] sm:$0x2]
    %vm1283 = vcmask 1041409
    %v1284 = vsel %vm1283, %v1282, %v1280
    %s1285 = scalar_lea.vmem [#allocation1], 254
    %v1286 = vld [vmem:[%s1285] sm:$0x4]
    %vm1287 = vcmask 1042434
    %v1288 = vsel %vm1287, %v1286, %v1284
    %s1289 = scalar_lea.vmem [#allocation1], 381
    %v1290 = vld [vmem:[%s1289] sm:$0x8]
    %vm1291 = vcmask 1043459
    %v1292 = vsel %vm1291, %v1290, %v1288
    %s1293 = scalar_lea.vmem [#allocation1], 508
    %v1294 = vld [vmem:[%s1293] sm:$0x10]
    %vm1295 = vcmask 1044484
    %v1296 = vsel %vm1295, %v1294, %v1292
    %s1297 = scalar_lea.vmem [#allocation1], 635
    %v1298 = vld [vmem:[%s1297] sm:$0x20]
    %vm1299 = vcmask 1045509
    %v1300 = vsel %vm1299, %v1298, %v1296
    %s1301 = scalar_lea.vmem [#allocation1], 762
    %v1302 = vld [vmem:[%s1301] sm:$0x40]
    %vm1303 = vcmask 1046534
    %v1304 = vsel %vm1303, %v1302, %v1300
    %s1305 = scalar_lea.vmem [#allocation1], 889
    %v1306 = vld [vmem:[%s1305] sm:$0x80]
    %vm1307 = vcmask 1047559
    %v1308 = vsel %vm1307, %v1306, %v1304
    %vm1309 = vcmask 31744
    %1310 = vst.msk [vmem:[#allocation0] ss:$8 sm:$0xf] %vm1309, %v1308
    %s1311 = scalar_lea.vmem [#allocation0], 4294967265
    %1312 = vst.msk [vmem:[%s1311] ss:$8 sm:$0xf0] %vm1309, %v1308
    %s1313 = scalar_lea.vmem [#allocation1], 1024
    %v1314 = vld [vmem:[%s1313] sm:$0x1]
    %s1315 = scalar_lea.vmem [#allocation1], 1151
    %v1316 = vld [vmem:[%s1315] sm:$0x2]
    %vm1317 = vcmask 1041409
    %v1318 = vsel %vm1317, %v1316, %v1314
    %s1319 = scalar_lea.vmem [#allocation1], 1278
    %v1320 = vld [vmem:[%s1319] sm:$0x4]
    %vm1321 = vcmask 1042434
    %v1322 = vsel %vm1321, %v1320, %v1318
    %s1323 = scalar_lea.vmem [#allocation1], 1405
    %v1324 = vld [vmem:[%s1323] sm:$0x8]
    %vm1325 = vcmask 1043459
    %v1326 = vsel %vm1325, %v1324, %v1322
    %s1327 = scalar_lea.vmem [#allocation1], 1532
    %v1328 = vld [vmem:[%s1327] sm:$0x10]
    %vm1329 = vcmask 1044484
    %v1330 = vsel %vm1329, %v1328, %v1326
    %s1331 = scalar_lea.vmem [#allocation1], 1659
    %v1332 = vld [vmem:[%s1331] sm:$0x20]
    %vm1333 = vcmask 1045509
    %v1334 = vsel %vm1333, %v1332, %v1330
    %s1335 = scalar_lea.vmem [#allocation1], 1786
    %v1336 = vld [vmem:[%s1335] sm:$0x40]
    %vm1337 = vcmask 1046534
    %v1338 = vsel %vm1337, %v1336, %v1334
    %s1339 = scalar_lea.vmem [#allocation1], 1913
    %v1340 = vld [vmem:[%s1339] sm:$0x80]
    %vm1341 = vcmask 1047559
    %v1342 = vsel %vm1341, %v1340, %v1338
    %vm1343 = vcmask 31744
    %s1344 = scalar_lea.vmem [#allocation0], 2
    %1345 = vst.msk [vmem:[%s1344] ss:$8 sm:$0xf] %vm1343, %v1342
    %s1346 = scalar_lea.vmem [#allocation0], 4294967267
    %1347 = vst.msk [vmem:[%s1346] ss:$8 sm:$0xf0] %vm1343, %v1342
    %s1348 = scalar_lea.vmem [#allocation1], 121
    %v1349 = vld [vmem:[%s1348] sm:$0x1]
    %s1350 = scalar_lea.vmem [#allocation1], 632
    %v1351 = vld [vmem:[%s1350] sm:$0x2]
    %vm1352 = vcmask 1041409
    %v1353 = vsel %vm1352, %v1351, %v1349
    %s1354 = scalar_lea.vmem [#allocation1], 1143
    %v1355 = vld [vmem:[%s1354] sm:$0x4]
    %vm1356 = vcmask 1042434
    %v1357 = vsel %vm1356, %v1355, %v1353
    %s1358 = scalar_lea.vmem [#allocation1], 1654
    %v1359 = vld [vmem:[%s1358] sm:$0x8]
    %vm1360 = vcmask 1043459
    %v1361 = vsel %vm1360, %v1359, %v1357
    %s1362 = scalar_lea.vmem [#allocation1], 245
    %v1363 = vld [vmem:[%s1362] sm:$0x10]
    %vm1364 = vcmask 1044484
    %v1365 = vsel %vm1364, %v1363, %v1361
    %s1366 = scalar_lea.vmem [#allocation1], 756
    %v1367 = vld [vmem:[%s1366] sm:$0x20]
    %vm1368 = vcmask 1045509
    %v1369 = vsel %vm1368, %v1367, %v1365
    %s1370 = scalar_lea.vmem [#allocation1], 1267
    %v1371 = vld [vmem:[%s1370] sm:$0x40]
    %vm1372 = vcmask 1046534
    %v1373 = vsel %vm1372, %v1371, %v1369
    %s1374 = scalar_lea.vmem [#allocation1], 1778
    %v1375 = vld [vmem:[%s1374] sm:$0x80]
    %vm1376 = vcmask 1047559
    %v1377 = vsel %vm1376, %v1375, %v1373
    %1378 = vrot.lane.b32.xlu0 %v1377, 124
    %v1379 = vpop.permute.xlu0 %1378
    %vm1380 = vcmask 1048544
    %1381 = vst.msk [vmem:[#allocation0] sm:$0xf] %vm1380, %v1379
    %s1382 = scalar_lea.vmem [#allocation0], 4
    %1383 = vst.msk [vmem:[%s1382] sm:$0xf0] %vm1380, %v1379
    %s1384 = scalar_lea.vmem [#allocation1], 377
    %v1385 = vld [vmem:[%s1384] sm:$0x1]
    %s1386 = scalar_lea.vmem [#allocation1], 888
    %v1387 = vld [vmem:[%s1386] sm:$0x2]
    %vm1388 = vcmask 1041409
    %v1389 = vsel %vm1388, %v1387, %v1385
    %s1390 = scalar_lea.vmem [#allocation1], 1399
    %v1391 = vld [vmem:[%s1390] sm:$0x4]
    %vm1392 = vcmask 1042434
    %v1393 = vsel %vm1392, %v1391, %v1389
    %s1394 = scalar_lea.vmem [#allocation1], 1910
    %v1395 = vld [vmem:[%s1394] sm:$0x8]
    %vm1396 = vcmask 1043459
    %v1397 = vsel %vm1396, %v1395, %v1393
    %s1398 = scalar_lea.vmem [#allocation1], 501
    %v1399 = vld [vmem:[%s1398] sm:$0x10]
    %vm1400 = vcmask 1044484
    %v1401 = vsel %vm1400, %v1399, %v1397
    %s1402 = scalar_lea.vmem [#allocation1], 1012
    %v1403 = vld [vmem:[%s1402] sm:$0x20]
    %vm1404 = vcmask 1045509
    %v1405 = vsel %vm1404, %v1403, %v1401
    %s1406 = scalar_lea.vmem [#allocation1], 1523
    %v1407 = vld [vmem:[%s1406] sm:$0x40]
    %vm1408 = vcmask 1046534
    %v1409 = vsel %vm1408, %v1407, %v1405
    %s1410 = scalar_lea.vmem [#allocation1], 2034
    %v1411 = vld [vmem:[%s1410] sm:$0x80]
    %vm1412 = vcmask 1047559
    %v1413 = vsel %vm1412, %v1411, %v1409
    %1414 = vrot.lane.b32.xlu0 %v1413, 124
    %v1415 = vpop.permute.xlu0 %1414
    %vm1416 = vcmask 1048544
    %s1417 = scalar_lea.vmem [#allocation0], 16
    %1418 = vst.msk [vmem:[%s1417] sm:$0xf] %vm1416, %v1415
    %s1419 = scalar_lea.vmem [#allocation0], 20
    %1420 = vst.msk [vmem:[%s1419] sm:$0xf0] %vm1416, %v1415
    %s1421 = scalar_lea.vmem [#allocation1], 120
    %v1422 = vld [vmem:[%s1421] sm:$0x1]
    %s1423 = scalar_lea.vmem [#allocation1], 631
    %v1424 = vld [vmem:[%s1423] sm:$0x2]
    %vm1425 = vcmask 1041409
    %v1426 = vsel %vm1425, %v1424, %v1422
    %s1427 = scalar_lea.vmem [#allocation1], 1142
    %v1428 = vld [vmem:[%s1427] sm:$0x4]
    %vm1429 = vcmask 1042434
    %v1430 = vsel %vm1429, %v1428, %v1426
    %s1431 = scalar_lea.vmem [#allocation1], 1653
    %v1432 = vld [vmem:[%s1431] sm:$0x8]
    %vm1433 = vcmask 1043459
    %v1434 = vsel %vm1433, %v1432, %v1430
    %s1435 = scalar_lea.vmem [#allocation1], 244
    %v1436 = vld [vmem:[%s1435] sm:$0x10]
    %vm1437 = vcmask 1044484
    %v1438 = vsel %vm1437, %v1436, %v1434
    %s1439 = scalar_lea.vmem [#allocation1], 755
    %v1440 = vld [vmem:[%s1439] sm:$0x20]
    %vm1441 = vcmask 1045509
    %v1442 = vsel %vm1441, %v1440, %v1438
    %s1443 = scalar_lea.vmem [#allocation1], 1266
    %v1444 = vld [vmem:[%s1443] sm:$0x40]
    %vm1445 = vcmask 1046534
    %v1446 = vsel %vm1445, %v1444, %v1442
    %s1447 = scalar_lea.vmem [#allocation1], 1777
    %v1448 = vld [vmem:[%s1447] sm:$0x80]
    %vm1449 = vcmask 1047559
    %v1450 = vsel %vm1449, %v1448, %v1446
    %1451 = vrot.lane.b32.xlu0 %v1450, 120
    %v1452 = vpop.permute.xlu0 %1451
    %vm1453 = vcmask 1015744
    %1454 = vst.msk [vmem:[#allocation0] sm:$0xf] %vm1453, %v1452
    %s1455 = scalar_lea.vmem [#allocation0], 4
    %1456 = vst.msk [vmem:[%s1455] sm:$0xf0] %vm1453, %v1452
    %s1457 = scalar_lea.vmem [#allocation1], 376
    %v1458 = vld [vmem:[%s1457] sm:$0x1]
    %s1459 = scalar_lea.vmem [#allocation1], 887
    %v1460 = vld [vmem:[%s1459] sm:$0x2]
    %vm1461 = vcmask 1041409
    %v1462 = vsel %vm1461, %v1460, %v1458
    %s1463 = scalar_lea.vmem [#allocation1], 1398
    %v1464 = vld [vmem:[%s1463] sm:$0x4]
    %vm1465 = vcmask 1042434
    %v1466 = vsel %vm1465, %v1464, %v1462
    %s1467 = scalar_lea.vmem [#allocation1], 1909
    %v1468 = vld [vmem:[%s1467] sm:$0x8]
    %vm1469 = vcmask 1043459
    %v1470 = vsel %vm1469, %v1468, %v1466
    %s1471 = scalar_lea.vmem [#allocation1], 500
    %v1472 = vld [vmem:[%s1471] sm:$0x10]
    %vm1473 = vcmask 1044484
    %v1474 = vsel %vm1473, %v1472, %v1470
    %s1475 = scalar_lea.vmem [#allocation1], 1011
    %v1476 = vld [vmem:[%s1475] sm:$0x20]
    %vm1477 = vcmask 1045509
    %v1478 = vsel %vm1477, %v1476, %v1474
    %s1479 = scalar_lea.vmem [#allocation1], 1522
    %v1480 = vld [vmem:[%s1479] sm:$0x40]
    %vm1481 = vcmask 1046534
    %v1482 = vsel %vm1481, %v1480, %v1478
    %s1483 = scalar_lea.vmem [#allocation1], 2033
    %v1484 = vld [vmem:[%s1483] sm:$0x80]
    %vm1485 = vcmask 1047559
    %v1486 = vsel %vm1485, %v1484, %v1482
    %1487 = vrot.lane.b32.xlu0 %v1486, 120
    %v1488 = vpop.permute.xlu0 %1487
    %vm1489 = vcmask 1015744
    %s1490 = scalar_lea.vmem [#allocation0], 16
    %1491 = vst.msk [vmem:[%s1490] sm:$0xf] %vm1489, %v1488
    %s1492 = scalar_lea.vmem [#allocation0], 20
    %1493 = vst.msk [vmem:[%s1492] sm:$0xf0] %vm1489, %v1488
    %s1494 = scalar_lea.vmem [#allocation1], 113
    %v1495 = vld [vmem:[%s1494] sm:$0x1]
    %s1496 = scalar_lea.vmem [#allocation1], 624
    %v1497 = vld [vmem:[%s1496] sm:$0x2]
    %vm1498 = vcmask 1041409
    %v1499 = vsel %vm1498, %v1497, %v1495
    %s1500 = scalar_lea.vmem [#allocation1], 1135
    %v1501 = vld [vmem:[%s1500] sm:$0x4]
    %vm1502 = vcmask 1042434
    %v1503 = vsel %vm1502, %v1501, %v1499
    %s1504 = scalar_lea.vmem [#allocation1], 1646
    %v1505 = vld [vmem:[%s1504] sm:$0x8]
    %vm1506 = vcmask 1043459
    %v1507 = vsel %vm1506, %v1505, %v1503
    %s1508 = scalar_lea.vmem [#allocation1], 237
    %v1509 = vld [vmem:[%s1508] sm:$0x10]
    %vm1510 = vcmask 1044484
    %v1511 = vsel %vm1510, %v1509, %v1507
    %s1512 = scalar_lea.vmem [#allocation1], 748
    %v1513 = vld [vmem:[%s1512] sm:$0x20]
    %vm1514 = vcmask 1045509
    %v1515 = vsel %vm1514, %v1513, %v1511
    %s1516 = scalar_lea.vmem [#allocation1], 1259
    %v1517 = vld [vmem:[%s1516] sm:$0x40]
    %vm1518 = vcmask 1046534
    %v1519 = vsel %vm1518, %v1517, %v1515
    %s1520 = scalar_lea.vmem [#allocation1], 1770
    %v1521 = vld [vmem:[%s1520] sm:$0x80]
    %vm1522 = vcmask 1047559
    %v1523 = vsel %vm1522, %v1521, %v1519
    %1524 = vrot.lane.b32.xlu0 %v1523, 116
    %v1525 = vpop.permute.xlu0 %1524
    %vm1526 = vcmask 982944
    %1527 = vst.msk [vmem:[#allocation0] sm:$0xf] %vm1526, %v1525
    %s1528 = scalar_lea.vmem [#allocation0], 4
    %1529 = vst.msk [vmem:[%s1528] sm:$0xf0] %vm1526, %v1525
    %s1530 = scalar_lea.vmem [#allocation1], 369
    %v1531 = vld [vmem:[%s1530] sm:$0x1]
    %s1532 = scalar_lea.vmem [#allocation1], 880
    %v1533 = vld [vmem:[%s1532] sm:$0x2]
    %vm1534 = vcmask 1041409
    %v1535 = vsel %vm1534, %v1533, %v1531
    %s1536 = scalar_lea.vmem [#allocation1], 1391
    %v1537 = vld [vmem:[%s1536] sm:$0x4]
    %vm1538 = vcmask 1042434
    %v1539 = vsel %vm1538, %v1537, %v1535
    %s1540 = scalar_lea.vmem [#allocation1], 1902
    %v1541 = vld [vmem:[%s1540] sm:$0x8]
    %vm1542 = vcmask 1043459
    %v1543 = vsel %vm1542, %v1541, %v1539
    %s1544 = scalar_lea.vmem [#allocation1], 493
    %v1545 = vld [vmem:[%s1544] sm:$0x10]
    %vm1546 = vcmask 1044484
    %v1547 = vsel %vm1546, %v1545, %v1543
    %s1548 = scalar_lea.vmem [#allocation1], 1004
    %v1549 = vld [vmem:[%s1548] sm:$0x20]
    %vm1550 = vcmask 1045509
    %v1551 = vsel %vm1550, %v1549, %v1547
    %s1552 = scalar_lea.vmem [#allocation1], 1515
    %v1553 = vld [vmem:[%s1552] sm:$0x40]
    %vm1554 = vcmask 1046534
    %v1555 = vsel %vm1554, %v1553, %v1551
    %s1556 = scalar_lea.vmem [#allocation1], 2026
    %v1557 = vld [vmem:[%s1556] sm:$0x80]
    %vm1558 = vcmask 1047559
    %v1559 = vsel %vm1558, %v1557, %v1555
    %1560 = vrot.lane.b32.xlu0 %v1559, 116
    %v1561 = vpop.permute.xlu0 %1560
    %vm1562 = vcmask 982944
    %s1563 = scalar_lea.vmem [#allocation0], 16
    %1564 = vst.msk [vmem:[%s1563] sm:$0xf] %vm1562, %v1561
    %s1565 = scalar_lea.vmem [#allocation0], 20
    %1566 = vst.msk [vmem:[%s1565] sm:$0xf0] %vm1562, %v1561
    %s1567 = scalar_lea.vmem [#allocation1], 112
    %v1568 = vld [vmem:[%s1567] sm:$0x1]
    %s1569 = scalar_lea.vmem [#allocation1], 623
    %v1570 = vld [vmem:[%s1569] sm:$0x2]
    %vm1571 = vcmask 1041409
    %v1572 = vsel %vm1571, %v1570, %v1568
    %s1573 = scalar_lea.vmem [#allocation1], 1134
    %v1574 = vld [vmem:[%s1573] sm:$0x4]
    %vm1575 = vcmask 1042434
    %v1576 = vsel %vm1575, %v1574, %v1572
    %s1577 = scalar_lea.vmem [#allocation1], 1645
    %v1578 = vld [vmem:[%s1577] sm:$0x8]
    %vm1579 = vcmask 1043459
    %v1580 = vsel %vm1579, %v1578, %v1576
    %s1581 = scalar_lea.vmem [#allocation1], 236
    %v1582 = vld [vmem:[%s1581] sm:$0x10]
    %vm1583 = vcmask 1044484
    %v1584 = vsel %vm1583, %v1582, %v1580
    %s1585 = scalar_lea.vmem [#allocation1], 747
    %v1586 = vld [vmem:[%s1585] sm:$0x20]
    %vm1587 = vcmask 1045509
    %v1588 = vsel %vm1587, %v1586, %v1584
    %s1589 = scalar_lea.vmem [#allocation1], 1258
    %v1590 = vld [vmem:[%s1589] sm:$0x40]
    %vm1591 = vcmask 1046534
    %v1592 = vsel %vm1591, %v1590, %v1588
    %s1593 = scalar_lea.vmem [#allocation1], 1769
    %v1594 = vld [vmem:[%s1593] sm:$0x80]
    %vm1595 = vcmask 1047559
    %v1596 = vsel %vm1595, %v1594, %v1592
    %1597 = vrot.lane.b32.xlu0 %v1596, 112
    %v1598 = vpop.permute.xlu0 %1597
    %vm1599 = vcmask 950144
    %1600 = vst.msk [vmem:[#allocation0] sm:$0xf] %vm1599, %v1598
    %s1601 = scalar_lea.vmem [#allocation0], 4
    %1602 = vst.msk [vmem:[%s1601] sm:$0xf0] %vm1599, %v1598
    %s1603 = scalar_lea.vmem [#allocation1], 368
    %v1604 = vld [vmem:[%s1603] sm:$0x1]
    %s1605 = scalar_lea.vmem [#allocation1], 879
    %v1606 = vld [vmem:[%s1605] sm:$0x2]
    %vm1607 = vcmask 1041409
    %v1608 = vsel %vm1607, %v1606, %v1604
    %s1609 = scalar_lea.vmem [#allocation1], 1390
    %v1610 = vld [vmem:[%s1609] sm:$0x4]
    %vm1611 = vcmask 1042434
    %v1612 = vsel %vm1611, %v1610, %v1608
    %s1613 = scalar_lea.vmem [#allocation1], 1901
    %v1614 = vld [vmem:[%s1613] sm:$0x8]
    %vm1615 = vcmask 1043459
    %v1616 = vsel %vm1615, %v1614, %v1612
    %s1617 = scalar_lea.vmem [#allocation1], 492
    %v1618 = vld [vmem:[%s1617] sm:$0x10]
    %vm1619 = vcmask 1044484
    %v1620 = vsel %vm1619, %v1618, %v1616
    %s1621 = scalar_lea.vmem [#allocation1], 1003
    %v1622 = vld [vmem:[%s1621] sm:$0x20]
    %vm1623 = vcmask 1045509
    %v1624 = vsel %vm1623, %v1622, %v1620
    %s1625 = scalar_lea.vmem [#allocation1], 1514
    %v1626 = vld [vmem:[%s1625] sm:$0x40]
    %vm1627 = vcmask 1046534
    %v1628 = vsel %vm1627, %v1626, %v1624
    %s1629 = scalar_lea.vmem [#allocation1], 2025
    %v1630 = vld [vmem:[%s1629] sm:$0x80]
    %vm1631 = vcmask 1047559
    %v1632 = vsel %vm1631, %v1630, %v1628
    %1633 = vrot.lane.b32.xlu0 %v1632, 112
    %v1634 = vpop.permute.xlu0 %1633
    %vm1635 = vcmask 950144
    %s1636 = scalar_lea.vmem [#allocation0], 16
    %1637 = vst.msk [vmem:[%s1636] sm:$0xf] %vm1635, %v1634
    %s1638 = scalar_lea.vmem [#allocation0], 20
    %1639 = vst.msk [vmem:[%s1638] sm:$0xf0] %vm1635, %v1634
    %s1640 = scalar_lea.vmem [#allocation1], 105
    %v1641 = vld [vmem:[%s1640] sm:$0x1]
    %s1642 = scalar_lea.vmem [#allocation1], 616
    %v1643 = vld [vmem:[%s1642] sm:$0x2]
    %vm1644 = vcmask 1041409
    %v1645 = vsel %vm1644, %v1643, %v1641
    %s1646 = scalar_lea.vmem [#allocation1], 1127
    %v1647 = vld [vmem:[%s1646] sm:$0x4]
    %vm1648 = vcmask 1042434
    %v1649 = vsel %vm1648, %v1647, %v1645
    %s1650 = scalar_lea.vmem [#allocation1], 1638
    %v1651 = vld [vmem:[%s1650] sm:$0x8]
    %vm1652 = vcmask 1043459
    %v1653 = vsel %vm1652, %v1651, %v1649
    %s1654 = scalar_lea.vmem [#allocation1], 229
    %v1655 = vld [vmem:[%s1654] sm:$0x10]
    %vm1656 = vcmask 1044484
    %v1657 = vsel %vm1656, %v1655, %v1653
    %s1658 = scalar_lea.vmem [#allocation1], 740
    %v1659 = vld [vmem:[%s1658] sm:$0x20]
    %vm1660 = vcmask 1045509
    %v1661 = vsel %vm1660, %v1659, %v1657
    %s1662 = scalar_lea.vmem [#allocation1], 1251
    %v1663 = vld [vmem:[%s1662] sm:$0x40]
    %vm1664 = vcmask 1046534
    %v1665 = vsel %vm1664, %v1663, %v1661
    %s1666 = scalar_lea.vmem [#allocation1], 1762
    %v1667 = vld [vmem:[%s1666] sm:$0x80]
    %vm1668 = vcmask 1047559
    %v1669 = vsel %vm1668, %v1667, %v1665
    %1670 = vrot.lane.b32.xlu0 %v1669, 108
    %v1671 = vpop.permute.xlu0 %1670
    %vm1672 = vcmask 917344
    %1673 = vst.msk [vmem:[#allocation0] sm:$0xf] %vm1672, %v1671
    %s1674 = scalar_lea.vmem [#allocation0], 4
    %1675 = vst.msk [vmem:[%s1674] sm:$0xf0] %vm1672, %v1671
    %s1676 = scalar_lea.vmem [#allocation1], 361
    %v1677 = vld [vmem:[%s1676] sm:$0x1]
    %s1678 = scalar_lea.vmem [#allocation1], 872
    %v1679 = vld [vmem:[%s1678] sm:$0x2]
    %vm1680 = vcmask 1041409
    %v1681 = vsel %vm1680, %v1679, %v1677
    %s1682 = scalar_lea.vmem [#allocation1], 1383
    %v1683 = vld [vmem:[%s1682] sm:$0x4]
    %vm1684 = vcmask 1042434
    %v1685 = vsel %vm1684, %v1683, %v1681
    %s1686 = scalar_lea.vmem [#allocation1], 1894
    %v1687 = vld [vmem:[%s1686] sm:$0x8]
    %vm1688 = vcmask 1043459
    %v1689 = vsel %vm1688, %v1687, %v1685
    %s1690 = scalar_lea.vmem [#allocation1], 485
    %v1691 = vld [vmem:[%s1690] sm:$0x10]
    %vm1692 = vcmask 1044484
    %v1693 = vsel %vm1692, %v1691, %v1689
    %s1694 = scalar_lea.vmem [#allocation1], 996
    %v1695 = vld [vmem:[%s1694] sm:$0x20]
    %vm1696 = vcmask 1045509
    %v1697 = vsel %vm1696, %v1695, %v1693
    %s1698 = scalar_lea.vmem [#allocation1], 1507
    %v1699 = vld [vmem:[%s1698] sm:$0x40]
    %vm1700 = vcmask 1046534
    %v1701 = vsel %vm1700, %v1699, %v1697
    %s1702 = scalar_lea.vmem [#allocation1], 2018
    %v1703 = vld [vmem:[%s1702] sm:$0x80]
    %vm1704 = vcmask 1047559
    %v1705 = vsel %vm1704, %v1703, %v1701
    %1706 = vrot.lane.b32.xlu0 %v1705, 108
    %v1707 = vpop.permute.xlu0 %1706
    %vm1708 = vcmask 917344
    %s1709 = scalar_lea.vmem [#allocation0], 16
    %1710 = vst.msk [vmem:[%s1709] sm:$0xf] %vm1708, %v1707
    %s1711 = scalar_lea.vmem [#allocation0], 20
    %1712 = vst.msk [vmem:[%s1711] sm:$0xf0] %vm1708, %v1707
    %s1713 = scalar_lea.vmem [#allocation1], 104
    %v1714 = vld [vmem:[%s1713] sm:$0x1]
    %s1715 = scalar_lea.vmem [#allocation1], 615
    %v1716 = vld [vmem:[%s1715] sm:$0x2]
    %vm1717 = vcmask 1041409
    %v1718 = vsel %vm1717, %v1716, %v1714
    %s1719 = scalar_lea.vmem [#allocation1], 1126
    %v1720 = vld [vmem:[%s1719] sm:$0x4]
    %vm1721 = vcmask 1042434
    %v1722 = vsel %vm1721, %v1720, %v1718
    %s1723 = scalar_lea.vmem [#allocation1], 1637
    %v1724 = vld [vmem:[%s1723] sm:$0x8]
    %vm1725 = vcmask 1043459
    %v1726 = vsel %vm1725, %v1724, %v1722
    %s1727 = scalar_lea.vmem [#allocation1], 228
    %v1728 = vld [vmem:[%s1727] sm:$0x10]
    %vm1729 = vcmask 1044484
    %v1730 = vsel %vm1729, %v1728, %v1726
    %s1731 = scalar_lea.vmem [#allocation1], 739
    %v1732 = vld [vmem:[%s1731] sm:$0x20]
    %vm1733 = vcmask 1045509
    %v1734 = vsel %vm1733, %v1732, %v1730
    %s1735 = scalar_lea.vmem [#allocation1], 1250
    %v1736 = vld [vmem:[%s1735] sm:$0x40]
    %vm1737 = vcmask 1046534
    %v1738 = vsel %vm1737, %v1736, %v1734
    %s1739 = scalar_lea.vmem [#allocation1], 1761
    %v1740 = vld [vmem:[%s1739] sm:$0x80]
    %vm1741 = vcmask 1047559
    %v1742 = vsel %vm1741, %v1740, %v1738
    %1743 = vrot.lane.b32.xlu0 %v1742, 104
    %v1744 = vpop.permute.xlu0 %1743
    %vm1745 = vcmask 884544
    %1746 = vst.msk [vmem:[#allocation0] sm:$0xf] %vm1745, %v1744
    %s1747 = scalar_lea.vmem [#allocation0], 4
    %1748 = vst.msk [vmem:[%s1747] sm:$0xf0] %vm1745, %v1744
    %s1749 = scalar_lea.vmem [#allocation1], 360
    %v1750 = vld [vmem:[%s1749] sm:$0x1]
    %s1751 = scalar_lea.vmem [#allocation1], 871
    %v1752 = vld [vmem:[%s1751] sm:$0x2]
    %vm1753 = vcmask 1041409
    %v1754 = vsel %vm1753, %v1752, %v1750
    %s1755 = scalar_lea.vmem [#allocation1], 1382
    %v1756 = vld [vmem:[%s1755] sm:$0x4]
    %vm1757 = vcmask 1042434
    %v1758 = vsel %vm1757, %v1756, %v1754
    %s1759 = scalar_lea.vmem [#allocation1], 1893
    %v1760 = vld [vmem:[%s1759] sm:$0x8]
    %vm1761 = vcmask 1043459
    %v1762 = vsel %vm1761, %v1760, %v1758
    %s1763 = scalar_lea.vmem [#allocation1], 484
    %v1764 = vld [vmem:[%s1763] sm:$0x10]
    %vm1765 = vcmask 1044484
    %v1766 = vsel %vm1765, %v1764, %v1762
    %s1767 = scalar_lea.vmem [#allocation1], 995
    %v1768 = vld [vmem:[%s1767] sm:$0x20]
    %vm1769 = vcmask 1045509
    %v1770 = vsel %vm1769, %v1768, %v1766
    %s1771 = scalar_lea.vmem [#allocation1], 1506
    %v1772 = vld [vmem:[%s1771] sm:$0x40]
    %vm1773 = vcmask 1046534
    %v1774 = vsel %vm1773, %v1772, %v1770
    %s1775 = scalar_lea.vmem [#allocation1], 2017
    %v1776 = vld [vmem:[%s1775] sm:$0x80]
    %vm1777 = vcmask 1047559
    %v1778 = vsel %vm1777, %v1776, %v1774
    %1779 = vrot.lane.b32.xlu0 %v1778, 104
    %v1780 = vpop.permute.xlu0 %1779
    %vm1781 = vcmask 884544
    %s1782 = scalar_lea.vmem [#allocation0], 16
    %1783 = vst.msk [vmem:[%s1782] sm:$0xf] %vm1781, %v1780
    %s1784 = scalar_lea.vmem [#allocation0], 20
    %1785 = vst.msk [vmem:[%s1784] sm:$0xf0] %vm1781, %v1780
    %s1786 = scalar_lea.vmem [#allocation1], 97
    %v1787 = vld [vmem:[%s1786] sm:$0x1]
    %s1788 = scalar_lea.vmem [#allocation1], 608
    %v1789 = vld [vmem:[%s1788] sm:$0x2]
    %vm1790 = vcmask 1041409
    %v1791 = vsel %vm1790, %v1789, %v1787
    %s1792 = scalar_lea.vmem [#allocation1], 1119
    %v1793 = vld [vmem:[%s1792] sm:$0x4]
    %vm1794 = vcmask 1042434
    %v1795 = vsel %vm1794, %v1793, %v1791
    %s1796 = scalar_lea.vmem [#allocation1], 1630
    %v1797 = vld [vmem:[%s1796] sm:$0x8]
    %vm1798 = vcmask 1043459
    %v1799 = vsel %vm1798, %v1797, %v1795
    %s1800 = scalar_lea.vmem [#allocation1], 221
    %v1801 = vld [vmem:[%s1800] sm:$0x10]
    %vm1802 = vcmask 1044484
    %v1803 = vsel %vm1802, %v1801, %v1799
    %s1804 = scalar_lea.vmem [#allocation1], 732
    %v1805 = vld [vmem:[%s1804] sm:$0x20]
    %vm1806 = vcmask 1045509
    %v1807 = vsel %vm1806, %v1805, %v1803
    %s1808 = scalar_lea.vmem [#allocation1], 1243
    %v1809 = vld [vmem:[%s1808] sm:$0x40]
    %vm1810 = vcmask 1046534
    %v1811 = vsel %vm1810, %v1809, %v1807
    %s1812 = scalar_lea.vmem [#allocation1], 1754
    %v1813 = vld [vmem:[%s1812] sm:$0x80]
    %vm1814 = vcmask 1047559
    %v1815 = vsel %vm1814, %v1813, %v1811
    %1816 = vrot.lane.b32.xlu0 %v1815, 100
    %v1817 = vpop.permute.xlu0 %1816
    %vm1818 = vcmask 851744
    %1819 = vst.msk [vmem:[#allocation0] sm:$0xf] %vm1818, %v1817
    %s1820 = scalar_lea.vmem [#allocation0], 4
    %1821 = vst.msk [vmem:[%s1820] sm:$0xf0] %vm1818, %v1817
    %s1822 = scalar_lea.vmem [#allocation1], 353
    %v1823 = vld [vmem:[%s1822] sm:$0x1]
    %s1824 = scalar_lea.vmem [#allocation1], 864
    %v1825 = vld [vmem:[%s1824] sm:$0x2]
    %vm1826 = vcmask 1041409
    %v1827 = vsel %vm1826, %v1825, %v1823
    %s1828 = scalar_lea.vmem [#allocation1], 1375
    %v1829 = vld [vmem:[%s1828] sm:$0x4]
    %vm1830 = vcmask 1042434
    %v1831 = vsel %vm1830, %v1829, %v1827
    %s1832 = scalar_lea.vmem [#allocation1], 1886
    %v1833 = vld [vmem:[%s1832] sm:$0x8]
    %vm1834 = vcmask 1043459
    %v1835 = vsel %vm1834, %v1833, %v1831
    %s1836 = scalar_lea.vmem [#allocation1], 477
    %v1837 = vld [vmem:[%s1836] sm:$0x10]
    %vm1838 = vcmask 1044484
    %v1839 = vsel %vm1838, %v1837, %v1835
    %s1840 = scalar_lea.vmem [#allocation1], 988
    %v1841 = vld [vmem:[%s1840] sm:$0x20]
    %vm1842 = vcmask 1045509
    %v1843 = vsel %vm1842, %v1841, %v1839
    %s1844 = scalar_lea.vmem [#allocation1], 1499
    %v1845 = vld [vmem:[%s1844] sm:$0x40]
    %vm1846 = vcmask 1046534
    %v1847 = vsel %vm1846, %v1845, %v1843
    %s1848 = scalar_lea.vmem [#allocation1], 2010
    %v1849 = vld [vmem:[%s1848] sm:$0x80]
    %vm1850 = vcmask 1047559
    %v1851 = vsel %vm1850, %v1849, %v1847
    %1852 = vrot.lane.b32.xlu0 %v1851, 100
    %v1853 = vpop.permute.xlu0 %1852
    %vm1854 = vcmask 851744
    %s1855 = scalar_lea.vmem [#allocation0], 16
    %1856 = vst.msk [vmem:[%s1855] sm:$0xf] %vm1854, %v1853
    %s1857 = scalar_lea.vmem [#allocation0], 20
    %1858 = vst.msk [vmem:[%s1857] sm:$0xf0] %vm1854, %v1853
    %s1859 = scalar_lea.vmem [#allocation1], 96
    %v1860 = vld [vmem:[%s1859] sm:$0x1]
    %s1861 = scalar_lea.vmem [#allocation1], 607
    %v1862 = vld [vmem:[%s1861] sm:$0x2]
    %vm1863 = vcmask 1041409
    %v1864 = vsel %vm1863, %v1862, %v1860
    %s1865 = scalar_lea.vmem [#allocation1], 1118
    %v1866 = vld [vmem:[%s1865] sm:$0x4]
    %vm1867 = vcmask 1042434
    %v1868 = vsel %vm1867, %v1866, %v1864
    %s1869 = scalar_lea.vmem [#allocation1], 1629
    %v1870 = vld [vmem:[%s1869] sm:$0x8]
    %vm1871 = vcmask 1043459
    %v1872 = vsel %vm1871, %v1870, %v1868
    %s1873 = scalar_lea.vmem [#allocation1], 220
    %v1874 = vld [vmem:[%s1873] sm:$0x10]
    %vm1875 = vcmask 1044484
    %v1876 = vsel %vm1875, %v1874, %v1872
    %s1877 = scalar_lea.vmem [#allocation1], 731
    %v1878 = vld [vmem:[%s1877] sm:$0x20]
    %vm1879 = vcmask 1045509
    %v1880 = vsel %vm1879, %v1878, %v1876
    %s1881 = scalar_lea.vmem [#allocation1], 1242
    %v1882 = vld [vmem:[%s1881] sm:$0x40]
    %vm1883 = vcmask 1046534
    %v1884 = vsel %vm1883, %v1882, %v1880
    %s1885 = scalar_lea.vmem [#allocation1], 1753
    %v1886 = vld [vmem:[%s1885] sm:$0x80]
    %vm1887 = vcmask 1047559
    %v1888 = vsel %vm1887, %v1886, %v1884
    %1889 = vrot.lane.b32.xlu0 %v1888, 96
    %v1890 = vpop.permute.xlu0 %1889
    %vm1891 = vcmask 818944
    %1892 = vst.msk [vmem:[#allocation0] sm:$0xf] %vm1891, %v1890
    %s1893 = scalar_lea.vmem [#allocation0], 4
    %1894 = vst.msk [vmem:[%s1893] sm:$0xf0] %vm1891, %v1890
    %s1895 = scalar_lea.vmem [#allocation1], 352
    %v1896 = vld [vmem:[%s1895] sm:$0x1]
    %s1897 = scalar_lea.vmem [#allocation1], 863
    %v1898 = vld [vmem:[%s1897] sm:$0x2]
    %vm1899 = vcmask 1041409
    %v1900 = vsel %vm1899, %v1898, %v1896
    %s1901 = scalar_lea.vmem [#allocation1], 1374
    %v1902 = vld [vmem:[%s1901] sm:$0x4]
    %vm1903 = vcmask 1042434
    %v1904 = vsel %vm1903, %v1902, %v1900
    %s1905 = scalar_lea.vmem [#allocation1], 1885
    %v1906 = vld [vmem:[%s1905] sm:$0x8]
    %vm1907 = vcmask 1043459
    %v1908 = vsel %vm1907, %v1906, %v1904
    %s1909 = scalar_lea.vmem [#allocation1], 476
    %v1910 = vld [vmem:[%s1909] sm:$0x10]
    %vm1911 = vcmask 1044484
    %v1912 = vsel %vm1911, %v1910, %v1908
    %s1913 = scalar_lea.vmem [#allocation1], 987
    %v1914 = vld [vmem:[%s1913] sm:$0x20]
    %vm1915 = vcmask 1045509
    %v1916 = vsel %vm1915, %v1914, %v1912
    %s1917 = scalar_lea.vmem [#allocation1], 1498
    %v1918 = vld [vmem:[%s1917] sm:$0x40]
    %vm1919 = vcmask 1046534
    %v1920 = vsel %vm1919, %v1918, %v1916
    %s1921 = scalar_lea.vmem [#allocation1], 2009
    %v1922 = vld [vmem:[%s1921] sm:$0x80]
    %vm1923 = vcmask 1047559
    %v1924 = vsel %vm1923, %v1922, %v1920
    %1925 = vrot.lane.b32.xlu0 %v1924, 96
    %v1926 = vpop.permute.xlu0 %1925
    %vm1927 = vcmask 818944
    %s1928 = scalar_lea.vmem [#allocation0], 16
    %1929 = vst.msk [vmem:[%s1928] sm:$0xf] %vm1927, %v1926
    %s1930 = scalar_lea.vmem [#allocation0], 20
    %1931 = vst.msk [vmem:[%s1930] sm:$0xf0] %vm1927, %v1926
    %s1932 = scalar_lea.vmem [#allocation1], 89
    %v1933 = vld [vmem:[%s1932] sm:$0x1]
    %s1934 = scalar_lea.vmem [#allocation1], 600
    %v1935 = vld [vmem:[%s1934] sm:$0x2]
    %vm1936 = vcmask 1041409
    %v1937 = vsel %vm1936, %v1935, %v1933
    %s1938 = scalar_lea.vmem [#allocation1], 1111
    %v1939 = vld [vmem:[%s1938] sm:$0x4]
    %vm1940 = vcmask 1042434
    %v1941 = vsel %vm1940, %v1939, %v1937
    %s1942 = scalar_lea.vmem [#allocation1], 1622
    %v1943 = vld [vmem:[%s1942] sm:$0x8]
    %vm1944 = vcmask 1043459
    %v1945 = vsel %vm1944, %v1943, %v1941
    %s1946 = scalar_lea.vmem [#allocation1], 213
    %v1947 = vld [vmem:[%s1946] sm:$0x10]
    %vm1948 = vcmask 1044484
    %v1949 = vsel %vm1948, %v1947, %v1945
    %s1950 = scalar_lea.vmem [#allocation1], 724
    %v1951 = vld [vmem:[%s1950] sm:$0x20]
    %vm1952 = vcmask 1045509
    %v1953 = vsel %vm1952, %v1951, %v1949
    %s1954 = scalar_lea.vmem [#allocation1], 1235
    %v1955 = vld [vmem:[%s1954] sm:$0x40]
    %vm1956 = vcmask 1046534
    %v1957 = vsel %vm1956, %v1955, %v1953
    %s1958 = scalar_lea.vmem [#allocation1], 1746
    %v1959 = vld [vmem:[%s1958] sm:$0x80]
    %vm1960 = vcmask 1047559
    %v1961 = vsel %vm1960, %v1959, %v1957
    %1962 = vrot.lane.b32.xlu0 %v1961, 92
    %v1963 = vpop.permute.xlu0 %1962
    %vm1964 = vcmask 786144
    %1965 = vst.msk [vmem:[#allocation0] sm:$0xf] %vm1964, %v1963
    %s1966 = scalar_lea.vmem [#allocation0], 4
    %1967 = vst.msk [vmem:[%s1966] sm:$0xf0] %vm1964, %v1963
    %s1968 = scalar_lea.vmem [#allocation1], 345
    %v1969 = vld [vmem:[%s1968] sm:$0x1]
    %s1970 = scalar_lea.vmem [#allocation1], 856
    %v1971 = vld [vmem:[%s1970] sm:$0x2]
    %vm1972 = vcmask 1041409
    %v1973 = vsel %vm1972, %v1971, %v1969
    %s1974 = scalar_lea.vmem [#allocation1], 1367
    %v1975 = vld [vmem:[%s1974] sm:$0x4]
    %vm1976 = vcmask 1042434
    %v1977 = vsel %vm1976, %v1975, %v1973
    %s1978 = scalar_lea.vmem [#allocation1], 1878
    %v1979 = vld [vmem:[%s1978] sm:$0x8]
    %vm1980 = vcmask 1043459
    %v1981 = vsel %vm1980, %v1979, %v1977
    %s1982 = scalar_lea.vmem [#allocation1], 469
    %v1983 = vld [vmem:[%s1982] sm:$0x10]
    %vm1984 = vcmask 1044484
    %v1985 = vsel %vm1984, %v1983, %v1981
    %s1986 = scalar_lea.vmem [#allocation1], 980
    %v1987 = vld [vmem:[%s1986] sm:$0x20]
    %vm1988 = vcmask 1045509
    %v1989 = vsel %vm1988, %v1987, %v1985
    %s1990 = scalar_lea.vmem [#allocation1], 1491
    %v1991 = vld [vmem:[%s1990] sm:$0x40]
    %vm1992 = vcmask 1046534
    %v1993 = vsel %vm1992, %v1991, %v1989
    %s1994 = scalar_lea.vmem [#allocation1], 2002
    %v1995 = vld [vmem:[%s1994] sm:$0x80]
    %vm1996 = vcmask 1047559
    %v1997 = vsel %vm1996, %v1995, %v1993
    %1998 = vrot.lane.b32.xlu0 %v1997, 92
    %v1999 = vpop.permute.xlu0 %1998
    %vm2000 = vcmask 786144
    %s2001 = scalar_lea.vmem [#allocation0], 16
    %2002 = vst.msk [vmem:[%s2001] sm:$0xf] %vm2000, %v1999
    %s2003 = scalar_lea.vmem [#allocation0], 20
    %2004 = vst.msk [vmem:[%s2003] sm:$0xf0] %vm2000, %v1999
    %s2005 = scalar_lea.vmem [#allocation1], 88
    %v2006 = vld [vmem:[%s2005] sm:$0x1]
    %s2007 = scalar_lea.vmem [#allocation1], 599
    %v2008 = vld [vmem:[%s2007] sm:$0x2]
    %vm2009 = vcmask 1041409
    %v2010 = vsel %vm2009, %v2008, %v2006
    %s2011 = scalar_lea.vmem [#allocation1], 1110
    %v2012 = vld [vmem:[%s2011] sm:$0x4]
    %vm2013 = vcmask 1042434
    %v2014 = vsel %vm2013, %v2012, %v2010
    %s2015 = scalar_lea.vmem [#allocation1], 1621
    %v2016 = vld [vmem:[%s2015] sm:$0x8]
    %vm2017 = vcmask 1043459
    %v2018 = vsel %vm2017, %v2016, %v2014
    %s2019 = scalar_lea.vmem [#allocation1], 212
    %v2020 = vld [vmem:[%s2019] sm:$0x10]
    %vm2021 = vcmask 1044484
    %v2022 = vsel %vm2021, %v2020, %v2018
    %s2023 = scalar_lea.vmem [#allocation1], 723
    %v2024 = vld [vmem:[%s2023] sm:$0x20]
    %vm2025 = vcmask 1045509
    %v2026 = vsel %vm2025, %v2024, %v2022
    %s2027 = scalar_lea.vmem [#allocation1], 1234
    %v2028 = vld [vmem:[%s2027] sm:$0x40]
    %vm2029 = vcmask 1046534
    %v2030 = vsel %vm2029, %v2028, %v2026
    %s2031 = scalar_lea.vmem [#allocation1], 1745
    %v2032 = vld [vmem:[%s2031] sm:$0x80]
    %vm2033 = vcmask 1047559
    %v2034 = vsel %vm2033, %v2032, %v2030
    %2035 = vrot.lane.b32.xlu0 %v2034, 88
    %v2036 = vpop.permute.xlu0 %2035
    %vm2037 = vcmask 753344
    %2038 = vst.msk [vmem:[#allocation0] sm:$0xf] %vm2037, %v2036
    %s2039 = scalar_lea.vmem [#allocation0], 4
    %2040 = vst.msk [vmem:[%s2039] sm:$0xf0] %vm2037, %v2036
    %s2041 = scalar_lea.vmem [#allocation1], 344
    %v2042 = vld [vmem:[%s2041] sm:$0x1]
    %s2043 = scalar_lea.vmem [#allocation1], 855
    %v2044 = vld [vmem:[%s2043] sm:$0x2]
    %vm2045 = vcmask 1041409
    %v2046 = vsel %vm2045, %v2044, %v2042
    %s2047 = scalar_lea.vmem [#allocation1], 1366
    %v2048 = vld [vmem:[%s2047] sm:$0x4]
    %vm2049 = vcmask 1042434
    %v2050 = vsel %vm2049, %v2048, %v2046
    %s2051 = scalar_lea.vmem [#allocation1], 1877
    %v2052 = vld [vmem:[%s2051] sm:$0x8]
    %vm2053 = vcmask 1043459
    %v2054 = vsel %vm2053, %v2052, %v2050
    %s2055 = scalar_lea.vmem [#allocation1], 468
    %v2056 = vld [vmem:[%s2055] sm:$0x10]
    %vm2057 = vcmask 1044484
    %v2058 = vsel %vm2057, %v2056, %v2054
    %s2059 = scalar_lea.vmem [#allocation1], 979
    %v2060 = vld [vmem:[%s2059] sm:$0x20]
    %vm2061 = vcmask 1045509
    %v2062 = vsel %vm2061, %v2060, %v2058
    %s2063 = scalar_lea.vmem [#allocation1], 1490
    %v2064 = vld [vmem:[%s2063] sm:$0x40]
    %vm2065 = vcmask 1046534
    %v2066 = vsel %vm2065, %v2064, %v2062
    %s2067 = scalar_lea.vmem [#allocation1], 2001
    %v2068 = vld [vmem:[%s2067] sm:$0x80]
    %vm2069 = vcmask 1047559
    %v2070 = vsel %vm2069, %v2068, %v2066
    %2071 = vrot.lane.b32.xlu0 %v2070, 88
    %v2072 = vpop.permute.xlu0 %2071
    %vm2073 = vcmask 753344
    %s2074 = scalar_lea.vmem [#allocation0], 16
    %2075 = vst.msk [vmem:[%s2074] sm:$0xf] %vm2073, %v2072
    %s2076 = scalar_lea.vmem [#allocation0], 20
    %2077 = vst.msk [vmem:[%s2076] sm:$0xf0] %vm2073, %v2072
    %s2078 = scalar_lea.vmem [#allocation1], 81
    %v2079 = vld [vmem:[%s2078] sm:$0x1]
    %s2080 = scalar_lea.vmem [#allocation1], 592
    %v2081 = vld [vmem:[%s2080] sm:$0x2]
    %vm2082 = vcmask 1041409
    %v2083 = vsel %vm2082, %v2081, %v2079
    %s2084 = scalar_lea.vmem [#allocation1], 1103
    %v2085 = vld [vmem:[%s2084] sm:$0x4]
    %vm2086 = vcmask 1042434
    %v2087 = vsel %vm2086, %v2085, %v2083
    %s2088 = scalar_lea.vmem [#allocation1], 1614
    %v2089 = vld [vmem:[%s2088] sm:$0x8]
    %vm2090 = vcmask 1043459
    %v2091 = vsel %vm2090, %v2089, %v2087
    %s2092 = scalar_lea.vmem [#allocation1], 205
    %v2093 = vld [vmem:[%s2092] sm:$0x10]
    %vm2094 = vcmask 1044484
    %v2095 = vsel %vm2094, %v2093, %v2091
    %s2096 = scalar_lea.vmem [#allocation1], 716
    %v2097 = vld [vmem:[%s2096] sm:$0x20]
    %vm2098 = vcmask 1045509
    %v2099 = vsel %vm2098, %v2097, %v2095
    %s2100 = scalar_lea.vmem [#allocation1], 1227
    %v2101 = vld [vmem:[%s2100] sm:$0x40]
    %vm2102 = vcmask 1046534
    %v2103 = vsel %vm2102, %v2101, %v2099
    %s2104 = scalar_lea.vmem [#allocation1], 1738
    %v2105 = vld [vmem:[%s2104] sm:$0x80]
    %vm2106 = vcmask 1047559
    %v2107 = vsel %vm2106, %v2105, %v2103
    %2108 = vrot.lane.b32.xlu0 %v2107, 84
    %v2109 = vpop.permute.xlu0 %2108
    %vm2110 = vcmask 720544
    %2111 = vst.msk [vmem:[#allocation0] sm:$0xf] %vm2110, %v2109
    %s2112 = scalar_lea.vmem [#allocation0], 4
    %2113 = vst.msk [vmem:[%s2112] sm:$0xf0] %vm2110, %v2109
    %s2114 = scalar_lea.vmem [#allocation1], 337
    %v2115 = vld [vmem:[%s2114] sm:$0x1]
    %s2116 = scalar_lea.vmem [#allocation1], 848
    %v2117 = vld [vmem:[%s2116] sm:$0x2]
    %vm2118 = vcmask 1041409
    %v2119 = vsel %vm2118, %v2117, %v2115
    %s2120 = scalar_lea.vmem [#allocation1], 1359
    %v2121 = vld [vmem:[%s2120] sm:$0x4]
    %vm2122 = vcmask 1042434
    %v2123 = vsel %vm2122, %v2121, %v2119
    %s2124 = scalar_lea.vmem [#allocation1], 1870
    %v2125 = vld [vmem:[%s2124] sm:$0x8]
    %vm2126 = vcmask 1043459
    %v2127 = vsel %vm2126, %v2125, %v2123
    %s2128 = scalar_lea.vmem [#allocation1], 461
    %v2129 = vld [vmem:[%s2128] sm:$0x10]
    %vm2130 = vcmask 1044484
    %v2131 = vsel %vm2130, %v2129, %v2127
    %s2132 = scalar_lea.vmem [#allocation1], 972
    %v2133 = vld [vmem:[%s2132] sm:$0x20]
    %vm2134 = vcmask 1045509
    %v2135 = vsel %vm2134, %v2133, %v2131
    %s2136 = scalar_lea.vmem [#allocation1], 1483
    %v2137 = vld [vmem:[%s2136] sm:$0x40]
    %vm2138 = vcmask 1046534
    %v2139 = vsel %vm2138, %v2137, %v2135
    %s2140 = scalar_lea.vmem [#allocation1], 1994
    %v2141 = vld [vmem:[%s2140] sm:$0x80]
    %vm2142 = vcmask 1047559
    %v2143 = vsel %vm2142, %v2141, %v2139
    %2144 = vrot.lane.b32.xlu0 %v2143, 84
    %v2145 = vpop.permute.xlu0 %2144
    %vm2146 = vcmask 720544
    %s2147 = scalar_lea.vmem [#allocation0], 16
    %2148 = vst.msk [vmem:[%s2147] sm:$0xf] %vm2146, %v2145
    %s2149 = scalar_lea.vmem [#allocation0], 20
    %2150 = vst.msk [vmem:[%s2149] sm:$0xf0] %vm2146, %v2145
    %s2151 = scalar_lea.vmem [#allocation1], 80
    %v2152 = vld [vmem:[%s2151] sm:$0x1]
    %s2153 = scalar_lea.vmem [#allocation1], 591
    %v2154 = vld [vmem:[%s2153] sm:$0x2]
    %vm2155 = vcmask 1041409
    %v2156 = vsel %vm2155, %v2154, %v2152
    %s2157 = scalar_lea.vmem [#allocation1], 1102
    %v2158 = vld [vmem:[%s2157] sm:$0x4]
    %vm2159 = vcmask 1042434
    %v2160 = vsel %vm2159, %v2158, %v2156
    %s2161 = scalar_lea.vmem [#allocation1], 1613
    %v2162 = vld [vmem:[%s2161] sm:$0x8]
    %vm2163 = vcmask 1043459
    %v2164 = vsel %vm2163, %v2162, %v2160
    %s2165 = scalar_lea.vmem [#allocation1], 204
    %v2166 = vld [vmem:[%s2165] sm:$0x10]
    %vm2167 = vcmask 1044484
    %v2168 = vsel %vm2167, %v2166, %v2164
    %s2169 = scalar_lea.vmem [#allocation1], 715
    %v2170 = vld [vmem:[%s2169] sm:$0x20]
    %vm2171 = vcmask 1045509
    %v2172 = vsel %vm2171, %v2170, %v2168
    %s2173 = scalar_lea.vmem [#allocation1], 1226
    %v2174 = vld [vmem:[%s2173] sm:$0x40]
    %vm2175 = vcmask 1046534
    %v2176 = vsel %vm2175, %v2174, %v2172
    %s2177 = scalar_lea.vmem [#allocation1], 1737
    %v2178 = vld [vmem:[%s2177] sm:$0x80]
    %vm2179 = vcmask 1047559
    %v2180 = vsel %vm2179, %v2178, %v2176
    %2181 = vrot.lane.b32.xlu0 %v2180, 80
    %v2182 = vpop.permute.xlu0 %2181
    %vm2183 = vcmask 687744
    %2184 = vst.msk [vmem:[#allocation0] sm:$0xf] %vm2183, %v2182
    %s2185 = scalar_lea.vmem [#allocation0], 4
    %2186 = vst.msk [vmem:[%s2185] sm:$0xf0] %vm2183, %v2182
    %s2187 = scalar_lea.vmem [#allocation1], 336
    %v2188 = vld [vmem:[%s2187] sm:$0x1]
    %s2189 = scalar_lea.vmem [#allocation1], 847
    %v2190 = vld [vmem:[%s2189] sm:$0x2]
    %vm2191 = vcmask 1041409
    %v2192 = vsel %vm2191, %v2190, %v2188
    %s2193 = scalar_lea.vmem [#allocation1], 1358
    %v2194 = vld [vmem:[%s2193] sm:$0x4]
    %vm2195 = vcmask 1042434
    %v2196 = vsel %vm2195, %v2194, %v2192
    %s2197 = scalar_lea.vmem [#allocation1], 1869
    %v2198 = vld [vmem:[%s2197] sm:$0x8]
    %vm2199 = vcmask 1043459
    %v2200 = vsel %vm2199, %v2198, %v2196
    %s2201 = scalar_lea.vmem [#allocation1], 460
    %v2202 = vld [vmem:[%s2201] sm:$0x10]
    %vm2203 = vcmask 1044484
    %v2204 = vsel %vm2203, %v2202, %v2200
    %s2205 = scalar_lea.vmem [#allocation1], 971
    %v2206 = vld [vmem:[%s2205] sm:$0x20]
    %vm2207 = vcmask 1045509
    %v2208 = vsel %vm2207, %v2206, %v2204
    %s2209 = scalar_lea.vmem [#allocation1], 1482
    %v2210 = vld [vmem:[%s2209] sm:$0x40]
    %vm2211 = vcmask 1046534
    %v2212 = vsel %vm2211, %v2210, %v2208
    %s2213 = scalar_lea.vmem [#allocation1], 1993
    %v2214 = vld [vmem:[%s2213] sm:$0x80]
    %vm2215 = vcmask 1047559
    %v2216 = vsel %vm2215, %v2214, %v2212
    %2217 = vrot.lane.b32.xlu0 %v2216, 80
    %v2218 = vpop.permute.xlu0 %2217
    %vm2219 = vcmask 687744
    %s2220 = scalar_lea.vmem [#allocation0], 16
    %2221 = vst.msk [vmem:[%s2220] sm:$0xf] %vm2219, %v2218
    %s2222 = scalar_lea.vmem [#allocation0], 20
    %2223 = vst.msk [vmem:[%s2222] sm:$0xf0] %vm2219, %v2218
    %s2224 = scalar_lea.vmem [#allocation1], 73
    %v2225 = vld [vmem:[%s2224] sm:$0x1]
    %s2226 = scalar_lea.vmem [#allocation1], 584
    %v2227 = vld [vmem:[%s2226] sm:$0x2]
    %vm2228 = vcmask 1041409
    %v2229 = vsel %vm2228, %v2227, %v2225
    %s2230 = scalar_lea.vmem [#allocation1], 1095
    %v2231 = vld [vmem:[%s2230] sm:$0x4]
    %vm2232 = vcmask 1042434
    %v2233 = vsel %vm2232, %v2231, %v2229
    %s2234 = scalar_lea.vmem [#allocation1], 1606
    %v2235 = vld [vmem:[%s2234] sm:$0x8]
    %vm2236 = vcmask 1043459
    %v2237 = vsel %vm2236, %v2235, %v2233
    %s2238 = scalar_lea.vmem [#allocation1], 197
    %v2239 = vld [vmem:[%s2238] sm:$0x10]
    %vm2240 = vcmask 1044484
    %v2241 = vsel %vm2240, %v2239, %v2237
    %s2242 = scalar_lea.vmem [#allocation1], 708
    %v2243 = vld [vmem:[%s2242] sm:$0x20]
    %vm2244 = vcmask 1045509
    %v2245 = vsel %vm2244, %v2243, %v2241
    %s2246 = scalar_lea.vmem [#allocation1], 1219
    %v2247 = vld [vmem:[%s2246] sm:$0x40]
    %vm2248 = vcmask 1046534
    %v2249 = vsel %vm2248, %v2247, %v2245
    %s2250 = scalar_lea.vmem [#allocation1], 1730
    %v2251 = vld [vmem:[%s2250] sm:$0x80]
    %vm2252 = vcmask 1047559
    %v2253 = vsel %vm2252, %v2251, %v2249
    %2254 = vrot.lane.b32.xlu0 %v2253, 76
    %v2255 = vpop.permute.xlu0 %2254
    %vm2256 = vcmask 654944
    %2257 = vst.msk [vmem:[#allocation0] sm:$0xf] %vm2256, %v2255
    %s2258 = scalar_lea.vmem [#allocation0], 4
    %2259 = vst.msk [vmem:[%s2258] sm:$0xf0] %vm2256, %v2255
    %s2260 = scalar_lea.vmem [#allocation1], 329
    %v2261 = vld [vmem:[%s2260] sm:$0x1]
    %s2262 = scalar_lea.vmem [#allocation1], 840
    %v2263 = vld [vmem:[%s2262] sm:$0x2]
    %vm2264 = vcmask 1041409
    %v2265 = vsel %vm2264, %v2263, %v2261
    %s2266 = scalar_lea.vmem [#allocation1], 1351
    %v2267 = vld [vmem:[%s2266] sm:$0x4]
    %vm2268 = vcmask 1042434
    %v2269 = vsel %vm2268, %v2267, %v2265
    %s2270 = scalar_lea.vmem [#allocation1], 1862
    %v2271 = vld [vmem:[%s2270] sm:$0x8]
    %vm2272 = vcmask 1043459
    %v2273 = vsel %vm2272, %v2271, %v2269
    %s2274 = scalar_lea.vmem [#allocation1], 453
    %v2275 = vld [vmem:[%s2274] sm:$0x10]
    %vm2276 = vcmask 1044484
    %v2277 = vsel %vm2276, %v2275, %v2273
    %s2278 = scalar_lea.vmem [#allocation1], 964
    %v2279 = vld [vmem:[%s2278] sm:$0x20]
    %vm2280 = vcmask 1045509
    %v2281 = vsel %vm2280, %v2279, %v2277
    %s2282 = scalar_lea.vmem [#allocation1], 1475
    %v2283 = vld [vmem:[%s2282] sm:$0x40]
    %vm2284 = vcmask 1046534
    %v2285 = vsel %vm2284, %v2283, %v2281
    %s2286 = scalar_lea.vmem [#allocation1], 1986
    %v2287 = vld [vmem:[%s2286] sm:$0x80]
    %vm2288 = vcmask 1047559
    %v2289 = vsel %vm2288, %v2287, %v2285
    %2290 = vrot.lane.b32.xlu0 %v2289, 76
    %v2291 = vpop.permute.xlu0 %2290
    %vm2292 = vcmask 654944
    %s2293 = scalar_lea.vmem [#allocation0], 16
    %2294 = vst.msk [vmem:[%s2293] sm:$0xf] %vm2292, %v2291
    %s2295 = scalar_lea.vmem [#allocation0], 20
    %2296 = vst.msk [vmem:[%s2295] sm:$0xf0] %vm2292, %v2291
    %s2297 = scalar_lea.vmem [#allocation1], 72
    %v2298 = vld [vmem:[%s2297] sm:$0x1]
    %s2299 = scalar_lea.vmem [#allocation1], 583
    %v2300 = vld [vmem:[%s2299] sm:$0x2]
    %vm2301 = vcmask 1041409
    %v2302 = vsel %vm2301, %v2300, %v2298
    %s2303 = scalar_lea.vmem [#allocation1], 1094
    %v2304 = vld [vmem:[%s2303] sm:$0x4]
    %vm2305 = vcmask 1042434
    %v2306 = vsel %vm2305, %v2304, %v2302
    %s2307 = scalar_lea.vmem [#allocation1], 1605
    %v2308 = vld [vmem:[%s2307] sm:$0x8]
    %vm2309 = vcmask 1043459
    %v2310 = vsel %vm2309, %v2308, %v2306
    %s2311 = scalar_lea.vmem [#allocation1], 196
    %v2312 = vld [vmem:[%s2311] sm:$0x10]
    %vm2313 = vcmask 1044484
    %v2314 = vsel %vm2313, %v2312, %v2310
    %s2315 = scalar_lea.vmem [#allocation1], 707
    %v2316 = vld [vmem:[%s2315] sm:$0x20]
    %vm2317 = vcmask 1045509
    %v2318 = vsel %vm2317, %v2316, %v2314
    %s2319 = scalar_lea.vmem [#allocation1], 1218
    %v2320 = vld [vmem:[%s2319] sm:$0x40]
    %vm2321 = vcmask 1046534
    %v2322 = vsel %vm2321, %v2320, %v2318
    %s2323 = scalar_lea.vmem [#allocation1], 1729
    %v2324 = vld [vmem:[%s2323] sm:$0x80]
    %vm2325 = vcmask 1047559
    %v2326 = vsel %vm2325, %v2324, %v2322
    %2327 = vrot.lane.b32.xlu0 %v2326, 72
    %v2328 = vpop.permute.xlu0 %2327
    %vm2329 = vcmask 622144
    %2330 = vst.msk [vmem:[#allocation0] sm:$0xf] %vm2329, %v2328
    %s2331 = scalar_lea.vmem [#allocation0], 4
    %2332 = vst.msk [vmem:[%s2331] sm:$0xf0] %vm2329, %v2328
    %s2333 = scalar_lea.vmem [#allocation1], 328
    %v2334 = vld [vmem:[%s2333] sm:$0x1]
    %s2335 = scalar_lea.vmem [#allocation1], 839
    %v2336 = vld [vmem:[%s2335] sm:$0x2]
    %vm2337 = vcmask 1041409
    %v2338 = vsel %vm2337, %v2336, %v2334
    %s2339 = scalar_lea.vmem [#allocation1], 1350
    %v2340 = vld [vmem:[%s2339] sm:$0x4]
    %vm2341 = vcmask 1042434
    %v2342 = vsel %vm2341, %v2340, %v2338
    %s2343 = scalar_lea.vmem [#allocation1], 1861
    %v2344 = vld [vmem:[%s2343] sm:$0x8]
    %vm2345 = vcmask 1043459
    %v2346 = vsel %vm2345, %v2344, %v2342
    %s2347 = scalar_lea.vmem [#allocation1], 452
    %v2348 = vld [vmem:[%s2347] sm:$0x10]
    %vm2349 = vcmask 1044484
    %v2350 = vsel %vm2349, %v2348, %v2346
    %s2351 = scalar_lea.vmem [#allocation1], 963
    %v2352 = vld [vmem:[%s2351] sm:$0x20]
    %vm2353 = vcmask 1045509
    %v2354 = vsel %vm2353, %v2352, %v2350
    %s2355 = scalar_lea.vmem [#allocation1], 1474
    %v2356 = vld [vmem:[%s2355] sm:$0x40]
    %vm2357 = vcmask 1046534
    %v2358 = vsel %vm2357, %v2356, %v2354
    %s2359 = scalar_lea.vmem [#allocation1], 1985
    %v2360 = vld [vmem:[%s2359] sm:$0x80]
    %vm2361 = vcmask 1047559
    %v2362 = vsel %vm2361, %v2360, %v2358
    %2363 = vrot.lane.b32.xlu0 %v2362, 72
    %v2364 = vpop.permute.xlu0 %2363
    %vm2365 = vcmask 622144
    %s2366 = scalar_lea.vmem [#allocation0], 16
    %2367 = vst.msk [vmem:[%s2366] sm:$0xf] %vm2365, %v2364
    %s2368 = scalar_lea.vmem [#allocation0], 20
    %2369 = vst.msk [vmem:[%s2368] sm:$0xf0] %vm2365, %v2364
    %s2370 = scalar_lea.vmem [#allocation1], 65
    %v2371 = vld [vmem:[%s2370] sm:$0x1]
    %s2372 = scalar_lea.vmem [#allocation1], 576
    %v2373 = vld [vmem:[%s2372] sm:$0x2]
    %vm2374 = vcmask 1041409
    %v2375 = vsel %vm2374, %v2373, %v2371
    %s2376 = scalar_lea.vmem [#allocation1], 1087
    %v2377 = vld [vmem:[%s2376] sm:$0x4]
    %vm2378 = vcmask 1042434
    %v2379 = vsel %vm2378, %v2377, %v2375
    %s2380 = scalar_lea.vmem [#allocation1], 1598
    %v2381 = vld [vmem:[%s2380] sm:$0x8]
    %vm2382 = vcmask 1043459
    %v2383 = vsel %vm2382, %v2381, %v2379
    %s2384 = scalar_lea.vmem [#allocation1], 189
    %v2385 = vld [vmem:[%s2384] sm:$0x10]
    %vm2386 = vcmask 1044484
    %v2387 = vsel %vm2386, %v2385, %v2383
    %s2388 = scalar_lea.vmem [#allocation1], 700
    %v2389 = vld [vmem:[%s2388] sm:$0x20]
    %vm2390 = vcmask 1045509
    %v2391 = vsel %vm2390, %v2389, %v2387
    %s2392 = scalar_lea.vmem [#allocation1], 1211
    %v2393 = vld [vmem:[%s2392] sm:$0x40]
    %vm2394 = vcmask 1046534
    %v2395 = vsel %vm2394, %v2393, %v2391
    %s2396 = scalar_lea.vmem [#allocation1], 1722
    %v2397 = vld [vmem:[%s2396] sm:$0x80]
    %vm2398 = vcmask 1047559
    %v2399 = vsel %vm2398, %v2397, %v2395
    %2400 = vrot.lane.b32.xlu0 %v2399, 68
    %v2401 = vpop.permute.xlu0 %2400
    %vm2402 = vcmask 589344
    %2403 = vst.msk [vmem:[#allocation0] sm:$0xf] %vm2402, %v2401
    %s2404 = scalar_lea.vmem [#allocation0], 4
    %2405 = vst.msk [vmem:[%s2404] sm:$0xf0] %vm2402, %v2401
    %s2406 = scalar_lea.vmem [#allocation1], 321
    %v2407 = vld [vmem:[%s2406] sm:$0x1]
    %s2408 = scalar_lea.vmem [#allocation1], 832
    %v2409 = vld [vmem:[%s2408] sm:$0x2]
    %vm2410 = vcmask 1041409
    %v2411 = vsel %vm2410, %v2409, %v2407
    %s2412 = scalar_lea.vmem [#allocation1], 1343
    %v2413 = vld [vmem:[%s2412] sm:$0x4]
    %vm2414 = vcmask 1042434
    %v2415 = vsel %vm2414, %v2413, %v2411
    %s2416 = scalar_lea.vmem [#allocation1], 1854
    %v2417 = vld [vmem:[%s2416] sm:$0x8]
    %vm2418 = vcmask 1043459
    %v2419 = vsel %vm2418, %v2417, %v2415
    %s2420 = scalar_lea.vmem [#allocation1], 445
    %v2421 = vld [vmem:[%s2420] sm:$0x10]
    %vm2422 = vcmask 1044484
    %v2423 = vsel %vm2422, %v2421, %v2419
    %s2424 = scalar_lea.vmem [#allocation1], 956
    %v2425 = vld [vmem:[%s2424] sm:$0x20]
    %vm2426 = vcmask 1045509
    %v2427 = vsel %vm2426, %v2425, %v2423
    %s2428 = scalar_lea.vmem [#allocation1], 1467
    %v2429 = vld [vmem:[%s2428] sm:$0x40]
    %vm2430 = vcmask 1046534
    %v2431 = vsel %vm2430, %v2429, %v2427
    %s2432 = scalar_lea.vmem [#allocation1], 1978
    %v2433 = vld [vmem:[%s2432] sm:$0x80]
    %vm2434 = vcmask 1047559
    %v2435 = vsel %vm2434, %v2433, %v2431
    %2436 = vrot.lane.b32.xlu0 %v2435, 68
    %v2437 = vpop.permute.xlu0 %2436
    %vm2438 = vcmask 589344
    %s2439 = scalar_lea.vmem [#allocation0], 16
    %2440 = vst.msk [vmem:[%s2439] sm:$0xf] %vm2438, %v2437
    %s2441 = scalar_lea.vmem [#allocation0], 20
    %2442 = vst.msk [vmem:[%s2441] sm:$0xf0] %vm2438, %v2437
    %s2443 = scalar_lea.vmem [#allocation1], 64
    %v2444 = vld [vmem:[%s2443] sm:$0x1]
    %s2445 = scalar_lea.vmem [#allocation1], 575
    %v2446 = vld [vmem:[%s2445] sm:$0x2]
    %vm2447 = vcmask 1041409
    %v2448 = vsel %vm2447, %v2446, %v2444
    %s2449 = scalar_lea.vmem [#allocation1], 1086
    %v2450 = vld [vmem:[%s2449] sm:$0x4]
    %vm2451 = vcmask 1042434
    %v2452 = vsel %vm2451, %v2450, %v2448
    %s2453 = scalar_lea.vmem [#allocation1], 1597
    %v2454 = vld [vmem:[%s2453] sm:$0x8]
    %vm2455 = vcmask 1043459
    %v2456 = vsel %vm2455, %v2454, %v2452
    %s2457 = scalar_lea.vmem [#allocation1], 188
    %v2458 = vld [vmem:[%s2457] sm:$0x10]
    %vm2459 = vcmask 1044484
    %v2460 = vsel %vm2459, %v2458, %v2456
    %s2461 = scalar_lea.vmem [#allocation1], 699
    %v2462 = vld [vmem:[%s2461] sm:$0x20]
    %vm2463 = vcmask 1045509
    %v2464 = vsel %vm2463, %v2462, %v2460
    %s2465 = scalar_lea.vmem [#allocation1], 1210
    %v2466 = vld [vmem:[%s2465] sm:$0x40]
    %vm2467 = vcmask 1046534
    %v2468 = vsel %vm2467, %v2466, %v2464
    %s2469 = scalar_lea.vmem [#allocation1], 1721
    %v2470 = vld [vmem:[%s2469] sm:$0x80]
    %vm2471 = vcmask 1047559
    %v2472 = vsel %vm2471, %v2470, %v2468
    %2473 = vrot.lane.b32.xlu0 %v2472, 64
    %v2474 = vpop.permute.xlu0 %2473
    %vm2475 = vcmask 556544
    %2476 = vst.msk [vmem:[#allocation0] sm:$0xf] %vm2475, %v2474
    %s2477 = scalar_lea.vmem [#allocation0], 4
    %2478 = vst.msk [vmem:[%s2477] sm:$0xf0] %vm2475, %v2474
    %s2479 = scalar_lea.vmem [#allocation1], 320
    %v2480 = vld [vmem:[%s2479] sm:$0x1]
    %s2481 = scalar_lea.vmem [#allocation1], 831
    %v2482 = vld [vmem:[%s2481] sm:$0x2]
    %vm2483 = vcmask 1041409
    %v2484 = vsel %vm2483, %v2482, %v2480
    %s2485 = scalar_lea.vmem [#allocation1], 1342
    %v2486 = vld [vmem:[%s2485] sm:$0x4]
    %vm2487 = vcmask 1042434
    %v2488 = vsel %vm2487, %v2486, %v2484
    %s2489 = scalar_lea.vmem [#allocation1], 1853
    %v2490 = vld [vmem:[%s2489] sm:$0x8]
    %vm2491 = vcmask 1043459
    %v2492 = vsel %vm2491, %v2490, %v2488
    %s2493 = scalar_lea.vmem [#allocation1], 444
    %v2494 = vld [vmem:[%s2493] sm:$0x10]
    %vm2495 = vcmask 1044484
    %v2496 = vsel %vm2495, %v2494, %v2492
    %s2497 = scalar_lea.vmem [#allocation1], 955
    %v2498 = vld [vmem:[%s2497] sm:$0x20]
    %vm2499 = vcmask 1045509
    %v2500 = vsel %vm2499, %v2498, %v2496
    %s2501 = scalar_lea.vmem [#allocation1], 1466
    %v2502 = vld [vmem:[%s2501] sm:$0x40]
    %vm2503 = vcmask 1046534
    %v2504 = vsel %vm2503, %v2502, %v2500
    %s2505 = scalar_lea.vmem [#allocation1], 1977
    %v2506 = vld [vmem:[%s2505] sm:$0x80]
    %vm2507 = vcmask 1047559
    %v2508 = vsel %vm2507, %v2506, %v2504
    %2509 = vrot.lane.b32.xlu0 %v2508, 64
    %v2510 = vpop.permute.xlu0 %2509
    %vm2511 = vcmask 556544
    %s2512 = scalar_lea.vmem [#allocation0], 16
    %2513 = vst.msk [vmem:[%s2512] sm:$0xf] %vm2511, %v2510
    %s2514 = scalar_lea.vmem [#allocation0], 20
    %2515 = vst.msk [vmem:[%s2514] sm:$0xf0] %vm2511, %v2510
    %s2516 = scalar_lea.vmem [#allocation1], 57
    %v2517 = vld [vmem:[%s2516] sm:$0x1]
    %s2518 = scalar_lea.vmem [#allocation1], 568
    %v2519 = vld [vmem:[%s2518] sm:$0x2]
    %vm2520 = vcmask 1041409
    %v2521 = vsel %vm2520, %v2519, %v2517
    %s2522 = scalar_lea.vmem [#allocation1], 1079
    %v2523 = vld [vmem:[%s2522] sm:$0x4]
    %vm2524 = vcmask 1042434
    %v2525 = vsel %vm2524, %v2523, %v2521
    %s2526 = scalar_lea.vmem [#allocation1], 1590
    %v2527 = vld [vmem:[%s2526] sm:$0x8]
    %vm2528 = vcmask 1043459
    %v2529 = vsel %vm2528, %v2527, %v2525
    %s2530 = scalar_lea.vmem [#allocation1], 181
    %v2531 = vld [vmem:[%s2530] sm:$0x10]
    %vm2532 = vcmask 1044484
    %v2533 = vsel %vm2532, %v2531, %v2529
    %s2534 = scalar_lea.vmem [#allocation1], 692
    %v2535 = vld [vmem:[%s2534] sm:$0x20]
    %vm2536 = vcmask 1045509
    %v2537 = vsel %vm2536, %v2535, %v2533
    %s2538 = scalar_lea.vmem [#allocation1], 1203
    %v2539 = vld [vmem:[%s2538] sm:$0x40]
    %vm2540 = vcmask 1046534
    %v2541 = vsel %vm2540, %v2539, %v2537
    %s2542 = scalar_lea.vmem [#allocation1], 1714
    %v2543 = vld [vmem:[%s2542] sm:$0x80]
    %vm2544 = vcmask 1047559
    %v2545 = vsel %vm2544, %v2543, %v2541
    %2546 = vrot.lane.b32.xlu0 %v2545, 60
    %v2547 = vpop.permute.xlu0 %2546
    %vm2548 = vcmask 523744
    %2549 = vst.msk [vmem:[#allocation0] sm:$0xf] %vm2548, %v2547
    %s2550 = scalar_lea.vmem [#allocation0], 4
    %2551 = vst.msk [vmem:[%s2550] sm:$0xf0] %vm2548, %v2547
    %s2552 = scalar_lea.vmem [#allocation1], 313
    %v2553 = vld [vmem:[%s2552] sm:$0x1]
    %s2554 = scalar_lea.vmem [#allocation1], 824
    %v2555 = vld [vmem:[%s2554] sm:$0x2]
    %vm2556 = vcmask 1041409
    %v2557 = vsel %vm2556, %v2555, %v2553
    %s2558 = scalar_lea.vmem [#allocation1], 1335
    %v2559 = vld [vmem:[%s2558] sm:$0x4]
    %vm2560 = vcmask 1042434
    %v2561 = vsel %vm2560, %v2559, %v2557
    %s2562 = scalar_lea.vmem [#allocation1], 1846
    %v2563 = vld [vmem:[%s2562] sm:$0x8]
    %vm2564 = vcmask 1043459
    %v2565 = vsel %vm2564, %v2563, %v2561
    %s2566 = scalar_lea.vmem [#allocation1], 437
    %v2567 = vld [vmem:[%s2566] sm:$0x10]
    %vm2568 = vcmask 1044484
    %v2569 = vsel %vm2568, %v2567, %v2565
    %s2570 = scalar_lea.vmem [#allocation1], 948
    %v2571 = vld [vmem:[%s2570] sm:$0x20]
    %vm2572 = vcmask 1045509
    %v2573 = vsel %vm2572, %v2571, %v2569
    %s2574 = scalar_lea.vmem [#allocation1], 1459
    %v2575 = vld [vmem:[%s2574] sm:$0x40]
    %vm2576 = vcmask 1046534
    %v2577 = vsel %vm2576, %v2575, %v2573
    %s2578 = scalar_lea.vmem [#allocation1], 1970
    %v2579 = vld [vmem:[%s2578] sm:$0x80]
    %vm2580 = vcmask 1047559
    %v2581 = vsel %vm2580, %v2579, %v2577
    %2582 = vrot.lane.b32.xlu0 %v2581, 60
    %v2583 = vpop.permute.xlu0 %2582
    %vm2584 = vcmask 523744
    %s2585 = scalar_lea.vmem [#allocation0], 16
    %2586 = vst.msk [vmem:[%s2585] sm:$0xf] %vm2584, %v2583
    %s2587 = scalar_lea.vmem [#allocation0], 20
    %2588 = vst.msk [vmem:[%s2587] sm:$0xf0] %vm2584, %v2583
    %s2589 = scalar_lea.vmem [#allocation1], 56
    %v2590 = vld [vmem:[%s2589] sm:$0x1]
    %s2591 = scalar_lea.vmem [#allocation1], 567
    %v2592 = vld [vmem:[%s2591] sm:$0x2]
    %vm2593 = vcmask 1041409
    %v2594 = vsel %vm2593, %v2592, %v2590
    %s2595 = scalar_lea.vmem [#allocation1], 1078
    %v2596 = vld [vmem:[%s2595] sm:$0x4]
    %vm2597 = vcmask 1042434
    %v2598 = vsel %vm2597, %v2596, %v2594
    %s2599 = scalar_lea.vmem [#allocation1], 1589
    %v2600 = vld [vmem:[%s2599] sm:$0x8]
    %vm2601 = vcmask 1043459
    %v2602 = vsel %vm2601, %v2600, %v2598
    %s2603 = scalar_lea.vmem [#allocation1], 180
    %v2604 = vld [vmem:[%s2603] sm:$0x10]
    %vm2605 = vcmask 1044484
    %v2606 = vsel %vm2605, %v2604, %v2602
    %s2607 = scalar_lea.vmem [#allocation1], 691
    %v2608 = vld [vmem:[%s2607] sm:$0x20]
    %vm2609 = vcmask 1045509
    %v2610 = vsel %vm2609, %v2608, %v2606
    %s2611 = scalar_lea.vmem [#allocation1], 1202
    %v2612 = vld [vmem:[%s2611] sm:$0x40]
    %vm2613 = vcmask 1046534
    %v2614 = vsel %vm2613, %v2612, %v2610
    %s2615 = scalar_lea.vmem [#allocation1], 1713
    %v2616 = vld [vmem:[%s2615] sm:$0x80]
    %vm2617 = vcmask 1047559
    %v2618 = vsel %vm2617, %v2616, %v2614
    %2619 = vrot.lane.b32.xlu0 %v2618, 56
    %v2620 = vpop.permute.xlu0 %2619
    %vm2621 = vcmask 490944
    %2622 = vst.msk [vmem:[#allocation0] sm:$0xf] %vm2621, %v2620
    %s2623 = scalar_lea.vmem [#allocation0], 4
    %2624 = vst.msk [vmem:[%s2623] sm:$0xf0] %vm2621, %v2620
    %s2625 = scalar_lea.vmem [#allocation1], 312
    %v2626 = vld [vmem:[%s2625] sm:$0x1]
    %s2627 = scalar_lea.vmem [#allocation1], 823
    %v2628 = vld [vmem:[%s2627] sm:$0x2]
    %vm2629 = vcmask 1041409
    %v2630 = vsel %vm2629, %v2628, %v2626
    %s2631 = scalar_lea.vmem [#allocation1], 1334
    %v2632 = vld [vmem:[%s2631] sm:$0x4]
    %vm2633 = vcmask 1042434
    %v2634 = vsel %vm2633, %v2632, %v2630
    %s2635 = scalar_lea.vmem [#allocation1], 1845
    %v2636 = vld [vmem:[%s2635] sm:$0x8]
    %vm2637 = vcmask 1043459
    %v2638 = vsel %vm2637, %v2636, %v2634
    %s2639 = scalar_lea.vmem [#allocation1], 436
    %v2640 = vld [vmem:[%s2639] sm:$0x10]
    %vm2641 = vcmask 1044484
    %v2642 = vsel %vm2641, %v2640, %v2638
    %s2643 = scalar_lea.vmem [#allocation1], 947
    %v2644 = vld [vmem:[%s2643] sm:$0x20]
    %vm2645 = vcmask 1045509
    %v2646 = vsel %vm2645, %v2644, %v2642
    %s2647 = scalar_lea.vmem [#allocation1], 1458
    %v2648 = vld [vmem:[%s2647] sm:$0x40]
    %vm2649 = vcmask 1046534
    %v2650 = vsel %vm2649, %v2648, %v2646
    %s2651 = scalar_lea.vmem [#allocation1], 1969
    %v2652 = vld [vmem:[%s2651] sm:$0x80]
    %vm2653 = vcmask 1047559
    %v2654 = vsel %vm2653, %v2652, %v2650
    %2655 = vrot.lane.b32.xlu0 %v2654, 56
    %v2656 = vpop.permute.xlu0 %2655
    %vm2657 = vcmask 490944
    %s2658 = scalar_lea.vmem [#allocation0], 16
    %2659 = vst.msk [vmem:[%s2658] sm:$0xf] %vm2657, %v2656
    %s2660 = scalar_lea.vmem [#allocation0], 20
    %2661 = vst.msk [vmem:[%s2660] sm:$0xf0] %vm2657, %v2656
    %s2662 = scalar_lea.vmem [#allocation1], 49
    %v2663 = vld [vmem:[%s2662] sm:$0x1]
    %s2664 = scalar_lea.vmem [#allocation1], 560
    %v2665 = vld [vmem:[%s2664] sm:$0x2]
    %vm2666 = vcmask 1041409
    %v2667 = vsel %vm2666, %v2665, %v2663
    %s2668 = scalar_lea.vmem [#allocation1], 1071
    %v2669 = vld [vmem:[%s2668] sm:$0x4]
    %vm2670 = vcmask 1042434
    %v2671 = vsel %vm2670, %v2669, %v2667
    %s2672 = scalar_lea.vmem [#allocation1], 1582
    %v2673 = vld [vmem:[%s2672] sm:$0x8]
    %vm2674 = vcmask 1043459
    %v2675 = vsel %vm2674, %v2673, %v2671
    %s2676 = scalar_lea.vmem [#allocation1], 173
    %v2677 = vld [vmem:[%s2676] sm:$0x10]
    %vm2678 = vcmask 1044484
    %v2679 = vsel %vm2678, %v2677, %v2675
    %s2680 = scalar_lea.vmem [#allocation1], 684
    %v2681 = vld [vmem:[%s2680] sm:$0x20]
    %vm2682 = vcmask 1045509
    %v2683 = vsel %vm2682, %v2681, %v2679
    %s2684 = scalar_lea.vmem [#allocation1], 1195
    %v2685 = vld [vmem:[%s2684] sm:$0x40]
    %vm2686 = vcmask 1046534
    %v2687 = vsel %vm2686, %v2685, %v2683
    %s2688 = scalar_lea.vmem [#allocation1], 1706
    %v2689 = vld [vmem:[%s2688] sm:$0x80]
    %vm2690 = vcmask 1047559
    %v2691 = vsel %vm2690, %v2689, %v2687
    %2692 = vrot.lane.b32.xlu0 %v2691, 52
    %v2693 = vpop.permute.xlu0 %2692
    %vm2694 = vcmask 458144
    %2695 = vst.msk [vmem:[#allocation0] sm:$0xf] %vm2694, %v2693
    %s2696 = scalar_lea.vmem [#allocation0], 4
    %2697 = vst.msk [vmem:[%s2696] sm:$0xf0] %vm2694, %v2693
    %s2698 = scalar_lea.vmem [#allocation1], 305
    %v2699 = vld [vmem:[%s2698] sm:$0x1]
    %s2700 = scalar_lea.vmem [#allocation1], 816
    %v2701 = vld [vmem:[%s2700] sm:$0x2]
    %vm2702 = vcmask 1041409
    %v2703 = vsel %vm2702, %v2701, %v2699
    %s2704 = scalar_lea.vmem [#allocation1], 1327
    %v2705 = vld [vmem:[%s2704] sm:$0x4]
    %vm2706 = vcmask 1042434
    %v2707 = vsel %vm2706, %v2705, %v2703
    %s2708 = scalar_lea.vmem [#allocation1], 1838
    %v2709 = vld [vmem:[%s2708] sm:$0x8]
    %vm2710 = vcmask 1043459
    %v2711 = vsel %vm2710, %v2709, %v2707
    %s2712 = scalar_lea.vmem [#allocation1], 429
    %v2713 = vld [vmem:[%s2712] sm:$0x10]
    %vm2714 = vcmask 1044484
    %v2715 = vsel %vm2714, %v2713, %v2711
    %s2716 = scalar_lea.vmem [#allocation1], 940
    %v2717 = vld [vmem:[%s2716] sm:$0x20]
    %vm2718 = vcmask 1045509
    %v2719 = vsel %vm2718, %v2717, %v2715
    %s2720 = scalar_lea.vmem [#allocation1], 1451
    %v2721 = vld [vmem:[%s2720] sm:$0x40]
    %vm2722 = vcmask 1046534
    %v2723 = vsel %vm2722, %v2721, %v2719
    %s2724 = scalar_lea.vmem [#allocation1], 1962
    %v2725 = vld [vmem:[%s2724] sm:$0x80]
    %vm2726 = vcmask 1047559
    %v2727 = vsel %vm2726, %v2725, %v2723
    %2728 = vrot.lane.b32.xlu0 %v2727, 52
    %v2729 = vpop.permute.xlu0 %2728
    %vm2730 = vcmask 458144
    %s2731 = scalar_lea.vmem [#allocation0], 16
    %2732 = vst.msk [vmem:[%s2731] sm:$0xf] %vm2730, %v2729
    %s2733 = scalar_lea.vmem [#allocation0], 20
    %2734 = vst.msk [vmem:[%s2733] sm:$0xf0] %vm2730, %v2729
    %s2735 = scalar_lea.vmem [#allocation1], 48
    %v2736 = vld [vmem:[%s2735] sm:$0x1]
    %s2737 = scalar_lea.vmem [#allocation1], 559
    %v2738 = vld [vmem:[%s2737] sm:$0x2]
    %vm2739 = vcmask 1041409
    %v2740 = vsel %vm2739, %v2738, %v2736
    %s2741 = scalar_lea.vmem [#allocation1], 1070
    %v2742 = vld [vmem:[%s2741] sm:$0x4]
    %vm2743 = vcmask 1042434
    %v2744 = vsel %vm2743, %v2742, %v2740
    %s2745 = scalar_lea.vmem [#allocation1], 1581
    %v2746 = vld [vmem:[%s2745] sm:$0x8]
    %vm2747 = vcmask 1043459
    %v2748 = vsel %vm2747, %v2746, %v2744
    %s2749 = scalar_lea.vmem [#allocation1], 172
    %v2750 = vld [vmem:[%s2749] sm:$0x10]
    %vm2751 = vcmask 1044484
    %v2752 = vsel %vm2751, %v2750, %v2748
    %s2753 = scalar_lea.vmem [#allocation1], 683
    %v2754 = vld [vmem:[%s2753] sm:$0x20]
    %vm2755 = vcmask 1045509
    %v2756 = vsel %vm2755, %v2754, %v2752
    %s2757 = scalar_lea.vmem [#allocation1], 1194
    %v2758 = vld [vmem:[%s2757] sm:$0x40]
    %vm2759 = vcmask 1046534
    %v2760 = vsel %vm2759, %v2758, %v2756
    %s2761 = scalar_lea.vmem [#allocation1], 1705
    %v2762 = vld [vmem:[%s2761] sm:$0x80]
    %vm2763 = vcmask 1047559
    %v2764 = vsel %vm2763, %v2762, %v2760
    %2765 = vrot.lane.b32.xlu0 %v2764, 48
    %v2766 = vpop.permute.xlu0 %2765
    %vm2767 = vcmask 425344
    %2768 = vst.msk [vmem:[#allocation0] sm:$0xf] %vm2767, %v2766
    %s2769 = scalar_lea.vmem [#allocation0], 4
    %2770 = vst.msk [vmem:[%s2769] sm:$0xf0] %vm2767, %v2766
    %s2771 = scalar_lea.vmem [#allocation1], 304
    %v2772 = vld [vmem:[%s2771] sm:$0x1]
    %s2773 = scalar_lea.vmem [#allocation1], 815
    %v2774 = vld [vmem:[%s2773] sm:$0x2]
    %vm2775 = vcmask 1041409
    %v2776 = vsel %vm2775, %v2774, %v2772
    %s2777 = scalar_lea.vmem [#allocation1], 1326
    %v2778 = vld [vmem:[%s2777] sm:$0x4]
    %vm2779 = vcmask 1042434
    %v2780 = vsel %vm2779, %v2778, %v2776
    %s2781 = scalar_lea.vmem [#allocation1], 1837
    %v2782 = vld [vmem:[%s2781] sm:$0x8]
    %vm2783 = vcmask 1043459
    %v2784 = vsel %vm2783, %v2782, %v2780
    %s2785 = scalar_lea.vmem [#allocation1], 428
    %v2786 = vld [vmem:[%s2785] sm:$0x10]
    %vm2787 = vcmask 1044484
    %v2788 = vsel %vm2787, %v2786, %v2784
    %s2789 = scalar_lea.vmem [#allocation1], 939
    %v2790 = vld [vmem:[%s2789] sm:$0x20]
    %vm2791 = vcmask 1045509
    %v2792 = vsel %vm2791, %v2790, %v2788
    %s2793 = scalar_lea.vmem [#allocation1], 1450
    %v2794 = vld [vmem:[%s2793] sm:$0x40]
    %vm2795 = vcmask 1046534
    %v2796 = vsel %vm2795, %v2794, %v2792
    %s2797 = scalar_lea.vmem [#allocation1], 1961
    %v2798 = vld [vmem:[%s2797] sm:$0x80]
    %vm2799 = vcmask 1047559
    %v2800 = vsel %vm2799, %v2798, %v2796
    %2801 = vrot.lane.b32.xlu0 %v2800, 48
    %v2802 = vpop.permute.xlu0 %2801
    %vm2803 = vcmask 425344
    %s2804 = scalar_lea.vmem [#allocation0], 16
    %2805 = vst.msk [vmem:[%s2804] sm:$0xf] %vm2803, %v2802
    %s2806 = scalar_lea.vmem [#allocation0], 20
    %2807 = vst.msk [vmem:[%s2806] sm:$0xf0] %vm2803, %v2802
    %s2808 = scalar_lea.vmem [#allocation1], 41
    %v2809 = vld [vmem:[%s2808] sm:$0x1]
    %s2810 = scalar_lea.vmem [#allocation1], 552
    %v2811 = vld [vmem:[%s2810] sm:$0x2]
    %vm2812 = vcmask 1041409
    %v2813 = vsel %vm2812, %v2811, %v2809
    %s2814 = scalar_lea.vmem [#allocation1], 1063
    %v2815 = vld [vmem:[%s2814] sm:$0x4]
    %vm2816 = vcmask 1042434
    %v2817 = vsel %vm2816, %v2815, %v2813
    %s2818 = scalar_lea.vmem [#allocation1], 1574
    %v2819 = vld [vmem:[%s2818] sm:$0x8]
    %vm2820 = vcmask 1043459
    %v2821 = vsel %vm2820, %v2819, %v2817
    %s2822 = scalar_lea.vmem [#allocation1], 165
    %v2823 = vld [vmem:[%s2822] sm:$0x10]
    %vm2824 = vcmask 1044484
    %v2825 = vsel %vm2824, %v2823, %v2821
    %s2826 = scalar_lea.vmem [#allocation1], 676
    %v2827 = vld [vmem:[%s2826] sm:$0x20]
    %vm2828 = vcmask 1045509
    %v2829 = vsel %vm2828, %v2827, %v2825
    %s2830 = scalar_lea.vmem [#allocation1], 1187
    %v2831 = vld [vmem:[%s2830] sm:$0x40]
    %vm2832 = vcmask 1046534
    %v2833 = vsel %vm2832, %v2831, %v2829
    %s2834 = scalar_lea.vmem [#allocation1], 1698
    %v2835 = vld [vmem:[%s2834] sm:$0x80]
    %vm2836 = vcmask 1047559
    %v2837 = vsel %vm2836, %v2835, %v2833
    %2838 = vrot.lane.b32.xlu0 %v2837, 44
    %v2839 = vpop.permute.xlu0 %2838
    %vm2840 = vcmask 392544
    %2841 = vst.msk [vmem:[#allocation0] sm:$0xf] %vm2840, %v2839
    %s2842 = scalar_lea.vmem [#allocation0], 4
    %2843 = vst.msk [vmem:[%s2842] sm:$0xf0] %vm2840, %v2839
    %s2844 = scalar_lea.vmem [#allocation1], 297
    %v2845 = vld [vmem:[%s2844] sm:$0x1]
    %s2846 = scalar_lea.vmem [#allocation1], 808
    %v2847 = vld [vmem:[%s2846] sm:$0x2]
    %vm2848 = vcmask 1041409
    %v2849 = vsel %vm2848, %v2847, %v2845
    %s2850 = scalar_lea.vmem [#allocation1], 1319
    %v2851 = vld [vmem:[%s2850] sm:$0x4]
    %vm2852 = vcmask 1042434
    %v2853 = vsel %vm2852, %v2851, %v2849
    %s2854 = scalar_lea.vmem [#allocation1], 1830
    %v2855 = vld [vmem:[%s2854] sm:$0x8]
    %vm2856 = vcmask 1043459
    %v2857 = vsel %vm2856, %v2855, %v2853
    %s2858 = scalar_lea.vmem [#allocation1], 421
    %v2859 = vld [vmem:[%s2858] sm:$0x10]
    %vm2860 = vcmask 1044484
    %v2861 = vsel %vm2860, %v2859, %v2857
    %s2862 = scalar_lea.vmem [#allocation1], 932
    %v2863 = vld [vmem:[%s2862] sm:$0x20]
    %vm2864 = vcmask 1045509
    %v2865 = vsel %vm2864, %v2863, %v2861
    %s2866 = scalar_lea.vmem [#allocation1], 1443
    %v2867 = vld [vmem:[%s2866] sm:$0x40]
    %vm2868 = vcmask 1046534
    %v2869 = vsel %vm2868, %v2867, %v2865
    %s2870 = scalar_lea.vmem [#allocation1], 1954
    %v2871 = vld [vmem:[%s2870] sm:$0x80]
    %vm2872 = vcmask 1047559
    %v2873 = vsel %vm2872, %v2871, %v2869
    %2874 = vrot.lane.b32.xlu0 %v2873, 44
    %v2875 = vpop.permute.xlu0 %2874
    %vm2876 = vcmask 392544
    %s2877 = scalar_lea.vmem [#allocation0], 16
    %2878 = vst.msk [vmem:[%s2877] sm:$0xf] %vm2876, %v2875
    %s2879 = scalar_lea.vmem [#allocation0], 20
    %2880 = vst.msk [vmem:[%s2879] sm:$0xf0] %vm2876, %v2875
    %s2881 = scalar_lea.vmem [#allocation1], 40
    %v2882 = vld [vmem:[%s2881] sm:$0x1]
    %s2883 = scalar_lea.vmem [#allocation1], 551
    %v2884 = vld [vmem:[%s2883] sm:$0x2]
    %vm2885 = vcmask 1041409
    %v2886 = vsel %vm2885, %v2884, %v2882
    %s2887 = scalar_lea.vmem [#allocation1], 1062
    %v2888 = vld [vmem:[%s2887] sm:$0x4]
    %vm2889 = vcmask 1042434
    %v2890 = vsel %vm2889, %v2888, %v2886
    %s2891 = scalar_lea.vmem [#allocation1], 1573
    %v2892 = vld [vmem:[%s2891] sm:$0x8]
    %vm2893 = vcmask 1043459
    %v2894 = vsel %vm2893, %v2892, %v2890
    %s2895 = scalar_lea.vmem [#allocation1], 164
    %v2896 = vld [vmem:[%s2895] sm:$0x10]
    %vm2897 = vcmask 1044484
    %v2898 = vsel %vm2897, %v2896, %v2894
    %s2899 = scalar_lea.vmem [#allocation1], 675
    %v2900 = vld [vmem:[%s2899] sm:$0x20]
    %vm2901 = vcmask 1045509
    %v2902 = vsel %vm2901, %v2900, %v2898
    %s2903 = scalar_lea.vmem [#allocation1], 1186
    %v2904 = vld [vmem:[%s2903] sm:$0x40]
    %vm2905 = vcmask 1046534
    %v2906 = vsel %vm2905, %v2904, %v2902
    %s2907 = scalar_lea.vmem [#allocation1], 1697
    %v2908 = vld [vmem:[%s2907] sm:$0x80]
    %vm2909 = vcmask 1047559
    %v2910 = vsel %vm2909, %v2908, %v2906
    %2911 = vrot.lane.b32.xlu0 %v2910, 40
    %v2912 = vpop.permute.xlu0 %2911
    %vm2913 = vcmask 359744
    %2914 = vst.msk [vmem:[#allocation0] sm:$0xf] %vm2913, %v2912
    %s2915 = scalar_lea.vmem [#allocation0], 4
    %2916 = vst.msk [vmem:[%s2915] sm:$0xf0] %vm2913, %v2912
    %s2917 = scalar_lea.vmem [#allocation1], 296
    %v2918 = vld [vmem:[%s2917] sm:$0x1]
    %s2919 = scalar_lea.vmem [#allocation1], 807
    %v2920 = vld [vmem:[%s2919] sm:$0x2]
    %vm2921 = vcmask 1041409
    %v2922 = vsel %vm2921, %v2920, %v2918
    %s2923 = scalar_lea.vmem [#allocation1], 1318
    %v2924 = vld [vmem:[%s2923] sm:$0x4]
    %vm2925 = vcmask 1042434
    %v2926 = vsel %vm2925, %v2924, %v2922
    %s2927 = scalar_lea.vmem [#allocation1], 1829
    %v2928 = vld [vmem:[%s2927] sm:$0x8]
    %vm2929 = vcmask 1043459
    %v2930 = vsel %vm2929, %v2928, %v2926
    %s2931 = scalar_lea.vmem [#allocation1], 420
    %v2932 = vld [vmem:[%s2931] sm:$0x10]
    %vm2933 = vcmask 1044484
    %v2934 = vsel %vm2933, %v2932, %v2930
    %s2935 = scalar_lea.vmem [#allocation1], 931
    %v2936 = vld [vmem:[%s2935] sm:$0x20]
    %vm2937 = vcmask 1045509
    %v2938 = vsel %vm2937, %v2936, %v2934
    %s2939 = scalar_lea.vmem [#allocation1], 1442
    %v2940 = vld [vmem:[%s2939] sm:$0x40]
    %vm2941 = vcmask 1046534
    %v2942 = vsel %vm2941, %v2940, %v2938
    %s2943 = scalar_lea.vmem [#allocation1], 1953
    %v2944 = vld [vmem:[%s2943] sm:$0x80]
    %vm2945 = vcmask 1047559
    %v2946 = vsel %vm2945, %v2944, %v2942
    %2947 = vrot.lane.b32.xlu0 %v2946, 40
    %v2948 = vpop.permute.xlu0 %2947
    %vm2949 = vcmask 359744
    %s2950 = scalar_lea.vmem [#allocation0], 16
    %2951 = vst.msk [vmem:[%s2950] sm:$0xf] %vm2949, %v2948
    %s2952 = scalar_lea.vmem [#allocation0], 20
    %2953 = vst.msk [vmem:[%s2952] sm:$0xf0] %vm2949, %v2948
    %s2954 = scalar_lea.vmem [#allocation1], 33
    %v2955 = vld [vmem:[%s2954] sm:$0x1]
    %s2956 = scalar_lea.vmem [#allocation1], 544
    %v2957 = vld [vmem:[%s2956] sm:$0x2]
    %vm2958 = vcmask 1041409
    %v2959 = vsel %vm2958, %v2957, %v2955
    %s2960 = scalar_lea.vmem [#allocation1], 1055
    %v2961 = vld [vmem:[%s2960] sm:$0x4]
    %vm2962 = vcmask 1042434
    %v2963 = vsel %vm2962, %v2961, %v2959
    %s2964 = scalar_lea.vmem [#allocation1], 1566
    %v2965 = vld [vmem:[%s2964] sm:$0x8]
    %vm2966 = vcmask 1043459
    %v2967 = vsel %vm2966, %v2965, %v2963
    %s2968 = scalar_lea.vmem [#allocation1], 157
    %v2969 = vld [vmem:[%s2968] sm:$0x10]
    %vm2970 = vcmask 1044484
    %v2971 = vsel %vm2970, %v2969, %v2967
    %s2972 = scalar_lea.vmem [#allocation1], 668
    %v2973 = vld [vmem:[%s2972] sm:$0x20]
    %vm2974 = vcmask 1045509
    %v2975 = vsel %vm2974, %v2973, %v2971
    %s2976 = scalar_lea.vmem [#allocation1], 1179
    %v2977 = vld [vmem:[%s2976] sm:$0x40]
    %vm2978 = vcmask 1046534
    %v2979 = vsel %vm2978, %v2977, %v2975
    %s2980 = scalar_lea.vmem [#allocation1], 1690
    %v2981 = vld [vmem:[%s2980] sm:$0x80]
    %vm2982 = vcmask 1047559
    %v2983 = vsel %vm2982, %v2981, %v2979
    %2984 = vrot.lane.b32.xlu0 %v2983, 36
    %v2985 = vpop.permute.xlu0 %2984
    %vm2986 = vcmask 326944
    %2987 = vst.msk [vmem:[#allocation0] sm:$0xf] %vm2986, %v2985
    %s2988 = scalar_lea.vmem [#allocation0], 4
    %2989 = vst.msk [vmem:[%s2988] sm:$0xf0] %vm2986, %v2985
    %s2990 = scalar_lea.vmem [#allocation1], 289
    %v2991 = vld [vmem:[%s2990] sm:$0x1]
    %s2992 = scalar_lea.vmem [#allocation1], 800
    %v2993 = vld [vmem:[%s2992] sm:$0x2]
    %vm2994 = vcmask 1041409
    %v2995 = vsel %vm2994, %v2993, %v2991
    %s2996 = scalar_lea.vmem [#allocation1], 1311
    %v2997 = vld [vmem:[%s2996] sm:$0x4]
    %vm2998 = vcmask 1042434
    %v2999 = vsel %vm2998, %v2997, %v2995
    %s3000 = scalar_lea.vmem [#allocation1], 1822
    %v3001 = vld [vmem:[%s3000] sm:$0x8]
    %vm3002 = vcmask 1043459
    %v3003 = vsel %vm3002, %v3001, %v2999
    %s3004 = scalar_lea.vmem [#allocation1], 413
    %v3005 = vld [vmem:[%s3004] sm:$0x10]
    %vm3006 = vcmask 1044484
    %v3007 = vsel %vm3006, %v3005, %v3003
    %s3008 = scalar_lea.vmem [#allocation1], 924
    %v3009 = vld [vmem:[%s3008] sm:$0x20]
    %vm3010 = vcmask 1045509
    %v3011 = vsel %vm3010, %v3009, %v3007
    %s3012 = scalar_lea.vmem [#allocation1], 1435
    %v3013 = vld [vmem:[%s3012] sm:$0x40]
    %vm3014 = vcmask 1046534
    %v3015 = vsel %vm3014, %v3013, %v3011
    %s3016 = scalar_lea.vmem [#allocation1], 1946
    %v3017 = vld [vmem:[%s3016] sm:$0x80]
    %vm3018 = vcmask 1047559
    %v3019 = vsel %vm3018, %v3017, %v3015
    %3020 = vrot.lane.b32.xlu0 %v3019, 36
    %v3021 = vpop.permute.xlu0 %3020
    %vm3022 = vcmask 326944
    %s3023 = scalar_lea.vmem [#allocation0], 16
    %3024 = vst.msk [vmem:[%s3023] sm:$0xf] %vm3022, %v3021
    %s3025 = scalar_lea.vmem [#allocation0], 20
    %3026 = vst.msk [vmem:[%s3025] sm:$0xf0] %vm3022, %v3021
    %s3027 = scalar_lea.vmem [#allocation1], 32
    %v3028 = vld [vmem:[%s3027] sm:$0x1]
    %s3029 = scalar_lea.vmem [#allocation1], 543
    %v3030 = vld [vmem:[%s3029] sm:$0x2]
    %vm3031 = vcmask 1041409
    %v3032 = vsel %vm3031, %v3030, %v3028
    %s3033 = scalar_lea.vmem [#allocation1], 1054
    %v3034 = vld [vmem:[%s3033] sm:$0x4]
    %vm3035 = vcmask 1042434
    %v3036 = vsel %vm3035, %v3034, %v3032
    %s3037 = scalar_lea.vmem [#allocation1], 1565
    %v3038 = vld [vmem:[%s3037] sm:$0x8]
    %vm3039 = vcmask 1043459
    %v3040 = vsel %vm3039, %v3038, %v3036
    %s3041 = scalar_lea.vmem [#allocation1], 156
    %v3042 = vld [vmem:[%s3041] sm:$0x10]
    %vm3043 = vcmask 1044484
    %v3044 = vsel %vm3043, %v3042, %v3040
    %s3045 = scalar_lea.vmem [#allocation1], 667
    %v3046 = vld [vmem:[%s3045] sm:$0x20]
    %vm3047 = vcmask 1045509
    %v3048 = vsel %vm3047, %v3046, %v3044
    %s3049 = scalar_lea.vmem [#allocation1], 1178
    %v3050 = vld [vmem:[%s3049] sm:$0x40]
    %vm3051 = vcmask 1046534
    %v3052 = vsel %vm3051, %v3050, %v3048
    %s3053 = scalar_lea.vmem [#allocation1], 1689
    %v3054 = vld [vmem:[%s3053] sm:$0x80]
    %vm3055 = vcmask 1047559
    %v3056 = vsel %vm3055, %v3054, %v3052
    %3057 = vrot.lane.b32.xlu0 %v3056, 32
    %v3058 = vpop.permute.xlu0 %3057
    %vm3059 = vcmask 294144
    %3060 = vst.msk [vmem:[#allocation0] sm:$0xf] %vm3059, %v3058
    %s3061 = scalar_lea.vmem [#allocation0], 4
    %3062 = vst.msk [vmem:[%s3061] sm:$0xf0] %vm3059, %v3058
    %s3063 = scalar_lea.vmem [#allocation1], 288
    %v3064 = vld [vmem:[%s3063] sm:$0x1]
    %s3065 = scalar_lea.vmem [#allocation1], 799
    %v3066 = vld [vmem:[%s3065] sm:$0x2]
    %vm3067 = vcmask 1041409
    %v3068 = vsel %vm3067, %v3066, %v3064
    %s3069 = scalar_lea.vmem [#allocation1], 1310
    %v3070 = vld [vmem:[%s3069] sm:$0x4]
    %vm3071 = vcmask 1042434
    %v3072 = vsel %vm3071, %v3070, %v3068
    %s3073 = scalar_lea.vmem [#allocation1], 1821
    %v3074 = vld [vmem:[%s3073] sm:$0x8]
    %vm3075 = vcmask 1043459
    %v3076 = vsel %vm3075, %v3074, %v3072
    %s3077 = scalar_lea.vmem [#allocation1], 412
    %v3078 = vld [vmem:[%s3077] sm:$0x10]
    %vm3079 = vcmask 1044484
    %v3080 = vsel %vm3079, %v3078, %v3076
    %s3081 = scalar_lea.vmem [#allocation1], 923
    %v3082 = vld [vmem:[%s3081] sm:$0x20]
    %vm3083 = vcmask 1045509
    %v3084 = vsel %vm3083, %v3082, %v3080
    %s3085 = scalar_lea.vmem [#allocation1], 1434
    %v3086 = vld [vmem:[%s3085] sm:$0x40]
    %vm3087 = vcmask 1046534
    %v3088 = vsel %vm3087, %v3086, %v3084
    %s3089 = scalar_lea.vmem [#allocation1], 1945
    %v3090 = vld [vmem:[%s3089] sm:$0x80]
    %vm3091 = vcmask 1047559
    %v3092 = vsel %vm3091, %v3090, %v3088
    %3093 = vrot.lane.b32.xlu0 %v3092, 32
    %v3094 = vpop.permute.xlu0 %3093
    %vm3095 = vcmask 294144
    %s3096 = scalar_lea.vmem [#allocation0], 16
    %3097 = vst.msk [vmem:[%s3096] sm:$0xf] %vm3095, %v3094
    %s3098 = scalar_lea.vmem [#allocation0], 20
    %3099 = vst.msk [vmem:[%s3098] sm:$0xf0] %vm3095, %v3094
    %s3100 = scalar_lea.vmem [#allocation1], 25
    %v3101 = vld [vmem:[%s3100] sm:$0x1]
    %s3102 = scalar_lea.vmem [#allocation1], 536
    %v3103 = vld [vmem:[%s3102] sm:$0x2]
    %vm3104 = vcmask 1041409
    %v3105 = vsel %vm3104, %v3103, %v3101
    %s3106 = scalar_lea.vmem [#allocation1], 1047
    %v3107 = vld [vmem:[%s3106] sm:$0x4]
    %vm3108 = vcmask 1042434
    %v3109 = vsel %vm3108, %v3107, %v3105
    %s3110 = scalar_lea.vmem [#allocation1], 1558
    %v3111 = vld [vmem:[%s3110] sm:$0x8]
    %vm3112 = vcmask 1043459
    %v3113 = vsel %vm3112, %v3111, %v3109
    %s3114 = scalar_lea.vmem [#allocation1], 149
    %v3115 = vld [vmem:[%s3114] sm:$0x10]
    %vm3116 = vcmask 1044484
    %v3117 = vsel %vm3116, %v3115, %v3113
    %s3118 = scalar_lea.vmem [#allocation1], 660
    %v3119 = vld [vmem:[%s3118] sm:$0x20]
    %vm3120 = vcmask 1045509
    %v3121 = vsel %vm3120, %v3119, %v3117
    %s3122 = scalar_lea.vmem [#allocation1], 1171
    %v3123 = vld [vmem:[%s3122] sm:$0x40]
    %vm3124 = vcmask 1046534
    %v3125 = vsel %vm3124, %v3123, %v3121
    %s3126 = scalar_lea.vmem [#allocation1], 1682
    %v3127 = vld [vmem:[%s3126] sm:$0x80]
    %vm3128 = vcmask 1047559
    %v3129 = vsel %vm3128, %v3127, %v3125
    %3130 = vrot.lane.b32.xlu0 %v3129, 28
    %v3131 = vpop.permute.xlu0 %3130
    %vm3132 = vcmask 261344
    %3133 = vst.msk [vmem:[#allocation0] sm:$0xf] %vm3132, %v3131
    %s3134 = scalar_lea.vmem [#allocation0], 4
    %3135 = vst.msk [vmem:[%s3134] sm:$0xf0] %vm3132, %v3131
    %s3136 = scalar_lea.vmem [#allocation1], 281
    %v3137 = vld [vmem:[%s3136] sm:$0x1]
    %s3138 = scalar_lea.vmem [#allocation1], 792
    %v3139 = vld [vmem:[%s3138] sm:$0x2]
    %vm3140 = vcmask 1041409
    %v3141 = vsel %vm3140, %v3139, %v3137
    %s3142 = scalar_lea.vmem [#allocation1], 1303
    %v3143 = vld [vmem:[%s3142] sm:$0x4]
    %vm3144 = vcmask 1042434
    %v3145 = vsel %vm3144, %v3143, %v3141
    %s3146 = scalar_lea.vmem [#allocation1], 1814
    %v3147 = vld [vmem:[%s3146] sm:$0x8]
    %vm3148 = vcmask 1043459
    %v3149 = vsel %vm3148, %v3147, %v3145
    %s3150 = scalar_lea.vmem [#allocation1], 405
    %v3151 = vld [vmem:[%s3150] sm:$0x10]
    %vm3152 = vcmask 1044484
    %v3153 = vsel %vm3152, %v3151, %v3149
    %s3154 = scalar_lea.vmem [#allocation1], 916
    %v3155 = vld [vmem:[%s3154] sm:$0x20]
    %vm3156 = vcmask 1045509
    %v3157 = vsel %vm3156, %v3155, %v3153
    %s3158 = scalar_lea.vmem [#allocation1], 1427
    %v3159 = vld [vmem:[%s3158] sm:$0x40]
    %vm3160 = vcmask 1046534
    %v3161 = vsel %vm3160, %v3159, %v3157
    %s3162 = scalar_lea.vmem [#allocation1], 1938
    %v3163 = vld [vmem:[%s3162] sm:$0x80]
    %vm3164 = vcmask 1047559
    %v3165 = vsel %vm3164, %v3163, %v3161
    %3166 = vrot.lane.b32.xlu0 %v3165, 28
    %v3167 = vpop.permute.xlu0 %3166
    %vm3168 = vcmask 261344
    %s3169 = scalar_lea.vmem [#allocation0], 16
    %3170 = vst.msk [vmem:[%s3169] sm:$0xf] %vm3168, %v3167
    %s3171 = scalar_lea.vmem [#allocation0], 20
    %3172 = vst.msk [vmem:[%s3171] sm:$0xf0] %vm3168, %v3167
    %s3173 = scalar_lea.vmem [#allocation1], 24
    %v3174 = vld [vmem:[%s3173] sm:$0x1]
    %s3175 = scalar_lea.vmem [#allocation1], 535
    %v3176 = vld [vmem:[%s3175] sm:$0x2]
    %vm3177 = vcmask 1041409
    %v3178 = vsel %vm3177, %v3176, %v3174
    %s3179 = scalar_lea.vmem [#allocation1], 1046
    %v3180 = vld [vmem:[%s3179] sm:$0x4]
    %vm3181 = vcmask 1042434
    %v3182 = vsel %vm3181, %v3180, %v3178
    %s3183 = scalar_lea.vmem [#allocation1], 1557
    %v3184 = vld [vmem:[%s3183] sm:$0x8]
    %vm3185 = vcmask 1043459
    %v3186 = vsel %vm3185, %v3184, %v3182
    %s3187 = scalar_lea.vmem [#allocation1], 148
    %v3188 = vld [vmem:[%s3187] sm:$0x10]
    %vm3189 = vcmask 1044484
    %v3190 = vsel %vm3189, %v3188, %v3186
    %s3191 = scalar_lea.vmem [#allocation1], 659
    %v3192 = vld [vmem:[%s3191] sm:$0x20]
    %vm3193 = vcmask 1045509
    %v3194 = vsel %vm3193, %v3192, %v3190
    %s3195 = scalar_lea.vmem [#allocation1], 1170
    %v3196 = vld [vmem:[%s3195] sm:$0x40]
    %vm3197 = vcmask 1046534
    %v3198 = vsel %vm3197, %v3196, %v3194
    %s3199 = scalar_lea.vmem [#allocation1], 1681
    %v3200 = vld [vmem:[%s3199] sm:$0x80]
    %vm3201 = vcmask 1047559
    %v3202 = vsel %vm3201, %v3200, %v3198
    %3203 = vrot.lane.b32.xlu0 %v3202, 24
    %v3204 = vpop.permute.xlu0 %3203
    %vm3205 = vcmask 228544
    %3206 = vst.msk [vmem:[#allocation0] sm:$0xf] %vm3205, %v3204
    %s3207 = scalar_lea.vmem [#allocation0], 4
    %3208 = vst.msk [vmem:[%s3207] sm:$0xf0] %vm3205, %v3204
    %s3209 = scalar_lea.vmem [#allocation1], 280
    %v3210 = vld [vmem:[%s3209] sm:$0x1]
    %s3211 = scalar_lea.vmem [#allocation1], 791
    %v3212 = vld [vmem:[%s3211] sm:$0x2]
    %vm3213 = vcmask 1041409
    %v3214 = vsel %vm3213, %v3212, %v3210
    %s3215 = scalar_lea.vmem [#allocation1], 1302
    %v3216 = vld [vmem:[%s3215] sm:$0x4]
    %vm3217 = vcmask 1042434
    %v3218 = vsel %vm3217, %v3216, %v3214
    %s3219 = scalar_lea.vmem [#allocation1], 1813
    %v3220 = vld [vmem:[%s3219] sm:$0x8]
    %vm3221 = vcmask 1043459
    %v3222 = vsel %vm3221, %v3220, %v3218
    %s3223 = scalar_lea.vmem [#allocation1], 404
    %v3224 = vld [vmem:[%s3223] sm:$0x10]
    %vm3225 = vcmask 1044484
    %v3226 = vsel %vm3225, %v3224, %v3222
    %s3227 = scalar_lea.vmem [#allocation1], 915
    %v3228 = vld [vmem:[%s3227] sm:$0x20]
    %vm3229 = vcmask 1045509
    %v3230 = vsel %vm3229, %v3228, %v3226
    %s3231 = scalar_lea.vmem [#allocation1], 1426
    %v3232 = vld [vmem:[%s3231] sm:$0x40]
    %vm3233 = vcmask 1046534
    %v3234 = vsel %vm3233, %v3232, %v3230
    %s3235 = scalar_lea.vmem [#allocation1], 1937
    %v3236 = vld [vmem:[%s3235] sm:$0x80]
    %vm3237 = vcmask 1047559
    %v3238 = vsel %vm3237, %v3236, %v3234
    %3239 = vrot.lane.b32.xlu0 %v3238, 24
    %v3240 = vpop.permute.xlu0 %3239
    %vm3241 = vcmask 228544
    %s3242 = scalar_lea.vmem [#allocation0], 16
    %3243 = vst.msk [vmem:[%s3242] sm:$0xf] %vm3241, %v3240
    %s3244 = scalar_lea.vmem [#allocation0], 20
    %3245 = vst.msk [vmem:[%s3244] sm:$0xf0] %vm3241, %v3240
    %s3246 = scalar_lea.vmem [#allocation1], 17
    %v3247 = vld [vmem:[%s3246] sm:$0x1]
    %s3248 = scalar_lea.vmem [#allocation1], 528
    %v3249 = vld [vmem:[%s3248] sm:$0x2]
    %vm3250 = vcmask 1041409
    %v3251 = vsel %vm3250, %v3249, %v3247
    %s3252 = scalar_lea.vmem [#allocation1], 1039
    %v3253 = vld [vmem:[%s3252] sm:$0x4]
    %vm3254 = vcmask 1042434
    %v3255 = vsel %vm3254, %v3253, %v3251
    %s3256 = scalar_lea.vmem [#allocation1], 1550
    %v3257 = vld [vmem:[%s3256] sm:$0x8]
    %vm3258 = vcmask 1043459
    %v3259 = vsel %vm3258, %v3257, %v3255
    %s3260 = scalar_lea.vmem [#allocation1], 141
    %v3261 = vld [vmem:[%s3260] sm:$0x10]
    %vm3262 = vcmask 1044484
    %v3263 = vsel %vm3262, %v3261, %v3259
    %s3264 = scalar_lea.vmem [#allocation1], 652
    %v3265 = vld [vmem:[%s3264] sm:$0x20]
    %vm3266 = vcmask 1045509
    %v3267 = vsel %vm3266, %v3265, %v3263
    %s3268 = scalar_lea.vmem [#allocation1], 1163
    %v3269 = vld [vmem:[%s3268] sm:$0x40]
    %vm3270 = vcmask 1046534
    %v3271 = vsel %vm3270, %v3269, %v3267
    %s3272 = scalar_lea.vmem [#allocation1], 1674
    %v3273 = vld [vmem:[%s3272] sm:$0x80]
    %vm3274 = vcmask 1047559
    %v3275 = vsel %vm3274, %v3273, %v3271
    %3276 = vrot.lane.b32.xlu0 %v3275, 20
    %v3277 = vpop.permute.xlu0 %3276
    %vm3278 = vcmask 195744
    %3279 = vst.msk [vmem:[#allocation0] sm:$0xf] %vm3278, %v3277
    %s3280 = scalar_lea.vmem [#allocation0], 4
    %3281 = vst.msk [vmem:[%s3280] sm:$0xf0] %vm3278, %v3277
    %s3282 = scalar_lea.vmem [#allocation1], 273
    %v3283 = vld [vmem:[%s3282] sm:$0x1]
    %s3284 = scalar_lea.vmem [#allocation1], 784
    %v3285 = vld [vmem:[%s3284] sm:$0x2]
    %vm3286 = vcmask 1041409
    %v3287 = vsel %vm3286, %v3285, %v3283
    %s3288 = scalar_lea.vmem [#allocation1], 1295
    %v3289 = vld [vmem:[%s3288] sm:$0x4]
    %vm3290 = vcmask 1042434
    %v3291 = vsel %vm3290, %v3289, %v3287
    %s3292 = scalar_lea.vmem [#allocation1], 1806
    %v3293 = vld [vmem:[%s3292] sm:$0x8]
    %vm3294 = vcmask 1043459
    %v3295 = vsel %vm3294, %v3293, %v3291
    %s3296 = scalar_lea.vmem [#allocation1], 397
    %v3297 = vld [vmem:[%s3296] sm:$0x10]
    %vm3298 = vcmask 1044484
    %v3299 = vsel %vm3298, %v3297, %v3295
    %s3300 = scalar_lea.vmem [#allocation1], 908
    %v3301 = vld [vmem:[%s3300] sm:$0x20]
    %vm3302 = vcmask 1045509
    %v3303 = vsel %vm3302, %v3301, %v3299
    %s3304 = scalar_lea.vmem [#allocation1], 1419
    %v3305 = vld [vmem:[%s3304] sm:$0x40]
    %vm3306 = vcmask 1046534
    %v3307 = vsel %vm3306, %v3305, %v3303
    %s3308 = scalar_lea.vmem [#allocation1], 1930
    %v3309 = vld [vmem:[%s3308] sm:$0x80]
    %vm3310 = vcmask 1047559
    %v3311 = vsel %vm3310, %v3309, %v3307
    %3312 = vrot.lane.b32.xlu0 %v3311, 20
    %v3313 = vpop.permute.xlu0 %3312
    %vm3314 = vcmask 195744
    %s3315 = scalar_lea.vmem [#allocation0], 16
    %3316 = vst.msk [vmem:[%s3315] sm:$0xf] %vm3314, %v3313
    %s3317 = scalar_lea.vmem [#allocation0], 20
    %3318 = vst.msk [vmem:[%s3317] sm:$0xf0] %vm3314, %v3313
    %s3319 = scalar_lea.vmem [#allocation1], 16
    %v3320 = vld [vmem:[%s3319] sm:$0x1]
    %s3321 = scalar_lea.vmem [#allocation1], 527
    %v3322 = vld [vmem:[%s3321] sm:$0x2]
    %vm3323 = vcmask 1041409
    %v3324 = vsel %vm3323, %v3322, %v3320
    %s3325 = scalar_lea.vmem [#allocation1], 1038
    %v3326 = vld [vmem:[%s3325] sm:$0x4]
    %vm3327 = vcmask 1042434
    %v3328 = vsel %vm3327, %v3326, %v3324
    %s3329 = scalar_lea.vmem [#allocation1], 1549
    %v3330 = vld [vmem:[%s3329] sm:$0x8]
    %vm3331 = vcmask 1043459
    %v3332 = vsel %vm3331, %v3330, %v3328
    %s3333 = scalar_lea.vmem [#allocation1], 140
    %v3334 = vld [vmem:[%s3333] sm:$0x10]
    %vm3335 = vcmask 1044484
    %v3336 = vsel %vm3335, %v3334, %v3332
    %s3337 = scalar_lea.vmem [#allocation1], 651
    %v3338 = vld [vmem:[%s3337] sm:$0x20]
    %vm3339 = vcmask 1045509
    %v3340 = vsel %vm3339, %v3338, %v3336
    %s3341 = scalar_lea.vmem [#allocation1], 1162
    %v3342 = vld [vmem:[%s3341] sm:$0x40]
    %vm3343 = vcmask 1046534
    %v3344 = vsel %vm3343, %v3342, %v3340
    %s3345 = scalar_lea.vmem [#allocation1], 1673
    %v3346 = vld [vmem:[%s3345] sm:$0x80]
    %vm3347 = vcmask 1047559
    %v3348 = vsel %vm3347, %v3346, %v3344
    %3349 = vrot.lane.b32.xlu0 %v3348, 16
    %v3350 = vpop.permute.xlu0 %3349
    %vm3351 = vcmask 162944
    %3352 = vst.msk [vmem:[#allocation0] sm:$0xf] %vm3351, %v3350
    %s3353 = scalar_lea.vmem [#allocation0], 4
    %3354 = vst.msk [vmem:[%s3353] sm:$0xf0] %vm3351, %v3350
    %s3355 = scalar_lea.vmem [#allocation1], 272
    %v3356 = vld [vmem:[%s3355] sm:$0x1]
    %s3357 = scalar_lea.vmem [#allocation1], 783
    %v3358 = vld [vmem:[%s3357] sm:$0x2]
    %vm3359 = vcmask 1041409
    %v3360 = vsel %vm3359, %v3358, %v3356
    %s3361 = scalar_lea.vmem [#allocation1], 1294
    %v3362 = vld [vmem:[%s3361] sm:$0x4]
    %vm3363 = vcmask 1042434
    %v3364 = vsel %vm3363, %v3362, %v3360
    %s3365 = scalar_lea.vmem [#allocation1], 1805
    %v3366 = vld [vmem:[%s3365] sm:$0x8]
    %vm3367 = vcmask 1043459
    %v3368 = vsel %vm3367, %v3366, %v3364
    %s3369 = scalar_lea.vmem [#allocation1], 396
    %v3370 = vld [vmem:[%s3369] sm:$0x10]
    %vm3371 = vcmask 1044484
    %v3372 = vsel %vm3371, %v3370, %v3368
    %s3373 = scalar_lea.vmem [#allocation1], 907
    %v3374 = vld [vmem:[%s3373] sm:$0x20]
    %vm3375 = vcmask 1045509
    %v3376 = vsel %vm3375, %v3374, %v3372
    %s3377 = scalar_lea.vmem [#allocation1], 1418
    %v3378 = vld [vmem:[%s3377] sm:$0x40]
    %vm3379 = vcmask 1046534
    %v3380 = vsel %vm3379, %v3378, %v3376
    %s3381 = scalar_lea.vmem [#allocation1], 1929
    %v3382 = vld [vmem:[%s3381] sm:$0x80]
    %vm3383 = vcmask 1047559
    %v3384 = vsel %vm3383, %v3382, %v3380
    %3385 = vrot.lane.b32.xlu0 %v3384, 16
    %v3386 = vpop.permute.xlu0 %3385
    %vm3387 = vcmask 162944
    %s3388 = scalar_lea.vmem [#allocation0], 16
    %3389 = vst.msk [vmem:[%s3388] sm:$0xf] %vm3387, %v3386
    %s3390 = scalar_lea.vmem [#allocation0], 20
    %3391 = vst.msk [vmem:[%s3390] sm:$0xf0] %vm3387, %v3386
    %s3392 = scalar_lea.vmem [#allocation1], 9
    %v3393 = vld [vmem:[%s3392] sm:$0x1]
    %s3394 = scalar_lea.vmem [#allocation1], 520
    %v3395 = vld [vmem:[%s3394] sm:$0x2]
    %vm3396 = vcmask 1041409
    %v3397 = vsel %vm3396, %v3395, %v3393
    %s3398 = scalar_lea.vmem [#allocation1], 1031
    %v3399 = vld [vmem:[%s3398] sm:$0x4]
    %vm3400 = vcmask 1042434
    %v3401 = vsel %vm3400, %v3399, %v3397
    %s3402 = scalar_lea.vmem [#allocation1], 1542
    %v3403 = vld [vmem:[%s3402] sm:$0x8]
    %vm3404 = vcmask 1043459
    %v3405 = vsel %vm3404, %v3403, %v3401
    %s3406 = scalar_lea.vmem [#allocation1], 133
    %v3407 = vld [vmem:[%s3406] sm:$0x10]
    %vm3408 = vcmask 1044484
    %v3409 = vsel %vm3408, %v3407, %v3405
    %s3410 = scalar_lea.vmem [#allocation1], 644
    %v3411 = vld [vmem:[%s3410] sm:$0x20]
    %vm3412 = vcmask 1045509
    %v3413 = vsel %vm3412, %v3411, %v3409
    %s3414 = scalar_lea.vmem [#allocation1], 1155
    %v3415 = vld [vmem:[%s3414] sm:$0x40]
    %vm3416 = vcmask 1046534
    %v3417 = vsel %vm3416, %v3415, %v3413
    %s3418 = scalar_lea.vmem [#allocation1], 1666
    %v3419 = vld [vmem:[%s3418] sm:$0x80]
    %vm3420 = vcmask 1047559
    %v3421 = vsel %vm3420, %v3419, %v3417
    %3422 = vrot.lane.b32.xlu0 %v3421, 12
    %v3423 = vpop.permute.xlu0 %3422
    %vm3424 = vcmask 130144
    %3425 = vst.msk [vmem:[#allocation0] sm:$0xf] %vm3424, %v3423
    %s3426 = scalar_lea.vmem [#allocation0], 4
    %3427 = vst.msk [vmem:[%s3426] sm:$0xf0] %vm3424, %v3423
    %s3428 = scalar_lea.vmem [#allocation1], 265
    %v3429 = vld [vmem:[%s3428] sm:$0x1]
    %s3430 = scalar_lea.vmem [#allocation1], 776
    %v3431 = vld [vmem:[%s3430] sm:$0x2]
    %vm3432 = vcmask 1041409
    %v3433 = vsel %vm3432, %v3431, %v3429
    %s3434 = scalar_lea.vmem [#allocation1], 1287
    %v3435 = vld [vmem:[%s3434] sm:$0x4]
    %vm3436 = vcmask 1042434
    %v3437 = vsel %vm3436, %v3435, %v3433
    %s3438 = scalar_lea.vmem [#allocation1], 1798
    %v3439 = vld [vmem:[%s3438] sm:$0x8]
    %vm3440 = vcmask 1043459
    %v3441 = vsel %vm3440, %v3439, %v3437
    %s3442 = scalar_lea.vmem [#allocation1], 389
    %v3443 = vld [vmem:[%s3442] sm:$0x10]
    %vm3444 = vcmask 1044484
    %v3445 = vsel %vm3444, %v3443, %v3441
    %s3446 = scalar_lea.vmem [#allocation1], 900
    %v3447 = vld [vmem:[%s3446] sm:$0x20]
    %vm3448 = vcmask 1045509
    %v3449 = vsel %vm3448, %v3447, %v3445
    %s3450 = scalar_lea.vmem [#allocation1], 1411
    %v3451 = vld [vmem:[%s3450] sm:$0x40]
    %vm3452 = vcmask 1046534
    %v3453 = vsel %vm3452, %v3451, %v3449
    %s3454 = scalar_lea.vmem [#allocation1], 1922
    %v3455 = vld [vmem:[%s3454] sm:$0x80]
    %vm3456 = vcmask 1047559
    %v3457 = vsel %vm3456, %v3455, %v3453
    %3458 = vrot.lane.b32.xlu0 %v3457, 12
    %v3459 = vpop.permute.xlu0 %3458
    %vm3460 = vcmask 130144
    %s3461 = scalar_lea.vmem [#allocation0], 16
    %3462 = vst.msk [vmem:[%s3461] sm:$0xf] %vm3460, %v3459
    %s3463 = scalar_lea.vmem [#allocation0], 20
    %3464 = vst.msk [vmem:[%s3463] sm:$0xf0] %vm3460, %v3459
    %s3465 = scalar_lea.vmem [#allocation1], 8
    %v3466 = vld [vmem:[%s3465] sm:$0x1]
    %s3467 = scalar_lea.vmem [#allocation1], 519
    %v3468 = vld [vmem:[%s3467] sm:$0x2]
    %vm3469 = vcmask 1041409
    %v3470 = vsel %vm3469, %v3468, %v3466
    %s3471 = scalar_lea.vmem [#allocation1], 1030
    %v3472 = vld [vmem:[%s3471] sm:$0x4]
    %vm3473 = vcmask 1042434
    %v3474 = vsel %vm3473, %v3472, %v3470
    %s3475 = scalar_lea.vmem [#allocation1], 1541
    %v3476 = vld [vmem:[%s3475] sm:$0x8]
    %vm3477 = vcmask 1043459
    %v3478 = vsel %vm3477, %v3476, %v3474
    %s3479 = scalar_lea.vmem [#allocation1], 132
    %v3480 = vld [vmem:[%s3479] sm:$0x10]
    %vm3481 = vcmask 1044484
    %v3482 = vsel %vm3481, %v3480, %v3478
    %s3483 = scalar_lea.vmem [#allocation1], 643
    %v3484 = vld [vmem:[%s3483] sm:$0x20]
    %vm3485 = vcmask 1045509
    %v3486 = vsel %vm3485, %v3484, %v3482
    %s3487 = scalar_lea.vmem [#allocation1], 1154
    %v3488 = vld [vmem:[%s3487] sm:$0x40]
    %vm3489 = vcmask 1046534
    %v3490 = vsel %vm3489, %v3488, %v3486
    %s3491 = scalar_lea.vmem [#allocation1], 1665
    %v3492 = vld [vmem:[%s3491] sm:$0x80]
    %vm3493 = vcmask 1047559
    %v3494 = vsel %vm3493, %v3492, %v3490
    %3495 = vrot.lane.b32.xlu0 %v3494, 8
    %v3496 = vpop.permute.xlu0 %3495
    %vm3497 = vcmask 97344
    %3498 = vst.msk [vmem:[#allocation0] sm:$0xf] %vm3497, %v3496
    %s3499 = scalar_lea.vmem [#allocation0], 4
    %3500 = vst.msk [vmem:[%s3499] sm:$0xf0] %vm3497, %v3496
    %s3501 = scalar_lea.vmem [#allocation1], 264
    %v3502 = vld [vmem:[%s3501] sm:$0x1]
    %s3503 = scalar_lea.vmem [#allocation1], 775
    %v3504 = vld [vmem:[%s3503] sm:$0x2]
    %vm3505 = vcmask 1041409
    %v3506 = vsel %vm3505, %v3504, %v3502
    %s3507 = scalar_lea.vmem [#allocation1], 1286
    %v3508 = vld [vmem:[%s3507] sm:$0x4]
    %vm3509 = vcmask 1042434
    %v3510 = vsel %vm3509, %v3508, %v3506
    %s3511 = scalar_lea.vmem [#allocation1], 1797
    %v3512 = vld [vmem:[%s3511] sm:$0x8]
    %vm3513 = vcmask 1043459
    %v3514 = vsel %vm3513, %v3512, %v3510
    %s3515 = scalar_lea.vmem [#allocation1], 388
    %v3516 = vld [vmem:[%s3515] sm:$0x10]
    %vm3517 = vcmask 1044484
    %v3518 = vsel %vm3517, %v3516, %v3514
    %s3519 = scalar_lea.vmem [#allocation1], 899
    %v3520 = vld [vmem:[%s3519] sm:$0x20]
    %vm3521 = vcmask 1045509
    %v3522 = vsel %vm3521, %v3520, %v3518
    %s3523 = scalar_lea.vmem [#allocation1], 1410
    %v3524 = vld [vmem:[%s3523] sm:$0x40]
    %vm3525 = vcmask 1046534
    %v3526 = vsel %vm3525, %v3524, %v3522
    %s3527 = scalar_lea.vmem [#allocation1], 1921
    %v3528 = vld [vmem:[%s3527] sm:$0x80]
    %vm3529 = vcmask 1047559
    %v3530 = vsel %vm3529, %v3528, %v3526
    %3531 = vrot.lane.b32.xlu0 %v3530, 8
    %v3532 = vpop.permute.xlu0 %3531
    %vm3533 = vcmask 97344
    %s3534 = scalar_lea.vmem [#allocation0], 16
    %3535 = vst.msk [vmem:[%s3534] sm:$0xf] %vm3533, %v3532
    %s3536 = scalar_lea.vmem [#allocation0], 20
    %3537 = vst.msk [vmem:[%s3536] sm:$0xf0] %vm3533, %v3532
    %s3538 = scalar_lea.vmem [#allocation1], 1
    %v3539 = vld [vmem:[%s3538] sm:$0x1]
    %s3540 = scalar_lea.vmem [#allocation1], 512
    %v3541 = vld [vmem:[%s3540] sm:$0x2]
    %vm3542 = vcmask 1041409
    %v3543 = vsel %vm3542, %v3541, %v3539
    %s3544 = scalar_lea.vmem [#allocation1], 1023
    %v3545 = vld [vmem:[%s3544] sm:$0x4]
    %vm3546 = vcmask 1042434
    %v3547 = vsel %vm3546, %v3545, %v3543
    %s3548 = scalar_lea.vmem [#allocation1], 1534
    %v3549 = vld [vmem:[%s3548] sm:$0x8]
    %vm3550 = vcmask 1043459
    %v3551 = vsel %vm3550, %v3549, %v3547
    %s3552 = scalar_lea.vmem [#allocation1], 125
    %v3553 = vld [vmem:[%s3552] sm:$0x10]
    %vm3554 = vcmask 1044484
    %v3555 = vsel %vm3554, %v3553, %v3551
    %s3556 = scalar_lea.vmem [#allocation1], 636
    %v3557 = vld [vmem:[%s3556] sm:$0x20]
    %vm3558 = vcmask 1045509
    %v3559 = vsel %vm3558, %v3557, %v3555
    %s3560 = scalar_lea.vmem [#allocation1], 1147
    %v3561 = vld [vmem:[%s3560] sm:$0x40]
    %vm3562 = vcmask 1046534
    %v3563 = vsel %vm3562, %v3561, %v3559
    %s3564 = scalar_lea.vmem [#allocation1], 1658
    %v3565 = vld [vmem:[%s3564] sm:$0x80]
    %vm3566 = vcmask 1047559
    %v3567 = vsel %vm3566, %v3565, %v3563
    %3568 = vrot.lane.b32.xlu0 %v3567, 4
    %v3569 = vpop.permute.xlu0 %3568
    %vm3570 = vcmask 64544
    %3571 = vst.msk [vmem:[#allocation0] sm:$0xf] %vm3570, %v3569
    %s3572 = scalar_lea.vmem [#allocation0], 4
    %3573 = vst.msk [vmem:[%s3572] sm:$0xf0] %vm3570, %v3569
    %s3574 = scalar_lea.vmem [#allocation1], 257
    %v3575 = vld [vmem:[%s3574] sm:$0x1]
    %s3576 = scalar_lea.vmem [#allocation1], 768
    %v3577 = vld [vmem:[%s3576] sm:$0x2]
    %vm3578 = vcmask 1041409
    %v3579 = vsel %vm3578, %v3577, %v3575
    %s3580 = scalar_lea.vmem [#allocation1], 1279
    %v3581 = vld [vmem:[%s3580] sm:$0x4]
    %vm3582 = vcmask 1042434
    %v3583 = vsel %vm3582, %v3581, %v3579
    %s3584 = scalar_lea.vmem [#allocation1], 1790
    %v3585 = vld [vmem:[%s3584] sm:$0x8]
    %vm3586 = vcmask 1043459
    %v3587 = vsel %vm3586, %v3585, %v3583
    %s3588 = scalar_lea.vmem [#allocation1], 381
    %v3589 = vld [vmem:[%s3588] sm:$0x10]
    %vm3590 = vcmask 1044484
    %v3591 = vsel %vm3590, %v3589, %v3587
    %s3592 = scalar_lea.vmem [#allocation1], 892
    %v3593 = vld [vmem:[%s3592] sm:$0x20]
    %vm3594 = vcmask 1045509
    %v3595 = vsel %vm3594, %v3593, %v3591
    %s3596 = scalar_lea.vmem [#allocation1], 1403
    %v3597 = vld [vmem:[%s3596] sm:$0x40]
    %vm3598 = vcmask 1046534
    %v3599 = vsel %vm3598, %v3597, %v3595
    %s3600 = scalar_lea.vmem [#allocation1], 1914
    %v3601 = vld [vmem:[%s3600] sm:$0x80]
    %vm3602 = vcmask 1047559
    %v3603 = vsel %vm3602, %v3601, %v3599
    %3604 = vrot.lane.b32.xlu0 %v3603, 4
    %v3605 = vpop.permute.xlu0 %3604
    %vm3606 = vcmask 64544
    %s3607 = scalar_lea.vmem [#allocation0], 16
    %3608 = vst.msk [vmem:[%s3607] sm:$0xf] %vm3606, %v3605
    %s3609 = scalar_lea.vmem [#allocation0], 20
    %3610 = vst.msk [vmem:[%s3609] sm:$0xf0] %vm3606, %v3605
    %s3612 = sshllo.u32 0, 4
    %v3614 = vld [vmem:[#allocation0] sm:%s3612]
    %s3615 = sshllo.u32 0, 4
    %3616 = vst [vmem:[%s1] sm:%s3615] %v3614
    %s3617 = scalar_lea.vmem [#allocation0], 8
    %v3618 = vld [vmem:[%s3617] sm:%s3612]
    %s3619 = sshllo.u32 0, 4
    %s3620 = scalar_lea.vmem %s1, 4
    %3621 = vst [vmem:[%s3620] sm:%s3619] %v3618
    %s3622 = scalar_lea.vmem [#allocation0], 16
    %v3623 = vld [vmem:[%s3622] sm:%s3612]
    %s3624 = sshllo.u32 0, 4
    %s3625 = smul.addr 4, 2
    %s3626 = scalar_lea.vmem %s1, %s3625
    %3627 = vst [vmem:[%s3626] sm:%s3624] %v3623
    %s3628 = scalar_lea.vmem [#allocation0], 24
    %v3629 = vld [vmem:[%s3628] sm:%s3612]
    %s3630 = sshllo.u32 0, 4
    %s3631 = smul.addr 4, 3
    %s3632 = scalar_lea.vmem %s1, %s3631
    %3633 = vst [vmem:[%s3632] sm:%s3630] %v3629

// kernel: bottleneck_forward.38
$region0: #{bottleneck_forward.38}
  #allocation0 [shape = 'u32[]', space=smem, size = 0x4, offset = 0x4, fixed_abs, tag = 'smem constant byte address 0x4 - core index']
  #allocation1 [shape = 'u32[144,128]{1,0:T(1,128)}', space=vmem, size = 0x12000, scoped, tag = 'internal scratch']
  %s0 = inlined_call_operand.vmem [shape: f32[8,320], index: 0, kind: input, shape index: {}]
  %s1 = inlined_call_operand.vmem [shape: bf16[8,8], index: 1, kind: input, shape index: {}]
  %s2 = inlined_call_operand.vmem [shape: f32[8,1], index: 2, kind: input, shape index: {}]
  %s3 = inlined_call_operand.vmem [shape: f32[8,1], index: 3, kind: input, shape index: {}]
  %s4 = inlined_call_operand.vmem [shape: f32[8,320], index: 4, kind: output, shape index: {}]
  %s5 = sld [smem:[#allocation0]]
  $region26: #{bottleneck_forward.38} parent=0
    _
  %s7 = ssub.s32 1, %s5
  %s8 = scalar_select 0, %s7, %s5
  // Predicated region
  $region2: #{bottleneck_forward.38} parent=0 // pred_check
    _
  $region3: #{bottleneck_forward.38} parent=0 // pred_check_branch
    %10 = sbr.rel (0) target = $region5
  $region4: #{bottleneck_forward.38} parent=0 // pred_region
    _
  $region5: #{bottleneck_forward.38} parent=0 // pred_fallthru
    _
  // Predicated region
  $region6: #{bottleneck_forward.38} parent=0 // pred_check
    _
  $region7: #{bottleneck_forward.38} parent=0 // pred_check_branch
    %12 = sbr.rel (0) target = $region9
  $region8: #{bottleneck_forward.38} parent=0 // pred_region
    _
  $region9: #{bottleneck_forward.38} parent=0 // pred_fallthru
    _
  // Predicated region
  $region10: #{bottleneck_forward.38} parent=0 // pred_check
    _
  $region11: #{bottleneck_forward.38} parent=0 // pred_check_branch
    %14 = sbr.rel (0) target = $region13
  $region12: #{bottleneck_forward.38} parent=0 // pred_region
    _
  $region13: #{bottleneck_forward.38} parent=0 // pred_fallthru
    _
  // Predicated region
  $region14: #{bottleneck_forward.38} parent=0 // pred_check
    _
  $region15: #{bottleneck_forward.38} parent=0 // pred_check_branch
    %16 = sbr.rel (0) target = $region17
  $region16: #{bottleneck_forward.38} parent=0 // pred_region
    _
  $region17: #{bottleneck_forward.38} parent=0 // pred_fallthru
    _
  %v18 = vld [vmem:[%s0] sm:$0xff]
  %v19 = vld [vmem:[%s0 + $0x8] sm:$0xff]
  %v20 = vld [vmem:[%s0 + $0x10] sm:$0xff]
  %v21 = vld [vmem:[%s1] sm:$0xf]
  %v22 = vpack.c.bf16 %v18, %v18
  %v23 = vpack.c.bf16 %v19, %v19
  %v24 = vpack.c.bf16 %v20, %v20
  %vm25 = vcmask 64512
  %v27 = vsel %vm25, %v21, 0
  %vm29 = vcmask 1043456
  %v31 = vsel %vm29, %v22, 0
  %v34 = vsel %vm29, %v23, 0
  %v37 = vsel %vm29, %v24, 0
  %39 = vmatprep.subr.bf16.mxu0 %v34
  %40 = vmatpush1.bf16.msra.mxu0 %v31
  %41 = vmatprep.subr.bf16.mxu0 0
  %42 = vmatpush1.bf16.msra.mxu0 0
  %43 = vmatprep.subr.bf16.mxu0 0
  %44 = vmatpush1.bf16.msra.mxu0 0
  %45 = vmatprep.subr.bf16.mxu0 0
  %46 = vmatpush1.bf16.msra.mxu0 0
  %47 = vmatprep.subr.bf16.mxu0 0
  %48 = vmatpush1.bf16.msra.mxu0 0
  %49 = vmatprep.subr.bf16.mxu0 0
  %50 = vmatpush1.bf16.msra.mxu0 0
  %51 = vmatprep.subr.bf16.mxu0 0
  %52 = vmatpush1.bf16.msra.mxu0 0
  %53 = vmatprep.subr.bf16.mxu0 0
  %54 = vmatpush1.bf16.msra.mxu0 0
  %55 = vmatprep.subr.bf16.mxu0 0
  %56 = vmatpush1.bf16.msra.mxu0 0
  %57 = vmatprep.subr.bf16.mxu0 0
  %58 = vmatpush1.bf16.msra.mxu0 0
  %59 = vmatprep.subr.bf16.mxu0 0
  %60 = vmatpush1.bf16.msra.mxu0 0
  %61 = vmatprep.subr.bf16.mxu0 0
  %62 = vmatpush1.bf16.msra.mxu0 0
  %63 = vmatprep.subr.bf16.mxu0 0
  %64 = vmatpush1.bf16.msra.mxu0 0
  %65 = vmatprep.subr.bf16.mxu0 0
  %66 = vmatpush1.bf16.msra.mxu0 0
  %67 = vmatprep.subr.bf16.mxu0 0
  %68 = vmatpush1.bf16.msra.mxu0 0
  %69 = vmatprep.subr.bf16.mxu0 0
  %70 = vmatpush1.bf16.msra.mxu0 0
  %71 = vmatprep.mubr.bf16.mxu0 0
  %72 = vmatmul.mubr.bf16.gmra.mrb[0].mxu0 %v27
  %v73 = vpop.f32.mrb[0].mxu0
  %v74 = vadd.f32 0.0, %v73
  %v75 = vpop.f32.mrb[0].mxu0
  %v76 = vadd.f32 0.0, %v75
  %v77 = vpop.f32.mrb[0].mxu0
  %v78 = vpop.f32.mrb[0].mxu0
  %79 = vdwg.mxu0
  %80 = vmatprep.subr.bf16.mxu0 0
  %81 = vmatpush1.bf16.msra.mxu0 %v37
  %82 = vmatprep.subr.bf16.mxu0 0
  %83 = vmatpush1.bf16.msra.mxu0 0
  %84 = vmatprep.subr.bf16.mxu0 0
  %85 = vmatpush1.bf16.msra.mxu0 0
  %86 = vmatprep.subr.bf16.mxu0 0
  %87 = vmatpush1.bf16.msra.mxu0 0
  %88 = vmatprep.subr.bf16.mxu0 0
  %89 = vmatpush1.bf16.msra.mxu0 0
  %90 = vmatprep.subr.bf16.mxu0 0
  %91 = vmatpush1.bf16.msra.mxu0 0
  %92 = vmatprep.subr.bf16.mxu0 0
  %93 = vmatpush1.bf16.msra.mxu0 0
  %94 = vmatprep.subr.bf16.mxu0 0
  %95 = vmatpush1.bf16.msra.mxu0 0
  %96 = vmatprep.subr.bf16.mxu0 0
  %97 = vmatpush1.bf16.msra.mxu0 0
  %98 = vmatprep.subr.bf16.mxu0 0
  %99 = vmatpush1.bf16.msra.mxu0 0
  %100 = vmatprep.subr.bf16.mxu0 0
  %101 = vmatpush1.bf16.msra.mxu0 0
  %102 = vmatprep.subr.bf16.mxu0 0
  %103 = vmatpush1.bf16.msra.mxu0 0
  %104 = vmatprep.subr.bf16.mxu0 0
  %105 = vmatpush1.bf16.msra.mxu0 0
  %106 = vmatprep.subr.bf16.mxu0 0
  %107 = vmatpush1.bf16.msra.mxu0 0
  %108 = vmatprep.subr.bf16.mxu0 0
  %109 = vmatpush1.bf16.msra.mxu0 0
  %110 = vmatprep.subr.bf16.mxu0 0
  %111 = vmatpush1.bf16.msra.mxu0 0
  %112 = vmatprep.mubr.bf16.mxu0 0
  %113 = vmatmul.mubr.bf16.gmra.mrb[0].mxu0 %v27
  %v114 = vpop.f32.mrb[0].mxu0
  %v115 = vadd.f32 0.0, %v114
  %v116 = vpop.f32.mrb[0].mxu0
  %v117 = vpop.f32.mrb[0].mxu0
  %v118 = vpop.f32.mrb[0].mxu0
  %119 = vdwg.mxu0
  %v120 = vld [vmem:[%s2] sm:$0xff]
  %122 = vset.pattern.permute.xlu0 0
  %123 = vperm.xlu0 %122, %v120
  %v124 = vpop.permute.xlu0 %123
  %v126 = vmul.f32 %v74, %v124
  %v127 = vmul.f32 %v76, %v124
  %v128 = vmul.f32 %v115, %v124
  %v129 = vld [vmem:[%s3] sm:$0xff]
  %131 = vset.pattern.permute.xlu0 0
  %132 = vperm.xlu0 %131, %v129
  %v133 = vpop.permute.xlu0 %132
  %v135 = vadd.f32 %v126, %v133
  %v136 = vadd.f32 %v127, %v133
  %v137 = vadd.f32 %v128, %v133
  %v138 = vmax.f32 %v135, 0.0
  %v139 = vmax.f32 %v136, 0.0
  %v140 = vmax.f32 %v137, 0.0
  %141 = vst [vmem:[%s4] sm:$0xff] %v138
  %142 = vst [vmem:[%s4 + $0x8] sm:$0xff] %v139
  %vm143 = vcmask 523264
  %144 = vst.msk [vmem:[%s4 + $0x10] sm:$0xff] %vm143, %v140
  // Predicated region
  $region18: #{bottleneck_forward.38} parent=0 // pred_check
    _
  $region19: #{bottleneck_forward.38} parent=0 // pred_check_branch
    %146 = sbr.rel (0) target = $region21
  $region20: #{bottleneck_forward.38} parent=0 // pred_region
    _
  $region21: #{bottleneck_forward.38} parent=0 // pred_fallthru
    _
  // Predicated region
  $region22: #{bottleneck_forward.38} parent=0 // pred_check
    _
  $region23: #{bottleneck_forward.38} parent=0 // pred_check_branch
    %148 = sbr.rel (0) target = $region25
  $region24: #{bottleneck_forward.38} parent=0 // pred_region
    _
  $region25: #{bottleneck_forward.38} parent=0 // pred_fallthru
    _

// kernel: reverse.15
$region0: #{reverse.15}
  %s0 = inlined_call_operand.vmem [shape: f32[4,2,4,8,3], index: 0, kind: input, shape index: {}]
  %s1 = inlined_call_operand.vmem [shape: f32[4,2,4,8,3], index: 1, kind: output, shape index: {}]
  $region1: #{reverse.15} parent=0
    #allocation0 [shape = 'u8[262144]{0}', space=vmem, size = 0x40000, scoped, tag = 'operand span for operand 0']
    #allocation1 [shape = 'u8[131072]{0}', space=vmem, size = 0x20000, scoped, tag = 'packed  for operand 0']
    #allocation2 [shape = 'u8[131072]{0}', space=vmem, size = 0x20000, scoped, tag = 'operand span for operand 1']
    #allocation3 [shape = 'u8[65536]{0}', space=vmem, size = 0x10000, scoped, tag = 'packed  for operand 1']
    %s2 = scalar_lea.vmem [#allocation1], 4
    // Predicated region
    $region2: #{reverse.15} parent=1 // pred_check
      _
    $region3: #{reverse.15} parent=1 // pred_check_branch
      %4 = sbr.rel (0) target = $region5
    $region4: #{reverse.15} parent=1 // pred_region
      // Predicated region
      $region6: #{reverse.15} parent=4 // pred_check
        _
      $region7: #{reverse.15} parent=4 // pred_check_branch
        %6 = sbr.rel target = $region9
      $region8: #{reverse.15} parent=4 // pred_region
        // Predicated region
        $region21: #{reverse.15} parent=8 // pred_check
          _
        $region22: #{reverse.15} parent=8 // pred_check_branch
          %83 = sbr.rel (0) target = $region24
        $region23: #{reverse.15} parent=8 // pred_region
          loop: start=0, step=1, limit=1
          $region25: #{reverse.15} parent=23 // loop_pre_header
            _
          $region26: #{reverse.15} parent=23 // loop_header
            %s85 = sphi 0, %s89
            %p86 = scmp.ge.s32.totalorder %s85, 1
            %s90 = sphi %s0, %s0
            %s91 = sphi %s2, %s2
          $region27: #{reverse.15} parent=23 // loop_header_branch
            %88 = sbr.rel (%p86) target = $region31
          $region28: #{reverse.15} parent=23 // loop_body
            _
          $region29: #{reverse.15} parent=23 // loop_footer
            %s89 = sadd.s32 1, %s85
          $region30: #{reverse.15} parent=23 // loop_footer_branch
            %84 = sbr.rel target = $region26
          $region31: #{reverse.15} parent=23 // loop_exit
            _
          loop: start=0, step=1, limit=1
          $region32: #{reverse.15} parent=23 // loop_pre_header
            _
          $region33: #{reverse.15} parent=23 // loop_header
            %s94 = sphi 0, %s98
            %p95 = scmp.ge.s32.totalorder %s94, 1
            %s99 = sphi %s0, %s0
            %s100 = sphi %s2, %s2
          $region34: #{reverse.15} parent=23 // loop_header_branch
            %97 = sbr.rel (%p95) target = $region38
          $region35: #{reverse.15} parent=23 // loop_body
            %v101 = vld [vmem:[%s99] sm:$0xf]
            %102 = vst [vmem:[%s100] sm:$0xf] %v101
            %v103 = vld [vmem:[%s99 + $0x4] sm:$0xf]
            %104 = vst [vmem:[%s100 + $0x8] sm:$0xf] %v103
            %v105 = vld [vmem:[%s99 + $0x8] sm:$0xf]
            %106 = vst [vmem:[%s100 + $0x10] sm:$0xf] %v105
            %v107 = vld [vmem:[%s99 + $0xc] sm:$0xf]
            %108 = vst [vmem:[%s100 + $0x18] sm:$0xf] %v107
            %v109 = vld [vmem:[%s99 + $0x10] sm:$0xf]
            %110 = vst [vmem:[%s100 + $0x20] sm:$0xf] %v109
            %v111 = vld [vmem:[%s99 + $0x14] sm:$0xf]
            %112 = vst [vmem:[%s100 + $0x28] sm:$0xf] %v111
            %v113 = vld [vmem:[%s99 + $0x18] sm:$0xf]
            %114 = vst [vmem:[%s100 + $0x30] sm:$0xf] %v113
            %v115 = vld [vmem:[%s99 + $0x1c] sm:$0xf]
            %116 = vst [vmem:[%s100 + $0x38] sm:$0xf] %v115
            %v117 = vld [vmem:[%s99 + $0x20] sm:$0xf]
            %118 = vst [vmem:[%s100 + $0x40] sm:$0xf] %v117
            %v119 = vld [vmem:[%s99 + $0x24] sm:$0xf]
            %120 = vst [vmem:[%s100 + $0x48] sm:$0xf] %v119
            %v121 = vld [vmem:[%s99 + $0x28] sm:$0xf]
            %122 = vst [vmem:[%s100 + $0x50] sm:$0xf] %v121
            %v123 = vld [vmem:[%s99 + $0x2c] sm:$0xf]
            %124 = vst [vmem:[%s100 + $0x58] sm:$0xf] %v123
            %v125 = vld [vmem:[%s99 + $0x30] sm:$0xf]
            %126 = vst [vmem:[%s100 + $0x60] sm:$0xf] %v125
            %v127 = vld [vmem:[%s99 + $0x34] sm:$0xf]
            %128 = vst [vmem:[%s100 + $0x68] sm:$0xf] %v127
            %v129 = vld [vmem:[%s99 + $0x38] sm:$0xf]
            %130 = vst [vmem:[%s100 + $0x70] sm:$0xf] %v129
            %v131 = vld [vmem:[%s99 + $0x3c] sm:$0xf]
            %132 = vst [vmem:[%s100 + $0x78] sm:$0xf] %v131
            %v133 = vld [vmem:[%s99 + $0x40] sm:$0xf]
            %134 = vst [vmem:[%s100 + $0x80] sm:$0xf] %v133
            %v135 = vld [vmem:[%s99 + $0x44] sm:$0xf]
            %136 = vst [vmem:[%s100 + $0x88] sm:$0xf] %v135
            %v137 = vld [vmem:[%s99 + $0x48] sm:$0xf]
            %138 = vst [vmem:[%s100 + $0x90] sm:$0xf] %v137
            %v139 = vld [vmem:[%s99 + $0x4c] sm:$0xf]
            %140 = vst [vmem:[%s100 + $0x98] sm:$0xf] %v139
            %v141 = vld [vmem:[%s99 + $0x50] sm:$0xf]
            %142 = vst [vmem:[%s100 + $0xa0] sm:$0xf] %v141
            %v143 = vld [vmem:[%s99 + $0x54] sm:$0xf]
            %144 = vst [vmem:[%s100 + $0xa8] sm:$0xf] %v143
            %v145 = vld [vmem:[%s99 + $0x58] sm:$0xf]
            %146 = vst [vmem:[%s100 + $0xb0] sm:$0xf] %v145
            %v147 = vld [vmem:[%s99 + $0x5c] sm:$0xf]
            %148 = vst [vmem:[%s100 + $0xb8] sm:$0xf] %v147
            %v149 = vld [vmem:[%s99 + $0x60] sm:$0xf]
            %150 = vst [vmem:[%s100 + $0xc0] sm:$0xf] %v149
            %v151 = vld [vmem:[%s99 + $0x64] sm:$0xf]
            %152 = vst [vmem:[%s100 + $0xc8] sm:$0xf] %v151
            %v153 = vld [vmem:[%s99 + $0x68] sm:$0xf]
            %154 = vst [vmem:[%s100 + $0xd0] sm:$0xf] %v153
            %v155 = vld [vmem:[%s99 + $0x6c] sm:$0xf]
            %156 = vst [vmem:[%s100 + $0xd8] sm:$0xf] %v155
            %v157 = vld [vmem:[%s99 + $0x70] sm:$0xf]
            %158 = vst [vmem:[%s100 + $0xe0] sm:$0xf] %v157
            %v159 = vld [vmem:[%s99 + $0x74] sm:$0xf]
            %160 = vst [vmem:[%s100 + $0xe8] sm:$0xf] %v159
            %v161 = vld [vmem:[%s99 + $0x78] sm:$0xf]
            %162 = vst [vmem:[%s100 + $0xf0] sm:$0xf] %v161
            %v163 = vld [vmem:[%s99 + $0x7c] sm:$0xf]
            %164 = vst [vmem:[%s100 + $0xf8] sm:$0xf] %v163
          $region36: #{reverse.15} parent=23 // loop_footer
            %s98 = sadd.s32 1, %s94
          $region37: #{reverse.15} parent=23 // loop_footer_branch
            %93 = sbr.rel target = $region33
          $region38: #{reverse.15} parent=23 // loop_exit
            _
        $region24: #{reverse.15} parent=8 // pred_fallthru
          _
      $region9: #{reverse.15} parent=4 // pred_fallthru
        _
      // Predicated region
      $region10: #{reverse.15} parent=4 // pred_check
        _
      $region11: #{reverse.15} parent=4 // pred_check_branch
        %8 = sbr.rel (0) target = $region13
      $region12: #{reverse.15} parent=4 // pred_region
        loop: start=0, step=1, limit=1
        $region14: #{reverse.15} parent=12 // loop_pre_header
          _
        $region15: #{reverse.15} parent=12 // loop_header
          %s11 = sphi 0, %s15
          %p12 = scmp.ge.s32.totalorder %s11, 1
          %s16 = sphi %s0, %s0
          %s17 = sphi %s2, %s2
        $region16: #{reverse.15} parent=12 // loop_header_branch
          %14 = sbr.rel (%p12) target = $region20
        $region17: #{reverse.15} parent=12 // loop_body
          %v18 = vld [vmem:[%s16] sm:$0xf]
          %19 = vst [vmem:[%s17] sm:$0xf] %v18
          %v20 = vld [vmem:[%s16 + $0x4] sm:$0xf]
          %21 = vst [vmem:[%s17 + $0x8] sm:$0xf] %v20
          %v22 = vld [vmem:[%s16 + $0x8] sm:$0xf]
          %23 = vst [vmem:[%s17 + $0x10] sm:$0xf] %v22
          %v24 = vld [vmem:[%s16 + $0xc] sm:$0xf]
          %25 = vst [vmem:[%s17 + $0x18] sm:$0xf] %v24
          %v26 = vld [vmem:[%s16 + $0x10] sm:$0xf]
          %27 = vst [vmem:[%s17 + $0x20] sm:$0xf] %v26
          %v28 = vld [vmem:[%s16 + $0x14] sm:$0xf]
          %29 = vst [vmem:[%s17 + $0x28] sm:$0xf] %v28
          %v30 = vld [vmem:[%s16 + $0x18] sm:$0xf]
          %31 = vst [vmem:[%s17 + $0x30] sm:$0xf] %v30
          %v32 = vld [vmem:[%s16 + $0x1c] sm:$0xf]
          %33 = vst [vmem:[%s17 + $0x38] sm:$0xf] %v32
          %v34 = vld [vmem:[%s16 + $0x20] sm:$0xf]
          %35 = vst [vmem:[%s17 + $0x40] sm:$0xf] %v34
          %v36 = vld [vmem:[%s16 + $0x24] sm:$0xf]
          %37 = vst [vmem:[%s17 + $0x48] sm:$0xf] %v36
          %v38 = vld [vmem:[%s16 + $0x28] sm:$0xf]
          %39 = vst [vmem:[%s17 + $0x50] sm:$0xf] %v38
          %v40 = vld [vmem:[%s16 + $0x2c] sm:$0xf]
          %41 = vst [vmem:[%s17 + $0x58] sm:$0xf] %v40
          %v42 = vld [vmem:[%s16 + $0x30] sm:$0xf]
          %43 = vst [vmem:[%s17 + $0x60] sm:$0xf] %v42
          %v44 = vld [vmem:[%s16 + $0x34] sm:$0xf]
          %45 = vst [vmem:[%s17 + $0x68] sm:$0xf] %v44
          %v46 = vld [vmem:[%s16 + $0x38] sm:$0xf]
          %47 = vst [vmem:[%s17 + $0x70] sm:$0xf] %v46
          %v48 = vld [vmem:[%s16 + $0x3c] sm:$0xf]
          %49 = vst [vmem:[%s17 + $0x78] sm:$0xf] %v48
          %v50 = vld [vmem:[%s16 + $0x40] sm:$0xf]
          %51 = vst [vmem:[%s17 + $0x80] sm:$0xf] %v50
          %v52 = vld [vmem:[%s16 + $0x44] sm:$0xf]
          %53 = vst [vmem:[%s17 + $0x88] sm:$0xf] %v52
          %v54 = vld [vmem:[%s16 + $0x48] sm:$0xf]
          %55 = vst [vmem:[%s17 + $0x90] sm:$0xf] %v54
          %v56 = vld [vmem:[%s16 + $0x4c] sm:$0xf]
          %57 = vst [vmem:[%s17 + $0x98] sm:$0xf] %v56
          %v58 = vld [vmem:[%s16 + $0x50] sm:$0xf]
          %59 = vst [vmem:[%s17 + $0xa0] sm:$0xf] %v58
          %v60 = vld [vmem:[%s16 + $0x54] sm:$0xf]
          %61 = vst [vmem:[%s17 + $0xa8] sm:$0xf] %v60
          %v62 = vld [vmem:[%s16 + $0x58] sm:$0xf]
          %63 = vst [vmem:[%s17 + $0xb0] sm:$0xf] %v62
          %v64 = vld [vmem:[%s16 + $0x5c] sm:$0xf]
          %65 = vst [vmem:[%s17 + $0xb8] sm:$0xf] %v64
          %v66 = vld [vmem:[%s16 + $0x60] sm:$0xf]
          %67 = vst [vmem:[%s17 + $0xc0] sm:$0xf] %v66
          %v68 = vld [vmem:[%s16 + $0x64] sm:$0xf]
          %69 = vst [vmem:[%s17 + $0xc8] sm:$0xf] %v68
          %v70 = vld [vmem:[%s16 + $0x68] sm:$0xf]
          %71 = vst [vmem:[%s17 + $0xd0] sm:$0xf] %v70
          %v72 = vld [vmem:[%s16 + $0x6c] sm:$0xf]
          %73 = vst [vmem:[%s17 + $0xd8] sm:$0xf] %v72
          %v74 = vld [vmem:[%s16 + $0x70] sm:$0xf]
          %75 = vst [vmem:[%s17 + $0xe0] sm:$0xf] %v74
          %v76 = vld [vmem:[%s16 + $0x74] sm:$0xf]
          %77 = vst [vmem:[%s17 + $0xe8] sm:$0xf] %v76
          %v78 = vld [vmem:[%s16 + $0x78] sm:$0xf]
          %79 = vst [vmem:[%s17 + $0xf0] sm:$0xf] %v78
          %v80 = vld [vmem:[%s16 + $0x7c] sm:$0xf]
          %81 = vst [vmem:[%s17 + $0xf8] sm:$0xf] %v80
        $region18: #{reverse.15} parent=12 // loop_footer
          %s15 = sadd.s32 1, %s11
        $region19: #{reverse.15} parent=12 // loop_footer_branch
          %10 = sbr.rel target = $region15
        $region20: #{reverse.15} parent=12 // loop_exit
          _
      $region13: #{reverse.15} parent=4 // pred_fallthru
        _
    $region5: #{reverse.15} parent=1 // pred_fallthru
      _
    %165 = vnop
    %s167 = sshllo.u32 0, 4
    %s168 = smul.addr 4, 63
    %s169 = scalar_lea.vmem [#allocation1], %s168
    %v170 = vld [vmem:[%s169] sm:%s167]
    %s171 = scalar_lea.vmem [#allocation0], 504
    %172 = vst [vmem:[%s171] sm:%s167] %v170
    %s173 = smul.addr 4, 62
    %s174 = scalar_lea.vmem [#allocation1], %s173
    %v175 = vld [vmem:[%s174] sm:%s167]
    %s176 = scalar_lea.vmem [#allocation0], 496
    %177 = vst [vmem:[%s176] sm:%s167] %v175
    %s178 = smul.addr 4, 61
    %s179 = scalar_lea.vmem [#allocation1], %s178
    %v180 = vld [vmem:[%s179] sm:%s167]
    %s181 = scalar_lea.vmem [#allocation0], 488
    %182 = vst [vmem:[%s181] sm:%s167] %v180
    %s183 = smul.addr 4, 60
    %s184 = scalar_lea.vmem [#allocation1], %s183
    %v185 = vld [vmem:[%s184] sm:%s167]
    %s186 = scalar_lea.vmem [#allocation0], 480
    %187 = vst [vmem:[%s186] sm:%s167] %v185
    %s188 = smul.addr 4, 59
    %s189 = scalar_lea.vmem [#allocation1], %s188
    %v190 = vld [vmem:[%s189] sm:%s167]
    %s191 = scalar_lea.vmem [#allocation0], 472
    %192 = vst [vmem:[%s191] sm:%s167] %v190
    %s193 = smul.addr 4, 58
    %s194 = scalar_lea.vmem [#allocation1], %s193
    %v195 = vld [vmem:[%s194] sm:%s167]
    %s196 = scalar_lea.vmem [#allocation0], 464
    %197 = vst [vmem:[%s196] sm:%s167] %v195
    %s198 = smul.addr 4, 57
    %s199 = scalar_lea.vmem [#allocation1], %s198
    %v200 = vld [vmem:[%s199] sm:%s167]
    %s201 = scalar_lea.vmem [#allocation0], 456
    %202 = vst [vmem:[%s201] sm:%s167] %v200
    %s203 = smul.addr 4, 56
    %s204 = scalar_lea.vmem [#allocation1], %s203
    %v205 = vld [vmem:[%s204] sm:%s167]
    %s206 = scalar_lea.vmem [#allocation0], 448
    %207 = vst [vmem:[%s206] sm:%s167] %v205
    %s208 = smul.addr 4, 55
    %s209 = scalar_lea.vmem [#allocation1], %s208
    %v210 = vld [vmem:[%s209] sm:%s167]
    %s211 = scalar_lea.vmem [#allocation0], 440
    %212 = vst [vmem:[%s211] sm:%s167] %v210
    %s213 = smul.addr 4, 54
    %s214 = scalar_lea.vmem [#allocation1], %s213
    %v215 = vld [vmem:[%s214] sm:%s167]
    %s216 = scalar_lea.vmem [#allocation0], 432
    %217 = vst [vmem:[%s216] sm:%s167] %v215
    %s218 = smul.addr 4, 53
    %s219 = scalar_lea.vmem [#allocation1], %s218
    %v220 = vld [vmem:[%s219] sm:%s167]
    %s221 = scalar_lea.vmem [#allocation0], 424
    %222 = vst [vmem:[%s221] sm:%s167] %v220
    %s223 = smul.addr 4, 52
    %s224 = scalar_lea.vmem [#allocation1], %s223
    %v225 = vld [vmem:[%s224] sm:%s167]
    %s226 = scalar_lea.vmem [#allocation0], 416
    %227 = vst [vmem:[%s226] sm:%s167] %v225
    %s228 = smul.addr 4, 51
    %s229 = scalar_lea.vmem [#allocation1], %s228
    %v230 = vld [vmem:[%s229] sm:%s167]
    %s231 = scalar_lea.vmem [#allocation0], 408
    %232 = vst [vmem:[%s231] sm:%s167] %v230
    %s233 = smul.addr 4, 50
    %s234 = scalar_lea.vmem [#allocation1], %s233
    %v235 = vld [vmem:[%s234] sm:%s167]
    %s236 = scalar_lea.vmem [#allocation0], 400
    %237 = vst [vmem:[%s236] sm:%s167] %v235
    %s238 = smul.addr 4, 49
    %s239 = scalar_lea.vmem [#allocation1], %s238
    %v240 = vld [vmem:[%s239] sm:%s167]
    %s241 = scalar_lea.vmem [#allocation0], 392
    %242 = vst [vmem:[%s241] sm:%s167] %v240
    %s243 = smul.addr 4, 48
    %s244 = scalar_lea.vmem [#allocation1], %s243
    %v245 = vld [vmem:[%s244] sm:%s167]
    %s246 = scalar_lea.vmem [#allocation0], 384
    %247 = vst [vmem:[%s246] sm:%s167] %v245
    %s248 = smul.addr 4, 47
    %s249 = scalar_lea.vmem [#allocation1], %s248
    %v250 = vld [vmem:[%s249] sm:%s167]
    %s251 = scalar_lea.vmem [#allocation0], 376
    %252 = vst [vmem:[%s251] sm:%s167] %v250
    %s253 = smul.addr 4, 46
    %s254 = scalar_lea.vmem [#allocation1], %s253
    %v255 = vld [vmem:[%s254] sm:%s167]
    %s256 = scalar_lea.vmem [#allocation0], 368
    %257 = vst [vmem:[%s256] sm:%s167] %v255
    %s258 = smul.addr 4, 45
    %s259 = scalar_lea.vmem [#allocation1], %s258
    %v260 = vld [vmem:[%s259] sm:%s167]
    %s261 = scalar_lea.vmem [#allocation0], 360
    %262 = vst [vmem:[%s261] sm:%s167] %v260
    %s263 = smul.addr 4, 44
    %s264 = scalar_lea.vmem [#allocation1], %s263
    %v265 = vld [vmem:[%s264] sm:%s167]
    %s266 = scalar_lea.vmem [#allocation0], 352
    %267 = vst [vmem:[%s266] sm:%s167] %v265
    %s268 = smul.addr 4, 43
    %s269 = scalar_lea.vmem [#allocation1], %s268
    %v270 = vld [vmem:[%s269] sm:%s167]
    %s271 = scalar_lea.vmem [#allocation0], 344
    %272 = vst [vmem:[%s271] sm:%s167] %v270
    %s273 = smul.addr 4, 42
    %s274 = scalar_lea.vmem [#allocation1], %s273
    %v275 = vld [vmem:[%s274] sm:%s167]
    %s276 = scalar_lea.vmem [#allocation0], 336
    %277 = vst [vmem:[%s276] sm:%s167] %v275
    %s278 = smul.addr 4, 41
    %s279 = scalar_lea.vmem [#allocation1], %s278
    %v280 = vld [vmem:[%s279] sm:%s167]
    %s281 = scalar_lea.vmem [#allocation0], 328
    %282 = vst [vmem:[%s281] sm:%s167] %v280
    %s283 = smul.addr 4, 40
    %s284 = scalar_lea.vmem [#allocation1], %s283
    %v285 = vld [vmem:[%s284] sm:%s167]
    %s286 = scalar_lea.vmem [#allocation0], 320
    %287 = vst [vmem:[%s286] sm:%s167] %v285
    %s288 = smul.addr 4, 39
    %s289 = scalar_lea.vmem [#allocation1], %s288
    %v290 = vld [vmem:[%s289] sm:%s167]
    %s291 = scalar_lea.vmem [#allocation0], 312
    %292 = vst [vmem:[%s291] sm:%s167] %v290
    %s293 = smul.addr 4, 38
    %s294 = scalar_lea.vmem [#allocation1], %s293
    %v295 = vld [vmem:[%s294] sm:%s167]
    %s296 = scalar_lea.vmem [#allocation0], 304
    %297 = vst [vmem:[%s296] sm:%s167] %v295
    %s298 = smul.addr 4, 37
    %s299 = scalar_lea.vmem [#allocation1], %s298
    %v300 = vld [vmem:[%s299] sm:%s167]
    %s301 = scalar_lea.vmem [#allocation0], 296
    %302 = vst [vmem:[%s301] sm:%s167] %v300
    %s303 = smul.addr 4, 36
    %s304 = scalar_lea.vmem [#allocation1], %s303
    %v305 = vld [vmem:[%s304] sm:%s167]
    %s306 = scalar_lea.vmem [#allocation0], 288
    %307 = vst [vmem:[%s306] sm:%s167] %v305
    %s308 = smul.addr 4, 35
    %s309 = scalar_lea.vmem [#allocation1], %s308
    %v310 = vld [vmem:[%s309] sm:%s167]
    %s311 = scalar_lea.vmem [#allocation0], 280
    %312 = vst [vmem:[%s311] sm:%s167] %v310
    %s313 = smul.addr 4, 34
    %s314 = scalar_lea.vmem [#allocation1], %s313
    %v315 = vld [vmem:[%s314] sm:%s167]
    %s316 = scalar_lea.vmem [#allocation0], 272
    %317 = vst [vmem:[%s316] sm:%s167] %v315
    %s318 = smul.addr 4, 33
    %s319 = scalar_lea.vmem [#allocation1], %s318
    %v320 = vld [vmem:[%s319] sm:%s167]
    %s321 = scalar_lea.vmem [#allocation0], 264
    %322 = vst [vmem:[%s321] sm:%s167] %v320
    %s323 = smul.addr 4, 32
    %s324 = scalar_lea.vmem [#allocation1], %s323
    %v325 = vld [vmem:[%s324] sm:%s167]
    %s326 = scalar_lea.vmem [#allocation0], 256
    %327 = vst [vmem:[%s326] sm:%s167] %v325
    %s328 = smul.addr 4, 31
    %s329 = scalar_lea.vmem [#allocation1], %s328
    %v330 = vld [vmem:[%s329] sm:%s167]
    %s331 = scalar_lea.vmem [#allocation0], 248
    %332 = vst [vmem:[%s331] sm:%s167] %v330
    %s333 = smul.addr 4, 30
    %s334 = scalar_lea.vmem [#allocation1], %s333
    %v335 = vld [vmem:[%s334] sm:%s167]
    %s336 = scalar_lea.vmem [#allocation0], 240
    %337 = vst [vmem:[%s336] sm:%s167] %v335
    %s338 = smul.addr 4, 29
    %s339 = scalar_lea.vmem [#allocation1], %s338
    %v340 = vld [vmem:[%s339] sm:%s167]
    %s341 = scalar_lea.vmem [#allocation0], 232
    %342 = vst [vmem:[%s341] sm:%s167] %v340
    %s343 = smul.addr 4, 28
    %s344 = scalar_lea.vmem [#allocation1], %s343
    %v345 = vld [vmem:[%s344] sm:%s167]
    %s346 = scalar_lea.vmem [#allocation0], 224
    %347 = vst [vmem:[%s346] sm:%s167] %v345
    %s348 = smul.addr 4, 27
    %s349 = scalar_lea.vmem [#allocation1], %s348
    %v350 = vld [vmem:[%s349] sm:%s167]
    %s351 = scalar_lea.vmem [#allocation0], 216
    %352 = vst [vmem:[%s351] sm:%s167] %v350
    %s353 = smul.addr 4, 26
    %s354 = scalar_lea.vmem [#allocation1], %s353
    %v355 = vld [vmem:[%s354] sm:%s167]
    %s356 = scalar_lea.vmem [#allocation0], 208
    %357 = vst [vmem:[%s356] sm:%s167] %v355
    %s358 = smul.addr 4, 25
    %s359 = scalar_lea.vmem [#allocation1], %s358
    %v360 = vld [vmem:[%s359] sm:%s167]
    %s361 = scalar_lea.vmem [#allocation0], 200
    %362 = vst [vmem:[%s361] sm:%s167] %v360
    %s363 = smul.addr 4, 24
    %s364 = scalar_lea.vmem [#allocation1], %s363
    %v365 = vld [vmem:[%s364] sm:%s167]
    %s366 = scalar_lea.vmem [#allocation0], 192
    %367 = vst [vmem:[%s366] sm:%s167] %v365
    %s368 = smul.addr 4, 23
    %s369 = scalar_lea.vmem [#allocation1], %s368
    %v370 = vld [vmem:[%s369] sm:%s167]
    %s371 = scalar_lea.vmem [#allocation0], 184
    %372 = vst [vmem:[%s371] sm:%s167] %v370
    %s373 = smul.addr 4, 22
    %s374 = scalar_lea.vmem [#allocation1], %s373
    %v375 = vld [vmem:[%s374] sm:%s167]
    %s376 = scalar_lea.vmem [#allocation0], 176
    %377 = vst [vmem:[%s376] sm:%s167] %v375
    %s378 = smul.addr 4, 21
    %s379 = scalar_lea.vmem [#allocation1], %s378
    %v380 = vld [vmem:[%s379] sm:%s167]
    %s381 = scalar_lea.vmem [#allocation0], 168
    %382 = vst [vmem:[%s381] sm:%s167] %v380
    %s383 = smul.addr 4, 20
    %s384 = scalar_lea.vmem [#allocation1], %s383
    %v385 = vld [vmem:[%s384] sm:%s167]
    %s386 = scalar_lea.vmem [#allocation0], 160
    %387 = vst [vmem:[%s386] sm:%s167] %v385
    %s388 = smul.addr 4, 19
    %s389 = scalar_lea.vmem [#allocation1], %s388
    %v390 = vld [vmem:[%s389] sm:%s167]
    %s391 = scalar_lea.vmem [#allocation0], 152
    %392 = vst [vmem:[%s391] sm:%s167] %v390
    %s393 = smul.addr 4, 18
    %s394 = scalar_lea.vmem [#allocation1], %s393
    %v395 = vld [vmem:[%s394] sm:%s167]
    %s396 = scalar_lea.vmem [#allocation0], 144
    %397 = vst [vmem:[%s396] sm:%s167] %v395
    %s398 = smul.addr 4, 17
    %s399 = scalar_lea.vmem [#allocation1], %s398
    %v400 = vld [vmem:[%s399] sm:%s167]
    %s401 = scalar_lea.vmem [#allocation0], 136
    %402 = vst [vmem:[%s401] sm:%s167] %v400
    %s403 = smul.addr 4, 16
    %s404 = scalar_lea.vmem [#allocation1], %s403
    %v405 = vld [vmem:[%s404] sm:%s167]
    %s406 = scalar_lea.vmem [#allocation0], 128
    %407 = vst [vmem:[%s406] sm:%s167] %v405
    %s408 = smul.addr 4, 15
    %s409 = scalar_lea.vmem [#allocation1], %s408
    %v410 = vld [vmem:[%s409] sm:%s167]
    %s411 = scalar_lea.vmem [#allocation0], 120
    %412 = vst [vmem:[%s411] sm:%s167] %v410
    %s413 = smul.addr 4, 14
    %s414 = scalar_lea.vmem [#allocation1], %s413
    %v415 = vld [vmem:[%s414] sm:%s167]
    %s416 = scalar_lea.vmem [#allocation0], 112
    %417 = vst [vmem:[%s416] sm:%s167] %v415
    %s418 = smul.addr 4, 13
    %s419 = scalar_lea.vmem [#allocation1], %s418
    %v420 = vld [vmem:[%s419] sm:%s167]
    %s421 = scalar_lea.vmem [#allocation0], 104
    %422 = vst [vmem:[%s421] sm:%s167] %v420
    %s423 = smul.addr 4, 12
    %s424 = scalar_lea.vmem [#allocation1], %s423
    %v425 = vld [vmem:[%s424] sm:%s167]
    %s426 = scalar_lea.vmem [#allocation0], 96
    %427 = vst [vmem:[%s426] sm:%s167] %v425
    %s428 = smul.addr 4, 11
    %s429 = scalar_lea.vmem [#allocation1], %s428
    %v430 = vld [vmem:[%s429] sm:%s167]
    %s431 = scalar_lea.vmem [#allocation0], 88
    %432 = vst [vmem:[%s431] sm:%s167] %v430
    %s433 = smul.addr 4, 10
    %s434 = scalar_lea.vmem [#allocation1], %s433
    %v435 = vld [vmem:[%s434] sm:%s167]
    %s436 = scalar_lea.vmem [#allocation0], 80
    %437 = vst [vmem:[%s436] sm:%s167] %v435
    %s438 = smul.addr 4, 9
    %s439 = scalar_lea.vmem [#allocation1], %s438
    %v440 = vld [vmem:[%s439] sm:%s167]
    %s441 = scalar_lea.vmem [#allocation0], 72
    %442 = vst [vmem:[%s441] sm:%s167] %v440
    %s443 = smul.addr 4, 8
    %s444 = scalar_lea.vmem [#allocation1], %s443
    %v445 = vld [vmem:[%s444] sm:%s167]
    %s446 = scalar_lea.vmem [#allocation0], 64
    %447 = vst [vmem:[%s446] sm:%s167] %v445
    %s448 = smul.addr 4, 7
    %s449 = scalar_lea.vmem [#allocation1], %s448
    %v450 = vld [vmem:[%s449] sm:%s167]
    %s451 = scalar_lea.vmem [#allocation0], 56
    %452 = vst [vmem:[%s451] sm:%s167] %v450
    %s453 = smul.addr 4, 6
    %s454 = scalar_lea.vmem [#allocation1], %s453
    %v455 = vld [vmem:[%s454] sm:%s167]
    %s456 = scalar_lea.vmem [#allocation0], 48
    %457 = vst [vmem:[%s456] sm:%s167] %v455
    %s458 = smul.addr 4, 5
    %s459 = scalar_lea.vmem [#allocation1], %s458
    %v460 = vld [vmem:[%s459] sm:%s167]
    %s461 = scalar_lea.vmem [#allocation0], 40
    %462 = vst [vmem:[%s461] sm:%s167] %v460
    %s463 = smul.addr 4, 4
    %s464 = scalar_lea.vmem [#allocation1], %s463
    %v465 = vld [vmem:[%s464] sm:%s167]
    %s466 = scalar_lea.vmem [#allocation0], 32
    %467 = vst [vmem:[%s466] sm:%s167] %v465
    %s468 = smul.addr 4, 3
    %s469 = scalar_lea.vmem [#allocation1], %s468
    %v470 = vld [vmem:[%s469] sm:%s167]
    %s471 = scalar_lea.vmem [#allocation0], 24
    %472 = vst [vmem:[%s471] sm:%s167] %v470
    %s473 = smul.addr 4, 2
    %s474 = scalar_lea.vmem [#allocation1], %s473
    %v475 = vld [vmem:[%s474] sm:%s167]
    %s476 = scalar_lea.vmem [#allocation0], 16
    %477 = vst [vmem:[%s476] sm:%s167] %v475
    %s478 = scalar_lea.vmem [#allocation1], 4
    %v479 = vld [vmem:[%s478] sm:%s167]
    %s480 = scalar_lea.vmem [#allocation0], 8
    %481 = vst [vmem:[%s480] sm:%s167] %v479
    %v482 = vld [vmem:[#allocation1] sm:%s167]
    %483 = vst [vmem:[#allocation0] sm:%s167] %v482
    %s484 = scalar_lea.vmem [#allocation0], 7
    %v485 = vld [vmem:[%s484] ss:$-1 sm:$0xff]
    %v486 = vrot.slane %v485, 5
    %487 = vst [vmem:[#allocation2] sm:$0xff] %v486
    %s488 = scalar_lea.vmem [#allocation0], 8
    %s489 = scalar_lea.vmem %s488, 7 [#allocation0]
    %v490 = vld [vmem:[%s489] ss:$-1 sm:$0xff]
    %v491 = vrot.slane %v490, 5
    %v492 = vlaneseq
    %v493 = vshrl.u32 %v492, 7
    %vm494 = vcmp.lt.s32.totalorder %v493, 3
    %495 = vst.msk [vmem:[#allocation2] sm:$0xff] %vm494, %v491
    %s496 = scalar_lea.vmem [#allocation2], 8
    %s497 = scalar_lea.vmem [#allocation0], 16
    %s498 = scalar_lea.vmem %s497, 7 [#allocation0]
    %v499 = vld [vmem:[%s498] ss:$-1 sm:$0xff]
    %v500 = vrot.slane %v499, 5
    %501 = vst [vmem:[%s496] sm:$0xff] %v500
    %s502 = scalar_lea.vmem %s497, 8 [#allocation0]
    %s503 = scalar_lea.vmem %s502, 7 [#allocation0]
    %v504 = vld [vmem:[%s503] ss:$-1 sm:$0xff]
    %v505 = vrot.slane %v504, 5
    %v506 = vlaneseq
    %v507 = vshrl.u32 %v506, 7
    %vm508 = vcmp.lt.s32.totalorder %v507, 3
    %509 = vst.msk [vmem:[%s496] sm:$0xff] %vm508, %v505
    %s510 = scalar_lea.vmem [#allocation2], 16
    %s511 = scalar_lea.vmem [#allocation0], 32
    %s512 = scalar_lea.vmem %s511, 7 [#allocation0]
    %v513 = vld [vmem:[%s512] ss:$-1 sm:$0xff]
    %v514 = vrot.slane %v513, 5
    %515 = vst [vmem:[%s510] sm:$0xff] %v514
    %s516 = scalar_lea.vmem %s511, 8 [#allocation0]
    %s517 = scalar_lea.vmem %s516, 7 [#allocation0]
    %v518 = vld [vmem:[%s517] ss:$-1 sm:$0xff]
    %v519 = vrot.slane %v518, 5
    %v520 = vlaneseq
    %v521 = vshrl.u32 %v520, 7
    %vm522 = vcmp.lt.s32.totalorder %v521, 3
    %523 = vst.msk [vmem:[%s510] sm:$0xff] %vm522, %v519
    %s524 = scalar_lea.vmem [#allocation2], 24
    %s525 = scalar_lea.vmem [#allocation0], 48
    %s526 = scalar_lea.vmem %s525, 7 [#allocation0]
    %v527 = vld [vmem:[%s526] ss:$-1 sm:$0xff]
    %v528 = vrot.slane %v527, 5
    %529 = vst [vmem:[%s524] sm:$0xff] %v528
    %s530 = scalar_lea.vmem %s525, 8 [#allocation0]
    %s531 = scalar_lea.vmem %s530, 7 [#allocation0]
    %v532 = vld [vmem:[%s531] ss:$-1 sm:$0xff]
    %v533 = vrot.slane %v532, 5
    %v534 = vlaneseq
    %v535 = vshrl.u32 %v534, 7
    %vm536 = vcmp.lt.s32.totalorder %v535, 3
    %537 = vst.msk [vmem:[%s524] sm:$0xff] %vm536, %v533
    %s538 = scalar_lea.vmem [#allocation2], 32
    %s539 = scalar_lea.vmem [#allocation0], 64
    %s540 = scalar_lea.vmem %s539, 7 [#allocation0]
    %v541 = vld [vmem:[%s540] ss:$-1 sm:$0xff]
    %v542 = vrot.slane %v541, 5
    %543 = vst [vmem:[%s538] sm:$0xff] %v542
    %s544 = scalar_lea.vmem %s539, 8 [#allocation0]
    %s545 = scalar_lea.vmem %s544, 7 [#allocation0]
    %v546 = vld [vmem:[%s545] ss:$-1 sm:$0xff]
    %v547 = vrot.slane %v546, 5
    %v548 = vlaneseq
    %v549 = vshrl.u32 %v548, 7
    %vm550 = vcmp.lt.s32.totalorder %v549, 3
    %551 = vst.msk [vmem:[%s538] sm:$0xff] %vm550, %v547
    %s552 = scalar_lea.vmem [#allocation2], 40
    %s553 = scalar_lea.vmem [#allocation0], 80
    %s554 = scalar_lea.vmem %s553, 7 [#allocation0]
    %v555 = vld [vmem:[%s554] ss:$-1 sm:$0xff]
    %v556 = vrot.slane %v555, 5
    %557 = vst [vmem:[%s552] sm:$0xff] %v556
    %s558 = scalar_lea.vmem %s553, 8 [#allocation0]
    %s559 = scalar_lea.vmem %s558, 7 [#allocation0]
    %v560 = vld [vmem:[%s559] ss:$-1 sm:$0xff]
    %v561 = vrot.slane %v560, 5
    %v562 = vlaneseq
    %v563 = vshrl.u32 %v562, 7
    %vm564 = vcmp.lt.s32.totalorder %v563, 3
    %565 = vst.msk [vmem:[%s552] sm:$0xff] %vm564, %v561
    %s566 = scalar_lea.vmem [#allocation2], 48
    %s567 = scalar_lea.vmem [#allocation0], 96
    %s568 = scalar_lea.vmem %s567, 7 [#allocation0]
    %v569 = vld [vmem:[%s568] ss:$-1 sm:$0xff]
    %v570 = vrot.slane %v569, 5
    %571 = vst [vmem:[%s566] sm:$0xff] %v570
    %s572 = scalar_lea.vmem %s567, 8 [#allocation0]
    %s573 = scalar_lea.vmem %s572, 7 [#allocation0]
    %v574 = vld [vmem:[%s573] ss:$-1 sm:$0xff]
    %v575 = vrot.slane %v574, 5
    %v576 = vlaneseq
    %v577 = vshrl.u32 %v576, 7
    %vm578 = vcmp.lt.s32.totalorder %v577, 3
    %579 = vst.msk [vmem:[%s566] sm:$0xff] %vm578, %v575
    %s580 = scalar_lea.vmem [#allocation2], 56
    %s581 = scalar_lea.vmem [#allocation0], 112
    %s582 = scalar_lea.vmem %s581, 7 [#allocation0]
    %v583 = vld [vmem:[%s582] ss:$-1 sm:$0xff]
    %v584 = vrot.slane %v583, 5
    %585 = vst [vmem:[%s580] sm:$0xff] %v584
    %s586 = scalar_lea.vmem %s581, 8 [#allocation0]
    %s587 = scalar_lea.vmem %s586, 7 [#allocation0]
    %v588 = vld [vmem:[%s587] ss:$-1 sm:$0xff]
    %v589 = vrot.slane %v588, 5
    %v590 = vlaneseq
    %v591 = vshrl.u32 %v590, 7
    %vm592 = vcmp.lt.s32.totalorder %v591, 3
    %593 = vst.msk [vmem:[%s580] sm:$0xff] %vm592, %v589
    %s594 = scalar_lea.vmem [#allocation2], 64
    %s595 = scalar_lea.vmem [#allocation0], 128
    %s596 = scalar_lea.vmem %s595, 7 [#allocation0]
    %v597 = vld [vmem:[%s596] ss:$-1 sm:$0xff]
    %v598 = vrot.slane %v597, 5
    %599 = vst [vmem:[%s594] sm:$0xff] %v598
    %s600 = scalar_lea.vmem %s595, 8 [#allocation0]
    %s601 = scalar_lea.vmem %s600, 7 [#allocation0]
    %v602 = vld [vmem:[%s601] ss:$-1 sm:$0xff]
    %v603 = vrot.slane %v602, 5
    %v604 = vlaneseq
    %v605 = vshrl.u32 %v604, 7
    %vm606 = vcmp.lt.s32.totalorder %v605, 3
    %607 = vst.msk [vmem:[%s594] sm:$0xff] %vm606, %v603
    %s608 = scalar_lea.vmem [#allocation2], 72
    %s609 = scalar_lea.vmem [#allocation0], 144
    %s610 = scalar_lea.vmem %s609, 7 [#allocation0]
    %v611 = vld [vmem:[%s610] ss:$-1 sm:$0xff]
    %v612 = vrot.slane %v611, 5
    %613 = vst [vmem:[%s608] sm:$0xff] %v612
    %s614 = scalar_lea.vmem %s609, 8 [#allocation0]
    %s615 = scalar_lea.vmem %s614, 7 [#allocation0]
    %v616 = vld [vmem:[%s615] ss:$-1 sm:$0xff]
    %v617 = vrot.slane %v616, 5
    %v618 = vlaneseq
    %v619 = vshrl.u32 %v618, 7
    %vm620 = vcmp.lt.s32.totalorder %v619, 3
    %621 = vst.msk [vmem:[%s608] sm:$0xff] %vm620, %v617
    %s622 = scalar_lea.vmem [#allocation2], 80
    %s623 = scalar_lea.vmem [#allocation0], 160
    %s624 = scalar_lea.vmem %s623, 7 [#allocation0]
    %v625 = vld [vmem:[%s624] ss:$-1 sm:$0xff]
    %v626 = vrot.slane %v625, 5
    %627 = vst [vmem:[%s622] sm:$0xff] %v626
    %s628 = scalar_lea.vmem %s623, 8 [#allocation0]
    %s629 = scalar_lea.vmem %s628, 7 [#allocation0]
    %v630 = vld [vmem:[%s629] ss:$-1 sm:$0xff]
    %v631 = vrot.slane %v630, 5
    %v632 = vlaneseq
    %v633 = vshrl.u32 %v632, 7
    %vm634 = vcmp.lt.s32.totalorder %v633, 3
    %635 = vst.msk [vmem:[%s622] sm:$0xff] %vm634, %v631
    %s636 = scalar_lea.vmem [#allocation2], 88
    %s637 = scalar_lea.vmem [#allocation0], 176
    %s638 = scalar_lea.vmem %s637, 7 [#allocation0]
    %v639 = vld [vmem:[%s638] ss:$-1 sm:$0xff]
    %v640 = vrot.slane %v639, 5
    %641 = vst [vmem:[%s636] sm:$0xff] %v640
    %s642 = scalar_lea.vmem %s637, 8 [#allocation0]
    %s643 = scalar_lea.vmem %s642, 7 [#allocation0]
    %v644 = vld [vmem:[%s643] ss:$-1 sm:$0xff]
    %v645 = vrot.slane %v644, 5
    %v646 = vlaneseq
    %v647 = vshrl.u32 %v646, 7
    %vm648 = vcmp.lt.s32.totalorder %v647, 3
    %649 = vst.msk [vmem:[%s636] sm:$0xff] %vm648, %v645
    %s650 = scalar_lea.vmem [#allocation2], 96
    %s651 = scalar_lea.vmem [#allocation0], 192
    %s652 = scalar_lea.vmem %s651, 7 [#allocation0]
    %v653 = vld [vmem:[%s652] ss:$-1 sm:$0xff]
    %v654 = vrot.slane %v653, 5
    %655 = vst [vmem:[%s650] sm:$0xff] %v654
    %s656 = scalar_lea.vmem %s651, 8 [#allocation0]
    %s657 = scalar_lea.vmem %s656, 7 [#allocation0]
    %v658 = vld [vmem:[%s657] ss:$-1 sm:$0xff]
    %v659 = vrot.slane %v658, 5
    %v660 = vlaneseq
    %v661 = vshrl.u32 %v660, 7
    %vm662 = vcmp.lt.s32.totalorder %v661, 3
    %663 = vst.msk [vmem:[%s650] sm:$0xff] %vm662, %v659
    %s664 = scalar_lea.vmem [#allocation2], 104
    %s665 = scalar_lea.vmem [#allocation0], 208
    %s666 = scalar_lea.vmem %s665, 7 [#allocation0]
    %v667 = vld [vmem:[%s666] ss:$-1 sm:$0xff]
    %v668 = vrot.slane %v667, 5
    %669 = vst [vmem:[%s664] sm:$0xff] %v668
    %s670 = scalar_lea.vmem %s665, 8 [#allocation0]
    %s671 = scalar_lea.vmem %s670, 7 [#allocation0]
    %v672 = vld [vmem:[%s671] ss:$-1 sm:$0xff]
    %v673 = vrot.slane %v672, 5
    %v674 = vlaneseq
    %v675 = vshrl.u32 %v674, 7
    %vm676 = vcmp.lt.s32.totalorder %v675, 3
    %677 = vst.msk [vmem:[%s664] sm:$0xff] %vm676, %v673
    %s678 = scalar_lea.vmem [#allocation2], 112
    %s679 = scalar_lea.vmem [#allocation0], 224
    %s680 = scalar_lea.vmem %s679, 7 [#allocation0]
    %v681 = vld [vmem:[%s680] ss:$-1 sm:$0xff]
    %v682 = vrot.slane %v681, 5
    %683 = vst [vmem:[%s678] sm:$0xff] %v682
    %s684 = scalar_lea.vmem %s679, 8 [#allocation0]
    %s685 = scalar_lea.vmem %s684, 7 [#allocation0]
    %v686 = vld [vmem:[%s685] ss:$-1 sm:$0xff]
    %v687 = vrot.slane %v686, 5
    %v688 = vlaneseq
    %v689 = vshrl.u32 %v688, 7
    %vm690 = vcmp.lt.s32.totalorder %v689, 3
    %691 = vst.msk [vmem:[%s678] sm:$0xff] %vm690, %v687
    %s692 = scalar_lea.vmem [#allocation2], 120
    %s693 = scalar_lea.vmem [#allocation0], 240
    %s694 = scalar_lea.vmem %s693, 7 [#allocation0]
    %v695 = vld [vmem:[%s694] ss:$-1 sm:$0xff]
    %v696 = vrot.slane %v695, 5
    %697 = vst [vmem:[%s692] sm:$0xff] %v696
    %s698 = scalar_lea.vmem %s693, 8 [#allocation0]
    %s699 = scalar_lea.vmem %s698, 7 [#allocation0]
    %v700 = vld [vmem:[%s699] ss:$-1 sm:$0xff]
    %v701 = vrot.slane %v700, 5
    %v702 = vlaneseq
    %v703 = vshrl.u32 %v702, 7
    %vm704 = vcmp.lt.s32.totalorder %v703, 3
    %705 = vst.msk [vmem:[%s692] sm:$0xff] %vm704, %v701
    %s706 = scalar_lea.vmem [#allocation2], 128
    %s707 = scalar_lea.vmem [#allocation0], 256
    %s708 = scalar_lea.vmem %s707, 7 [#allocation0]
    %v709 = vld [vmem:[%s708] ss:$-1 sm:$0xff]
    %v710 = vrot.slane %v709, 5
    %711 = vst [vmem:[%s706] sm:$0xff] %v710
    %s712 = scalar_lea.vmem %s707, 8 [#allocation0]
    %s713 = scalar_lea.vmem %s712, 7 [#allocation0]
    %v714 = vld [vmem:[%s713] ss:$-1 sm:$0xff]
    %v715 = vrot.slane %v714, 5
    %v716 = vlaneseq
    %v717 = vshrl.u32 %v716, 7
    %vm718 = vcmp.lt.s32.totalorder %v717, 3
    %719 = vst.msk [vmem:[%s706] sm:$0xff] %vm718, %v715
    %s720 = scalar_lea.vmem [#allocation2], 136
    %s721 = scalar_lea.vmem [#allocation0], 272
    %s722 = scalar_lea.vmem %s721, 7 [#allocation0]
    %v723 = vld [vmem:[%s722] ss:$-1 sm:$0xff]
    %v724 = vrot.slane %v723, 5
    %725 = vst [vmem:[%s720] sm:$0xff] %v724
    %s726 = scalar_lea.vmem %s721, 8 [#allocation0]
    %s727 = scalar_lea.vmem %s726, 7 [#allocation0]
    %v728 = vld [vmem:[%s727] ss:$-1 sm:$0xff]
    %v729 = vrot.slane %v728, 5
    %v730 = vlaneseq
    %v731 = vshrl.u32 %v730, 7
    %vm732 = vcmp.lt.s32.totalorder %v731, 3
    %733 = vst.msk [vmem:[%s720] sm:$0xff] %vm732, %v729
    %s734 = scalar_lea.vmem [#allocation2], 144
    %s735 = scalar_lea.vmem [#allocation0], 288
    %s736 = scalar_lea.vmem %s735, 7 [#allocation0]
    %v737 = vld [vmem:[%s736] ss:$-1 sm:$0xff]
    %v738 = vrot.slane %v737, 5
    %739 = vst [vmem:[%s734] sm:$0xff] %v738
    %s740 = scalar_lea.vmem %s735, 8 [#allocation0]
    %s741 = scalar_lea.vmem %s740, 7 [#allocation0]
    %v742 = vld [vmem:[%s741] ss:$-1 sm:$0xff]
    %v743 = vrot.slane %v742, 5
    %v744 = vlaneseq
    %v745 = vshrl.u32 %v744, 7
    %vm746 = vcmp.lt.s32.totalorder %v745, 3
    %747 = vst.msk [vmem:[%s734] sm:$0xff] %vm746, %v743
    %s748 = scalar_lea.vmem [#allocation2], 152
    %s749 = scalar_lea.vmem [#allocation0], 304
    %s750 = scalar_lea.vmem %s749, 7 [#allocation0]
    %v751 = vld [vmem:[%s750] ss:$-1 sm:$0xff]
    %v752 = vrot.slane %v751, 5
    %753 = vst [vmem:[%s748] sm:$0xff] %v752
    %s754 = scalar_lea.vmem %s749, 8 [#allocation0]
    %s755 = scalar_lea.vmem %s754, 7 [#allocation0]
    %v756 = vld [vmem:[%s755] ss:$-1 sm:$0xff]
    %v757 = vrot.slane %v756, 5
    %v758 = vlaneseq
    %v759 = vshrl.u32 %v758, 7
    %vm760 = vcmp.lt.s32.totalorder %v759, 3
    %761 = vst.msk [vmem:[%s748] sm:$0xff] %vm760, %v757
    %s762 = scalar_lea.vmem [#allocation2], 160
    %s763 = scalar_lea.vmem [#allocation0], 320
    %s764 = scalar_lea.vmem %s763, 7 [#allocation0]
    %v765 = vld [vmem:[%s764] ss:$-1 sm:$0xff]
    %v766 = vrot.slane %v765, 5
    %767 = vst [vmem:[%s762] sm:$0xff] %v766
    %s768 = scalar_lea.vmem %s763, 8 [#allocation0]
    %s769 = scalar_lea.vmem %s768, 7 [#allocation0]
    %v770 = vld [vmem:[%s769] ss:$-1 sm:$0xff]
    %v771 = vrot.slane %v770, 5
    %v772 = vlaneseq
    %v773 = vshrl.u32 %v772, 7
    %vm774 = vcmp.lt.s32.totalorder %v773, 3
    %775 = vst.msk [vmem:[%s762] sm:$0xff] %vm774, %v771
    %s776 = scalar_lea.vmem [#allocation2], 168
    %s777 = scalar_lea.vmem [#allocation0], 336
    %s778 = scalar_lea.vmem %s777, 7 [#allocation0]
    %v779 = vld [vmem:[%s778] ss:$-1 sm:$0xff]
    %v780 = vrot.slane %v779, 5
    %781 = vst [vmem:[%s776] sm:$0xff] %v780
    %s782 = scalar_lea.vmem %s777, 8 [#allocation0]
    %s783 = scalar_lea.vmem %s782, 7 [#allocation0]
    %v784 = vld [vmem:[%s783] ss:$-1 sm:$0xff]
    %v785 = vrot.slane %v784, 5
    %v786 = vlaneseq
    %v787 = vshrl.u32 %v786, 7
    %vm788 = vcmp.lt.s32.totalorder %v787, 3
    %789 = vst.msk [vmem:[%s776] sm:$0xff] %vm788, %v785
    %s790 = scalar_lea.vmem [#allocation2], 176
    %s791 = scalar_lea.vmem [#allocation0], 352
    %s792 = scalar_lea.vmem %s791, 7 [#allocation0]
    %v793 = vld [vmem:[%s792] ss:$-1 sm:$0xff]
    %v794 = vrot.slane %v793, 5
    %795 = vst [vmem:[%s790] sm:$0xff] %v794
    %s796 = scalar_lea.vmem %s791, 8 [#allocation0]
    %s797 = scalar_lea.vmem %s796, 7 [#allocation0]
    %v798 = vld [vmem:[%s797] ss:$-1 sm:$0xff]
    %v799 = vrot.slane %v798, 5
    %v800 = vlaneseq
    %v801 = vshrl.u32 %v800, 7
    %vm802 = vcmp.lt.s32.totalorder %v801, 3
    %803 = vst.msk [vmem:[%s790] sm:$0xff] %vm802, %v799
    %s804 = scalar_lea.vmem [#allocation2], 184
    %s805 = scalar_lea.vmem [#allocation0], 368
    %s806 = scalar_lea.vmem %s805, 7 [#allocation0]
    %v807 = vld [vmem:[%s806] ss:$-1 sm:$0xff]
    %v808 = vrot.slane %v807, 5
    %809 = vst [vmem:[%s804] sm:$0xff] %v808
    %s810 = scalar_lea.vmem %s805, 8 [#allocation0]
    %s811 = scalar_lea.vmem %s810, 7 [#allocation0]
    %v812 = vld [vmem:[%s811] ss:$-1 sm:$0xff]
    %v813 = vrot.slane %v812, 5
    %v814 = vlaneseq
    %v815 = vshrl.u32 %v814, 7
    %vm816 = vcmp.lt.s32.totalorder %v815, 3
    %817 = vst.msk [vmem:[%s804] sm:$0xff] %vm816, %v813
    %s818 = scalar_lea.vmem [#allocation2], 192
    %s819 = scalar_lea.vmem [#allocation0], 384
    %s820 = scalar_lea.vmem %s819, 7 [#allocation0]
    %v821 = vld [vmem:[%s820] ss:$-1 sm:$0xff]
    %v822 = vrot.slane %v821, 5
    %823 = vst [vmem:[%s818] sm:$0xff] %v822
    %s824 = scalar_lea.vmem %s819, 8 [#allocation0]
    %s825 = scalar_lea.vmem %s824, 7 [#allocation0]
    %v826 = vld [vmem:[%s825] ss:$-1 sm:$0xff]
    %v827 = vrot.slane %v826, 5
    %v828 = vlaneseq
    %v829 = vshrl.u32 %v828, 7
    %vm830 = vcmp.lt.s32.totalorder %v829, 3
    %831 = vst.msk [vmem:[%s818] sm:$0xff] %vm830, %v827
    %s832 = scalar_lea.vmem [#allocation2], 200
    %s833 = scalar_lea.vmem [#allocation0], 400
    %s834 = scalar_lea.vmem %s833, 7 [#allocation0]
    %v835 = vld [vmem:[%s834] ss:$-1 sm:$0xff]
    %v836 = vrot.slane %v835, 5
    %837 = vst [vmem:[%s832] sm:$0xff] %v836
    %s838 = scalar_lea.vmem %s833, 8 [#allocation0]
    %s839 = scalar_lea.vmem %s838, 7 [#allocation0]
    %v840 = vld [vmem:[%s839] ss:$-1 sm:$0xff]
    %v841 = vrot.slane %v840, 5
    %v842 = vlaneseq
    %v843 = vshrl.u32 %v842, 7
    %vm844 = vcmp.lt.s32.totalorder %v843, 3
    %845 = vst.msk [vmem:[%s832] sm:$0xff] %vm844, %v841
    %s846 = scalar_lea.vmem [#allocation2], 208
    %s847 = scalar_lea.vmem [#allocation0], 416
    %s848 = scalar_lea.vmem %s847, 7 [#allocation0]
    %v849 = vld [vmem:[%s848] ss:$-1 sm:$0xff]
    %v850 = vrot.slane %v849, 5
    %851 = vst [vmem:[%s846] sm:$0xff] %v850
    %s852 = scalar_lea.vmem %s847, 8 [#allocation0]
    %s853 = scalar_lea.vmem %s852, 7 [#allocation0]
    %v854 = vld [vmem:[%s853] ss:$-1 sm:$0xff]
    %v855 = vrot.slane %v854, 5
    %v856 = vlaneseq
    %v857 = vshrl.u32 %v856, 7
    %vm858 = vcmp.lt.s32.totalorder %v857, 3
    %859 = vst.msk [vmem:[%s846] sm:$0xff] %vm858, %v855
    %s860 = scalar_lea.vmem [#allocation2], 216
    %s861 = scalar_lea.vmem [#allocation0], 432
    %s862 = scalar_lea.vmem %s861, 7 [#allocation0]
    %v863 = vld [vmem:[%s862] ss:$-1 sm:$0xff]
    %v864 = vrot.slane %v863, 5
    %865 = vst [vmem:[%s860] sm:$0xff] %v864
    %s866 = scalar_lea.vmem %s861, 8 [#allocation0]
    %s867 = scalar_lea.vmem %s866, 7 [#allocation0]
    %v868 = vld [vmem:[%s867] ss:$-1 sm:$0xff]
    %v869 = vrot.slane %v868, 5
    %v870 = vlaneseq
    %v871 = vshrl.u32 %v870, 7
    %vm872 = vcmp.lt.s32.totalorder %v871, 3
    %873 = vst.msk [vmem:[%s860] sm:$0xff] %vm872, %v869
    %s874 = scalar_lea.vmem [#allocation2], 224
    %s875 = scalar_lea.vmem [#allocation0], 448
    %s876 = scalar_lea.vmem %s875, 7 [#allocation0]
    %v877 = vld [vmem:[%s876] ss:$-1 sm:$0xff]
    %v878 = vrot.slane %v877, 5
    %879 = vst [vmem:[%s874] sm:$0xff] %v878
    %s880 = scalar_lea.vmem %s875, 8 [#allocation0]
    %s881 = scalar_lea.vmem %s880, 7 [#allocation0]
    %v882 = vld [vmem:[%s881] ss:$-1 sm:$0xff]
    %v883 = vrot.slane %v882, 5
    %v884 = vlaneseq
    %v885 = vshrl.u32 %v884, 7
    %vm886 = vcmp.lt.s32.totalorder %v885, 3
    %887 = vst.msk [vmem:[%s874] sm:$0xff] %vm886, %v883
    %s888 = scalar_lea.vmem [#allocation2], 232
    %s889 = scalar_lea.vmem [#allocation0], 464
    %s890 = scalar_lea.vmem %s889, 7 [#allocation0]
    %v891 = vld [vmem:[%s890] ss:$-1 sm:$0xff]
    %v892 = vrot.slane %v891, 5
    %893 = vst [vmem:[%s888] sm:$0xff] %v892
    %s894 = scalar_lea.vmem %s889, 8 [#allocation0]
    %s895 = scalar_lea.vmem %s894, 7 [#allocation0]
    %v896 = vld [vmem:[%s895] ss:$-1 sm:$0xff]
    %v897 = vrot.slane %v896, 5
    %v898 = vlaneseq
    %v899 = vshrl.u32 %v898, 7
    %vm900 = vcmp.lt.s32.totalorder %v899, 3
    %901 = vst.msk [vmem:[%s888] sm:$0xff] %vm900, %v897
    %s902 = scalar_lea.vmem [#allocation2], 240
    %s903 = scalar_lea.vmem [#allocation0], 480
    %s904 = scalar_lea.vmem %s903, 7 [#allocation0]
    %v905 = vld [vmem:[%s904] ss:$-1 sm:$0xff]
    %v906 = vrot.slane %v905, 5
    %907 = vst [vmem:[%s902] sm:$0xff] %v906
    %s908 = scalar_lea.vmem %s903, 8 [#allocation0]
    %s909 = scalar_lea.vmem %s908, 7 [#allocation0]
    %v910 = vld [vmem:[%s909] ss:$-1 sm:$0xff]
    %v911 = vrot.slane %v910, 5
    %v912 = vlaneseq
    %v913 = vshrl.u32 %v912, 7
    %vm914 = vcmp.lt.s32.totalorder %v913, 3
    %915 = vst.msk [vmem:[%s902] sm:$0xff] %vm914, %v911
    %s916 = scalar_lea.vmem [#allocation2], 248
    %s917 = scalar_lea.vmem [#allocation0], 496
    %s918 = scalar_lea.vmem %s917, 7 [#allocation0]
    %v919 = vld [vmem:[%s918] ss:$-1 sm:$0xff]
    %v920 = vrot.slane %v919, 5
    %921 = vst [vmem:[%s916] sm:$0xff] %v920
    %s922 = scalar_lea.vmem %s917, 8 [#allocation0]
    %s923 = scalar_lea.vmem %s922, 7 [#allocation0]
    %v924 = vld [vmem:[%s923] ss:$-1 sm:$0xff]
    %v925 = vrot.slane %v924, 5
    %v926 = vlaneseq
    %v927 = vshrl.u32 %v926, 7
    %vm928 = vcmp.lt.s32.totalorder %v927, 3
    %929 = vst.msk [vmem:[%s916] sm:$0xff] %vm928, %v925
    %s931 = sshllo.u32 0, 4
    %v933 = vld [vmem:[#allocation2] sm:%s931]
    %s934 = sshllo.u32 0, 4
    %935 = vst [vmem:[#allocation3] sm:%s934] %v933
    %s936 = scalar_lea.vmem [#allocation2], 8
    %v937 = vld [vmem:[%s936] sm:%s931]
    %s938 = sshllo.u32 0, 4
    %s939 = scalar_lea.vmem [#allocation3], 4
    %940 = vst [vmem:[%s939] sm:%s938] %v937
    %s941 = scalar_lea.vmem [#allocation2], 16
    %v942 = vld [vmem:[%s941] sm:%s931]
    %s943 = sshllo.u32 0, 4
    %s944 = smul.addr 4, 2
    %s945 = scalar_lea.vmem [#allocation3], %s944
    %946 = vst [vmem:[%s945] sm:%s943] %v942
    %s947 = scalar_lea.vmem [#allocation2], 24
    %v948 = vld [vmem:[%s947] sm:%s931]
    %s949 = sshllo.u32 0, 4
    %s950 = smul.addr 4, 3
    %s951 = scalar_lea.vmem [#allocation3], %s950
    %952 = vst [vmem:[%s951] sm:%s949] %v948
    %s953 = scalar_lea.vmem [#allocation2], 32
    %v954 = vld [vmem:[%s953] sm:%s931]
    %s955 = sshllo.u32 0, 4
    %s956 = smul.addr 4, 4
    %s957 = scalar_lea.vmem [#allocation3], %s956
    %958 = vst [vmem:[%s957] sm:%s955] %v954
    %s959 = scalar_lea.vmem [#allocation2], 40
    %v960 = vld [vmem:[%s959] sm:%s931]
    %s961 = sshllo.u32 0, 4
    %s962 = smul.addr 4, 5
    %s963 = scalar_lea.vmem [#allocation3], %s962
    %964 = vst [vmem:[%s963] sm:%s961] %v960
    %s965 = scalar_lea.vmem [#allocation2], 48
    %v966 = vld [vmem:[%s965] sm:%s931]
    %s967 = sshllo.u32 0, 4
    %s968 = smul.addr 4, 6
    %s969 = scalar_lea.vmem [#allocation3], %s968
    %970 = vst [vmem:[%s969] sm:%s967] %v966
    %s971 = scalar_lea.vmem [#allocation2], 56
    %v972 = vld [vmem:[%s971] sm:%s931]
    %s973 = sshllo.u32 0, 4
    %s974 = smul.addr 4, 7
    %s975 = scalar_lea.vmem [#allocation3], %s974
    %976 = vst [vmem:[%s975] sm:%s973] %v972
    %s977 = scalar_lea.vmem [#allocation2], 64
    %v978 = vld [vmem:[%s977] sm:%s931]
    %s979 = sshllo.u32 0, 4
    %s980 = smul.addr 4, 8
    %s981 = scalar_lea.vmem [#allocation3], %s980
    %982 = vst [vmem:[%s981] sm:%s979] %v978
    %s983 = scalar_lea.vmem [#allocation2], 72
    %v984 = vld [vmem:[%s983] sm:%s931]
    %s985 = sshllo.u32 0, 4
    %s986 = smul.addr 4, 9
    %s987 = scalar_lea.vmem [#allocation3], %s986
    %988 = vst [vmem:[%s987] sm:%s985] %v984
    %s989 = scalar_lea.vmem [#allocation2], 80
    %v990 = vld [vmem:[%s989] sm:%s931]
    %s991 = sshllo.u32 0, 4
    %s992 = smul.addr 4, 10
    %s993 = scalar_lea.vmem [#allocation3], %s992
    %994 = vst [vmem:[%s993] sm:%s991] %v990
    %s995 = scalar_lea.vmem [#allocation2], 88
    %v996 = vld [vmem:[%s995] sm:%s931]
    %s997 = sshllo.u32 0, 4
    %s998 = smul.addr 4, 11
    %s999 = scalar_lea.vmem [#allocation3], %s998
    %1000 = vst [vmem:[%s999] sm:%s997] %v996
    %s1001 = scalar_lea.vmem [#allocation2], 96
    %v1002 = vld [vmem:[%s1001] sm:%s931]
    %s1003 = sshllo.u32 0, 4
    %s1004 = smul.addr 4, 12
    %s1005 = scalar_lea.vmem [#allocation3], %s1004
    %1006 = vst [vmem:[%s1005] sm:%s1003] %v1002
    %s1007 = scalar_lea.vmem [#allocation2], 104
    %v1008 = vld [vmem:[%s1007] sm:%s931]
    %s1009 = sshllo.u32 0, 4
    %s1010 = smul.addr 4, 13
    %s1011 = scalar_lea.vmem [#allocation3], %s1010
    %1012 = vst [vmem:[%s1011] sm:%s1009] %v1008
    %s1013 = scalar_lea.vmem [#allocation2], 112
    %v1014 = vld [vmem:[%s1013] sm:%s931]
    %s1015 = sshllo.u32 0, 4
    %s1016 = smul.addr 4, 14
    %s1017 = scalar_lea.vmem [#allocation3], %s1016
    %1018 = vst [vmem:[%s1017] sm:%s1015] %v1014
    %s1019 = scalar_lea.vmem [#allocation2], 120
    %v1020 = vld [vmem:[%s1019] sm:%s931]
    %s1021 = sshllo.u32 0, 4
    %s1022 = smul.addr 4, 15
    %s1023 = scalar_lea.vmem [#allocation3], %s1022
    %1024 = vst [vmem:[%s1023] sm:%s1021] %v1020
    %s1025 = scalar_lea.vmem [#allocation2], 128
    %v1026 = vld [vmem:[%s1025] sm:%s931]
    %s1027 = sshllo.u32 0, 4
    %s1028 = smul.addr 4, 16
    %s1029 = scalar_lea.vmem [#allocation3], %s1028
    %1030 = vst [vmem:[%s1029] sm:%s1027] %v1026
    %s1031 = scalar_lea.vmem [#allocation2], 136
    %v1032 = vld [vmem:[%s1031] sm:%s931]
    %s1033 = sshllo.u32 0, 4
    %s1034 = smul.addr 4, 17
    %s1035 = scalar_lea.vmem [#allocation3], %s1034
    %1036 = vst [vmem:[%s1035] sm:%s1033] %v1032
    %s1037 = scalar_lea.vmem [#allocation2], 144
    %v1038 = vld [vmem:[%s1037] sm:%s931]
    %s1039 = sshllo.u32 0, 4
    %s1040 = smul.addr 4, 18
    %s1041 = scalar_lea.vmem [#allocation3], %s1040
    %1042 = vst [vmem:[%s1041] sm:%s1039] %v1038
    %s1043 = scalar_lea.vmem [#allocation2], 152
    %v1044 = vld [vmem:[%s1043] sm:%s931]
    %s1045 = sshllo.u32 0, 4
    %s1046 = smul.addr 4, 19
    %s1047 = scalar_lea.vmem [#allocation3], %s1046
    %1048 = vst [vmem:[%s1047] sm:%s1045] %v1044
    %s1049 = scalar_lea.vmem [#allocation2], 160
    %v1050 = vld [vmem:[%s1049] sm:%s931]
    %s1051 = sshllo.u32 0, 4
    %s1052 = smul.addr 4, 20
    %s1053 = scalar_lea.vmem [#allocation3], %s1052
    %1054 = vst [vmem:[%s1053] sm:%s1051] %v1050
    %s1055 = scalar_lea.vmem [#allocation2], 168
    %v1056 = vld [vmem:[%s1055] sm:%s931]
    %s1057 = sshllo.u32 0, 4
    %s1058 = smul.addr 4, 21
    %s1059 = scalar_lea.vmem [#allocation3], %s1058
    %1060 = vst [vmem:[%s1059] sm:%s1057] %v1056
    %s1061 = scalar_lea.vmem [#allocation2], 176
    %v1062 = vld [vmem:[%s1061] sm:%s931]
    %s1063 = sshllo.u32 0, 4
    %s1064 = smul.addr 4, 22
    %s1065 = scalar_lea.vmem [#allocation3], %s1064
    %1066 = vst [vmem:[%s1065] sm:%s1063] %v1062
    %s1067 = scalar_lea.vmem [#allocation2], 184
    %v1068 = vld [vmem:[%s1067] sm:%s931]
    %s1069 = sshllo.u32 0, 4
    %s1070 = smul.addr 4, 23
    %s1071 = scalar_lea.vmem [#allocation3], %s1070
    %1072 = vst [vmem:[%s1071] sm:%s1069] %v1068
    %s1073 = scalar_lea.vmem [#allocation2], 192
    %v1074 = vld [vmem:[%s1073] sm:%s931]
    %s1075 = sshllo.u32 0, 4
    %s1076 = smul.addr 4, 24
    %s1077 = scalar_lea.vmem [#allocation3], %s1076
    %1078 = vst [vmem:[%s1077] sm:%s1075] %v1074
    %s1079 = scalar_lea.vmem [#allocation2], 200
    %v1080 = vld [vmem:[%s1079] sm:%s931]
    %s1081 = sshllo.u32 0, 4
    %s1082 = smul.addr 4, 25
    %s1083 = scalar_lea.vmem [#allocation3], %s1082
    %1084 = vst [vmem:[%s1083] sm:%s1081] %v1080
    %s1085 = scalar_lea.vmem [#allocation2], 208
    %v1086 = vld [vmem:[%s1085] sm:%s931]
    %s1087 = sshllo.u32 0, 4
    %s1088 = smul.addr 4, 26
    %s1089 = scalar_lea.vmem [#allocation3], %s1088
    %1090 = vst [vmem:[%s1089] sm:%s1087] %v1086
    %s1091 = scalar_lea.vmem [#allocation2], 216
    %v1092 = vld [vmem:[%s1091] sm:%s931]
    %s1093 = sshllo.u32 0, 4
    %s1094 = smul.addr 4, 27
    %s1095 = scalar_lea.vmem [#allocation3], %s1094
    %1096 = vst [vmem:[%s1095] sm:%s1093] %v1092
    %s1097 = scalar_lea.vmem [#allocation2], 224
    %v1098 = vld [vmem:[%s1097] sm:%s931]
    %s1099 = sshllo.u32 0, 4
    %s1100 = smul.addr 4, 28
    %s1101 = scalar_lea.vmem [#allocation3], %s1100
    %1102 = vst [vmem:[%s1101] sm:%s1099] %v1098
    %s1103 = scalar_lea.vmem [#allocation2], 232
    %v1104 = vld [vmem:[%s1103] sm:%s931]
    %s1105 = sshllo.u32 0, 4
    %s1106 = smul.addr 4, 29
    %s1107 = scalar_lea.vmem [#allocation3], %s1106
    %1108 = vst [vmem:[%s1107] sm:%s1105] %v1104
    %s1109 = scalar_lea.vmem [#allocation2], 240
    %v1110 = vld [vmem:[%s1109] sm:%s931]
    %s1111 = sshllo.u32 0, 4
    %s1112 = smul.addr 4, 30
    %s1113 = scalar_lea.vmem [#allocation3], %s1112
    %1114 = vst [vmem:[%s1113] sm:%s1111] %v1110
    %s1115 = scalar_lea.vmem [#allocation2], 248
    %v1116 = vld [vmem:[%s1115] sm:%s931]
    %s1117 = sshllo.u32 0, 4
    %s1118 = smul.addr 4, 31
    %s1119 = scalar_lea.vmem [#allocation3], %s1118
    %1120 = vst [vmem:[%s1119] sm:%s1117] %v1116
    // Predicated region
    $region39: #{reverse.15} parent=1 // pred_check
      _
    $region40: #{reverse.15} parent=1 // pred_check_branch
      %1122 = sbr.rel (0) target = $region42
    $region41: #{reverse.15} parent=1 // pred_region
      // Predicated region
      $region43: #{reverse.15} parent=41 // pred_check
        _
      $region44: #{reverse.15} parent=41 // pred_check_branch
        %1124 = sbr.rel target = $region46
      $region45: #{reverse.15} parent=41 // pred_region
        // Predicated region
        $region58: #{reverse.15} parent=45 // pred_check
          _
        $region59: #{reverse.15} parent=45 // pred_check_branch
          %1201 = sbr.rel (0) target = $region61
        $region60: #{reverse.15} parent=45 // pred_region
          loop: start=0, step=1, limit=1
          $region62: #{reverse.15} parent=60 // loop_pre_header
            _
          $region63: #{reverse.15} parent=60 // loop_header
            %s1203 = sphi 0, %s1207
            %p1204 = scmp.ge.s32.totalorder %s1203, 1
            %s1208 = sphi [#allocation3], [#allocation3]
            %s1209 = sphi %s1, %s1
          $region64: #{reverse.15} parent=60 // loop_header_branch
            %1206 = sbr.rel (%p1204) target = $region68
          $region65: #{reverse.15} parent=60 // loop_body
            _
          $region66: #{reverse.15} parent=60 // loop_footer
            %s1207 = sadd.s32 1, %s1203
          $region67: #{reverse.15} parent=60 // loop_footer_branch
            %1202 = sbr.rel target = $region63
          $region68: #{reverse.15} parent=60 // loop_exit
            _
          loop: start=0, step=1, limit=1
          $region69: #{reverse.15} parent=60 // loop_pre_header
            _
          $region70: #{reverse.15} parent=60 // loop_header
            %s1212 = sphi 0, %s1216
            %p1213 = scmp.ge.s32.totalorder %s1212, 1
            %s1217 = sphi [#allocation3], [#allocation3]
            %s1218 = sphi %s1, %s1
          $region71: #{reverse.15} parent=60 // loop_header_branch
            %1215 = sbr.rel (%p1213) target = $region75
          $region72: #{reverse.15} parent=60 // loop_body
            %v1219 = vld [vmem:[%s1217] sm:$0xf]
            %1220 = vst [vmem:[%s1218] sm:$0xf] %v1219
            %v1221 = vld [vmem:[%s1217 + $0x4] sm:$0xf]
            %1222 = vst [vmem:[%s1218 + $0x4] sm:$0xf] %v1221
            %v1223 = vld [vmem:[%s1217 + $0x8] sm:$0xf]
            %1224 = vst [vmem:[%s1218 + $0x8] sm:$0xf] %v1223
            %v1225 = vld [vmem:[%s1217 + $0xc] sm:$0xf]
            %1226 = vst [vmem:[%s1218 + $0xc] sm:$0xf] %v1225
            %v1227 = vld [vmem:[%s1217 + $0x10] sm:$0xf]
            %1228 = vst [vmem:[%s1218 + $0x10] sm:$0xf] %v1227
            %v1229 = vld [vmem:[%s1217 + $0x14] sm:$0xf]
            %1230 = vst [vmem:[%s1218 + $0x14] sm:$0xf] %v1229
            %v1231 = vld [vmem:[%s1217 + $0x18] sm:$0xf]
            %1232 = vst [vmem:[%s1218 + $0x18] sm:$0xf] %v1231
            %v1233 = vld [vmem:[%s1217 + $0x1c] sm:$0xf]
            %1234 = vst [vmem:[%s1218 + $0x1c] sm:$0xf] %v1233
            %v1235 = vld [vmem:[%s1217 + $0x20] sm:$0xf]
            %1236 = vst [vmem:[%s1218 + $0x20] sm:$0xf] %v1235
            %v1237 = vld [vmem:[%s1217 + $0x24] sm:$0xf]
            %1238 = vst [vmem:[%s1218 + $0x24] sm:$0xf] %v1237
            %v1239 = vld [vmem:[%s1217 + $0x28] sm:$0xf]
            %1240 = vst [vmem:[%s1218 + $0x28] sm:$0xf] %v1239
            %v1241 = vld [vmem:[%s1217 + $0x2c] sm:$0xf]
            %1242 = vst [vmem:[%s1218 + $0x2c] sm:$0xf] %v1241
            %v1243 = vld [vmem:[%s1217 + $0x30] sm:$0xf]
            %1244 = vst [vmem:[%s1218 + $0x30] sm:$0xf] %v1243
            %v1245 = vld [vmem:[%s1217 + $0x34] sm:$0xf]
            %1246 = vst [vmem:[%s1218 + $0x34] sm:$0xf] %v1245
            %v1247 = vld [vmem:[%s1217 + $0x38] sm:$0xf]
            %1248 = vst [vmem:[%s1218 + $0x38] sm:$0xf] %v1247
            %v1249 = vld [vmem:[%s1217 + $0x3c] sm:$0xf]
            %1250 = vst [vmem:[%s1218 + $0x3c] sm:$0xf] %v1249
            %v1251 = vld [vmem:[%s1217 + $0x40] sm:$0xf]
            %1252 = vst [vmem:[%s1218 + $0x40] sm:$0xf] %v1251
            %v1253 = vld [vmem:[%s1217 + $0x44] sm:$0xf]
            %1254 = vst [vmem:[%s1218 + $0x44] sm:$0xf] %v1253
            %v1255 = vld [vmem:[%s1217 + $0x48] sm:$0xf]
            %1256 = vst [vmem:[%s1218 + $0x48] sm:$0xf] %v1255
            %v1257 = vld [vmem:[%s1217 + $0x4c] sm:$0xf]
            %1258 = vst [vmem:[%s1218 + $0x4c] sm:$0xf] %v1257
            %v1259 = vld [vmem:[%s1217 + $0x50] sm:$0xf]
            %1260 = vst [vmem:[%s1218 + $0x50] sm:$0xf] %v1259
            %v1261 = vld [vmem:[%s1217 + $0x54] sm:$0xf]
            %1262 = vst [vmem:[%s1218 + $0x54] sm:$0xf] %v1261
            %v1263 = vld [vmem:[%s1217 + $0x58] sm:$0xf]
            %1264 = vst [vmem:[%s1218 + $0x58] sm:$0xf] %v1263
            %v1265 = vld [vmem:[%s1217 + $0x5c] sm:$0xf]
            %1266 = vst [vmem:[%s1218 + $0x5c] sm:$0xf] %v1265
            %v1267 = vld [vmem:[%s1217 + $0x60] sm:$0xf]
            %1268 = vst [vmem:[%s1218 + $0x60] sm:$0xf] %v1267
            %v1269 = vld [vmem:[%s1217 + $0x64] sm:$0xf]
            %1270 = vst [vmem:[%s1218 + $0x64] sm:$0xf] %v1269
            %v1271 = vld [vmem:[%s1217 + $0x68] sm:$0xf]
            %1272 = vst [vmem:[%s1218 + $0x68] sm:$0xf] %v1271
            %v1273 = vld [vmem:[%s1217 + $0x6c] sm:$0xf]
            %1274 = vst [vmem:[%s1218 + $0x6c] sm:$0xf] %v1273
            %v1275 = vld [vmem:[%s1217 + $0x70] sm:$0xf]
            %1276 = vst [vmem:[%s1218 + $0x70] sm:$0xf] %v1275
            %v1277 = vld [vmem:[%s1217 + $0x74] sm:$0xf]
            %1278 = vst [vmem:[%s1218 + $0x74] sm:$0xf] %v1277
            %v1279 = vld [vmem:[%s1217 + $0x78] sm:$0xf]
            %1280 = vst [vmem:[%s1218 + $0x78] sm:$0xf] %v1279
            %v1281 = vld [vmem:[%s1217 + $0x7c] sm:$0xf]
            %1282 = vst [vmem:[%s1218 + $0x7c] sm:$0xf] %v1281
          $region73: #{reverse.15} parent=60 // loop_footer
            %s1216 = sadd.s32 1, %s1212
          $region74: #{reverse.15} parent=60 // loop_footer_branch
            %1211 = sbr.rel target = $region70
          $region75: #{reverse.15} parent=60 // loop_exit
            _
        $region61: #{reverse.15} parent=45 // pred_fallthru
          _
      $region46: #{reverse.15} parent=41 // pred_fallthru
        _
      // Predicated region
      $region47: #{reverse.15} parent=41 // pred_check
        _
      $region48: #{reverse.15} parent=41 // pred_check_branch
        %1126 = sbr.rel (0) target = $region50
      $region49: #{reverse.15} parent=41 // pred_region
        loop: start=0, step=1, limit=1
        $region51: #{reverse.15} parent=49 // loop_pre_header
          _
        $region52: #{reverse.15} parent=49 // loop_header
          %s1129 = sphi 0, %s1133
          %p1130 = scmp.ge.s32.totalorder %s1129, 1
          %s1134 = sphi [#allocation3], [#allocation3]
          %s1135 = sphi %s1, %s1
        $region53: #{reverse.15} parent=49 // loop_header_branch
          %1132 = sbr.rel (%p1130) target = $region57
        $region54: #{reverse.15} parent=49 // loop_body
          %v1136 = vld [vmem:[%s1134] sm:$0xf]
          %1137 = vst [vmem:[%s1135] sm:$0xf] %v1136
          %v1138 = vld [vmem:[%s1134 + $0x4] sm:$0xf]
          %1139 = vst [vmem:[%s1135 + $0x4] sm:$0xf] %v1138
          %v1140 = vld [vmem:[%s1134 + $0x8] sm:$0xf]
          %1141 = vst [vmem:[%s1135 + $0x8] sm:$0xf] %v1140
          %v1142 = vld [vmem:[%s1134 + $0xc] sm:$0xf]
          %1143 = vst [vmem:[%s1135 + $0xc] sm:$0xf] %v1142
          %v1144 = vld [vmem:[%s1134 + $0x10] sm:$0xf]
          %1145 = vst [vmem:[%s1135 + $0x10] sm:$0xf] %v1144
          %v1146 = vld [vmem:[%s1134 + $0x14] sm:$0xf]
          %1147 = vst [vmem:[%s1135 + $0x14] sm:$0xf] %v1146
          %v1148 = vld [vmem:[%s1134 + $0x18] sm:$0xf]
          %1149 = vst [vmem:[%s1135 + $0x18] sm:$0xf] %v1148
          %v1150 = vld [vmem:[%s1134 + $0x1c] sm:$0xf]
          %1151 = vst [vmem:[%s1135 + $0x1c] sm:$0xf] %v1150
          %v1152 = vld [vmem:[%s1134 + $0x20] sm:$0xf]
          %1153 = vst [vmem:[%s1135 + $0x20] sm:$0xf] %v1152
          %v1154 = vld [vmem:[%s1134 + $0x24] sm:$0xf]
          %1155 = vst [vmem:[%s1135 + $0x24] sm:$0xf] %v1154
          %v1156 = vld [vmem:[%s1134 + $0x28] sm:$0xf]
          %1157 = vst [vmem:[%s1135 + $0x28] sm:$0xf] %v1156
          %v1158 = vld [vmem:[%s1134 + $0x2c] sm:$0xf]
          %1159 = vst [vmem:[%s1135 + $0x2c] sm:$0xf] %v1158
          %v1160 = vld [vmem:[%s1134 + $0x30] sm:$0xf]
          %1161 = vst [vmem:[%s1135 + $0x30] sm:$0xf] %v1160
          %v1162 = vld [vmem:[%s1134 + $0x34] sm:$0xf]
          %1163 = vst [vmem:[%s1135 + $0x34] sm:$0xf] %v1162
          %v1164 = vld [vmem:[%s1134 + $0x38] sm:$0xf]
          %1165 = vst [vmem:[%s1135 + $0x38] sm:$0xf] %v1164
          %v1166 = vld [vmem:[%s1134 + $0x3c] sm:$0xf]
          %1167 = vst [vmem:[%s1135 + $0x3c] sm:$0xf] %v1166
          %v1168 = vld [vmem:[%s1134 + $0x40] sm:$0xf]
          %1169 = vst [vmem:[%s1135 + $0x40] sm:$0xf] %v1168
          %v1170 = vld [vmem:[%s1134 + $0x44] sm:$0xf]
          %1171 = vst [vmem:[%s1135 + $0x44] sm:$0xf] %v1170
          %v1172 = vld [vmem:[%s1134 + $0x48] sm:$0xf]
          %1173 = vst [vmem:[%s1135 + $0x48] sm:$0xf] %v1172
          %v1174 = vld [vmem:[%s1134 + $0x4c] sm:$0xf]
          %1175 = vst [vmem:[%s1135 + $0x4c] sm:$0xf] %v1174
          %v1176 = vld [vmem:[%s1134 + $0x50] sm:$0xf]
          %1177 = vst [vmem:[%s1135 + $0x50] sm:$0xf] %v1176
          %v1178 = vld [vmem:[%s1134 + $0x54] sm:$0xf]
          %1179 = vst [vmem:[%s1135 + $0x54] sm:$0xf] %v1178
          %v1180 = vld [vmem:[%s1134 + $0x58] sm:$0xf]
          %1181 = vst [vmem:[%s1135 + $0x58] sm:$0xf] %v1180
          %v1182 = vld [vmem:[%s1134 + $0x5c] sm:$0xf]
          %1183 = vst [vmem:[%s1135 + $0x5c] sm:$0xf] %v1182
          %v1184 = vld [vmem:[%s1134 + $0x60] sm:$0xf]
          %1185 = vst [vmem:[%s1135 + $0x60] sm:$0xf] %v1184
          %v1186 = vld [vmem:[%s1134 + $0x64] sm:$0xf]
          %1187 = vst [vmem:[%s1135 + $0x64] sm:$0xf] %v1186
          %v1188 = vld [vmem:[%s1134 + $0x68] sm:$0xf]
          %1189 = vst [vmem:[%s1135 + $0x68] sm:$0xf] %v1188
          %v1190 = vld [vmem:[%s1134 + $0x6c] sm:$0xf]
          %1191 = vst [vmem:[%s1135 + $0x6c] sm:$0xf] %v1190
          %v1192 = vld [vmem:[%s1134 + $0x70] sm:$0xf]
          %1193 = vst [vmem:[%s1135 + $0x70] sm:$0xf] %v1192
          %v1194 = vld [vmem:[%s1134 + $0x74] sm:$0xf]
          %1195 = vst [vmem:[%s1135 + $0x74] sm:$0xf] %v1194
          %v1196 = vld [vmem:[%s1134 + $0x78] sm:$0xf]
          %1197 = vst [vmem:[%s1135 + $0x78] sm:$0xf] %v1196
          %v1198 = vld [vmem:[%s1134 + $0x7c] sm:$0xf]
          %1199 = vst [vmem:[%s1135 + $0x7c] sm:$0xf] %v1198
        $region55: #{reverse.15} parent=49 // loop_footer
          %s1133 = sadd.s32 1, %s1129
        $region56: #{reverse.15} parent=49 // loop_footer_branch
          %1128 = sbr.rel target = $region52
        $region57: #{reverse.15} parent=49 // loop_exit
          _
      $region50: #{reverse.15} parent=41 // pred_fallthru
        _
    $region42: #{reverse.15} parent=1 // pred_fallthru
      _
    %1283 = vnop

// kernel: bottleneck_forward.40
$region0: #{bottleneck_forward.40}
  #allocation0 [shape = 'u32[]', space=smem, size = 0x4, offset = 0x4, fixed_abs, tag = 'smem constant byte address 0x4 - core index']
  #allocation1 [shape = 'u32[144,128]{1,0:T(1,128)}', space=vmem, size = 0x12000, scoped, tag = 'internal scratch']
  %s0 = inlined_call_operand.vmem [shape: f32[4,512], index: 0, kind: input, shape index: {}]
  %s1 = inlined_call_operand.vmem [shape: f32[4,512], index: 1, kind: input, shape index: {}]
  %s2 = inlined_call_operand.vmem [shape: f32[4,512], index: 2, kind: input, shape index: {}]
  %s3 = inlined_call_operand.vmem [shape: bf16[8,4], index: 3, kind: input, shape index: {}]
  %s4 = inlined_call_operand.vmem [shape: f32[8,1], index: 4, kind: input, shape index: {}]
  %s5 = inlined_call_operand.vmem [shape: f32[8,1], index: 5, kind: input, shape index: {}]
  %s6 = inlined_call_operand.vmem [shape: f32[8,512], index: 6, kind: output, shape index: {}]
  %s7 = sld [smem:[#allocation0]]
  $region57: #{bottleneck_forward.40} parent=0
    _
  %s9 = ssub.s32 1, %s7
  %s10 = scalar_select 0, %s9, %s7
  loop: start=0, step=1, limit=4
  $region2: #{bottleneck_forward.40} parent=0 // loop_pre_header
    _
  $region3: #{bottleneck_forward.40} parent=0 // loop_header
    %s12 = sphi 0, %s16
    %p13 = scmp.ge.s32.totalorder %s12, 4
    %s22 = sphi 0, %s24
    %s25 = sphi 0, %s22
    %s26 = sphi 0, %s25
    %s42 = sphi 0, %s26
    %s48 = sphi 0, %s50
    %s51 = sphi 0, %s48
    %s52 = sphi 0, %s51
    %s68 = sphi 0, %s52
    %s74 = sphi 0, %s76
    %s77 = sphi 0, %s74
    %s78 = sphi 0, %s77
    %s94 = sphi 0, %s78
    %s98 = sphi 0, %s98
    %s100 = sphi 0, %s98
    %s101 = sphi 0, %s100
    %s115 = sphi 0, %s101
    %s119 = sphi 0, %s119
    %s121 = sphi 0, %s119
    %s122 = sphi 0, %s121
    %s136 = sphi 0, %s122
    %s140 = sphi 0, %s140
    %s142 = sphi 0, %s140
    %s143 = sphi 0, %s142
    %s157 = sphi 0, %s143
    %s163 = sphi 0, %s165
    %s166 = sphi 0, %s163
    %s167 = sphi 0, %s166
    %s183 = sphi 0, %s167
  $region4: #{bottleneck_forward.40} parent=0 // loop_header_branch
    %15 = sbr.rel (%p13) target = $region8
  $region5: #{bottleneck_forward.40} parent=0 // loop_body
    %s17 = ssub.s32 %s12, 1
    %s18 = ssub.s32 %s12, 2
    %s19 = sadd.s32 %s12, 1
    %s20 = ssub.s32 %s12, %s19
    %p21 = scmp.eq.s32.totalorder %s20, 0
    %s23 = sadd.s32 %s22, 1
    %s24 = scalar_select %p21, %s22, %s23
    %p27 = pneg %p21
    %p28 = scmp.eq.s32.totalorder %s12, 1
    %p29 = por %p27, %p28
    %p30 = scmp.ne.s32.totalorder %s22, %s25
    %p31 = scmp.eq.s32.totalorder %s12, 0
    %p32 = por %p30, %p31
    %p33 = scmp.ne.s32.totalorder %s22, %s25
    %p34 = scmp.eq.s32.totalorder %s17, 1
    %p35 = por %p33, %p34
    %p36 = scmp.ne.s32.totalorder %s25, %s26
    %p37 = scmp.eq.s32.totalorder %s17, 0
    %p38 = por %p36, %p37
    %p39 = scmp.ne.s32.totalorder %s25, %s26
    %p40 = scmp.eq.s32.totalorder %s18, 1
    %p41 = por %p39, %p40
    %p43 = scmp.ne.s32.totalorder %s26, %s42
    %p44 = scmp.eq.s32.totalorder %s18, 0
    %p45 = por %p43, %p44
    %s46 = ssub.s32 %s12, %s19
    %p47 = scmp.eq.s32.totalorder %s46, 0
    %s49 = sadd.s32 %s48, 1
    %s50 = scalar_select %p47, %s48, %s49
    %p53 = pneg %p47
    %p54 = scmp.eq.s32.totalorder %s12, 1
    %p55 = por %p53, %p54
    %p56 = scmp.ne.s32.totalorder %s48, %s51
    %p57 = scmp.eq.s32.totalorder %s12, 0
    %p58 = por %p56, %p57
    %p59 = scmp.ne.s32.totalorder %s48, %s51
    %p60 = scmp.eq.s32.totalorder %s17, 1
    %p61 = por %p59, %p60
    %p62 = scmp.ne.s32.totalorder %s51, %s52
    %p63 = scmp.eq.s32.totalorder %s17, 0
    %p64 = por %p62, %p63
    %p65 = scmp.ne.s32.totalorder %s51, %s52
    %p66 = scmp.eq.s32.totalorder %s18, 1
    %p67 = por %p65, %p66
    %p69 = scmp.ne.s32.totalorder %s52, %s68
    %p70 = scmp.eq.s32.totalorder %s18, 0
    %p71 = por %p69, %p70
    %s72 = ssub.s32 %s12, %s19
    %p73 = scmp.eq.s32.totalorder %s72, 0
    %s75 = sadd.s32 %s74, 1
    %s76 = scalar_select %p73, %s74, %s75
    %p79 = pneg %p73
    %p80 = scmp.eq.s32.totalorder %s12, 1
    %p81 = por %p79, %p80
    %p82 = scmp.ne.s32.totalorder %s74, %s77
    %p83 = scmp.eq.s32.totalorder %s12, 0
    %p84 = por %p82, %p83
    %p85 = scmp.ne.s32.totalorder %s74, %s77
    %p86 = scmp.eq.s32.totalorder %s17, 1
    %p87 = por %p85, %p86
    %p88 = scmp.ne.s32.totalorder %s77, %s78
    %p89 = scmp.eq.s32.totalorder %s17, 0
    %p90 = por %p88, %p89
    %p91 = scmp.ne.s32.totalorder %s77, %s78
    %p92 = scmp.eq.s32.totalorder %s18, 1
    %p93 = por %p91, %p92
    %p95 = scmp.ne.s32.totalorder %s78, %s94
    %p96 = scmp.eq.s32.totalorder %s18, 0
    %p97 = por %p95, %p96
    %s99 = sadd.s32 %s98, 1
    %p102 = scmp.eq.s32.totalorder %s12, 1
    %p103 = scmp.ne.s32.totalorder %s98, %s100
    %p104 = scmp.eq.s32.totalorder %s12, 0
    %p105 = por %p103, %p104
    %p106 = scmp.ne.s32.totalorder %s98, %s100
    %p107 = scmp.eq.s32.totalorder %s17, 1
    %p108 = por %p106, %p107
    %p109 = scmp.ne.s32.totalorder %s100, %s101
    %p110 = scmp.eq.s32.totalorder %s17, 0
    %p111 = por %p109, %p110
    %p112 = scmp.ne.s32.totalorder %s100, %s101
    %p113 = scmp.eq.s32.totalorder %s18, 1
    %p114 = por %p112, %p113
    %p116 = scmp.ne.s32.totalorder %s101, %s115
    %p117 = scmp.eq.s32.totalorder %s18, 0
    %p118 = por %p116, %p117
    %s120 = sadd.s32 %s119, 1
    %p123 = scmp.eq.s32.totalorder %s12, 1
    %p124 = scmp.ne.s32.totalorder %s119, %s121
    %p125 = scmp.eq.s32.totalorder %s12, 0
    %p126 = por %p124, %p125
    %p127 = scmp.ne.s32.totalorder %s119, %s121
    %p128 = scmp.eq.s32.totalorder %s17, 1
    %p129 = por %p127, %p128
    %p130 = scmp.ne.s32.totalorder %s121, %s122
    %p131 = scmp.eq.s32.totalorder %s17, 0
    %p132 = por %p130, %p131
    %p133 = scmp.ne.s32.totalorder %s121, %s122
    %p134 = scmp.eq.s32.totalorder %s18, 1
    %p135 = por %p133, %p134
    %p137 = scmp.ne.s32.totalorder %s122, %s136
    %p138 = scmp.eq.s32.totalorder %s18, 0
    %p139 = por %p137, %p138
    %s141 = sadd.s32 %s140, 1
    %p144 = scmp.eq.s32.totalorder %s12, 1
    %p145 = scmp.ne.s32.totalorder %s140, %s142
    %p146 = scmp.eq.s32.totalorder %s12, 0
    %p147 = por %p145, %p146
    %p148 = scmp.ne.s32.totalorder %s140, %s142
    %p149 = scmp.eq.s32.totalorder %s17, 1
    %p150 = por %p148, %p149
    %p151 = scmp.ne.s32.totalorder %s142, %s143
    %p152 = scmp.eq.s32.totalorder %s17, 0
    %p153 = por %p151, %p152
    %p154 = scmp.ne.s32.totalorder %s142, %s143
    %p155 = scmp.eq.s32.totalorder %s18, 1
    %p156 = por %p154, %p155
    %p158 = scmp.ne.s32.totalorder %s143, %s157
    %p159 = scmp.eq.s32.totalorder %s18, 0
    %p160 = por %p158, %p159
    %s161 = ssub.s32 %s12, %s19
    %p162 = scmp.eq.s32.totalorder %s161, 0
    %s164 = sadd.s32 %s163, 1
    %s165 = scalar_select %p162, %s163, %s164
    %p168 = pneg %p162
    %p169 = scmp.eq.s32.totalorder %s12, 1
    %p170 = por %p168, %p169
    %p171 = scmp.ne.s32.totalorder %s163, %s166
    %p172 = scmp.eq.s32.totalorder %s12, 0
    %p173 = por %p171, %p172
    %p174 = scmp.ne.s32.totalorder %s163, %s166
    %p175 = scmp.eq.s32.totalorder %s17, 1
    %p176 = por %p174, %p175
    %p177 = scmp.ne.s32.totalorder %s166, %s167
    %p178 = scmp.eq.s32.totalorder %s17, 0
    %p179 = por %p177, %p178
    %p180 = scmp.ne.s32.totalorder %s166, %s167
    %p181 = scmp.eq.s32.totalorder %s18, 1
    %p182 = por %p180, %p181
    %p184 = scmp.ne.s32.totalorder %s167, %s183
    %p185 = scmp.eq.s32.totalorder %s18, 0
    %p186 = por %p184, %p185
    %p187 = scmp.le.s32.totalorder 1, %s12
    %p188 = scmp.lt.s32.totalorder %s12, 3
    %p189 = pnand %p187, %p188
    %p190 = pneg %p189
    // Predicated region
    $region9: #{bottleneck_forward.40} parent=5 // pred_check
      _
    $region10: #{bottleneck_forward.40} parent=5 // pred_check_branch
      %192 = sbr.rel (%p189) target = $region12
    $region11: #{bottleneck_forward.40} parent=5 // pred_region
      %s193 = ssub.s32 %s12, 1
      // Predicated region
      $region13: #{bottleneck_forward.40} parent=11 // pred_check
        %p194 = pneg %p111
      $region14: #{bottleneck_forward.40} parent=11 // pred_check_branch
        %196 = sbr.rel (%p194) target = $region16
      $region15: #{bottleneck_forward.40} parent=11 // pred_region
        _
      $region16: #{bottleneck_forward.40} parent=11 // pred_fallthru
        _
      // Predicated region
      $region17: #{bottleneck_forward.40} parent=11 // pred_check
        %p197 = pneg %p132
      $region18: #{bottleneck_forward.40} parent=11 // pred_check_branch
        %199 = sbr.rel (%p197) target = $region20
      $region19: #{bottleneck_forward.40} parent=11 // pred_region
        _
      $region20: #{bottleneck_forward.40} parent=11 // pred_fallthru
        _
      // Predicated region
      $region21: #{bottleneck_forward.40} parent=11 // pred_check
        %p200 = pneg %p153
      $region22: #{bottleneck_forward.40} parent=11 // pred_check_branch
        %202 = sbr.rel (%p200) target = $region24
      $region23: #{bottleneck_forward.40} parent=11 // pred_region
        _
      $region24: #{bottleneck_forward.40} parent=11 // pred_fallthru
        _
    $region12: #{bottleneck_forward.40} parent=5 // pred_fallthru
      _
    %p203 = scmp.lt.s32.totalorder %s12, 2
    // Predicated region
    $region25: #{bottleneck_forward.40} parent=5 // pred_check
      %p204 = pneg %p203
    $region26: #{bottleneck_forward.40} parent=5 // pred_check_branch
      %206 = sbr.rel (%p204) target = $region28
    $region27: #{bottleneck_forward.40} parent=5 // pred_region
      // Predicated region
      $region29: #{bottleneck_forward.40} parent=27 // pred_check
        %p207 = pneg %p32
      $region30: #{bottleneck_forward.40} parent=27 // pred_check_branch
        %209 = sbr.rel (%p207) target = $region32
      $region31: #{bottleneck_forward.40} parent=27 // pred_region
        %s210 = smul.u32 2, %s12
        %p211 = scmp.lt.s32.totalorder %s210, 3
        %s212 = scalar_select %p211, %s210, 3
        %s213 = smul.addr %s212, 4
        %s214 = scalar_lea.vmem %s0, %s213
        %s215 = smul.u32 2, %s12
      $region32: #{bottleneck_forward.40} parent=27 // pred_fallthru
        _
      // Predicated region
      $region33: #{bottleneck_forward.40} parent=27 // pred_check
        %p216 = pneg %p58
      $region34: #{bottleneck_forward.40} parent=27 // pred_check_branch
        %218 = sbr.rel (%p216) target = $region36
      $region35: #{bottleneck_forward.40} parent=27 // pred_region
        %s219 = smul.u32 2, %s12
        %p220 = scmp.lt.s32.totalorder %s219, 3
        %s221 = scalar_select %p220, %s219, 3
        %s222 = smul.addr %s221, 4
        %s223 = scalar_lea.vmem %s1, %s222
        %s224 = smul.u32 2, %s12
      $region36: #{bottleneck_forward.40} parent=27 // pred_fallthru
        _
      // Predicated region
      $region37: #{bottleneck_forward.40} parent=27 // pred_check
        %p225 = pneg %p84
      $region38: #{bottleneck_forward.40} parent=27 // pred_check_branch
        %227 = sbr.rel (%p225) target = $region40
      $region39: #{bottleneck_forward.40} parent=27 // pred_region
        %s228 = smul.u32 2, %s12
        %p229 = scmp.lt.s32.totalorder %s228, 3
        %s230 = scalar_select %p229, %s228, 3
        %s231 = smul.addr %s230, 4
        %s232 = scalar_lea.vmem %s2, %s231
        %s233 = smul.u32 2, %s12
      $region40: #{bottleneck_forward.40} parent=27 // pred_fallthru
        _
    $region28: #{bottleneck_forward.40} parent=5 // pred_fallthru
      _
    %p234 = scmp.le.s32.totalorder 1, %s12
    %p235 = scmp.lt.s32.totalorder %s12, 3
    %p236 = pnand %p234, %p235
    %p237 = pneg %p236
    // Predicated region
    $region41: #{bottleneck_forward.40} parent=5 // pred_check
      _
    $region42: #{bottleneck_forward.40} parent=5 // pred_check_branch
      %239 = sbr.rel (%p236) target = $region44
    $region43: #{bottleneck_forward.40} parent=5 // pred_region
      %s240 = ssub.s32 %s12, 1
      %s241 = smul.u32 2, %s17
      %p242 = scmp.lt.s32.totalorder %s241, 3
      %s243 = scalar_select %p242, %s241, 3
      %s244 = smul.addr %s243, 4
      %s245 = scalar_lea.vmem %s0, %s244
      %p246 = pneg %p38
      %p247 = pneg %p35
      %s248 = smul.u32 2, %s17
      %p249 = scmp.lt.s32.totalorder %s248, 3
      %s250 = scalar_select %p249, %s248, 3
      %s251 = smul.addr %s250, 4
      %s252 = scalar_lea.vmem %s1, %s251
      %p253 = pneg %p64
      %p254 = pneg %p61
      %s255 = smul.u32 2, %s17
      %p256 = scmp.lt.s32.totalorder %s255, 3
      %s257 = scalar_select %p256, %s255, 3
      %s258 = smul.addr %s257, 4
      %s259 = scalar_lea.vmem %s2, %s258
      %p260 = pneg %p90
      %p261 = pneg %p87
      %p262 = pneg %p111
      %p263 = pneg %p108
      %p264 = pneg %p132
      %p265 = pneg %p129
      %p266 = pneg %p153
      %p267 = pneg %p150
      %p268 = pneg %p179
      %p269 = pneg %p176
      %s270 = smul.u32 2, %s17
      %p271 = scmp.lt.s32.totalorder %s270, 3
      %s272 = scalar_select %p271, %s270, 3
      %s273 = smul.addr %s272, 8
      %s274 = scalar_lea.vmem %s6, %s273
      %s275 = smul.u32 2, %s17
      %p276 = scmp.lt.s32.totalorder %s275, 3
      %s277 = scalar_select %p276, %s275, 3
      %s278 = smul.addr %s277, 4
      %s279 = scalar_lea.vmem %s0, %s278
      %s280 = smul.u32 2, %s17
      %s281 = smul.u32 2, %s17
      %p282 = scmp.lt.s32.totalorder %s281, 3
      %s283 = scalar_select %p282, %s281, 3
      %s284 = smul.addr %s283, 4
      %s285 = scalar_lea.vmem %s1, %s284
      %s286 = smul.u32 2, %s17
      %s287 = smul.u32 2, %s17
      %p288 = scmp.lt.s32.totalorder %s287, 3
      %s289 = scalar_select %p288, %s287, 3
      %s290 = smul.addr %s289, 4
      %s291 = scalar_lea.vmem %s2, %s290
      %s292 = smul.u32 2, %s17
      %s293 = smul.u32 2, %s17
      %p294 = scmp.lt.s32.totalorder %s293, 3
      %s295 = scalar_select %p294, %s293, 3
      %s296 = smul.addr %s295, 8
      %s297 = scalar_lea.vmem %s6, %s296
      %s298 = smul.u32 2, %s17
      %v300 = vld [vmem:[%s279] sm:$0xff]
      %v301 = vld [vmem:[%s285] sm:$0xff]
      %v302 = vadd.f32 %v300, %v301
      %v303 = vld [vmem:[%s291] sm:$0xff]
      %v304 = vadd.f32 %v302, %v303
      %v305 = vld [vmem:[%s3] sm:$0xf]
      %v307 = vcombine.high %v304, %v304
      %v309 = vpack.c.bf16 %v304, %v304
      %v310 = vpack.c.bf16 %v307, %v307
      %vm311 = vcmask 31744
      %v313 = vsel %vm311, %v305, 0
      %vm315 = vcmask 1041408
      %v317 = vsel %vm315, %v309, 0
      %v320 = vsel %vm315, %v310, 0
      %322 = vmatprep.subr.bf16.mxu0 %v320
      %323 = vmatpush1.bf16.msra.mxu0 %v317
      %324 = vmatprep.subr.bf16.mxu0 0
      %325 = vmatpush1.bf16.msra.mxu0 0
      %326 = vmatprep.subr.bf16.mxu0 0
      %327 = vmatpush1.bf16.msra.mxu0 0
      %328 = vmatprep.subr.bf16.mxu0 0
      %329 = vmatpush1.bf16.msra.mxu0 0
      %330 = vmatprep.subr.bf16.mxu0 0
      %331 = vmatpush1.bf16.msra.mxu0 0
      %332 = vmatprep.subr.bf16.mxu0 0
      %333 = vmatpush1.bf16.msra.mxu0 0
      %334 = vmatprep.subr.bf16.mxu0 0
      %335 = vmatpush1.bf16.msra.mxu0 0
      %336 = vmatprep.subr.bf16.mxu0 0
      %337 = vmatpush1.bf16.msra.mxu0 0
      %338 = vmatprep.subr.bf16.mxu0 0
      %339 = vmatpush1.bf16.msra.mxu0 0
      %340 = vmatprep.subr.bf16.mxu0 0
      %341 = vmatpush1.bf16.msra.mxu0 0
      %342 = vmatprep.subr.bf16.mxu0 0
      %343 = vmatpush1.bf16.msra.mxu0 0
      %344 = vmatprep.subr.bf16.mxu0 0
      %345 = vmatpush1.bf16.msra.mxu0 0
      %346 = vmatprep.subr.bf16.mxu0 0
      %347 = vmatpush1.bf16.msra.mxu0 0
      %348 = vmatprep.subr.bf16.mxu0 0
      %349 = vmatpush1.bf16.msra.mxu0 0
      %350 = vmatprep.subr.bf16.mxu0 0
      %351 = vmatpush1.bf16.msra.mxu0 0
      %352 = vmatprep.subr.bf16.mxu0 0
      %353 = vmatpush1.bf16.msra.mxu0 0
      %354 = vmatprep.mubr.bf16.mxu0 0
      %355 = vmatmul.mubr.bf16.gmra.mrb[0].mxu0 %v313
      %v356 = vpop.f32.mrb[0].mxu0
      %v357 = vadd.f32 0.0, %v356
      %v358 = vpop.f32.mrb[0].mxu0
      %v359 = vadd.f32 0.0, %v358
      %v360 = vpop.f32.mrb[0].mxu0
      %v361 = vpop.f32.mrb[0].mxu0
      %362 = vdwg.mxu0
      %v363 = vld [vmem:[%s4] sm:$0xff]
      %365 = vset.pattern.permute.xlu0 0
      %366 = vperm.xlu0 %365, %v363
      %v367 = vpop.permute.xlu0 %366
      %v369 = vmul.f32 %v357, %v367
      %v370 = vmul.f32 %v359, %v367
      %v371 = vld [vmem:[%s5] sm:$0xff]
      %373 = vset.pattern.permute.xlu0 0
      %374 = vperm.xlu0 %373, %v371
      %v375 = vpop.permute.xlu0 %374
      %v377 = vadd.f32 %v369, %v375
      %v378 = vadd.f32 %v370, %v375
      %379 = vst [vmem:[%s297] sm:$0xff] %v377
      %380 = vst [vmem:[%s297 + $0x8] sm:$0xff] %v378
      %s381 = smul.u32 2, %s17
      %p382 = scmp.lt.s32.totalorder %s381, 3
      %s383 = scalar_select %p382, %s381, 3
      %s384 = smul.addr %s383, 8
      %s385 = scalar_lea.vmem %s6, %s384
      // Predicated region
      $region45: #{bottleneck_forward.40} parent=43 // pred_check
        %p386 = pneg %p176
      $region46: #{bottleneck_forward.40} parent=43 // pred_check_branch
        %388 = sbr.rel (%p386) target = $region48
      $region47: #{bottleneck_forward.40} parent=43 // pred_region
        %s389 = smul.u32 2, %s17
      $region48: #{bottleneck_forward.40} parent=43 // pred_fallthru
        _
    $region44: #{bottleneck_forward.40} parent=5 // pred_fallthru
      _
    %p390 = scmp.le.s32.totalorder 2, %s12
    // Predicated region
    $region49: #{bottleneck_forward.40} parent=5 // pred_check
      %p391 = pneg %p390
    $region50: #{bottleneck_forward.40} parent=5 // pred_check_branch
      %393 = sbr.rel (%p391) target = $region52
    $region51: #{bottleneck_forward.40} parent=5 // pred_region
      %s394 = ssub.s32 %s12, 2
      // Predicated region
      $region53: #{bottleneck_forward.40} parent=51 // pred_check
        %p395 = pneg %p182
      $region54: #{bottleneck_forward.40} parent=51 // pred_check_branch
        %397 = sbr.rel (%p395) target = $region56
      $region55: #{bottleneck_forward.40} parent=51 // pred_region
        %s398 = smul.u32 2, %s18
        %p399 = scmp.lt.s32.totalorder %s398, 3
        %s400 = scalar_select %p399, %s398, 3
        %s401 = smul.addr %s400, 8
        %s402 = scalar_lea.vmem %s6, %s401
      $region56: #{bottleneck_forward.40} parent=51 // pred_fallthru
        _
    $region52: #{bottleneck_forward.40} parent=5 // pred_fallthru
      _
  $region6: #{bottleneck_forward.40} parent=0 // loop_footer
    %s16 = sadd.s32 1, %s12
  $region7: #{bottleneck_forward.40} parent=0 // loop_footer_branch
    %11 = sbr.rel target = $region3
  $region8: #{bottleneck_forward.40} parent=0 // loop_exit
    _

// kernel: bottleneck_forward.36
$region0: #{bottleneck_forward.36}
  #allocation0 [shape = 'u32[]', space=smem, size = 0x4, offset = 0x4, fixed_abs, tag = 'smem constant byte address 0x4 - core index']
  #allocation1 [shape = 'u32[144,128]{1,0:T(1,128)}', space=vmem, size = 0x12000, scoped, tag = 'internal scratch']
  %s0 = inlined_call_operand.vmem [shape: bf16[432,512], index: 0, kind: input, shape index: {}]
  %s1 = inlined_call_operand.vmem [shape: bf16[16,432], index: 1, kind: input, shape index: {}]
  %s2 = inlined_call_operand.vmem [shape: f32[8,1], index: 2, kind: input, shape index: {}]
  %s3 = inlined_call_operand.vmem [shape: f32[8,1], index: 3, kind: input, shape index: {}]
  %s4 = inlined_call_operand.vmem [shape: f32[8,512], index: 4, kind: output, shape index: {0}]
  %s5 = inlined_call_operand.vmem [shape: f32[8,512], index: 5, kind: output, shape index: {1}]
  %6 = xla_tuple %s4, %s5
  %s7 = sld [smem:[#allocation0]]
  $region95: #{bottleneck_forward.36} parent=0
    _
  %s9 = ssub.s32 1, %s7
  %s10 = scalar_select 0, %s9, %s7
  $region1: #{bottleneck_forward.36} parent=0
    #allocation2 [shape = 'u8[442368]{0}', space=vmem, size = 0x6c000, scoped, tag = 'input window, operand 0']
    loop: start=0, step=1, limit=4
    $region2: #{bottleneck_forward.36} parent=1 // loop_pre_header
      _
    $region3: #{bottleneck_forward.36} parent=1 // loop_header
      %s12 = sphi 0, %s16
      %p13 = scmp.ge.s32.totalorder %s12, 4
      %s22 = sphi 0, %s24
      %s25 = sphi 0, %s22
      %s26 = sphi 0, %s25
      %s42 = sphi 0, %s26
      %s46 = sphi 0, %s46
      %s48 = sphi 0, %s46
      %s49 = sphi 0, %s48
      %s63 = sphi 0, %s49
      %s67 = sphi 0, %s67
      %s69 = sphi 0, %s67
      %s70 = sphi 0, %s69
      %s84 = sphi 0, %s70
      %s88 = sphi 0, %s88
      %s90 = sphi 0, %s88
      %s91 = sphi 0, %s90
      %s105 = sphi 0, %s91
      %s111 = sphi 0, %s113
      %s114 = sphi 0, %s111
      %s115 = sphi 0, %s114
      %s131 = sphi 0, %s115
      %s137 = sphi 0, %s139
      %s140 = sphi 0, %s137
      %s141 = sphi 0, %s140
      %s157 = sphi 0, %s141
    $region4: #{bottleneck_forward.36} parent=1 // loop_header_branch
      %15 = sbr.rel (%p13) target = $region8
    $region5: #{bottleneck_forward.36} parent=1 // loop_body
      %s17 = ssub.s32 %s12, 1
      %s18 = ssub.s32 %s12, 2
      %s19 = sadd.s32 %s12, 1
      %s20 = ssub.s32 %s12, %s19
      %p21 = scmp.eq.s32.totalorder %s20, 0
      %s23 = sadd.s32 %s22, 1
      %s24 = scalar_select %p21, %s22, %s23
      %p27 = pneg %p21
      %p28 = scmp.eq.s32.totalorder %s12, 1
      %p29 = por %p27, %p28
      %p30 = scmp.ne.s32.totalorder %s22, %s25
      %p31 = scmp.eq.s32.totalorder %s12, 0
      %p32 = por %p30, %p31
      %p33 = scmp.ne.s32.totalorder %s22, %s25
      %p34 = scmp.eq.s32.totalorder %s17, 1
      %p35 = por %p33, %p34
      %p36 = scmp.ne.s32.totalorder %s25, %s26
      %p37 = scmp.eq.s32.totalorder %s17, 0
      %p38 = por %p36, %p37
      %p39 = scmp.ne.s32.totalorder %s25, %s26
      %p40 = scmp.eq.s32.totalorder %s18, 1
      %p41 = por %p39, %p40
      %p43 = scmp.ne.s32.totalorder %s26, %s42
      %p44 = scmp.eq.s32.totalorder %s18, 0
      %p45 = por %p43, %p44
      %s47 = sadd.s32 %s46, 1
      %p50 = scmp.eq.s32.totalorder %s12, 1
      %p51 = scmp.ne.s32.totalorder %s46, %s48
      %p52 = scmp.eq.s32.totalorder %s12, 0
      %p53 = por %p51, %p52
      %p54 = scmp.ne.s32.totalorder %s46, %s48
      %p55 = scmp.eq.s32.totalorder %s17, 1
      %p56 = por %p54, %p55
      %p57 = scmp.ne.s32.totalorder %s48, %s49
      %p58 = scmp.eq.s32.totalorder %s17, 0
      %p59 = por %p57, %p58
      %p60 = scmp.ne.s32.totalorder %s48, %s49
      %p61 = scmp.eq.s32.totalorder %s18, 1
      %p62 = por %p60, %p61
      %p64 = scmp.ne.s32.totalorder %s49, %s63
      %p65 = scmp.eq.s32.totalorder %s18, 0
      %p66 = por %p64, %p65
      %s68 = sadd.s32 %s67, 1
      %p71 = scmp.eq.s32.totalorder %s12, 1
      %p72 = scmp.ne.s32.totalorder %s67, %s69
      %p73 = scmp.eq.s32.totalorder %s12, 0
      %p74 = por %p72, %p73
      %p75 = scmp.ne.s32.totalorder %s67, %s69
      %p76 = scmp.eq.s32.totalorder %s17, 1
      %p77 = por %p75, %p76
      %p78 = scmp.ne.s32.totalorder %s69, %s70
      %p79 = scmp.eq.s32.totalorder %s17, 0
      %p80 = por %p78, %p79
      %p81 = scmp.ne.s32.totalorder %s69, %s70
      %p82 = scmp.eq.s32.totalorder %s18, 1
      %p83 = por %p81, %p82
      %p85 = scmp.ne.s32.totalorder %s70, %s84
      %p86 = scmp.eq.s32.totalorder %s18, 0
      %p87 = por %p85, %p86
      %s89 = sadd.s32 %s88, 1
      %p92 = scmp.eq.s32.totalorder %s12, 1
      %p93 = scmp.ne.s32.totalorder %s88, %s90
      %p94 = scmp.eq.s32.totalorder %s12, 0
      %p95 = por %p93, %p94
      %p96 = scmp.ne.s32.totalorder %s88, %s90
      %p97 = scmp.eq.s32.totalorder %s17, 1
      %p98 = por %p96, %p97
      %p99 = scmp.ne.s32.totalorder %s90, %s91
      %p100 = scmp.eq.s32.totalorder %s17, 0
      %p101 = por %p99, %p100
      %p102 = scmp.ne.s32.totalorder %s90, %s91
      %p103 = scmp.eq.s32.totalorder %s18, 1
      %p104 = por %p102, %p103
      %p106 = scmp.ne.s32.totalorder %s91, %s105
      %p107 = scmp.eq.s32.totalorder %s18, 0
      %p108 = por %p106, %p107
      %s109 = ssub.s32 %s12, %s19
      %p110 = scmp.eq.s32.totalorder %s109, 0
      %s112 = sadd.s32 %s111, 1
      %s113 = scalar_select %p110, %s111, %s112
      %p116 = pneg %p110
      %p117 = scmp.eq.s32.totalorder %s12, 1
      %p118 = por %p116, %p117
      %p119 = scmp.ne.s32.totalorder %s111, %s114
      %p120 = scmp.eq.s32.totalorder %s12, 0
      %p121 = por %p119, %p120
      %p122 = scmp.ne.s32.totalorder %s111, %s114
      %p123 = scmp.eq.s32.totalorder %s17, 1
      %p124 = por %p122, %p123
      %p125 = scmp.ne.s32.totalorder %s114, %s115
      %p126 = scmp.eq.s32.totalorder %s17, 0
      %p127 = por %p125, %p126
      %p128 = scmp.ne.s32.totalorder %s114, %s115
      %p129 = scmp.eq.s32.totalorder %s18, 1
      %p130 = por %p128, %p129
      %p132 = scmp.ne.s32.totalorder %s115, %s131
      %p133 = scmp.eq.s32.totalorder %s18, 0
      %p134 = por %p132, %p133
      %s135 = ssub.s32 %s12, %s19
      %p136 = scmp.eq.s32.totalorder %s135, 0
      %s138 = sadd.s32 %s137, 1
      %s139 = scalar_select %p136, %s137, %s138
      %p142 = pneg %p136
      %p143 = scmp.eq.s32.totalorder %s12, 1
      %p144 = por %p142, %p143
      %p145 = scmp.ne.s32.totalorder %s137, %s140
      %p146 = scmp.eq.s32.totalorder %s12, 0
      %p147 = por %p145, %p146
      %p148 = scmp.ne.s32.totalorder %s137, %s140
      %p149 = scmp.eq.s32.totalorder %s17, 1
      %p150 = por %p148, %p149
      %p151 = scmp.ne.s32.totalorder %s140, %s141
      %p152 = scmp.eq.s32.totalorder %s17, 0
      %p153 = por %p151, %p152
      %p154 = scmp.ne.s32.totalorder %s140, %s141
      %p155 = scmp.eq.s32.totalorder %s18, 1
      %p156 = por %p154, %p155
      %p158 = scmp.ne.s32.totalorder %s141, %s157
      %p159 = scmp.eq.s32.totalorder %s18, 0
      %p160 = por %p158, %p159
      %p161 = scmp.le.s32.totalorder 1, %s12
      %p162 = scmp.lt.s32.totalorder %s12, 3
      %p163 = pnand %p161, %p162
      %p164 = pneg %p163
      // Predicated region
      $region9: #{bottleneck_forward.36} parent=5 // pred_check
        _
      $region10: #{bottleneck_forward.36} parent=5 // pred_check_branch
        %166 = sbr.rel (%p163) target = $region12
      $region11: #{bottleneck_forward.36} parent=5 // pred_region
        %s167 = ssub.s32 %s12, 1
        // Predicated region
        $region13: #{bottleneck_forward.36} parent=11 // pred_check
          %p168 = pneg %p59
        $region14: #{bottleneck_forward.36} parent=11 // pred_check_branch
          %170 = sbr.rel (%p168) target = $region16
        $region15: #{bottleneck_forward.36} parent=11 // pred_region
          _
        $region16: #{bottleneck_forward.36} parent=11 // pred_fallthru
          _
        // Predicated region
        $region17: #{bottleneck_forward.36} parent=11 // pred_check
          %p171 = pneg %p80
        $region18: #{bottleneck_forward.36} parent=11 // pred_check_branch
          %173 = sbr.rel (%p171) target = $region20
        $region19: #{bottleneck_forward.36} parent=11 // pred_region
          _
        $region20: #{bottleneck_forward.36} parent=11 // pred_fallthru
          _
        // Predicated region
        $region21: #{bottleneck_forward.36} parent=11 // pred_check
          %p174 = pneg %p101
        $region22: #{bottleneck_forward.36} parent=11 // pred_check_branch
          %176 = sbr.rel (%p174) target = $region24
        $region23: #{bottleneck_forward.36} parent=11 // pred_region
          _
        $region24: #{bottleneck_forward.36} parent=11 // pred_fallthru
          _
      $region12: #{bottleneck_forward.36} parent=5 // pred_fallthru
        _
      %p177 = scmp.lt.s32.totalorder %s12, 2
      // Predicated region
      $region25: #{bottleneck_forward.36} parent=5 // pred_check
        %p178 = pneg %p177
      $region26: #{bottleneck_forward.36} parent=5 // pred_check_branch
        %180 = sbr.rel (%p178) target = $region28
      $region27: #{bottleneck_forward.36} parent=5 // pred_region
        // Predicated region
        $region29: #{bottleneck_forward.36} parent=27 // pred_check
          %p181 = pneg %p32
        $region30: #{bottleneck_forward.36} parent=27 // pred_check_branch
          %183 = sbr.rel (%p181) target = $region32
        $region31: #{bottleneck_forward.36} parent=27 // pred_region
          %s184 = sand.u32 %s22, 1
          %s185 = sand.u32 %s22, 1
          %s186 = smul.addr %s185, 432
          %s187 = scalar_lea.vmem [#allocation2], %s186
          %s188 = smul.u32 2, %s12
          %s189 = smul.addr %s188, 4
          %s190 = scalar_lea.vmem %s0, %s189
          // Predicated region
          $region33: #{bottleneck_forward.36} parent=31 // pred_check
            _
          $region34: #{bottleneck_forward.36} parent=31 // pred_check_branch
            %192 = sbr.rel (0) target = $region36
          $region35: #{bottleneck_forward.36} parent=31 // pred_region
            // Predicated region
            $region37: #{bottleneck_forward.36} parent=35 // pred_check
              _
            $region38: #{bottleneck_forward.36} parent=35 // pred_check_branch
              %194 = sbr.rel (0) target = $region40
            $region39: #{bottleneck_forward.36} parent=35 // pred_region
              // Predicated region
              $region52: #{bottleneck_forward.36} parent=39 // pred_check
                _
              $region53: #{bottleneck_forward.36} parent=39 // pred_check_branch
                %315 = sbr.rel (0) target = $region55
              $region54: #{bottleneck_forward.36} parent=39 // pred_region
                loop: start=0, step=1, limit=1
                $region56: #{bottleneck_forward.36} parent=54 // loop_pre_header
                  _
                $region57: #{bottleneck_forward.36} parent=54 // loop_header
                  %s317 = sphi 0, %s321
                  %p318 = scmp.ge.s32.totalorder %s317, 1
                  %s322 = sphi %s190, %s190
                  %s323 = sphi %s187, %s187
                $region58: #{bottleneck_forward.36} parent=54 // loop_header_branch
                  %320 = sbr.rel (%p318) target = $region62
                $region59: #{bottleneck_forward.36} parent=54 // loop_body
                  %v324 = vld [vmem:[%s322] sm:$0xff]
                  %325 = vst [vmem:[%s323] sm:$0xff] %v324
                  %v326 = vld [vmem:[%s322 + $0x10] sm:$0xff]
                  %327 = vst [vmem:[%s323 + $0x8] sm:$0xff] %v326
                  %v328 = vld [vmem:[%s322 + $0x20] sm:$0xff]
                  %329 = vst [vmem:[%s323 + $0x10] sm:$0xff] %v328
                  %v330 = vld [vmem:[%s322 + $0x30] sm:$0xff]
                  %331 = vst [vmem:[%s323 + $0x18] sm:$0xff] %v330
                  %v332 = vld [vmem:[%s322 + $0x40] sm:$0xff]
                  %333 = vst [vmem:[%s323 + $0x20] sm:$0xff] %v332
                  %v334 = vld [vmem:[%s322 + $0x50] sm:$0xff]
                  %335 = vst [vmem:[%s323 + $0x28] sm:$0xff] %v334
                  %v336 = vld [vmem:[%s322 + $0x60] sm:$0xff]
                  %337 = vst [vmem:[%s323 + $0x30] sm:$0xff] %v336
                  %v338 = vld [vmem:[%s322 + $0x70] sm:$0xff]
                  %339 = vst [vmem:[%s323 + $0x38] sm:$0xff] %v338
                  %v340 = vld [vmem:[%s322 + $0x80] sm:$0xff]
                  %341 = vst [vmem:[%s323 + $0x40] sm:$0xff] %v340
                  %v342 = vld [vmem:[%s322 + $0x90] sm:$0xff]
                  %343 = vst [vmem:[%s323 + $0x48] sm:$0xff] %v342
                  %v344 = vld [vmem:[%s322 + $0xa0] sm:$0xff]
                  %345 = vst [vmem:[%s323 + $0x50] sm:$0xff] %v344
                  %v346 = vld [vmem:[%s322 + $0xb0] sm:$0xff]
                  %347 = vst [vmem:[%s323 + $0x58] sm:$0xff] %v346
                  %v348 = vld [vmem:[%s322 + $0xc0] sm:$0xff]
                  %349 = vst [vmem:[%s323 + $0x60] sm:$0xff] %v348
                  %v350 = vld [vmem:[%s322 + $0xd0] sm:$0xff]
                  %351 = vst [vmem:[%s323 + $0x68] sm:$0xff] %v350
                  %v352 = vld [vmem:[%s322 + $0xe0] sm:$0xff]
                  %353 = vst [vmem:[%s323 + $0x70] sm:$0xff] %v352
                  %v354 = vld [vmem:[%s322 + $0xf0] sm:$0xff]
                  %355 = vst [vmem:[%s323 + $0x78] sm:$0xff] %v354
                  %v356 = vld [vmem:[%s322 + $0x100] sm:$0xff]
                  %357 = vst [vmem:[%s323 + $0x80] sm:$0xff] %v356
                  %v358 = vld [vmem:[%s322 + $0x110] sm:$0xff]
                  %359 = vst [vmem:[%s323 + $0x88] sm:$0xff] %v358
                  %v360 = vld [vmem:[%s322 + $0x120] sm:$0xff]
                  %361 = vst [vmem:[%s323 + $0x90] sm:$0xff] %v360
                  %v362 = vld [vmem:[%s322 + $0x130] sm:$0xff]
                  %363 = vst [vmem:[%s323 + $0x98] sm:$0xff] %v362
                  %v364 = vld [vmem:[%s322 + $0x140] sm:$0xff]
                  %365 = vst [vmem:[%s323 + $0xa0] sm:$0xff] %v364
                  %v366 = vld [vmem:[%s322 + $0x150] sm:$0xff]
                  %367 = vst [vmem:[%s323 + $0xa8] sm:$0xff] %v366
                  %v368 = vld [vmem:[%s322 + $0x160] sm:$0xff]
                  %369 = vst [vmem:[%s323 + $0xb0] sm:$0xff] %v368
                  %v370 = vld [vmem:[%s322 + $0x170] sm:$0xff]
                  %371 = vst [vmem:[%s323 + $0xb8] sm:$0xff] %v370
                  %v372 = vld [vmem:[%s322 + $0x180] sm:$0xff]
                  %373 = vst [vmem:[%s323 + $0xc0] sm:$0xff] %v372
                  %v374 = vld [vmem:[%s322 + $0x190] sm:$0xff]
                  %375 = vst [vmem:[%s323 + $0xc8] sm:$0xff] %v374
                  %v376 = vld [vmem:[%s322 + $0x1a0] sm:$0xff]
                  %377 = vst [vmem:[%s323 + $0xd0] sm:$0xff] %v376
                  %v378 = vld [vmem:[%s322 + $0x1b0] sm:$0xff]
                  %379 = vst [vmem:[%s323 + $0xd8] sm:$0xff] %v378
                  %v380 = vld [vmem:[%s322 + $0x1c0] sm:$0xff]
                  %381 = vst [vmem:[%s323 + $0xe0] sm:$0xff] %v380
                  %v382 = vld [vmem:[%s322 + $0x1d0] sm:$0xff]
                  %383 = vst [vmem:[%s323 + $0xe8] sm:$0xff] %v382
                  %v384 = vld [vmem:[%s322 + $0x1e0] sm:$0xff]
                  %385 = vst [vmem:[%s323 + $0xf0] sm:$0xff] %v384
                  %v386 = vld [vmem:[%s322 + $0x1f0] sm:$0xff]
                  %387 = vst [vmem:[%s323 + $0xf8] sm:$0xff] %v386
                  %v388 = vld [vmem:[%s322 + $0x200] sm:$0xff]
                  %389 = vst [vmem:[%s323 + $0x100] sm:$0xff] %v388
                  %v390 = vld [vmem:[%s322 + $0x210] sm:$0xff]
                  %391 = vst [vmem:[%s323 + $0x108] sm:$0xff] %v390
                  %v392 = vld [vmem:[%s322 + $0x220] sm:$0xff]
                  %393 = vst [vmem:[%s323 + $0x110] sm:$0xff] %v392
                  %v394 = vld [vmem:[%s322 + $0x230] sm:$0xff]
                  %395 = vst [vmem:[%s323 + $0x118] sm:$0xff] %v394
                  %v396 = vld [vmem:[%s322 + $0x240] sm:$0xff]
                  %397 = vst [vmem:[%s323 + $0x120] sm:$0xff] %v396
                  %v398 = vld [vmem:[%s322 + $0x250] sm:$0xff]
                  %399 = vst [vmem:[%s323 + $0x128] sm:$0xff] %v398
                  %v400 = vld [vmem:[%s322 + $0x260] sm:$0xff]
                  %401 = vst [vmem:[%s323 + $0x130] sm:$0xff] %v400
                  %v402 = vld [vmem:[%s322 + $0x270] sm:$0xff]
                  %403 = vst [vmem:[%s323 + $0x138] sm:$0xff] %v402
                  %v404 = vld [vmem:[%s322 + $0x280] sm:$0xff]
                  %405 = vst [vmem:[%s323 + $0x140] sm:$0xff] %v404
                  %v406 = vld [vmem:[%s322 + $0x290] sm:$0xff]
                  %407 = vst [vmem:[%s323 + $0x148] sm:$0xff] %v406
                  %v408 = vld [vmem:[%s322 + $0x2a0] sm:$0xff]
                  %409 = vst [vmem:[%s323 + $0x150] sm:$0xff] %v408
                  %v410 = vld [vmem:[%s322 + $0x2b0] sm:$0xff]
                  %411 = vst [vmem:[%s323 + $0x158] sm:$0xff] %v410
                  %v412 = vld [vmem:[%s322 + $0x2c0] sm:$0xff]
                  %413 = vst [vmem:[%s323 + $0x160] sm:$0xff] %v412
                  %v414 = vld [vmem:[%s322 + $0x2d0] sm:$0xff]
                  %415 = vst [vmem:[%s323 + $0x168] sm:$0xff] %v414
                  %v416 = vld [vmem:[%s322 + $0x2e0] sm:$0xff]
                  %417 = vst [vmem:[%s323 + $0x170] sm:$0xff] %v416
                  %v418 = vld [vmem:[%s322 + $0x2f0] sm:$0xff]
                  %419 = vst [vmem:[%s323 + $0x178] sm:$0xff] %v418
                  %v420 = vld [vmem:[%s322 + $0x300] sm:$0xff]
                  %421 = vst [vmem:[%s323 + $0x180] sm:$0xff] %v420
                  %v422 = vld [vmem:[%s322 + $0x310] sm:$0xff]
                  %423 = vst [vmem:[%s323 + $0x188] sm:$0xff] %v422
                  %v424 = vld [vmem:[%s322 + $0x320] sm:$0xff]
                  %425 = vst [vmem:[%s323 + $0x190] sm:$0xff] %v424
                  %v426 = vld [vmem:[%s322 + $0x330] sm:$0xff]
                  %427 = vst [vmem:[%s323 + $0x198] sm:$0xff] %v426
                  %v428 = vld [vmem:[%s322 + $0x340] sm:$0xff]
                  %429 = vst [vmem:[%s323 + $0x1a0] sm:$0xff] %v428
                  %v430 = vld [vmem:[%s322 + $0x350] sm:$0xff]
                  %431 = vst [vmem:[%s323 + $0x1a8] sm:$0xff] %v430
                $region60: #{bottleneck_forward.36} parent=54 // loop_footer
                  %s321 = sadd.s32 1, %s317
                $region61: #{bottleneck_forward.36} parent=54 // loop_footer_branch
                  %316 = sbr.rel target = $region57
                $region62: #{bottleneck_forward.36} parent=54 // loop_exit
                  _
              $region55: #{bottleneck_forward.36} parent=39 // pred_fallthru
                _
              // Predicated region
              $region63: #{bottleneck_forward.36} parent=39 // pred_check
                _
              $region64: #{bottleneck_forward.36} parent=39 // pred_check_branch
                %433 = sbr.rel target = $region66
              $region65: #{bottleneck_forward.36} parent=39 // pred_region
                _
              $region66: #{bottleneck_forward.36} parent=39 // pred_fallthru
                _
            $region40: #{bottleneck_forward.36} parent=35 // pred_fallthru
              _
            // Predicated region
            $region41: #{bottleneck_forward.36} parent=35 // pred_check
              _
            $region42: #{bottleneck_forward.36} parent=35 // pred_check_branch
              %196 = sbr.rel target = $region44
            $region43: #{bottleneck_forward.36} parent=35 // pred_region
              loop: start=0, step=1, limit=1
              $region45: #{bottleneck_forward.36} parent=43 // loop_pre_header
                _
              $region46: #{bottleneck_forward.36} parent=43 // loop_header
                %s199 = sphi 0, %s203
                %p200 = scmp.ge.s32.totalorder %s199, 1
                %s204 = sphi %s190, %s190
                %s205 = sphi %s187, %s187
              $region47: #{bottleneck_forward.36} parent=43 // loop_header_branch
                %202 = sbr.rel (%p200) target = $region51
              $region48: #{bottleneck_forward.36} parent=43 // loop_body
                %v206 = vld [vmem:[%s204] sm:$0xff]
                %207 = vst [vmem:[%s205] sm:$0xff] %v206
                %v208 = vld [vmem:[%s204 + $0x10] sm:$0xff]
                %209 = vst [vmem:[%s205 + $0x8] sm:$0xff] %v208
                %v210 = vld [vmem:[%s204 + $0x20] sm:$0xff]
                %211 = vst [vmem:[%s205 + $0x10] sm:$0xff] %v210
                %v212 = vld [vmem:[%s204 + $0x30] sm:$0xff]
                %213 = vst [vmem:[%s205 + $0x18] sm:$0xff] %v212
                %v214 = vld [vmem:[%s204 + $0x40] sm:$0xff]
                %215 = vst [vmem:[%s205 + $0x20] sm:$0xff] %v214
                %v216 = vld [vmem:[%s204 + $0x50] sm:$0xff]
                %217 = vst [vmem:[%s205 + $0x28] sm:$0xff] %v216
                %v218 = vld [vmem:[%s204 + $0x60] sm:$0xff]
                %219 = vst [vmem:[%s205 + $0x30] sm:$0xff] %v218
                %v220 = vld [vmem:[%s204 + $0x70] sm:$0xff]
                %221 = vst [vmem:[%s205 + $0x38] sm:$0xff] %v220
                %v222 = vld [vmem:[%s204 + $0x80] sm:$0xff]
                %223 = vst [vmem:[%s205 + $0x40] sm:$0xff] %v222
                %v224 = vld [vmem:[%s204 + $0x90] sm:$0xff]
                %225 = vst [vmem:[%s205 + $0x48] sm:$0xff] %v224
                %v226 = vld [vmem:[%s204 + $0xa0] sm:$0xff]
                %227 = vst [vmem:[%s205 + $0x50] sm:$0xff] %v226
                %v228 = vld [vmem:[%s204 + $0xb0] sm:$0xff]
                %229 = vst [vmem:[%s205 + $0x58] sm:$0xff] %v228
                %v230 = vld [vmem:[%s204 + $0xc0] sm:$0xff]
                %231 = vst [vmem:[%s205 + $0x60] sm:$0xff] %v230
                %v232 = vld [vmem:[%s204 + $0xd0] sm:$0xff]
                %233 = vst [vmem:[%s205 + $0x68] sm:$0xff] %v232
                %v234 = vld [vmem:[%s204 + $0xe0] sm:$0xff]
                %235 = vst [vmem:[%s205 + $0x70] sm:$0xff] %v234
                %v236 = vld [vmem:[%s204 + $0xf0] sm:$0xff]
                %237 = vst [vmem:[%s205 + $0x78] sm:$0xff] %v236
                %v238 = vld [vmem:[%s204 + $0x100] sm:$0xff]
                %239 = vst [vmem:[%s205 + $0x80] sm:$0xff] %v238
                %v240 = vld [vmem:[%s204 + $0x110] sm:$0xff]
                %241 = vst [vmem:[%s205 + $0x88] sm:$0xff] %v240
                %v242 = vld [vmem:[%s204 + $0x120] sm:$0xff]
                %243 = vst [vmem:[%s205 + $0x90] sm:$0xff] %v242
                %v244 = vld [vmem:[%s204 + $0x130] sm:$0xff]
                %245 = vst [vmem:[%s205 + $0x98] sm:$0xff] %v244
                %v246 = vld [vmem:[%s204 + $0x140] sm:$0xff]
                %247 = vst [vmem:[%s205 + $0xa0] sm:$0xff] %v246
                %v248 = vld [vmem:[%s204 + $0x150] sm:$0xff]
                %249 = vst [vmem:[%s205 + $0xa8] sm:$0xff] %v248
                %v250 = vld [vmem:[%s204 + $0x160] sm:$0xff]
                %251 = vst [vmem:[%s205 + $0xb0] sm:$0xff] %v250
                %v252 = vld [vmem:[%s204 + $0x170] sm:$0xff]
                %253 = vst [vmem:[%s205 + $0xb8] sm:$0xff] %v252
                %v254 = vld [vmem:[%s204 + $0x180] sm:$0xff]
                %255 = vst [vmem:[%s205 + $0xc0] sm:$0xff] %v254
                %v256 = vld [vmem:[%s204 + $0x190] sm:$0xff]
                %257 = vst [vmem:[%s205 + $0xc8] sm:$0xff] %v256
                %v258 = vld [vmem:[%s204 + $0x1a0] sm:$0xff]
                %259 = vst [vmem:[%s205 + $0xd0] sm:$0xff] %v258
                %v260 = vld [vmem:[%s204 + $0x1b0] sm:$0xff]
                %261 = vst [vmem:[%s205 + $0xd8] sm:$0xff] %v260
                %v262 = vld [vmem:[%s204 + $0x1c0] sm:$0xff]
                %263 = vst [vmem:[%s205 + $0xe0] sm:$0xff] %v262
                %v264 = vld [vmem:[%s204 + $0x1d0] sm:$0xff]
                %265 = vst [vmem:[%s205 + $0xe8] sm:$0xff] %v264
                %v266 = vld [vmem:[%s204 + $0x1e0] sm:$0xff]
                %267 = vst [vmem:[%s205 + $0xf0] sm:$0xff] %v266
                %v268 = vld [vmem:[%s204 + $0x1f0] sm:$0xff]
                %269 = vst [vmem:[%s205 + $0xf8] sm:$0xff] %v268
                %v270 = vld [vmem:[%s204 + $0x200] sm:$0xff]
                %271 = vst [vmem:[%s205 + $0x100] sm:$0xff] %v270
                %v272 = vld [vmem:[%s204 + $0x210] sm:$0xff]
                %273 = vst [vmem:[%s205 + $0x108] sm:$0xff] %v272
                %v274 = vld [vmem:[%s204 + $0x220] sm:$0xff]
                %275 = vst [vmem:[%s205 + $0x110] sm:$0xff] %v274
                %v276 = vld [vmem:[%s204 + $0x230] sm:$0xff]
                %277 = vst [vmem:[%s205 + $0x118] sm:$0xff] %v276
                %v278 = vld [vmem:[%s204 + $0x240] sm:$0xff]
                %279 = vst [vmem:[%s205 + $0x120] sm:$0xff] %v278
                %v280 = vld [vmem:[%s204 + $0x250] sm:$0xff]
                %281 = vst [vmem:[%s205 + $0x128] sm:$0xff] %v280
                %v282 = vld [vmem:[%s204 + $0x260] sm:$0xff]
                %283 = vst [vmem:[%s205 + $0x130] sm:$0xff] %v282
                %v284 = vld [vmem:[%s204 + $0x270] sm:$0xff]
                %285 = vst [vmem:[%s205 + $0x138] sm:$0xff] %v284
                %v286 = vld [vmem:[%s204 + $0x280] sm:$0xff]
                %287 = vst [vmem:[%s205 + $0x140] sm:$0xff] %v286
                %v288 = vld [vmem:[%s204 + $0x290] sm:$0xff]
                %289 = vst [vmem:[%s205 + $0x148] sm:$0xff] %v288
                %v290 = vld [vmem:[%s204 + $0x2a0] sm:$0xff]
                %291 = vst [vmem:[%s205 + $0x150] sm:$0xff] %v290
                %v292 = vld [vmem:[%s204 + $0x2b0] sm:$0xff]
                %293 = vst [vmem:[%s205 + $0x158] sm:$0xff] %v292
                %v294 = vld [vmem:[%s204 + $0x2c0] sm:$0xff]
                %295 = vst [vmem:[%s205 + $0x160] sm:$0xff] %v294
                %v296 = vld [vmem:[%s204 + $0x2d0] sm:$0xff]
                %297 = vst [vmem:[%s205 + $0x168] sm:$0xff] %v296
                %v298 = vld [vmem:[%s204 + $0x2e0] sm:$0xff]
                %299 = vst [vmem:[%s205 + $0x170] sm:$0xff] %v298
                %v300 = vld [vmem:[%s204 + $0x2f0] sm:$0xff]
                %301 = vst [vmem:[%s205 + $0x178] sm:$0xff] %v300
                %v302 = vld [vmem:[%s204 + $0x300] sm:$0xff]
                %303 = vst [vmem:[%s205 + $0x180] sm:$0xff] %v302
                %v304 = vld [vmem:[%s204 + $0x310] sm:$0xff]
                %305 = vst [vmem:[%s205 + $0x188] sm:$0xff] %v304
                %v306 = vld [vmem:[%s204 + $0x320] sm:$0xff]
                %307 = vst [vmem:[%s205 + $0x190] sm:$0xff] %v306
                %v308 = vld [vmem:[%s204 + $0x330] sm:$0xff]
                %309 = vst [vmem:[%s205 + $0x198] sm:$0xff] %v308
                %v310 = vld [vmem:[%s204 + $0x340] sm:$0xff]
                %311 = vst [vmem:[%s205 + $0x1a0] sm:$0xff] %v310
                %v312 = vld [vmem:[%s204 + $0x350] sm:$0xff]
                %313 = vst [vmem:[%s205 + $0x1a8] sm:$0xff] %v312
              $region49: #{bottleneck_forward.36} parent=43 // loop_footer
                %s203 = sadd.s32 1, %s199
              $region50: #{bottleneck_forward.36} parent=43 // loop_footer_branch
                %198 = sbr.rel target = $region46
              $region51: #{bottleneck_forward.36} parent=43 // loop_exit
                _
            $region44: #{bottleneck_forward.36} parent=35 // pred_fallthru
              _
          $region36: #{bottleneck_forward.36} parent=31 // pred_fallthru
            _
          %434 = vnop
        $region32: #{bottleneck_forward.36} parent=27 // pred_fallthru
          _
      $region28: #{bottleneck_forward.36} parent=5 // pred_fallthru
        _
      %p435 = scmp.le.s32.totalorder 1, %s12
      %p436 = scmp.lt.s32.totalorder %s12, 3
      %p437 = pnand %p435, %p436
      %p438 = pneg %p437
      // Predicated region
      $region67: #{bottleneck_forward.36} parent=5 // pred_check
        _
      $region68: #{bottleneck_forward.36} parent=5 // pred_check_branch
        %440 = sbr.rel (%p437) target = $region70
      $region69: #{bottleneck_forward.36} parent=5 // pred_region
        %s441 = ssub.s32 %s12, 1
        %s442 = sand.u32 %s25, 1
        %s443 = sand.u32 %s25, 1
        %s444 = smul.addr %s443, 432
        %s445 = scalar_lea.vmem [#allocation2], %s444
        // Predicated region
        $region71: #{bottleneck_forward.36} parent=69 // pred_check
          %p446 = pneg %p38
        $region72: #{bottleneck_forward.36} parent=69 // pred_check_branch
          %448 = sbr.rel (%p446) target = $region74
        $region73: #{bottleneck_forward.36} parent=69 // pred_region
          _
        $region74: #{bottleneck_forward.36} parent=69 // pred_fallthru
          _
        %s449 = sand.u32 %s25, 1
        %s450 = sand.u32 %s25, 1
        %s451 = smul.addr %s450, 432
        %s452 = scalar_lea.vmem [#allocation2], %s451
        %p453 = pneg %p38
        %p454 = pneg %p35
        %p455 = pneg %p59
        %p456 = pneg %p56
        %p457 = pneg %p80
        %p458 = pneg %p77
        %p459 = pneg %p101
        %p460 = pneg %p98
        %p461 = pneg %p127
        %p462 = pneg %p124
        %s463 = smul.u32 2, %s17
        %p464 = scmp.lt.s32.totalorder %s463, 3
        %s465 = scalar_select %p464, %s463, 3
        %s466 = smul.addr %s465, 8
        %s467 = scalar_lea.vmem %s4, %s466
        %p468 = pneg %p153
        %p469 = pneg %p150
        %s470 = smul.u32 2, %s17
        %p471 = scmp.lt.s32.totalorder %s470, 3
        %s472 = scalar_select %p471, %s470, 3
        %s473 = smul.addr %s472, 8
        %s474 = scalar_lea.vmem %s5, %s473
        %s475 = smul.u32 2, %s17
        %s476 = smul.u32 2, %s17
        %p477 = scmp.lt.s32.totalorder %s476, 3
        %s478 = scalar_select %p477, %s476, 3
        %s479 = smul.addr %s478, 8
        %s480 = scalar_lea.vmem %s4, %s479
        %s481 = smul.u32 2, %s17
        %s482 = smul.u32 2, %s17
        %p483 = scmp.lt.s32.totalorder %s482, 3
        %s484 = scalar_select %p483, %s482, 3
        %s485 = smul.addr %s484, 8
        %s486 = scalar_lea.vmem %s5, %s485
        %s487 = smul.u32 2, %s17
        %v489 = vld [vmem:[%s1] sm:$0xff]
        %v490 = vld [vmem:[%s1 + $0x8] sm:$0xff]
        %v491 = vld [vmem:[%s1 + $0x10] sm:$0xff]
        %v492 = vld [vmem:[%s1 + $0x18] sm:$0xff]
        %v493 = vld [vmem:[%s445] sm:$0xff]
        %v494 = vld [vmem:[%s445 + $0x8] sm:$0xff]
        %v495 = vld [vmem:[%s445 + $0x10] sm:$0xff]
        %v496 = vld [vmem:[%s445 + $0x18] sm:$0xff]
        %v497 = vld [vmem:[%s445 + $0x20] sm:$0xff]
        %v498 = vld [vmem:[%s445 + $0x28] sm:$0xff]
        %v499 = vld [vmem:[%s445 + $0x30] sm:$0xff]
        %v500 = vld [vmem:[%s445 + $0x38] sm:$0xff]
        %v501 = vld [vmem:[%s445 + $0x40] sm:$0xff]
        %v502 = vld [vmem:[%s445 + $0x48] sm:$0xff]
        %v503 = vld [vmem:[%s445 + $0x50] sm:$0xff]
        %v504 = vld [vmem:[%s445 + $0x58] sm:$0xff]
        %v505 = vld [vmem:[%s445 + $0x60] sm:$0xff]
        %v506 = vld [vmem:[%s445 + $0x68] sm:$0xff]
        %v507 = vld [vmem:[%s445 + $0x70] sm:$0xff]
        %v508 = vld [vmem:[%s445 + $0x78] sm:$0xff]
        %v509 = vld [vmem:[%s445 + $0x80] sm:$0xff]
        %v510 = vld [vmem:[%s445 + $0x88] sm:$0xff]
        %v511 = vld [vmem:[%s445 + $0x90] sm:$0xff]
        %v512 = vld [vmem:[%s445 + $0x98] sm:$0xff]
        %v513 = vld [vmem:[%s445 + $0xa0] sm:$0xff]
        %v514 = vld [vmem:[%s445 + $0xa8] sm:$0xff]
        %v515 = vld [vmem:[%s445 + $0xb0] sm:$0xff]
        %v516 = vld [vmem:[%s445 + $0xb8] sm:$0xff]
        %v517 = vld [vmem:[%s445 + $0xc0] sm:$0xff]
        %v518 = vld [vmem:[%s445 + $0xc8] sm:$0xff]
        %v519 = vld [vmem:[%s445 + $0xd0] sm:$0xff]
        %v520 = vld [vmem:[%s445 + $0xd8] sm:$0xff]
        %v521 = vld [vmem:[%s445 + $0xe0] sm:$0xff]
        %v522 = vld [vmem:[%s445 + $0xe8] sm:$0xff]
        %v523 = vld [vmem:[%s445 + $0xf0] sm:$0xff]
        %v524 = vld [vmem:[%s445 + $0xf8] sm:$0xff]
        %v525 = vld [vmem:[%s445 + $0x100] sm:$0xff]
        %v526 = vld [vmem:[%s445 + $0x108] sm:$0xff]
        %v527 = vld [vmem:[%s445 + $0x110] sm:$0xff]
        %v528 = vld [vmem:[%s445 + $0x118] sm:$0xff]
        %v529 = vld [vmem:[%s445 + $0x120] sm:$0xff]
        %v530 = vld [vmem:[%s445 + $0x128] sm:$0xff]
        %v531 = vld [vmem:[%s445 + $0x130] sm:$0xff]
        %v532 = vld [vmem:[%s445 + $0x138] sm:$0xff]
        %v533 = vld [vmem:[%s445 + $0x140] sm:$0xff]
        %v534 = vld [vmem:[%s445 + $0x148] sm:$0xff]
        %v535 = vld [vmem:[%s445 + $0x150] sm:$0xff]
        %v536 = vld [vmem:[%s445 + $0x158] sm:$0xff]
        %v537 = vld [vmem:[%s445 + $0x160] sm:$0xff]
        %v538 = vld [vmem:[%s445 + $0x168] sm:$0xff]
        %v539 = vld [vmem:[%s445 + $0x170] sm:$0xff]
        %v540 = vld [vmem:[%s445 + $0x178] sm:$0xff]
        %v541 = vld [vmem:[%s445 + $0x180] sm:$0xff]
        %v542 = vld [vmem:[%s445 + $0x188] sm:$0xff]
        %v543 = vld [vmem:[%s445 + $0x190] sm:$0xff]
        %v544 = vld [vmem:[%s445 + $0x198] sm:$0xff]
        %v545 = vld [vmem:[%s445 + $0x1a0] sm:$0xff]
        %v546 = vld [vmem:[%s445 + $0x1a8] sm:$0xff]
        %v551 = vunpack.c.l.b16 %v489
        %v552 = vunpack.c.h.b16 %v489
        %v553 = vunpack.c.l.b16 %v490
        %v554 = vunpack.c.h.b16 %v490
        %v555 = vunpack.c.l.b16 %v491
        %v556 = vunpack.c.h.b16 %v491
        %v557 = vunpack.c.l.b16 %v492
        %v558 = vunpack.c.h.b16 %v492
        %v559 = vpack.c.b16 %v555, %v551
        %v560 = vpack.c.b16 %v556, %v552
        %v561 = vpack.c.b16 %v557, %v553
        %v562 = vpack.c.b16 %v558, %v554
        %v620 = vunpack.c.l.b16 %v493
        %v621 = vunpack.c.h.b16 %v493
        %v622 = vunpack.c.l.b16 %v494
        %v623 = vunpack.c.h.b16 %v494
        %v624 = vunpack.c.l.b16 %v495
        %v625 = vunpack.c.h.b16 %v495
        %v626 = vunpack.c.l.b16 %v496
        %v627 = vunpack.c.h.b16 %v496
        %v628 = vunpack.c.l.b16 %v497
        %v629 = vunpack.c.h.b16 %v497
        %v630 = vunpack.c.l.b16 %v498
        %v631 = vunpack.c.h.b16 %v498
        %v632 = vunpack.c.l.b16 %v499
        %v633 = vunpack.c.h.b16 %v499
        %v634 = vunpack.c.l.b16 %v500
        %v635 = vunpack.c.h.b16 %v500
        %v636 = vunpack.c.l.b16 %v501
        %v637 = vunpack.c.h.b16 %v501
        %v638 = vunpack.c.l.b16 %v502
        %v639 = vunpack.c.h.b16 %v502
        %v640 = vunpack.c.l.b16 %v503
        %v641 = vunpack.c.h.b16 %v503
        %v642 = vunpack.c.l.b16 %v504
        %v643 = vunpack.c.h.b16 %v504
        %v644 = vunpack.c.l.b16 %v505
        %v645 = vunpack.c.h.b16 %v505
        %v646 = vunpack.c.l.b16 %v506
        %v647 = vunpack.c.h.b16 %v506
        %v648 = vunpack.c.l.b16 %v507
        %v649 = vunpack.c.h.b16 %v507
        %v650 = vunpack.c.l.b16 %v508
        %v651 = vunpack.c.h.b16 %v508
        %v652 = vunpack.c.l.b16 %v509
        %v653 = vunpack.c.h.b16 %v509
        %v654 = vunpack.c.l.b16 %v510
        %v655 = vunpack.c.h.b16 %v510
        %v656 = vunpack.c.l.b16 %v511
        %v657 = vunpack.c.h.b16 %v511
        %v658 = vunpack.c.l.b16 %v512
        %v659 = vunpack.c.h.b16 %v512
        %v660 = vunpack.c.l.b16 %v513
        %v661 = vunpack.c.h.b16 %v513
        %v662 = vunpack.c.l.b16 %v514
        %v663 = vunpack.c.h.b16 %v514
        %v664 = vunpack.c.l.b16 %v515
        %v665 = vunpack.c.h.b16 %v515
        %v666 = vunpack.c.l.b16 %v516
        %v667 = vunpack.c.h.b16 %v516
        %v668 = vunpack.c.l.b16 %v517
        %v669 = vunpack.c.h.b16 %v517
        %v670 = vunpack.c.l.b16 %v518
        %v671 = vunpack.c.h.b16 %v518
        %v672 = vunpack.c.l.b16 %v519
        %v673 = vunpack.c.h.b16 %v519
        %v674 = vunpack.c.l.b16 %v520
        %v675 = vunpack.c.h.b16 %v520
        %v676 = vunpack.c.l.b16 %v521
        %v677 = vunpack.c.h.b16 %v521
        %v678 = vunpack.c.l.b16 %v522
        %v679 = vunpack.c.h.b16 %v522
        %v680 = vunpack.c.l.b16 %v523
        %v681 = vunpack.c.h.b16 %v523
        %v682 = vunpack.c.l.b16 %v524
        %v683 = vunpack.c.h.b16 %v524
        %v684 = vunpack.c.l.b16 %v525
        %v685 = vunpack.c.h.b16 %v525
        %v686 = vunpack.c.l.b16 %v526
        %v687 = vunpack.c.h.b16 %v526
        %v688 = vunpack.c.l.b16 %v527
        %v689 = vunpack.c.h.b16 %v527
        %v690 = vunpack.c.l.b16 %v528
        %v691 = vunpack.c.h.b16 %v528
        %v692 = vunpack.c.l.b16 %v529
        %v693 = vunpack.c.h.b16 %v529
        %v694 = vunpack.c.l.b16 %v530
        %v695 = vunpack.c.h.b16 %v530
        %v696 = vunpack.c.l.b16 %v531
        %v697 = vunpack.c.h.b16 %v531
        %v698 = vunpack.c.l.b16 %v532
        %v699 = vunpack.c.h.b16 %v532
        %v700 = vunpack.c.l.b16 %v533
        %v701 = vunpack.c.h.b16 %v533
        %v702 = vunpack.c.l.b16 %v534
        %v703 = vunpack.c.h.b16 %v534
        %v704 = vunpack.c.l.b16 %v535
        %v705 = vunpack.c.h.b16 %v535
        %v706 = vunpack.c.l.b16 %v536
        %v707 = vunpack.c.h.b16 %v536
        %v708 = vunpack.c.l.b16 %v537
        %v709 = vunpack.c.h.b16 %v537
        %v710 = vunpack.c.l.b16 %v538
        %v711 = vunpack.c.h.b16 %v538
        %v712 = vunpack.c.l.b16 %v539
        %v713 = vunpack.c.h.b16 %v539
        %v714 = vunpack.c.l.b16 %v540
        %v715 = vunpack.c.h.b16 %v540
        %v716 = vunpack.c.l.b16 %v541
        %v717 = vunpack.c.h.b16 %v541
        %v718 = vunpack.c.l.b16 %v542
        %v719 = vunpack.c.h.b16 %v542
        %v720 = vunpack.c.l.b16 %v543
        %v721 = vunpack.c.h.b16 %v543
        %v722 = vunpack.c.l.b16 %v544
        %v723 = vunpack.c.h.b16 %v544
        %v724 = vunpack.c.l.b16 %v545
        %v725 = vunpack.c.h.b16 %v545
        %v726 = vunpack.c.l.b16 %v546
        %v727 = vunpack.c.h.b16 %v546
        %v728 = vpack.c.b16 %v622, %v620
        %v729 = vpack.c.b16 %v623, %v621
        %v730 = vpack.c.b16 %v626, %v624
        %v731 = vpack.c.b16 %v627, %v625
        %v732 = vpack.c.b16 %v630, %v628
        %v733 = vpack.c.b16 %v631, %v629
        %v734 = vpack.c.b16 %v634, %v632
        %v735 = vpack.c.b16 %v635, %v633
        %v736 = vpack.c.b16 %v638, %v636
        %v737 = vpack.c.b16 %v639, %v637
        %v738 = vpack.c.b16 %v642, %v640
        %v739 = vpack.c.b16 %v643, %v641
        %v740 = vpack.c.b16 %v646, %v644
        %v741 = vpack.c.b16 %v647, %v645
        %v742 = vpack.c.b16 %v650, %v648
        %v743 = vpack.c.b16 %v651, %v649
        %v744 = vpack.c.b16 %v654, %v652
        %v745 = vpack.c.b16 %v655, %v653
        %v746 = vpack.c.b16 %v658, %v656
        %v747 = vpack.c.b16 %v659, %v657
        %v748 = vpack.c.b16 %v662, %v660
        %v749 = vpack.c.b16 %v663, %v661
        %v750 = vpack.c.b16 %v666, %v664
        %v751 = vpack.c.b16 %v667, %v665
        %v752 = vpack.c.b16 %v670, %v668
        %v753 = vpack.c.b16 %v671, %v669
        %v754 = vpack.c.b16 %v674, %v672
        %v755 = vpack.c.b16 %v675, %v673
        %v756 = vpack.c.b16 %v678, %v676
        %v757 = vpack.c.b16 %v679, %v677
        %v758 = vpack.c.b16 %v682, %v680
        %v759 = vpack.c.b16 %v683, %v681
        %v760 = vpack.c.b16 %v686, %v684
        %v761 = vpack.c.b16 %v687, %v685
        %v762 = vpack.c.b16 %v690, %v688
        %v763 = vpack.c.b16 %v691, %v689
        %v764 = vpack.c.b16 %v694, %v692
        %v765 = vpack.c.b16 %v695, %v693
        %v766 = vpack.c.b16 %v698, %v696
        %v767 = vpack.c.b16 %v699, %v697
        %v768 = vpack.c.b16 %v702, %v700
        %v769 = vpack.c.b16 %v703, %v701
        %v770 = vpack.c.b16 %v706, %v704
        %v771 = vpack.c.b16 %v707, %v705
        %v772 = vpack.c.b16 %v710, %v708
        %v773 = vpack.c.b16 %v711, %v709
        %v774 = vpack.c.b16 %v714, %v712
        %v775 = vpack.c.b16 %v715, %v713
        %v776 = vpack.c.b16 %v718, %v716
        %v777 = vpack.c.b16 %v719, %v717
        %v778 = vpack.c.b16 %v722, %v720
        %v779 = vpack.c.b16 %v723, %v721
        %v780 = vpack.c.b16 %v726, %v724
        %v781 = vpack.c.b16 %v727, %v725
        %vm836 = vcmask 392192
        %v838 = vsel %vm836, %v562, 0
        %840 = vmatprep.subr.bf16.mxu0 %v729
        %841 = vmatpush1.bf16.msra.mxu0 %v728
        %842 = vmatprep.subr.bf16.mxu0 %v731
        %843 = vmatpush1.bf16.msra.mxu0 %v730
        %844 = vmatprep.subr.bf16.mxu0 %v733
        %845 = vmatpush1.bf16.msra.mxu0 %v732
        %846 = vmatprep.subr.bf16.mxu0 %v735
        %847 = vmatpush1.bf16.msra.mxu0 %v734
        %848 = vmatprep.subr.bf16.mxu0 %v737
        %849 = vmatpush1.bf16.msra.mxu0 %v736
        %850 = vmatprep.subr.bf16.mxu0 %v739
        %851 = vmatpush1.bf16.msra.mxu0 %v738
        %852 = vmatprep.subr.bf16.mxu0 %v741
        %853 = vmatpush1.bf16.msra.mxu0 %v740
        %854 = vmatprep.subr.bf16.mxu0 %v743
        %855 = vmatpush1.bf16.msra.mxu0 %v742
        %856 = vmatprep.subr.bf16.mxu0 %v745
        %857 = vmatpush1.bf16.msra.mxu0 %v744
        %858 = vmatprep.subr.bf16.mxu0 %v747
        %859 = vmatpush1.bf16.msra.mxu0 %v746
        %860 = vmatprep.subr.bf16.mxu0 %v749
        %861 = vmatpush1.bf16.msra.mxu0 %v748
        %862 = vmatprep.subr.bf16.mxu0 %v751
        %863 = vmatpush1.bf16.msra.mxu0 %v750
        %864 = vmatprep.subr.bf16.mxu0 %v753
        %865 = vmatpush1.bf16.msra.mxu0 %v752
        %866 = vmatprep.subr.bf16.mxu0 %v755
        %867 = vmatpush1.bf16.msra.mxu0 %v754
        %868 = vmatprep.subr.bf16.mxu0 %v757
        %869 = vmatpush1.bf16.msra.mxu0 %v756
        %870 = vmatprep.subr.bf16.mxu0 %v759
        %871 = vmatpush1.bf16.msra.mxu0 %v758
        %872 = vmatprep.mubr.bf16.mxu0 %v560
        %873 = vmatmul.mubr.bf16.gmra.mrb[0].mxu0 %v559
        %v874 = vpop.f32.mrb[0].mxu0
        %v875 = vadd.f32 0.0, %v874
        %v876 = vpop.f32.mrb[0].mxu0
        %v877 = vadd.f32 0.0, %v876
        %v878 = vpop.f32.mrb[0].mxu0
        %v879 = vadd.f32 0.0, %v878
        %v880 = vpop.f32.mrb[0].mxu0
        %v881 = vadd.f32 0.0, %v880
        %882 = vdwg.mxu0
        %883 = vmatprep.subr.bf16.mxu0 %v761
        %884 = vmatpush1.bf16.msra.mxu0 %v760
        %885 = vmatprep.subr.bf16.mxu0 %v763
        %886 = vmatpush1.bf16.msra.mxu0 %v762
        %887 = vmatprep.subr.bf16.mxu0 %v765
        %888 = vmatpush1.bf16.msra.mxu0 %v764
        %889 = vmatprep.subr.bf16.mxu0 %v767
        %890 = vmatpush1.bf16.msra.mxu0 %v766
        %891 = vmatprep.subr.bf16.mxu0 %v769
        %892 = vmatpush1.bf16.msra.mxu0 %v768
        %893 = vmatprep.subr.bf16.mxu0 %v771
        %894 = vmatpush1.bf16.msra.mxu0 %v770
        %895 = vmatprep.subr.bf16.mxu0 %v773
        %896 = vmatpush1.bf16.msra.mxu0 %v772
        %897 = vmatprep.subr.bf16.mxu0 %v775
        %898 = vmatpush1.bf16.msra.mxu0 %v774
        %899 = vmatprep.subr.bf16.mxu0 %v777
        %900 = vmatpush1.bf16.msra.mxu0 %v776
        %901 = vmatprep.subr.bf16.mxu0 %v779
        %902 = vmatpush1.bf16.msra.mxu0 %v778
        %903 = vmatprep.subr.bf16.mxu0 %v781
        %904 = vmatpush1.bf16.msra.mxu0 %v780
        %905 = vmatprep.subr.bf16.mxu0 0
        %906 = vmatpush1.bf16.msra.mxu0 0
        %907 = vmatprep.subr.bf16.mxu0 0
        %908 = vmatpush1.bf16.msra.mxu0 0
        %909 = vmatprep.subr.bf16.mxu0 0
        %910 = vmatpush1.bf16.msra.mxu0 0
        %911 = vmatprep.subr.bf16.mxu0 0
        %912 = vmatpush1.bf16.msra.mxu0 0
        %913 = vmatprep.subr.bf16.mxu0 0
        %914 = vmatpush1.bf16.msra.mxu0 0
        %915 = vmatprep.mubr.bf16.mxu0 %v838
        %916 = vmatmul.mubr.bf16.gmra.mrb[0].mxu0 %v561
        %v917 = vpop.f32.mrb[0].mxu0
        %v918 = vadd.f32 %v875, %v917
        %v919 = vpop.f32.mrb[0].mxu0
        %v920 = vadd.f32 %v877, %v919
        %v921 = vpop.f32.mrb[0].mxu0
        %v922 = vadd.f32 %v879, %v921
        %v923 = vpop.f32.mrb[0].mxu0
        %v924 = vadd.f32 %v881, %v923
        %925 = vdwg.mxu0
        %v926 = vld [vmem:[%s2] sm:$0xff]
        %928 = vset.pattern.permute.xlu0 0
        %929 = vperm.xlu0 %928, %v926
        %v930 = vpop.permute.xlu0 %929
        %v932 = vmul.f32 %v918, %v930
        %v933 = vmul.f32 %v920, %v930
        %v934 = vld [vmem:[%s3] sm:$0xff]
        %936 = vset.pattern.permute.xlu0 0
        %937 = vperm.xlu0 %936, %v934
        %v938 = vpop.permute.xlu0 %937
        %v940 = vadd.f32 %v932, %v938
        %v941 = vadd.f32 %v933, %v938
        %v942 = vmax.f32 %v940, 0.0
        %v943 = vmax.f32 %v941, 0.0
        %944 = vst [vmem:[%s480] sm:$0xff] %v942
        %945 = vst [vmem:[%s480 + $0x8] sm:$0xff] %v943
        %946 = vst [vmem:[%s486] sm:$0xff] %v922
        %947 = vst [vmem:[%s486 + $0x8] sm:$0xff] %v924
        %s948 = smul.u32 2, %s17
        %p949 = scmp.lt.s32.totalorder %s948, 3
        %s950 = scalar_select %p949, %s948, 3
        %s951 = smul.addr %s950, 8
        %s952 = scalar_lea.vmem %s4, %s951
        %s953 = smul.u32 2, %s17
        %p954 = scmp.lt.s32.totalorder %s953, 3
        %s955 = scalar_select %p954, %s953, 3
        %s956 = smul.addr %s955, 8
        %s957 = scalar_lea.vmem %s5, %s956
        // Predicated region
        $region75: #{bottleneck_forward.36} parent=69 // pred_check
          %p958 = pneg %p124
        $region76: #{bottleneck_forward.36} parent=69 // pred_check_branch
          %960 = sbr.rel (%p958) target = $region78
        $region77: #{bottleneck_forward.36} parent=69 // pred_region
          %s961 = smul.u32 2, %s17
        $region78: #{bottleneck_forward.36} parent=69 // pred_fallthru
          _
        // Predicated region
        $region79: #{bottleneck_forward.36} parent=69 // pred_check
          %p962 = pneg %p150
        $region80: #{bottleneck_forward.36} parent=69 // pred_check_branch
          %964 = sbr.rel (%p962) target = $region82
        $region81: #{bottleneck_forward.36} parent=69 // pred_region
          %s965 = smul.u32 2, %s17
        $region82: #{bottleneck_forward.36} parent=69 // pred_fallthru
          _
      $region70: #{bottleneck_forward.36} parent=5 // pred_fallthru
        _
      %p966 = scmp.le.s32.totalorder 2, %s12
      // Predicated region
      $region83: #{bottleneck_forward.36} parent=5 // pred_check
        %p967 = pneg %p966
      $region84: #{bottleneck_forward.36} parent=5 // pred_check_branch
        %969 = sbr.rel (%p967) target = $region86
      $region85: #{bottleneck_forward.36} parent=5 // pred_region
        %s970 = ssub.s32 %s12, 2
        // Predicated region
        $region87: #{bottleneck_forward.36} parent=85 // pred_check
          %p971 = pneg %p130
        $region88: #{bottleneck_forward.36} parent=85 // pred_check_branch
          %973 = sbr.rel (%p971) target = $region90
        $region89: #{bottleneck_forward.36} parent=85 // pred_region
          %s974 = smul.u32 2, %s18
          %p975 = scmp.lt.s32.totalorder %s974, 3
          %s976 = scalar_select %p975, %s974, 3
          %s977 = smul.addr %s976, 8
          %s978 = scalar_lea.vmem %s4, %s977
        $region90: #{bottleneck_forward.36} parent=85 // pred_fallthru
          _
        // Predicated region
        $region91: #{bottleneck_forward.36} parent=85 // pred_check
          %p979 = pneg %p156
        $region92: #{bottleneck_forward.36} parent=85 // pred_check_branch
          %981 = sbr.rel (%p979) target = $region94
        $region93: #{bottleneck_forward.36} parent=85 // pred_region
          %s982 = smul.u32 2, %s18
          %p983 = scmp.lt.s32.totalorder %s982, 3
          %s984 = scalar_select %p983, %s982, 3
          %s985 = smul.addr %s984, 8
          %s986 = scalar_lea.vmem %s5, %s985
        $region94: #{bottleneck_forward.36} parent=85 // pred_fallthru
          _
      $region86: #{bottleneck_forward.36} parent=5 // pred_fallthru
        _
    $region6: #{bottleneck_forward.36} parent=1 // loop_footer
      %s16 = sadd.s32 1, %s12
    $region7: #{bottleneck_forward.36} parent=1 // loop_footer_branch
      %11 = sbr.rel target = $region3
    $region8: #{bottleneck_forward.36} parent=1 // loop_exit
      _

// kernel: bottleneck_forward.41
$region0: #{bottleneck_forward.41}
  #allocation0 [shape = 'u32[]', space=smem, size = 0x4, offset = 0x4, fixed_abs, tag = 'smem constant byte address 0x4 - core index']
  #allocation1 [shape = 'u32[144,128]{1,0:T(1,128)}', space=vmem, size = 0x12000, scoped, tag = 'internal scratch']
  %s0 = inlined_call_operand.vmem [shape: f32[8,512], index: 0, kind: input, shape index: {}]
  %s1 = inlined_call_operand.vmem [shape: f32[8,512], index: 1, kind: input, shape index: {}]
  %s2 = inlined_call_operand.vmem [shape: f32[8,1], index: 2, kind: input, shape index: {}]
  %s3 = inlined_call_operand.vmem [shape: f32[8,1], index: 3, kind: input, shape index: {}]
  %s4 = inlined_call_operand.vmem [shape: f32[8,512], index: 4, kind: output, shape index: {}]
  %s5 = sld [smem:[#allocation0]]
  $region49: #{bottleneck_forward.41} parent=0
    _
  %s7 = ssub.s32 1, %s5
  %s8 = scalar_select 0, %s7, %s5
  loop: start=0, step=1, limit=4
  $region2: #{bottleneck_forward.41} parent=0 // loop_pre_header
    _
  $region3: #{bottleneck_forward.41} parent=0 // loop_header
    %s10 = sphi 0, %s14
    %p11 = scmp.ge.s32.totalorder %s10, 4
    %s20 = sphi 0, %s22
    %s23 = sphi 0, %s20
    %s24 = sphi 0, %s23
    %s40 = sphi 0, %s24
    %s46 = sphi 0, %s48
    %s49 = sphi 0, %s46
    %s50 = sphi 0, %s49
    %s66 = sphi 0, %s50
    %s70 = sphi 0, %s70
    %s72 = sphi 0, %s70
    %s73 = sphi 0, %s72
    %s87 = sphi 0, %s73
    %s91 = sphi 0, %s91
    %s93 = sphi 0, %s91
    %s94 = sphi 0, %s93
    %s108 = sphi 0, %s94
    %s114 = sphi 0, %s116
    %s117 = sphi 0, %s114
    %s118 = sphi 0, %s117
    %s134 = sphi 0, %s118
  $region4: #{bottleneck_forward.41} parent=0 // loop_header_branch
    %13 = sbr.rel (%p11) target = $region8
  $region5: #{bottleneck_forward.41} parent=0 // loop_body
    %s15 = ssub.s32 %s10, 1
    %s16 = ssub.s32 %s10, 2
    %s17 = sadd.s32 %s10, 1
    %s18 = ssub.s32 %s10, %s17
    %p19 = scmp.eq.s32.totalorder %s18, 0
    %s21 = sadd.s32 %s20, 1
    %s22 = scalar_select %p19, %s20, %s21
    %p25 = pneg %p19
    %p26 = scmp.eq.s32.totalorder %s10, 1
    %p27 = por %p25, %p26
    %p28 = scmp.ne.s32.totalorder %s20, %s23
    %p29 = scmp.eq.s32.totalorder %s10, 0
    %p30 = por %p28, %p29
    %p31 = scmp.ne.s32.totalorder %s20, %s23
    %p32 = scmp.eq.s32.totalorder %s15, 1
    %p33 = por %p31, %p32
    %p34 = scmp.ne.s32.totalorder %s23, %s24
    %p35 = scmp.eq.s32.totalorder %s15, 0
    %p36 = por %p34, %p35
    %p37 = scmp.ne.s32.totalorder %s23, %s24
    %p38 = scmp.eq.s32.totalorder %s16, 1
    %p39 = por %p37, %p38
    %p41 = scmp.ne.s32.totalorder %s24, %s40
    %p42 = scmp.eq.s32.totalorder %s16, 0
    %p43 = por %p41, %p42
    %s44 = ssub.s32 %s10, %s17
    %p45 = scmp.eq.s32.totalorder %s44, 0
    %s47 = sadd.s32 %s46, 1
    %s48 = scalar_select %p45, %s46, %s47
    %p51 = pneg %p45
    %p52 = scmp.eq.s32.totalorder %s10, 1
    %p53 = por %p51, %p52
    %p54 = scmp.ne.s32.totalorder %s46, %s49
    %p55 = scmp.eq.s32.totalorder %s10, 0
    %p56 = por %p54, %p55
    %p57 = scmp.ne.s32.totalorder %s46, %s49
    %p58 = scmp.eq.s32.totalorder %s15, 1
    %p59 = por %p57, %p58
    %p60 = scmp.ne.s32.totalorder %s49, %s50
    %p61 = scmp.eq.s32.totalorder %s15, 0
    %p62 = por %p60, %p61
    %p63 = scmp.ne.s32.totalorder %s49, %s50
    %p64 = scmp.eq.s32.totalorder %s16, 1
    %p65 = por %p63, %p64
    %p67 = scmp.ne.s32.totalorder %s50, %s66
    %p68 = scmp.eq.s32.totalorder %s16, 0
    %p69 = por %p67, %p68
    %s71 = sadd.s32 %s70, 1
    %p74 = scmp.eq.s32.totalorder %s10, 1
    %p75 = scmp.ne.s32.totalorder %s70, %s72
    %p76 = scmp.eq.s32.totalorder %s10, 0
    %p77 = por %p75, %p76
    %p78 = scmp.ne.s32.totalorder %s70, %s72
    %p79 = scmp.eq.s32.totalorder %s15, 1
    %p80 = por %p78, %p79
    %p81 = scmp.ne.s32.totalorder %s72, %s73
    %p82 = scmp.eq.s32.totalorder %s15, 0
    %p83 = por %p81, %p82
    %p84 = scmp.ne.s32.totalorder %s72, %s73
    %p85 = scmp.eq.s32.totalorder %s16, 1
    %p86 = por %p84, %p85
    %p88 = scmp.ne.s32.totalorder %s73, %s87
    %p89 = scmp.eq.s32.totalorder %s16, 0
    %p90 = por %p88, %p89
    %s92 = sadd.s32 %s91, 1
    %p95 = scmp.eq.s32.totalorder %s10, 1
    %p96 = scmp.ne.s32.totalorder %s91, %s93
    %p97 = scmp.eq.s32.totalorder %s10, 0
    %p98 = por %p96, %p97
    %p99 = scmp.ne.s32.totalorder %s91, %s93
    %p100 = scmp.eq.s32.totalorder %s15, 1
    %p101 = por %p99, %p100
    %p102 = scmp.ne.s32.totalorder %s93, %s94
    %p103 = scmp.eq.s32.totalorder %s15, 0
    %p104 = por %p102, %p103
    %p105 = scmp.ne.s32.totalorder %s93, %s94
    %p106 = scmp.eq.s32.totalorder %s16, 1
    %p107 = por %p105, %p106
    %p109 = scmp.ne.s32.totalorder %s94, %s108
    %p110 = scmp.eq.s32.totalorder %s16, 0
    %p111 = por %p109, %p110
    %s112 = ssub.s32 %s10, %s17
    %p113 = scmp.eq.s32.totalorder %s112, 0
    %s115 = sadd.s32 %s114, 1
    %s116 = scalar_select %p113, %s114, %s115
    %p119 = pneg %p113
    %p120 = scmp.eq.s32.totalorder %s10, 1
    %p121 = por %p119, %p120
    %p122 = scmp.ne.s32.totalorder %s114, %s117
    %p123 = scmp.eq.s32.totalorder %s10, 0
    %p124 = por %p122, %p123
    %p125 = scmp.ne.s32.totalorder %s114, %s117
    %p126 = scmp.eq.s32.totalorder %s15, 1
    %p127 = por %p125, %p126
    %p128 = scmp.ne.s32.totalorder %s117, %s118
    %p129 = scmp.eq.s32.totalorder %s15, 0
    %p130 = por %p128, %p129
    %p131 = scmp.ne.s32.totalorder %s117, %s118
    %p132 = scmp.eq.s32.totalorder %s16, 1
    %p133 = por %p131, %p132
    %p135 = scmp.ne.s32.totalorder %s118, %s134
    %p136 = scmp.eq.s32.totalorder %s16, 0
    %p137 = por %p135, %p136
    %p138 = scmp.le.s32.totalorder 1, %s10
    %p139 = scmp.lt.s32.totalorder %s10, 3
    %p140 = pnand %p138, %p139
    %p141 = pneg %p140
    // Predicated region
    $region9: #{bottleneck_forward.41} parent=5 // pred_check
      _
    $region10: #{bottleneck_forward.41} parent=5 // pred_check_branch
      %143 = sbr.rel (%p140) target = $region12
    $region11: #{bottleneck_forward.41} parent=5 // pred_region
      %s144 = ssub.s32 %s10, 1
      // Predicated region
      $region13: #{bottleneck_forward.41} parent=11 // pred_check
        %p145 = pneg %p83
      $region14: #{bottleneck_forward.41} parent=11 // pred_check_branch
        %147 = sbr.rel (%p145) target = $region16
      $region15: #{bottleneck_forward.41} parent=11 // pred_region
        _
      $region16: #{bottleneck_forward.41} parent=11 // pred_fallthru
        _
      // Predicated region
      $region17: #{bottleneck_forward.41} parent=11 // pred_check
        %p148 = pneg %p104
      $region18: #{bottleneck_forward.41} parent=11 // pred_check_branch
        %150 = sbr.rel (%p148) target = $region20
      $region19: #{bottleneck_forward.41} parent=11 // pred_region
        _
      $region20: #{bottleneck_forward.41} parent=11 // pred_fallthru
        _
    $region12: #{bottleneck_forward.41} parent=5 // pred_fallthru
      _
    %p151 = scmp.lt.s32.totalorder %s10, 2
    // Predicated region
    $region21: #{bottleneck_forward.41} parent=5 // pred_check
      %p152 = pneg %p151
    $region22: #{bottleneck_forward.41} parent=5 // pred_check_branch
      %154 = sbr.rel (%p152) target = $region24
    $region23: #{bottleneck_forward.41} parent=5 // pred_region
      // Predicated region
      $region25: #{bottleneck_forward.41} parent=23 // pred_check
        %p155 = pneg %p30
      $region26: #{bottleneck_forward.41} parent=23 // pred_check_branch
        %157 = sbr.rel (%p155) target = $region28
      $region27: #{bottleneck_forward.41} parent=23 // pred_region
        %s158 = smul.u32 2, %s10
        %p159 = scmp.lt.s32.totalorder %s158, 3
        %s160 = scalar_select %p159, %s158, 3
        %s161 = smul.addr %s160, 8
        %s162 = scalar_lea.vmem %s0, %s161
        %s163 = smul.u32 2, %s10
      $region28: #{bottleneck_forward.41} parent=23 // pred_fallthru
        _
      // Predicated region
      $region29: #{bottleneck_forward.41} parent=23 // pred_check
        %p164 = pneg %p56
      $region30: #{bottleneck_forward.41} parent=23 // pred_check_branch
        %166 = sbr.rel (%p164) target = $region32
      $region31: #{bottleneck_forward.41} parent=23 // pred_region
        %s167 = smul.u32 2, %s10
        %p168 = scmp.lt.s32.totalorder %s167, 3
        %s169 = scalar_select %p168, %s167, 3
        %s170 = smul.addr %s169, 8
        %s171 = scalar_lea.vmem %s1, %s170
        %s172 = smul.u32 2, %s10
      $region32: #{bottleneck_forward.41} parent=23 // pred_fallthru
        _
    $region24: #{bottleneck_forward.41} parent=5 // pred_fallthru
      _
    %p173 = scmp.le.s32.totalorder 1, %s10
    %p174 = scmp.lt.s32.totalorder %s10, 3
    %p175 = pnand %p173, %p174
    %p176 = pneg %p175
    // Predicated region
    $region33: #{bottleneck_forward.41} parent=5 // pred_check
      _
    $region34: #{bottleneck_forward.41} parent=5 // pred_check_branch
      %178 = sbr.rel (%p175) target = $region36
    $region35: #{bottleneck_forward.41} parent=5 // pred_region
      %s179 = ssub.s32 %s10, 1
      %s180 = smul.u32 2, %s15
      %p181 = scmp.lt.s32.totalorder %s180, 3
      %s182 = scalar_select %p181, %s180, 3
      %s183 = smul.addr %s182, 8
      %s184 = scalar_lea.vmem %s0, %s183
      %p185 = pneg %p36
      %p186 = pneg %p33
      %s187 = smul.u32 2, %s15
      %p188 = scmp.lt.s32.totalorder %s187, 3
      %s189 = scalar_select %p188, %s187, 3
      %s190 = smul.addr %s189, 8
      %s191 = scalar_lea.vmem %s1, %s190
      %p192 = pneg %p62
      %p193 = pneg %p59
      %p194 = pneg %p83
      %p195 = pneg %p80
      %p196 = pneg %p104
      %p197 = pneg %p101
      %p198 = pneg %p130
      %p199 = pneg %p127
      %s200 = smul.u32 2, %s15
      %p201 = scmp.lt.s32.totalorder %s200, 3
      %s202 = scalar_select %p201, %s200, 3
      %s203 = smul.addr %s202, 8
      %s204 = scalar_lea.vmem %s4, %s203
      %s205 = smul.u32 2, %s15
      %p206 = scmp.lt.s32.totalorder %s205, 3
      %s207 = scalar_select %p206, %s205, 3
      %s208 = smul.addr %s207, 8
      %s209 = scalar_lea.vmem %s0, %s208
      %s210 = smul.u32 2, %s15
      %s211 = smul.u32 2, %s15
      %p212 = scmp.lt.s32.totalorder %s211, 3
      %s213 = scalar_select %p212, %s211, 3
      %s214 = smul.addr %s213, 8
      %s215 = scalar_lea.vmem %s1, %s214
      %s216 = smul.u32 2, %s15
      %s217 = smul.u32 2, %s15
      %p218 = scmp.lt.s32.totalorder %s217, 3
      %s219 = scalar_select %p218, %s217, 3
      %s220 = smul.addr %s219, 8
      %s221 = scalar_lea.vmem %s4, %s220
      %s222 = smul.u32 2, %s15
      %v223 = vld [vmem:[%s209] sm:$0xff]
      %v224 = vld [vmem:[%s209 + $0x8] sm:$0xff]
      %v225 = vld [vmem:[%s215] sm:$0xff]
      %v226 = vld [vmem:[%s215 + $0x8] sm:$0xff]
      %v227 = vadd.f32 %v223, %v225
      %v228 = vadd.f32 %v224, %v226
      %v229 = vld [vmem:[%s2] sm:$0xff]
      %231 = vset.pattern.permute.xlu0 0
      %232 = vperm.xlu0 %231, %v229
      %v233 = vpop.permute.xlu0 %232
      %v235 = vmul.f32 %v227, %v233
      %v236 = vmul.f32 %v228, %v233
      %v237 = vld [vmem:[%s3] sm:$0xff]
      %239 = vset.pattern.permute.xlu0 0
      %240 = vperm.xlu0 %239, %v237
      %v241 = vpop.permute.xlu0 %240
      %v243 = vadd.f32 %v235, %v241
      %v244 = vadd.f32 %v236, %v241
      %v245 = vmax.f32 %v243, 0.0
      %v246 = vmax.f32 %v244, 0.0
      %247 = vst [vmem:[%s221] sm:$0xff] %v245
      %248 = vst [vmem:[%s221 + $0x8] sm:$0xff] %v246
      %s249 = smul.u32 2, %s15
      %p250 = scmp.lt.s32.totalorder %s249, 3
      %s251 = scalar_select %p250, %s249, 3
      %s252 = smul.addr %s251, 8
      %s253 = scalar_lea.vmem %s4, %s252
      // Predicated region
      $region37: #{bottleneck_forward.41} parent=35 // pred_check
        %p254 = pneg %p127
      $region38: #{bottleneck_forward.41} parent=35 // pred_check_branch
        %256 = sbr.rel (%p254) target = $region40
      $region39: #{bottleneck_forward.41} parent=35 // pred_region
        %s257 = smul.u32 2, %s15
      $region40: #{bottleneck_forward.41} parent=35 // pred_fallthru
        _
    $region36: #{bottleneck_forward.41} parent=5 // pred_fallthru
      _
    %p258 = scmp.le.s32.totalorder 2, %s10
    // Predicated region
    $region41: #{bottleneck_forward.41} parent=5 // pred_check
      %p259 = pneg %p258
    $region42: #{bottleneck_forward.41} parent=5 // pred_check_branch
      %261 = sbr.rel (%p259) target = $region44
    $region43: #{bottleneck_forward.41} parent=5 // pred_region
      %s262 = ssub.s32 %s10, 2
      // Predicated region
      $region45: #{bottleneck_forward.41} parent=43 // pred_check
        %p263 = pneg %p133
      $region46: #{bottleneck_forward.41} parent=43 // pred_check_branch
        %265 = sbr.rel (%p263) target = $region48
      $region47: #{bottleneck_forward.41} parent=43 // pred_region
        %s266 = smul.u32 2, %s16
        %p267 = scmp.lt.s32.totalorder %s266, 3
        %s268 = scalar_select %p267, %s266, 3
        %s269 = smul.addr %s268, 8
        %s270 = scalar_lea.vmem %s4, %s269
      $region48: #{bottleneck_forward.41} parent=43 // pred_fallthru
        _
    $region44: #{bottleneck_forward.41} parent=5 // pred_fallthru
      _
  $region6: #{bottleneck_forward.41} parent=0 // loop_footer
    %s14 = sadd.s32 1, %s10
  $region7: #{bottleneck_forward.41} parent=0 // loop_footer_branch
    %9 = sbr.rel target = $region3
  $region8: #{bottleneck_forward.41} parent=0 // loop_exit
    _

// kernel: bottleneck_forward.43
$region0: #{bottleneck_forward.43}
  #allocation0 [shape = 'u32[]', space=smem, size = 0x4, offset = 0x4, fixed_abs, tag = 'smem constant byte address 0x4 - core index']
  #allocation1 [shape = 'u32[144,128]{1,0:T(1,128)}', space=vmem, size = 0x12000, scoped, tag = 'internal scratch']
  %s0 = inlined_call_operand.vmem [shape: f32[8,512], index: 0, kind: input, shape index: {}]
  %s1 = inlined_call_operand.vmem [shape: bf16[4,8], index: 1, kind: input, shape index: {}]
  %s2 = inlined_call_operand.vmem [shape: f32[4,1], index: 2, kind: input, shape index: {}]
  %s3 = inlined_call_operand.vmem [shape: f32[4,1], index: 3, kind: input, shape index: {}]
  %s4 = inlined_call_operand.vmem [shape: f32[4,512], index: 4, kind: output, shape index: {}]
  %s5 = sld [smem:[#allocation0]]
  $region49: #{bottleneck_forward.43} parent=0
    _
  %s7 = ssub.s32 1, %s5
  %s8 = scalar_select 0, %s7, %s5
  loop: start=0, step=1, limit=4
  $region2: #{bottleneck_forward.43} parent=0 // loop_pre_header
    _
  $region3: #{bottleneck_forward.43} parent=0 // loop_header
    %s10 = sphi 0, %s14
    %p11 = scmp.ge.s32.totalorder %s10, 4
    %s20 = sphi 0, %s22
    %s23 = sphi 0, %s20
    %s24 = sphi 0, %s23
    %s40 = sphi 0, %s24
    %s44 = sphi 0, %s44
    %s46 = sphi 0, %s44
    %s47 = sphi 0, %s46
    %s61 = sphi 0, %s47
    %s65 = sphi 0, %s65
    %s67 = sphi 0, %s65
    %s68 = sphi 0, %s67
    %s82 = sphi 0, %s68
    %s86 = sphi 0, %s86
    %s88 = sphi 0, %s86
    %s89 = sphi 0, %s88
    %s103 = sphi 0, %s89
    %s109 = sphi 0, %s111
    %s112 = sphi 0, %s109
    %s113 = sphi 0, %s112
    %s129 = sphi 0, %s113
  $region4: #{bottleneck_forward.43} parent=0 // loop_header_branch
    %13 = sbr.rel (%p11) target = $region8
  $region5: #{bottleneck_forward.43} parent=0 // loop_body
    %s15 = ssub.s32 %s10, 1
    %s16 = ssub.s32 %s10, 2
    %s17 = sadd.s32 %s10, 1
    %s18 = ssub.s32 %s10, %s17
    %p19 = scmp.eq.s32.totalorder %s18, 0
    %s21 = sadd.s32 %s20, 1
    %s22 = scalar_select %p19, %s20, %s21
    %p25 = pneg %p19
    %p26 = scmp.eq.s32.totalorder %s10, 1
    %p27 = por %p25, %p26
    %p28 = scmp.ne.s32.totalorder %s20, %s23
    %p29 = scmp.eq.s32.totalorder %s10, 0
    %p30 = por %p28, %p29
    %p31 = scmp.ne.s32.totalorder %s20, %s23
    %p32 = scmp.eq.s32.totalorder %s15, 1
    %p33 = por %p31, %p32
    %p34 = scmp.ne.s32.totalorder %s23, %s24
    %p35 = scmp.eq.s32.totalorder %s15, 0
    %p36 = por %p34, %p35
    %p37 = scmp.ne.s32.totalorder %s23, %s24
    %p38 = scmp.eq.s32.totalorder %s16, 1
    %p39 = por %p37, %p38
    %p41 = scmp.ne.s32.totalorder %s24, %s40
    %p42 = scmp.eq.s32.totalorder %s16, 0
    %p43 = por %p41, %p42
    %s45 = sadd.s32 %s44, 1
    %p48 = scmp.eq.s32.totalorder %s10, 1
    %p49 = scmp.ne.s32.totalorder %s44, %s46
    %p50 = scmp.eq.s32.totalorder %s10, 0
    %p51 = por %p49, %p50
    %p52 = scmp.ne.s32.totalorder %s44, %s46
    %p53 = scmp.eq.s32.totalorder %s15, 1
    %p54 = por %p52, %p53
    %p55 = scmp.ne.s32.totalorder %s46, %s47
    %p56 = scmp.eq.s32.totalorder %s15, 0
    %p57 = por %p55, %p56
    %p58 = scmp.ne.s32.totalorder %s46, %s47
    %p59 = scmp.eq.s32.totalorder %s16, 1
    %p60 = por %p58, %p59
    %p62 = scmp.ne.s32.totalorder %s47, %s61
    %p63 = scmp.eq.s32.totalorder %s16, 0
    %p64 = por %p62, %p63
    %s66 = sadd.s32 %s65, 1
    %p69 = scmp.eq.s32.totalorder %s10, 1
    %p70 = scmp.ne.s32.totalorder %s65, %s67
    %p71 = scmp.eq.s32.totalorder %s10, 0
    %p72 = por %p70, %p71
    %p73 = scmp.ne.s32.totalorder %s65, %s67
    %p74 = scmp.eq.s32.totalorder %s15, 1
    %p75 = por %p73, %p74
    %p76 = scmp.ne.s32.totalorder %s67, %s68
    %p77 = scmp.eq.s32.totalorder %s15, 0
    %p78 = por %p76, %p77
    %p79 = scmp.ne.s32.totalorder %s67, %s68
    %p80 = scmp.eq.s32.totalorder %s16, 1
    %p81 = por %p79, %p80
    %p83 = scmp.ne.s32.totalorder %s68, %s82
    %p84 = scmp.eq.s32.totalorder %s16, 0
    %p85 = por %p83, %p84
    %s87 = sadd.s32 %s86, 1
    %p90 = scmp.eq.s32.totalorder %s10, 1
    %p91 = scmp.ne.s32.totalorder %s86, %s88
    %p92 = scmp.eq.s32.totalorder %s10, 0
    %p93 = por %p91, %p92
    %p94 = scmp.ne.s32.totalorder %s86, %s88
    %p95 = scmp.eq.s32.totalorder %s15, 1
    %p96 = por %p94, %p95
    %p97 = scmp.ne.s32.totalorder %s88, %s89
    %p98 = scmp.eq.s32.totalorder %s15, 0
    %p99 = por %p97, %p98
    %p100 = scmp.ne.s32.totalorder %s88, %s89
    %p101 = scmp.eq.s32.totalorder %s16, 1
    %p102 = por %p100, %p101
    %p104 = scmp.ne.s32.totalorder %s89, %s103
    %p105 = scmp.eq.s32.totalorder %s16, 0
    %p106 = por %p104, %p105
    %s107 = ssub.s32 %s10, %s17
    %p108 = scmp.eq.s32.totalorder %s107, 0
    %s110 = sadd.s32 %s109, 1
    %s111 = scalar_select %p108, %s109, %s110
    %p114 = pneg %p108
    %p115 = scmp.eq.s32.totalorder %s10, 1
    %p116 = por %p114, %p115
    %p117 = scmp.ne.s32.totalorder %s109, %s112
    %p118 = scmp.eq.s32.totalorder %s10, 0
    %p119 = por %p117, %p118
    %p120 = scmp.ne.s32.totalorder %s109, %s112
    %p121 = scmp.eq.s32.totalorder %s15, 1
    %p122 = por %p120, %p121
    %p123 = scmp.ne.s32.totalorder %s112, %s113
    %p124 = scmp.eq.s32.totalorder %s15, 0
    %p125 = por %p123, %p124
    %p126 = scmp.ne.s32.totalorder %s112, %s113
    %p127 = scmp.eq.s32.totalorder %s16, 1
    %p128 = por %p126, %p127
    %p130 = scmp.ne.s32.totalorder %s113, %s129
    %p131 = scmp.eq.s32.totalorder %s16, 0
    %p132 = por %p130, %p131
    %p133 = scmp.le.s32.totalorder 1, %s10
    %p134 = scmp.lt.s32.totalorder %s10, 3
    %p135 = pnand %p133, %p134
    %p136 = pneg %p135
    // Predicated region
    $region9: #{bottleneck_forward.43} parent=5 // pred_check
      _
    $region10: #{bottleneck_forward.43} parent=5 // pred_check_branch
      %138 = sbr.rel (%p135) target = $region12
    $region11: #{bottleneck_forward.43} parent=5 // pred_region
      %s139 = ssub.s32 %s10, 1
      // Predicated region
      $region13: #{bottleneck_forward.43} parent=11 // pred_check
        %p140 = pneg %p57
      $region14: #{bottleneck_forward.43} parent=11 // pred_check_branch
        %142 = sbr.rel (%p140) target = $region16
      $region15: #{bottleneck_forward.43} parent=11 // pred_region
        _
      $region16: #{bottleneck_forward.43} parent=11 // pred_fallthru
        _
      // Predicated region
      $region17: #{bottleneck_forward.43} parent=11 // pred_check
        %p143 = pneg %p78
      $region18: #{bottleneck_forward.43} parent=11 // pred_check_branch
        %145 = sbr.rel (%p143) target = $region20
      $region19: #{bottleneck_forward.43} parent=11 // pred_region
        _
      $region20: #{bottleneck_forward.43} parent=11 // pred_fallthru
        _
      // Predicated region
      $region21: #{bottleneck_forward.43} parent=11 // pred_check
        %p146 = pneg %p99
      $region22: #{bottleneck_forward.43} parent=11 // pred_check_branch
        %148 = sbr.rel (%p146) target = $region24
      $region23: #{bottleneck_forward.43} parent=11 // pred_region
        _
      $region24: #{bottleneck_forward.43} parent=11 // pred_fallthru
        _
    $region12: #{bottleneck_forward.43} parent=5 // pred_fallthru
      _
    %p149 = scmp.lt.s32.totalorder %s10, 2
    // Predicated region
    $region25: #{bottleneck_forward.43} parent=5 // pred_check
      %p150 = pneg %p149
    $region26: #{bottleneck_forward.43} parent=5 // pred_check_branch
      %152 = sbr.rel (%p150) target = $region28
    $region27: #{bottleneck_forward.43} parent=5 // pred_region
      // Predicated region
      $region29: #{bottleneck_forward.43} parent=27 // pred_check
        %p153 = pneg %p30
      $region30: #{bottleneck_forward.43} parent=27 // pred_check_branch
        %155 = sbr.rel (%p153) target = $region32
      $region31: #{bottleneck_forward.43} parent=27 // pred_region
        %s156 = smul.u32 2, %s10
        %p157 = scmp.lt.s32.totalorder %s156, 3
        %s158 = scalar_select %p157, %s156, 3
        %s159 = smul.addr %s158, 8
        %s160 = scalar_lea.vmem %s0, %s159
        %s161 = smul.u32 2, %s10
      $region32: #{bottleneck_forward.43} parent=27 // pred_fallthru
        _
    $region28: #{bottleneck_forward.43} parent=5 // pred_fallthru
      _
    %p162 = scmp.le.s32.totalorder 1, %s10
    %p163 = scmp.lt.s32.totalorder %s10, 3
    %p164 = pnand %p162, %p163
    %p165 = pneg %p164
    // Predicated region
    $region33: #{bottleneck_forward.43} parent=5 // pred_check
      _
    $region34: #{bottleneck_forward.43} parent=5 // pred_check_branch
      %167 = sbr.rel (%p164) target = $region36
    $region35: #{bottleneck_forward.43} parent=5 // pred_region
      %s168 = ssub.s32 %s10, 1
      %s169 = smul.u32 2, %s15
      %p170 = scmp.lt.s32.totalorder %s169, 3
      %s171 = scalar_select %p170, %s169, 3
      %s172 = smul.addr %s171, 8
      %s173 = scalar_lea.vmem %s0, %s172
      %p174 = pneg %p36
      %p175 = pneg %p33
      %p176 = pneg %p57
      %p177 = pneg %p54
      %p178 = pneg %p78
      %p179 = pneg %p75
      %p180 = pneg %p99
      %p181 = pneg %p96
      %p182 = pneg %p125
      %p183 = pneg %p122
      %s184 = smul.u32 2, %s15
      %p185 = scmp.lt.s32.totalorder %s184, 3
      %s186 = scalar_select %p185, %s184, 3
      %s187 = smul.addr %s186, 4
      %s188 = scalar_lea.vmem %s4, %s187
      %s189 = smul.u32 2, %s15
      %p190 = scmp.lt.s32.totalorder %s189, 3
      %s191 = scalar_select %p190, %s189, 3
      %s192 = smul.addr %s191, 8
      %s193 = scalar_lea.vmem %s0, %s192
      %s194 = smul.u32 2, %s15
      %s195 = smul.u32 2, %s15
      %p196 = scmp.lt.s32.totalorder %s195, 3
      %s197 = scalar_select %p196, %s195, 3
      %s198 = smul.addr %s197, 4
      %s199 = scalar_lea.vmem %s4, %s198
      %s200 = smul.u32 2, %s15
      %v202 = vld [vmem:[%s193] sm:$0xff]
      %v203 = vld [vmem:[%s193 + $0x8] sm:$0xff]
      %v204 = vld [vmem:[%s1] sm:$0x3]
      %v205 = vpack.c.bf16 %v202, %v202
      %v206 = vpack.c.bf16 %v203, %v203
      %vm207 = vcmask 64512
      %v209 = vsel %vm207, %v204, 0
      %vm211 = vcmask 1043456
      %v213 = vsel %vm211, %v205, 0
      %v216 = vsel %vm211, %v206, 0
      %218 = vmatprep.subr.bf16.mxu0 %v216
      %219 = vmatpush1.bf16.msra.mxu0 %v213
      %220 = vmatprep.subr.bf16.mxu0 0
      %221 = vmatpush1.bf16.msra.mxu0 0
      %222 = vmatprep.subr.bf16.mxu0 0
      %223 = vmatpush1.bf16.msra.mxu0 0
      %224 = vmatprep.subr.bf16.mxu0 0
      %225 = vmatpush1.bf16.msra.mxu0 0
      %226 = vmatprep.subr.bf16.mxu0 0
      %227 = vmatpush1.bf16.msra.mxu0 0
      %228 = vmatprep.subr.bf16.mxu0 0
      %229 = vmatpush1.bf16.msra.mxu0 0
      %230 = vmatprep.subr.bf16.mxu0 0
      %231 = vmatpush1.bf16.msra.mxu0 0
      %232 = vmatprep.subr.bf16.mxu0 0
      %233 = vmatpush1.bf16.msra.mxu0 0
      %234 = vmatprep.subr.bf16.mxu0 0
      %235 = vmatpush1.bf16.msra.mxu0 0
      %236 = vmatprep.subr.bf16.mxu0 0
      %237 = vmatpush1.bf16.msra.mxu0 0
      %238 = vmatprep.subr.bf16.mxu0 0
      %239 = vmatpush1.bf16.msra.mxu0 0
      %240 = vmatprep.subr.bf16.mxu0 0
      %241 = vmatpush1.bf16.msra.mxu0 0
      %242 = vmatprep.subr.bf16.mxu0 0
      %243 = vmatpush1.bf16.msra.mxu0 0
      %244 = vmatprep.subr.bf16.mxu0 0
      %245 = vmatpush1.bf16.msra.mxu0 0
      %246 = vmatprep.subr.bf16.mxu0 0
      %247 = vmatpush1.bf16.msra.mxu0 0
      %248 = vmatprep.subr.bf16.mxu0 0
      %249 = vmatpush1.bf16.msra.mxu0 0
      %250 = vmatprep.mubr.bf16.mxu0 0
      %251 = vmatmul.mubr.bf16.gmra.mrb[0].mxu0 %v209
      %v252 = vpop.f32.mrb[0].mxu0
      %v253 = vadd.f32 0.0, %v252
      %v254 = vpop.f32.mrb[0].mxu0
      %v255 = vadd.f32 0.0, %v254
      %v256 = vpop.f32.mrb[0].mxu0
      %v257 = vpop.f32.mrb[0].mxu0
      %258 = vdwg.mxu0
      %v259 = vld [vmem:[%s2] sm:$0xf]
      %261 = vset.pattern.permute.xlu0 0
      %262 = vperm.xlu0 %261, %v259
      %v263 = vpop.permute.xlu0 %262
      %v265 = vmul.f32 %v253, %v263
      %v266 = vmul.f32 %v255, %v263
      %v267 = vld [vmem:[%s3] sm:$0xf]
      %269 = vset.pattern.permute.xlu0 0
      %270 = vperm.xlu0 %269, %v267
      %v271 = vpop.permute.xlu0 %270
      %v273 = vadd.f32 %v265, %v271
      %v274 = vadd.f32 %v266, %v271
      %v275 = vmax.f32 %v273, 0.0
      %v276 = vmax.f32 %v274, 0.0
      %v279 = vcombine.low %v275, %v276
      %281 = vst [vmem:[%s199] sm:$0xff] %v279
      %s282 = smul.u32 2, %s15
      %p283 = scmp.lt.s32.totalorder %s282, 3
      %s284 = scalar_select %p283, %s282, 3
      %s285 = smul.addr %s284, 4
      %s286 = scalar_lea.vmem %s4, %s285
      // Predicated region
      $region37: #{bottleneck_forward.43} parent=35 // pred_check
        %p287 = pneg %p122
      $region38: #{bottleneck_forward.43} parent=35 // pred_check_branch
        %289 = sbr.rel (%p287) target = $region40
      $region39: #{bottleneck_forward.43} parent=35 // pred_region
        %s290 = smul.u32 2, %s15
      $region40: #{bottleneck_forward.43} parent=35 // pred_fallthru
        _
    $region36: #{bottleneck_forward.43} parent=5 // pred_fallthru
      _
    %p291 = scmp.le.s32.totalorder 2, %s10
    // Predicated region
    $region41: #{bottleneck_forward.43} parent=5 // pred_check
      %p292 = pneg %p291
    $region42: #{bottleneck_forward.43} parent=5 // pred_check_branch
      %294 = sbr.rel (%p292) target = $region44
    $region43: #{bottleneck_forward.43} parent=5 // pred_region
      %s295 = ssub.s32 %s10, 2
      // Predicated region
      $region45: #{bottleneck_forward.43} parent=43 // pred_check
        %p296 = pneg %p128
      $region46: #{bottleneck_forward.43} parent=43 // pred_check_branch
        %298 = sbr.rel (%p296) target = $region48
      $region47: #{bottleneck_forward.43} parent=43 // pred_region
        %s299 = smul.u32 2, %s16
        %p300 = scmp.lt.s32.totalorder %s299, 3
        %s301 = scalar_select %p300, %s299, 3
        %s302 = smul.addr %s301, 4
        %s303 = scalar_lea.vmem %s4, %s302
      $region48: #{bottleneck_forward.43} parent=43 // pred_fallthru
        _
    $region44: #{bottleneck_forward.43} parent=5 // pred_fallthru
      _
  $region6: #{bottleneck_forward.43} parent=0 // loop_footer
    %s14 = sadd.s32 1, %s10
  $region7: #{bottleneck_forward.43} parent=0 // loop_footer_branch
    %9 = sbr.rel target = $region3
  $region8: #{bottleneck_forward.43} parent=0 // loop_exit
    _

// kernel: bottleneck_forward.45
$region0: #{bottleneck_forward.45}
  #allocation0 [shape = 'u32[]', space=smem, size = 0x4, offset = 0x4, fixed_abs, tag = 'smem constant byte address 0x4 - core index']
  #allocation1 [shape = 'u32[144,128]{1,0:T(1,128)}', space=vmem, size = 0x12000, scoped, tag = 'internal scratch']
  %s0 = inlined_call_operand.vmem [shape: f32[8,96], index: 0, kind: input, shape index: {}]
  %s1 = inlined_call_operand.vmem [shape: bf16[8,8], index: 1, kind: input, shape index: {}]
  %s2 = inlined_call_operand.vmem [shape: f32[8,1], index: 2, kind: input, shape index: {}]
  %s3 = inlined_call_operand.vmem [shape: f32[8,1], index: 3, kind: input, shape index: {}]
  %s4 = inlined_call_operand.vmem [shape: f32[8,96], index: 4, kind: output, shape index: {}]
  %s5 = sld [smem:[#allocation0]]
  $region26: #{bottleneck_forward.45} parent=0
    _
  %s7 = ssub.s32 1, %s5
  %s8 = scalar_select 0, %s7, %s5
  // Predicated region
  $region2: #{bottleneck_forward.45} parent=0 // pred_check
    _
  $region3: #{bottleneck_forward.45} parent=0 // pred_check_branch
    %10 = sbr.rel (0) target = $region5
  $region4: #{bottleneck_forward.45} parent=0 // pred_region
    _
  $region5: #{bottleneck_forward.45} parent=0 // pred_fallthru
    _
  // Predicated region
  $region6: #{bottleneck_forward.45} parent=0 // pred_check
    _
  $region7: #{bottleneck_forward.45} parent=0 // pred_check_branch
    %12 = sbr.rel (0) target = $region9
  $region8: #{bottleneck_forward.45} parent=0 // pred_region
    _
  $region9: #{bottleneck_forward.45} parent=0 // pred_fallthru
    _
  // Predicated region
  $region10: #{bottleneck_forward.45} parent=0 // pred_check
    _
  $region11: #{bottleneck_forward.45} parent=0 // pred_check_branch
    %14 = sbr.rel (0) target = $region13
  $region12: #{bottleneck_forward.45} parent=0 // pred_region
    _
  $region13: #{bottleneck_forward.45} parent=0 // pred_fallthru
    _
  // Predicated region
  $region14: #{bottleneck_forward.45} parent=0 // pred_check
    _
  $region15: #{bottleneck_forward.45} parent=0 // pred_check_branch
    %16 = sbr.rel (0) target = $region17
  $region16: #{bottleneck_forward.45} parent=0 // pred_region
    _
  $region17: #{bottleneck_forward.45} parent=0 // pred_fallthru
    _
  %v18 = vld [vmem:[%s0] sm:$0xff]
  %v19 = vld [vmem:[%s1] sm:$0xf]
  %v20 = vpack.c.bf16 %v18, %v18
  %vm21 = vcmask 64512
  %v23 = vsel %vm21, %v19, 0
  %vm25 = vcmask 1043456
  %v27 = vsel %vm25, %v20, 0
  %29 = vmatprep.subr.bf16.mxu0 0
  %30 = vmatpush1.bf16.msra.mxu0 %v27
  %31 = vmatprep.subr.bf16.mxu0 0
  %32 = vmatpush1.bf16.msra.mxu0 0
  %33 = vmatprep.subr.bf16.mxu0 0
  %34 = vmatpush1.bf16.msra.mxu0 0
  %35 = vmatprep.subr.bf16.mxu0 0
  %36 = vmatpush1.bf16.msra.mxu0 0
  %37 = vmatprep.subr.bf16.mxu0 0
  %38 = vmatpush1.bf16.msra.mxu0 0
  %39 = vmatprep.subr.bf16.mxu0 0
  %40 = vmatpush1.bf16.msra.mxu0 0
  %41 = vmatprep.subr.bf16.mxu0 0
  %42 = vmatpush1.bf16.msra.mxu0 0
  %43 = vmatprep.subr.bf16.mxu0 0
  %44 = vmatpush1.bf16.msra.mxu0 0
  %45 = vmatprep.subr.bf16.mxu0 0
  %46 = vmatpush1.bf16.msra.mxu0 0
  %47 = vmatprep.subr.bf16.mxu0 0
  %48 = vmatpush1.bf16.msra.mxu0 0
  %49 = vmatprep.subr.bf16.mxu0 0
  %50 = vmatpush1.bf16.msra.mxu0 0
  %51 = vmatprep.subr.bf16.mxu0 0
  %52 = vmatpush1.bf16.msra.mxu0 0
  %53 = vmatprep.subr.bf16.mxu0 0
  %54 = vmatpush1.bf16.msra.mxu0 0
  %55 = vmatprep.subr.bf16.mxu0 0
  %56 = vmatpush1.bf16.msra.mxu0 0
  %57 = vmatprep.subr.bf16.mxu0 0
  %58 = vmatpush1.bf16.msra.mxu0 0
  %59 = vmatprep.subr.bf16.mxu0 0
  %60 = vmatpush1.bf16.msra.mxu0 0
  %61 = vmatprep.mubr.bf16.mxu0 0
  %62 = vmatmul.mubr.bf16.gmra.mrb[0].mxu0 %v23
  %v63 = vpop.f32.mrb[0].mxu0
  %v64 = vadd.f32 0.0, %v63
  %v65 = vpop.f32.mrb[0].mxu0
  %v66 = vpop.f32.mrb[0].mxu0
  %v67 = vpop.f32.mrb[0].mxu0
  %68 = vdwg.mxu0
  %v69 = vld [vmem:[%s2] sm:$0xff]
  %71 = vset.pattern.permute.xlu0 0
  %72 = vperm.xlu0 %71, %v69
  %v73 = vpop.permute.xlu0 %72
  %v75 = vmul.f32 %v64, %v73
  %v76 = vld [vmem:[%s3] sm:$0xff]
  %78 = vset.pattern.permute.xlu0 0
  %79 = vperm.xlu0 %78, %v76
  %v80 = vpop.permute.xlu0 %79
  %v82 = vadd.f32 %v75, %v80
  %v83 = vmax.f32 %v82, 0.0
  %vm84 = vcmask 785408
  %85 = vst.msk [vmem:[%s4] sm:$0xff] %vm84, %v83
  // Predicated region
  $region18: #{bottleneck_forward.45} parent=0 // pred_check
    _
  $region19: #{bottleneck_forward.45} parent=0 // pred_check_branch
    %87 = sbr.rel (0) target = $region21
  $region20: #{bottleneck_forward.45} parent=0 // pred_region
    _
  $region21: #{bottleneck_forward.45} parent=0 // pred_fallthru
    _
  // Predicated region
  $region22: #{bottleneck_forward.45} parent=0 // pred_check
    _
  $region23: #{bottleneck_forward.45} parent=0 // pred_check_branch
    %89 = sbr.rel (0) target = $region25
  $region24: #{bottleneck_forward.45} parent=0 // pred_region
    _
  $region25: #{bottleneck_forward.45} parent=0 // pred_fallthru
    _

// kernel: bottleneck_forward.47
$region0: #{bottleneck_forward.47}
  #allocation0 [shape = 'u32[]', space=smem, size = 0x4, offset = 0x4, fixed_abs, tag = 'smem constant byte address 0x4 - core index']
  #allocation1 [shape = 'u32[144,128]{1,0:T(1,128)}', space=vmem, size = 0x12000, scoped, tag = 'internal scratch']
  %s0 = inlined_call_operand.vmem [shape: f32[8,512], index: 0, kind: input, shape index: {}]
  %s1 = inlined_call_operand.vmem [shape: f32[8,512], index: 1, kind: input, shape index: {}]
  %s2 = inlined_call_operand.vmem [shape: f32[8,1], index: 2, kind: input, shape index: {}]
  %s3 = inlined_call_operand.vmem [shape: f32[8,1], index: 3, kind: input, shape index: {}]
  %s4 = inlined_call_operand.vmem [shape: f32[8,512], index: 4, kind: input, shape index: {}]
  %s5 = inlined_call_operand.vmem [shape: f32[8,512], index: 5, kind: output, shape index: {}]
  %s6 = sld [smem:[#allocation0]]
  $region53: #{bottleneck_forward.47} parent=0
    _
  %s8 = ssub.s32 1, %s6
  %s9 = scalar_select 0, %s8, %s6
  loop: start=0, step=1, limit=4
  $region2: #{bottleneck_forward.47} parent=0 // loop_pre_header
    _
  $region3: #{bottleneck_forward.47} parent=0 // loop_header
    %s11 = sphi 0, %s15
    %p12 = scmp.ge.s32.totalorder %s11, 4
    %s21 = sphi 0, %s23
    %s24 = sphi 0, %s21
    %s25 = sphi 0, %s24
    %s41 = sphi 0, %s25
    %s47 = sphi 0, %s49
    %s50 = sphi 0, %s47
    %s51 = sphi 0, %s50
    %s67 = sphi 0, %s51
    %s71 = sphi 0, %s71
    %s73 = sphi 0, %s71
    %s74 = sphi 0, %s73
    %s88 = sphi 0, %s74
    %s92 = sphi 0, %s92
    %s94 = sphi 0, %s92
    %s95 = sphi 0, %s94
    %s109 = sphi 0, %s95
    %s115 = sphi 0, %s117
    %s118 = sphi 0, %s115
    %s119 = sphi 0, %s118
    %s135 = sphi 0, %s119
    %s141 = sphi 0, %s143
    %s144 = sphi 0, %s141
    %s145 = sphi 0, %s144
    %s161 = sphi 0, %s145
  $region4: #{bottleneck_forward.47} parent=0 // loop_header_branch
    %14 = sbr.rel (%p12) target = $region8
  $region5: #{bottleneck_forward.47} parent=0 // loop_body
    %s16 = ssub.s32 %s11, 1
    %s17 = ssub.s32 %s11, 2
    %s18 = sadd.s32 %s11, 1
    %s19 = ssub.s32 %s11, %s18
    %p20 = scmp.eq.s32.totalorder %s19, 0
    %s22 = sadd.s32 %s21, 1
    %s23 = scalar_select %p20, %s21, %s22
    %p26 = pneg %p20
    %p27 = scmp.eq.s32.totalorder %s11, 1
    %p28 = por %p26, %p27
    %p29 = scmp.ne.s32.totalorder %s21, %s24
    %p30 = scmp.eq.s32.totalorder %s11, 0
    %p31 = por %p29, %p30
    %p32 = scmp.ne.s32.totalorder %s21, %s24
    %p33 = scmp.eq.s32.totalorder %s16, 1
    %p34 = por %p32, %p33
    %p35 = scmp.ne.s32.totalorder %s24, %s25
    %p36 = scmp.eq.s32.totalorder %s16, 0
    %p37 = por %p35, %p36
    %p38 = scmp.ne.s32.totalorder %s24, %s25
    %p39 = scmp.eq.s32.totalorder %s17, 1
    %p40 = por %p38, %p39
    %p42 = scmp.ne.s32.totalorder %s25, %s41
    %p43 = scmp.eq.s32.totalorder %s17, 0
    %p44 = por %p42, %p43
    %s45 = ssub.s32 %s11, %s18
    %p46 = scmp.eq.s32.totalorder %s45, 0
    %s48 = sadd.s32 %s47, 1
    %s49 = scalar_select %p46, %s47, %s48
    %p52 = pneg %p46
    %p53 = scmp.eq.s32.totalorder %s11, 1
    %p54 = por %p52, %p53
    %p55 = scmp.ne.s32.totalorder %s47, %s50
    %p56 = scmp.eq.s32.totalorder %s11, 0
    %p57 = por %p55, %p56
    %p58 = scmp.ne.s32.totalorder %s47, %s50
    %p59 = scmp.eq.s32.totalorder %s16, 1
    %p60 = por %p58, %p59
    %p61 = scmp.ne.s32.totalorder %s50, %s51
    %p62 = scmp.eq.s32.totalorder %s16, 0
    %p63 = por %p61, %p62
    %p64 = scmp.ne.s32.totalorder %s50, %s51
    %p65 = scmp.eq.s32.totalorder %s17, 1
    %p66 = por %p64, %p65
    %p68 = scmp.ne.s32.totalorder %s51, %s67
    %p69 = scmp.eq.s32.totalorder %s17, 0
    %p70 = por %p68, %p69
    %s72 = sadd.s32 %s71, 1
    %p75 = scmp.eq.s32.totalorder %s11, 1
    %p76 = scmp.ne.s32.totalorder %s71, %s73
    %p77 = scmp.eq.s32.totalorder %s11, 0
    %p78 = por %p76, %p77
    %p79 = scmp.ne.s32.totalorder %s71, %s73
    %p80 = scmp.eq.s32.totalorder %s16, 1
    %p81 = por %p79, %p80
    %p82 = scmp.ne.s32.totalorder %s73, %s74
    %p83 = scmp.eq.s32.totalorder %s16, 0
    %p84 = por %p82, %p83
    %p85 = scmp.ne.s32.totalorder %s73, %s74
    %p86 = scmp.eq.s32.totalorder %s17, 1
    %p87 = por %p85, %p86
    %p89 = scmp.ne.s32.totalorder %s74, %s88
    %p90 = scmp.eq.s32.totalorder %s17, 0
    %p91 = por %p89, %p90
    %s93 = sadd.s32 %s92, 1
    %p96 = scmp.eq.s32.totalorder %s11, 1
    %p97 = scmp.ne.s32.totalorder %s92, %s94
    %p98 = scmp.eq.s32.totalorder %s11, 0
    %p99 = por %p97, %p98
    %p100 = scmp.ne.s32.totalorder %s92, %s94
    %p101 = scmp.eq.s32.totalorder %s16, 1
    %p102 = por %p100, %p101
    %p103 = scmp.ne.s32.totalorder %s94, %s95
    %p104 = scmp.eq.s32.totalorder %s16, 0
    %p105 = por %p103, %p104
    %p106 = scmp.ne.s32.totalorder %s94, %s95
    %p107 = scmp.eq.s32.totalorder %s17, 1
    %p108 = por %p106, %p107
    %p110 = scmp.ne.s32.totalorder %s95, %s109
    %p111 = scmp.eq.s32.totalorder %s17, 0
    %p112 = por %p110, %p111
    %s113 = ssub.s32 %s11, %s18
    %p114 = scmp.eq.s32.totalorder %s113, 0
    %s116 = sadd.s32 %s115, 1
    %s117 = scalar_select %p114, %s115, %s116
    %p120 = pneg %p114
    %p121 = scmp.eq.s32.totalorder %s11, 1
    %p122 = por %p120, %p121
    %p123 = scmp.ne.s32.totalorder %s115, %s118
    %p124 = scmp.eq.s32.totalorder %s11, 0
    %p125 = por %p123, %p124
    %p126 = scmp.ne.s32.totalorder %s115, %s118
    %p127 = scmp.eq.s32.totalorder %s16, 1
    %p128 = por %p126, %p127
    %p129 = scmp.ne.s32.totalorder %s118, %s119
    %p130 = scmp.eq.s32.totalorder %s16, 0
    %p131 = por %p129, %p130
    %p132 = scmp.ne.s32.totalorder %s118, %s119
    %p133 = scmp.eq.s32.totalorder %s17, 1
    %p134 = por %p132, %p133
    %p136 = scmp.ne.s32.totalorder %s119, %s135
    %p137 = scmp.eq.s32.totalorder %s17, 0
    %p138 = por %p136, %p137
    %s139 = ssub.s32 %s11, %s18
    %p140 = scmp.eq.s32.totalorder %s139, 0
    %s142 = sadd.s32 %s141, 1
    %s143 = scalar_select %p140, %s141, %s142
    %p146 = pneg %p140
    %p147 = scmp.eq.s32.totalorder %s11, 1
    %p148 = por %p146, %p147
    %p149 = scmp.ne.s32.totalorder %s141, %s144
    %p150 = scmp.eq.s32.totalorder %s11, 0
    %p151 = por %p149, %p150
    %p152 = scmp.ne.s32.totalorder %s141, %s144
    %p153 = scmp.eq.s32.totalorder %s16, 1
    %p154 = por %p152, %p153
    %p155 = scmp.ne.s32.totalorder %s144, %s145
    %p156 = scmp.eq.s32.totalorder %s16, 0
    %p157 = por %p155, %p156
    %p158 = scmp.ne.s32.totalorder %s144, %s145
    %p159 = scmp.eq.s32.totalorder %s17, 1
    %p160 = por %p158, %p159
    %p162 = scmp.ne.s32.totalorder %s145, %s161
    %p163 = scmp.eq.s32.totalorder %s17, 0
    %p164 = por %p162, %p163
    %p165 = scmp.le.s32.totalorder 1, %s11
    %p166 = scmp.lt.s32.totalorder %s11, 3
    %p167 = pnand %p165, %p166
    %p168 = pneg %p167
    // Predicated region
    $region9: #{bottleneck_forward.47} parent=5 // pred_check
      _
    $region10: #{bottleneck_forward.47} parent=5 // pred_check_branch
      %170 = sbr.rel (%p167) target = $region12
    $region11: #{bottleneck_forward.47} parent=5 // pred_region
      %s171 = ssub.s32 %s11, 1
      // Predicated region
      $region13: #{bottleneck_forward.47} parent=11 // pred_check
        %p172 = pneg %p84
      $region14: #{bottleneck_forward.47} parent=11 // pred_check_branch
        %174 = sbr.rel (%p172) target = $region16
      $region15: #{bottleneck_forward.47} parent=11 // pred_region
        _
      $region16: #{bottleneck_forward.47} parent=11 // pred_fallthru
        _
      // Predicated region
      $region17: #{bottleneck_forward.47} parent=11 // pred_check
        %p175 = pneg %p105
      $region18: #{bottleneck_forward.47} parent=11 // pred_check_branch
        %177 = sbr.rel (%p175) target = $region20
      $region19: #{bottleneck_forward.47} parent=11 // pred_region
        _
      $region20: #{bottleneck_forward.47} parent=11 // pred_fallthru
        _
    $region12: #{bottleneck_forward.47} parent=5 // pred_fallthru
      _
    %p178 = scmp.lt.s32.totalorder %s11, 2
    // Predicated region
    $region21: #{bottleneck_forward.47} parent=5 // pred_check
      %p179 = pneg %p178
    $region22: #{bottleneck_forward.47} parent=5 // pred_check_branch
      %181 = sbr.rel (%p179) target = $region24
    $region23: #{bottleneck_forward.47} parent=5 // pred_region
      // Predicated region
      $region25: #{bottleneck_forward.47} parent=23 // pred_check
        %p182 = pneg %p31
      $region26: #{bottleneck_forward.47} parent=23 // pred_check_branch
        %184 = sbr.rel (%p182) target = $region28
      $region27: #{bottleneck_forward.47} parent=23 // pred_region
        %s185 = smul.u32 2, %s11
        %p186 = scmp.lt.s32.totalorder %s185, 3
        %s187 = scalar_select %p186, %s185, 3
        %s188 = smul.addr %s187, 8
        %s189 = scalar_lea.vmem %s0, %s188
        %s190 = smul.u32 2, %s11
      $region28: #{bottleneck_forward.47} parent=23 // pred_fallthru
        _
      // Predicated region
      $region29: #{bottleneck_forward.47} parent=23 // pred_check
        %p191 = pneg %p57
      $region30: #{bottleneck_forward.47} parent=23 // pred_check_branch
        %193 = sbr.rel (%p191) target = $region32
      $region31: #{bottleneck_forward.47} parent=23 // pred_region
        %s194 = smul.u32 2, %s11
        %p195 = scmp.lt.s32.totalorder %s194, 3
        %s196 = scalar_select %p195, %s194, 3
        %s197 = smul.addr %s196, 8
        %s198 = scalar_lea.vmem %s1, %s197
        %s199 = smul.u32 2, %s11
      $region32: #{bottleneck_forward.47} parent=23 // pred_fallthru
        _
      // Predicated region
      $region33: #{bottleneck_forward.47} parent=23 // pred_check
        %p200 = pneg %p125
      $region34: #{bottleneck_forward.47} parent=23 // pred_check_branch
        %202 = sbr.rel (%p200) target = $region36
      $region35: #{bottleneck_forward.47} parent=23 // pred_region
        %s203 = smul.u32 2, %s11
        %p204 = scmp.lt.s32.totalorder %s203, 3
        %s205 = scalar_select %p204, %s203, 3
        %s206 = smul.addr %s205, 8
        %s207 = scalar_lea.vmem %s4, %s206
        %s208 = smul.u32 2, %s11
      $region36: #{bottleneck_forward.47} parent=23 // pred_fallthru
        _
    $region24: #{bottleneck_forward.47} parent=5 // pred_fallthru
      _
    %p209 = scmp.le.s32.totalorder 1, %s11
    %p210 = scmp.lt.s32.totalorder %s11, 3
    %p211 = pnand %p209, %p210
    %p212 = pneg %p211
    // Predicated region
    $region37: #{bottleneck_forward.47} parent=5 // pred_check
      _
    $region38: #{bottleneck_forward.47} parent=5 // pred_check_branch
      %214 = sbr.rel (%p211) target = $region40
    $region39: #{bottleneck_forward.47} parent=5 // pred_region
      %s215 = ssub.s32 %s11, 1
      %s216 = smul.u32 2, %s16
      %p217 = scmp.lt.s32.totalorder %s216, 3
      %s218 = scalar_select %p217, %s216, 3
      %s219 = smul.addr %s218, 8
      %s220 = scalar_lea.vmem %s0, %s219
      %p221 = pneg %p37
      %p222 = pneg %p34
      %s223 = smul.u32 2, %s16
      %p224 = scmp.lt.s32.totalorder %s223, 3
      %s225 = scalar_select %p224, %s223, 3
      %s226 = smul.addr %s225, 8
      %s227 = scalar_lea.vmem %s1, %s226
      %p228 = pneg %p63
      %p229 = pneg %p60
      %p230 = pneg %p84
      %p231 = pneg %p81
      %p232 = pneg %p105
      %p233 = pneg %p102
      %s234 = smul.u32 2, %s16
      %p235 = scmp.lt.s32.totalorder %s234, 3
      %s236 = scalar_select %p235, %s234, 3
      %s237 = smul.addr %s236, 8
      %s238 = scalar_lea.vmem %s4, %s237
      %p239 = pneg %p131
      %p240 = pneg %p128
      %p241 = pneg %p157
      %p242 = pneg %p154
      %s243 = smul.u32 2, %s16
      %p244 = scmp.lt.s32.totalorder %s243, 3
      %s245 = scalar_select %p244, %s243, 3
      %s246 = smul.addr %s245, 8
      %s247 = scalar_lea.vmem %s5, %s246
      %s248 = smul.u32 2, %s16
      %p249 = scmp.lt.s32.totalorder %s248, 3
      %s250 = scalar_select %p249, %s248, 3
      %s251 = smul.addr %s250, 8
      %s252 = scalar_lea.vmem %s0, %s251
      %s253 = smul.u32 2, %s16
      %s254 = smul.u32 2, %s16
      %p255 = scmp.lt.s32.totalorder %s254, 3
      %s256 = scalar_select %p255, %s254, 3
      %s257 = smul.addr %s256, 8
      %s258 = scalar_lea.vmem %s1, %s257
      %s259 = smul.u32 2, %s16
      %s260 = smul.u32 2, %s16
      %p261 = scmp.lt.s32.totalorder %s260, 3
      %s262 = scalar_select %p261, %s260, 3
      %s263 = smul.addr %s262, 8
      %s264 = scalar_lea.vmem %s4, %s263
      %s265 = smul.u32 2, %s16
      %s266 = smul.u32 2, %s16
      %p267 = scmp.lt.s32.totalorder %s266, 3
      %s268 = scalar_select %p267, %s266, 3
      %s269 = smul.addr %s268, 8
      %s270 = scalar_lea.vmem %s5, %s269
      %s271 = smul.u32 2, %s16
      %v272 = vld [vmem:[%s252] sm:$0xff]
      %v273 = vld [vmem:[%s252 + $0x8] sm:$0xff]
      %v274 = vld [vmem:[%s258] sm:$0xff]
      %v275 = vld [vmem:[%s258 + $0x8] sm:$0xff]
      %v276 = vadd.f32 %v272, %v274
      %v277 = vadd.f32 %v273, %v275
      %v278 = vld [vmem:[%s2] sm:$0xff]
      %280 = vset.pattern.permute.xlu0 0
      %281 = vperm.xlu0 %280, %v278
      %v282 = vpop.permute.xlu0 %281
      %v284 = vmul.f32 %v276, %v282
      %v285 = vmul.f32 %v277, %v282
      %v286 = vld [vmem:[%s3] sm:$0xff]
      %288 = vset.pattern.permute.xlu0 0
      %289 = vperm.xlu0 %288, %v286
      %v290 = vpop.permute.xlu0 %289
      %v292 = vadd.f32 %v284, %v290
      %v293 = vadd.f32 %v285, %v290
      %v294 = vmax.f32 %v292, 0.0
      %v295 = vmax.f32 %v293, 0.0
      %v296 = vld [vmem:[%s264] sm:$0xff]
      %v297 = vld [vmem:[%s264 + $0x8] sm:$0xff]
      %v298 = vadd.f32 %v294, %v296
      %v299 = vadd.f32 %v295, %v297
      %300 = vst [vmem:[%s270] sm:$0xff] %v298
      %301 = vst [vmem:[%s270 + $0x8] sm:$0xff] %v299
      %s302 = smul.u32 2, %s16
      %p303 = scmp.lt.s32.totalorder %s302, 3
      %s304 = scalar_select %p303, %s302, 3
      %s305 = smul.addr %s304, 8
      %s306 = scalar_lea.vmem %s5, %s305
      // Predicated region
      $region41: #{bottleneck_forward.47} parent=39 // pred_check
        %p307 = pneg %p154
      $region42: #{bottleneck_forward.47} parent=39 // pred_check_branch
        %309 = sbr.rel (%p307) target = $region44
      $region43: #{bottleneck_forward.47} parent=39 // pred_region
        %s310 = smul.u32 2, %s16
      $region44: #{bottleneck_forward.47} parent=39 // pred_fallthru
        _
    $region40: #{bottleneck_forward.47} parent=5 // pred_fallthru
      _
    %p311 = scmp.le.s32.totalorder 2, %s11
    // Predicated region
    $region45: #{bottleneck_forward.47} parent=5 // pred_check
      %p312 = pneg %p311
    $region46: #{bottleneck_forward.47} parent=5 // pred_check_branch
      %314 = sbr.rel (%p312) target = $region48
    $region47: #{bottleneck_forward.47} parent=5 // pred_region
      %s315 = ssub.s32 %s11, 2
      // Predicated region
      $region49: #{bottleneck_forward.47} parent=47 // pred_check
        %p316 = pneg %p160
      $region50: #{bottleneck_forward.47} parent=47 // pred_check_branch
        %318 = sbr.rel (%p316) target = $region52
      $region51: #{bottleneck_forward.47} parent=47 // pred_region
        %s319 = smul.u32 2, %s17
        %p320 = scmp.lt.s32.totalorder %s319, 3
        %s321 = scalar_select %p320, %s319, 3
        %s322 = smul.addr %s321, 8
        %s323 = scalar_lea.vmem %s5, %s322
      $region52: #{bottleneck_forward.47} parent=47 // pred_fallthru
        _
    $region48: #{bottleneck_forward.47} parent=5 // pred_fallthru
      _
  $region6: #{bottleneck_forward.47} parent=0 // loop_footer
    %s15 = sadd.s32 1, %s11
  $region7: #{bottleneck_forward.47} parent=0 // loop_footer_branch
    %10 = sbr.rel target = $region3
  $region8: #{bottleneck_forward.47} parent=0 // loop_exit
    _

// kernel: bottleneck_forward.42
$region0: #{bottleneck_forward.42}
  #allocation0 [shape = 'u32[]', space=smem, size = 0x4, offset = 0x4, fixed_abs, tag = 'smem constant byte address 0x4 - core index']
  #allocation1 [shape = 'u32[144,128]{1,0:T(1,128)}', space=vmem, size = 0x12000, scoped, tag = 'internal scratch']
  %s0 = inlined_call_operand.vmem [shape: bf16[432,512], index: 0, kind: input, shape index: {}]
  %s1 = inlined_call_operand.vmem [shape: bf16[16,432], index: 1, kind: input, shape index: {}]
  %s2 = inlined_call_operand.vmem [shape: f32[8,1], index: 2, kind: input, shape index: {}]
  %s3 = inlined_call_operand.vmem [shape: f32[8,1], index: 3, kind: input, shape index: {}]
  %s4 = inlined_call_operand.vmem [shape: f32[8,512], index: 4, kind: input, shape index: {}]
  %s5 = inlined_call_operand.vmem [shape: f32[8,512], index: 5, kind: output, shape index: {0}]
  %s6 = inlined_call_operand.vmem [shape: f32[8,512], index: 6, kind: output, shape index: {1}]
  %7 = xla_tuple %s5, %s6
  %s8 = sld [smem:[#allocation0]]
  $region99: #{bottleneck_forward.42} parent=0
    _
  %s10 = ssub.s32 1, %s8
  %s11 = scalar_select 0, %s10, %s8
  $region1: #{bottleneck_forward.42} parent=0
    #allocation2 [shape = 'u8[442368]{0}', space=vmem, size = 0x6c000, scoped, tag = 'input window, operand 0']
    loop: start=0, step=1, limit=4
    $region2: #{bottleneck_forward.42} parent=1 // loop_pre_header
      _
    $region3: #{bottleneck_forward.42} parent=1 // loop_header
      %s13 = sphi 0, %s17
      %p14 = scmp.ge.s32.totalorder %s13, 4
      %s23 = sphi 0, %s25
      %s26 = sphi 0, %s23
      %s27 = sphi 0, %s26
      %s43 = sphi 0, %s27
      %s47 = sphi 0, %s47
      %s49 = sphi 0, %s47
      %s50 = sphi 0, %s49
      %s64 = sphi 0, %s50
      %s68 = sphi 0, %s68
      %s70 = sphi 0, %s68
      %s71 = sphi 0, %s70
      %s85 = sphi 0, %s71
      %s89 = sphi 0, %s89
      %s91 = sphi 0, %s89
      %s92 = sphi 0, %s91
      %s106 = sphi 0, %s92
      %s112 = sphi 0, %s114
      %s115 = sphi 0, %s112
      %s116 = sphi 0, %s115
      %s132 = sphi 0, %s116
      %s138 = sphi 0, %s140
      %s141 = sphi 0, %s138
      %s142 = sphi 0, %s141
      %s158 = sphi 0, %s142
      %s164 = sphi 0, %s166
      %s167 = sphi 0, %s164
      %s168 = sphi 0, %s167
      %s184 = sphi 0, %s168
    $region4: #{bottleneck_forward.42} parent=1 // loop_header_branch
      %16 = sbr.rel (%p14) target = $region8
    $region5: #{bottleneck_forward.42} parent=1 // loop_body
      %s18 = ssub.s32 %s13, 1
      %s19 = ssub.s32 %s13, 2
      %s20 = sadd.s32 %s13, 1
      %s21 = ssub.s32 %s13, %s20
      %p22 = scmp.eq.s32.totalorder %s21, 0
      %s24 = sadd.s32 %s23, 1
      %s25 = scalar_select %p22, %s23, %s24
      %p28 = pneg %p22
      %p29 = scmp.eq.s32.totalorder %s13, 1
      %p30 = por %p28, %p29
      %p31 = scmp.ne.s32.totalorder %s23, %s26
      %p32 = scmp.eq.s32.totalorder %s13, 0
      %p33 = por %p31, %p32
      %p34 = scmp.ne.s32.totalorder %s23, %s26
      %p35 = scmp.eq.s32.totalorder %s18, 1
      %p36 = por %p34, %p35
      %p37 = scmp.ne.s32.totalorder %s26, %s27
      %p38 = scmp.eq.s32.totalorder %s18, 0
      %p39 = por %p37, %p38
      %p40 = scmp.ne.s32.totalorder %s26, %s27
      %p41 = scmp.eq.s32.totalorder %s19, 1
      %p42 = por %p40, %p41
      %p44 = scmp.ne.s32.totalorder %s27, %s43
      %p45 = scmp.eq.s32.totalorder %s19, 0
      %p46 = por %p44, %p45
      %s48 = sadd.s32 %s47, 1
      %p51 = scmp.eq.s32.totalorder %s13, 1
      %p52 = scmp.ne.s32.totalorder %s47, %s49
      %p53 = scmp.eq.s32.totalorder %s13, 0
      %p54 = por %p52, %p53
      %p55 = scmp.ne.s32.totalorder %s47, %s49
      %p56 = scmp.eq.s32.totalorder %s18, 1
      %p57 = por %p55, %p56
      %p58 = scmp.ne.s32.totalorder %s49, %s50
      %p59 = scmp.eq.s32.totalorder %s18, 0
      %p60 = por %p58, %p59
      %p61 = scmp.ne.s32.totalorder %s49, %s50
      %p62 = scmp.eq.s32.totalorder %s19, 1
      %p63 = por %p61, %p62
      %p65 = scmp.ne.s32.totalorder %s50, %s64
      %p66 = scmp.eq.s32.totalorder %s19, 0
      %p67 = por %p65, %p66
      %s69 = sadd.s32 %s68, 1
      %p72 = scmp.eq.s32.totalorder %s13, 1
      %p73 = scmp.ne.s32.totalorder %s68, %s70
      %p74 = scmp.eq.s32.totalorder %s13, 0
      %p75 = por %p73, %p74
      %p76 = scmp.ne.s32.totalorder %s68, %s70
      %p77 = scmp.eq.s32.totalorder %s18, 1
      %p78 = por %p76, %p77
      %p79 = scmp.ne.s32.totalorder %s70, %s71
      %p80 = scmp.eq.s32.totalorder %s18, 0
      %p81 = por %p79, %p80
      %p82 = scmp.ne.s32.totalorder %s70, %s71
      %p83 = scmp.eq.s32.totalorder %s19, 1
      %p84 = por %p82, %p83
      %p86 = scmp.ne.s32.totalorder %s71, %s85
      %p87 = scmp.eq.s32.totalorder %s19, 0
      %p88 = por %p86, %p87
      %s90 = sadd.s32 %s89, 1
      %p93 = scmp.eq.s32.totalorder %s13, 1
      %p94 = scmp.ne.s32.totalorder %s89, %s91
      %p95 = scmp.eq.s32.totalorder %s13, 0
      %p96 = por %p94, %p95
      %p97 = scmp.ne.s32.totalorder %s89, %s91
      %p98 = scmp.eq.s32.totalorder %s18, 1
      %p99 = por %p97, %p98
      %p100 = scmp.ne.s32.totalorder %s91, %s92
      %p101 = scmp.eq.s32.totalorder %s18, 0
      %p102 = por %p100, %p101
      %p103 = scmp.ne.s32.totalorder %s91, %s92
      %p104 = scmp.eq.s32.totalorder %s19, 1
      %p105 = por %p103, %p104
      %p107 = scmp.ne.s32.totalorder %s92, %s106
      %p108 = scmp.eq.s32.totalorder %s19, 0
      %p109 = por %p107, %p108
      %s110 = ssub.s32 %s13, %s20
      %p111 = scmp.eq.s32.totalorder %s110, 0
      %s113 = sadd.s32 %s112, 1
      %s114 = scalar_select %p111, %s112, %s113
      %p117 = pneg %p111
      %p118 = scmp.eq.s32.totalorder %s13, 1
      %p119 = por %p117, %p118
      %p120 = scmp.ne.s32.totalorder %s112, %s115
      %p121 = scmp.eq.s32.totalorder %s13, 0
      %p122 = por %p120, %p121
      %p123 = scmp.ne.s32.totalorder %s112, %s115
      %p124 = scmp.eq.s32.totalorder %s18, 1
      %p125 = por %p123, %p124
      %p126 = scmp.ne.s32.totalorder %s115, %s116
      %p127 = scmp.eq.s32.totalorder %s18, 0
      %p128 = por %p126, %p127
      %p129 = scmp.ne.s32.totalorder %s115, %s116
      %p130 = scmp.eq.s32.totalorder %s19, 1
      %p131 = por %p129, %p130
      %p133 = scmp.ne.s32.totalorder %s116, %s132
      %p134 = scmp.eq.s32.totalorder %s19, 0
      %p135 = por %p133, %p134
      %s136 = ssub.s32 %s13, %s20
      %p137 = scmp.eq.s32.totalorder %s136, 0
      %s139 = sadd.s32 %s138, 1
      %s140 = scalar_select %p137, %s138, %s139
      %p143 = pneg %p137
      %p144 = scmp.eq.s32.totalorder %s13, 1
      %p145 = por %p143, %p144
      %p146 = scmp.ne.s32.totalorder %s138, %s141
      %p147 = scmp.eq.s32.totalorder %s13, 0
      %p148 = por %p146, %p147
      %p149 = scmp.ne.s32.totalorder %s138, %s141
      %p150 = scmp.eq.s32.totalorder %s18, 1
      %p151 = por %p149, %p150
      %p152 = scmp.ne.s32.totalorder %s141, %s142
      %p153 = scmp.eq.s32.totalorder %s18, 0
      %p154 = por %p152, %p153
      %p155 = scmp.ne.s32.totalorder %s141, %s142
      %p156 = scmp.eq.s32.totalorder %s19, 1
      %p157 = por %p155, %p156
      %p159 = scmp.ne.s32.totalorder %s142, %s158
      %p160 = scmp.eq.s32.totalorder %s19, 0
      %p161 = por %p159, %p160
      %s162 = ssub.s32 %s13, %s20
      %p163 = scmp.eq.s32.totalorder %s162, 0
      %s165 = sadd.s32 %s164, 1
      %s166 = scalar_select %p163, %s164, %s165
      %p169 = pneg %p163
      %p170 = scmp.eq.s32.totalorder %s13, 1
      %p171 = por %p169, %p170
      %p172 = scmp.ne.s32.totalorder %s164, %s167
      %p173 = scmp.eq.s32.totalorder %s13, 0
      %p174 = por %p172, %p173
      %p175 = scmp.ne.s32.totalorder %s164, %s167
      %p176 = scmp.eq.s32.totalorder %s18, 1
      %p177 = por %p175, %p176
      %p178 = scmp.ne.s32.totalorder %s167, %s168
      %p179 = scmp.eq.s32.totalorder %s18, 0
      %p180 = por %p178, %p179
      %p181 = scmp.ne.s32.totalorder %s167, %s168
      %p182 = scmp.eq.s32.totalorder %s19, 1
      %p183 = por %p181, %p182
      %p185 = scmp.ne.s32.totalorder %s168, %s184
      %p186 = scmp.eq.s32.totalorder %s19, 0
      %p187 = por %p185, %p186
      %p188 = scmp.le.s32.totalorder 1, %s13
      %p189 = scmp.lt.s32.totalorder %s13, 3
      %p190 = pnand %p188, %p189
      %p191 = pneg %p190
      // Predicated region
      $region9: #{bottleneck_forward.42} parent=5 // pred_check
        _
      $region10: #{bottleneck_forward.42} parent=5 // pred_check_branch
        %193 = sbr.rel (%p190) target = $region12
      $region11: #{bottleneck_forward.42} parent=5 // pred_region
        %s194 = ssub.s32 %s13, 1
        // Predicated region
        $region13: #{bottleneck_forward.42} parent=11 // pred_check
          %p195 = pneg %p60
        $region14: #{bottleneck_forward.42} parent=11 // pred_check_branch
          %197 = sbr.rel (%p195) target = $region16
        $region15: #{bottleneck_forward.42} parent=11 // pred_region
          _
        $region16: #{bottleneck_forward.42} parent=11 // pred_fallthru
          _
        // Predicated region
        $region17: #{bottleneck_forward.42} parent=11 // pred_check
          %p198 = pneg %p81
        $region18: #{bottleneck_forward.42} parent=11 // pred_check_branch
          %200 = sbr.rel (%p198) target = $region20
        $region19: #{bottleneck_forward.42} parent=11 // pred_region
          _
        $region20: #{bottleneck_forward.42} parent=11 // pred_fallthru
          _
        // Predicated region
        $region21: #{bottleneck_forward.42} parent=11 // pred_check
          %p201 = pneg %p102
        $region22: #{bottleneck_forward.42} parent=11 // pred_check_branch
          %203 = sbr.rel (%p201) target = $region24
        $region23: #{bottleneck_forward.42} parent=11 // pred_region
          _
        $region24: #{bottleneck_forward.42} parent=11 // pred_fallthru
          _
      $region12: #{bottleneck_forward.42} parent=5 // pred_fallthru
        _
      %p204 = scmp.lt.s32.totalorder %s13, 2
      // Predicated region
      $region25: #{bottleneck_forward.42} parent=5 // pred_check
        %p205 = pneg %p204
      $region26: #{bottleneck_forward.42} parent=5 // pred_check_branch
        %207 = sbr.rel (%p205) target = $region28
      $region27: #{bottleneck_forward.42} parent=5 // pred_region
        // Predicated region
        $region29: #{bottleneck_forward.42} parent=27 // pred_check
          %p208 = pneg %p33
        $region30: #{bottleneck_forward.42} parent=27 // pred_check_branch
          %210 = sbr.rel (%p208) target = $region32
        $region31: #{bottleneck_forward.42} parent=27 // pred_region
          %s211 = sand.u32 %s23, 1
          %s212 = sand.u32 %s23, 1
          %s213 = smul.addr %s212, 432
          %s214 = scalar_lea.vmem [#allocation2], %s213
          %s215 = smul.u32 2, %s13
          %s216 = smul.addr %s215, 4
          %s217 = scalar_lea.vmem %s0, %s216
          // Predicated region
          $region33: #{bottleneck_forward.42} parent=31 // pred_check
            _
          $region34: #{bottleneck_forward.42} parent=31 // pred_check_branch
            %219 = sbr.rel (0) target = $region36
          $region35: #{bottleneck_forward.42} parent=31 // pred_region
            // Predicated region
            $region37: #{bottleneck_forward.42} parent=35 // pred_check
              _
            $region38: #{bottleneck_forward.42} parent=35 // pred_check_branch
              %221 = sbr.rel (0) target = $region40
            $region39: #{bottleneck_forward.42} parent=35 // pred_region
              // Predicated region
              $region52: #{bottleneck_forward.42} parent=39 // pred_check
                _
              $region53: #{bottleneck_forward.42} parent=39 // pred_check_branch
                %342 = sbr.rel (0) target = $region55
              $region54: #{bottleneck_forward.42} parent=39 // pred_region
                loop: start=0, step=1, limit=1
                $region56: #{bottleneck_forward.42} parent=54 // loop_pre_header
                  _
                $region57: #{bottleneck_forward.42} parent=54 // loop_header
                  %s344 = sphi 0, %s348
                  %p345 = scmp.ge.s32.totalorder %s344, 1
                  %s349 = sphi %s217, %s217
                  %s350 = sphi %s214, %s214
                $region58: #{bottleneck_forward.42} parent=54 // loop_header_branch
                  %347 = sbr.rel (%p345) target = $region62
                $region59: #{bottleneck_forward.42} parent=54 // loop_body
                  %v351 = vld [vmem:[%s349] sm:$0xff]
                  %352 = vst [vmem:[%s350] sm:$0xff] %v351
                  %v353 = vld [vmem:[%s349 + $0x10] sm:$0xff]
                  %354 = vst [vmem:[%s350 + $0x8] sm:$0xff] %v353
                  %v355 = vld [vmem:[%s349 + $0x20] sm:$0xff]
                  %356 = vst [vmem:[%s350 + $0x10] sm:$0xff] %v355
                  %v357 = vld [vmem:[%s349 + $0x30] sm:$0xff]
                  %358 = vst [vmem:[%s350 + $0x18] sm:$0xff] %v357
                  %v359 = vld [vmem:[%s349 + $0x40] sm:$0xff]
                  %360 = vst [vmem:[%s350 + $0x20] sm:$0xff] %v359
                  %v361 = vld [vmem:[%s349 + $0x50] sm:$0xff]
                  %362 = vst [vmem:[%s350 + $0x28] sm:$0xff] %v361
                  %v363 = vld [vmem:[%s349 + $0x60] sm:$0xff]
                  %364 = vst [vmem:[%s350 + $0x30] sm:$0xff] %v363
                  %v365 = vld [vmem:[%s349 + $0x70] sm:$0xff]
                  %366 = vst [vmem:[%s350 + $0x38] sm:$0xff] %v365
                  %v367 = vld [vmem:[%s349 + $0x80] sm:$0xff]
                  %368 = vst [vmem:[%s350 + $0x40] sm:$0xff] %v367
                  %v369 = vld [vmem:[%s349 + $0x90] sm:$0xff]
                  %370 = vst [vmem:[%s350 + $0x48] sm:$0xff] %v369
                  %v371 = vld [vmem:[%s349 + $0xa0] sm:$0xff]
                  %372 = vst [vmem:[%s350 + $0x50] sm:$0xff] %v371
                  %v373 = vld [vmem:[%s349 + $0xb0] sm:$0xff]
                  %374 = vst [vmem:[%s350 + $0x58] sm:$0xff] %v373
                  %v375 = vld [vmem:[%s349 + $0xc0] sm:$0xff]
                  %376 = vst [vmem:[%s350 + $0x60] sm:$0xff] %v375
                  %v377 = vld [vmem:[%s349 + $0xd0] sm:$0xff]
                  %378 = vst [vmem:[%s350 + $0x68] sm:$0xff] %v377
                  %v379 = vld [vmem:[%s349 + $0xe0] sm:$0xff]
                  %380 = vst [vmem:[%s350 + $0x70] sm:$0xff] %v379
                  %v381 = vld [vmem:[%s349 + $0xf0] sm:$0xff]
                  %382 = vst [vmem:[%s350 + $0x78] sm:$0xff] %v381
                  %v383 = vld [vmem:[%s349 + $0x100] sm:$0xff]
                  %384 = vst [vmem:[%s350 + $0x80] sm:$0xff] %v383
                  %v385 = vld [vmem:[%s349 + $0x110] sm:$0xff]
                  %386 = vst [vmem:[%s350 + $0x88] sm:$0xff] %v385
                  %v387 = vld [vmem:[%s349 + $0x120] sm:$0xff]
                  %388 = vst [vmem:[%s350 + $0x90] sm:$0xff] %v387
                  %v389 = vld [vmem:[%s349 + $0x130] sm:$0xff]
                  %390 = vst [vmem:[%s350 + $0x98] sm:$0xff] %v389
                  %v391 = vld [vmem:[%s349 + $0x140] sm:$0xff]
                  %392 = vst [vmem:[%s350 + $0xa0] sm:$0xff] %v391
                  %v393 = vld [vmem:[%s349 + $0x150] sm:$0xff]
                  %394 = vst [vmem:[%s350 + $0xa8] sm:$0xff] %v393
                  %v395 = vld [vmem:[%s349 + $0x160] sm:$0xff]
                  %396 = vst [vmem:[%s350 + $0xb0] sm:$0xff] %v395
                  %v397 = vld [vmem:[%s349 + $0x170] sm:$0xff]
                  %398 = vst [vmem:[%s350 + $0xb8] sm:$0xff] %v397
                  %v399 = vld [vmem:[%s349 + $0x180] sm:$0xff]
                  %400 = vst [vmem:[%s350 + $0xc0] sm:$0xff] %v399
                  %v401 = vld [vmem:[%s349 + $0x190] sm:$0xff]
                  %402 = vst [vmem:[%s350 + $0xc8] sm:$0xff] %v401
                  %v403 = vld [vmem:[%s349 + $0x1a0] sm:$0xff]
                  %404 = vst [vmem:[%s350 + $0xd0] sm:$0xff] %v403
                  %v405 = vld [vmem:[%s349 + $0x1b0] sm:$0xff]
                  %406 = vst [vmem:[%s350 + $0xd8] sm:$0xff] %v405
                  %v407 = vld [vmem:[%s349 + $0x1c0] sm:$0xff]
                  %408 = vst [vmem:[%s350 + $0xe0] sm:$0xff] %v407
                  %v409 = vld [vmem:[%s349 + $0x1d0] sm:$0xff]
                  %410 = vst [vmem:[%s350 + $0xe8] sm:$0xff] %v409
                  %v411 = vld [vmem:[%s349 + $0x1e0] sm:$0xff]
                  %412 = vst [vmem:[%s350 + $0xf0] sm:$0xff] %v411
                  %v413 = vld [vmem:[%s349 + $0x1f0] sm:$0xff]
                  %414 = vst [vmem:[%s350 + $0xf8] sm:$0xff] %v413
                  %v415 = vld [vmem:[%s349 + $0x200] sm:$0xff]
                  %416 = vst [vmem:[%s350 + $0x100] sm:$0xff] %v415
                  %v417 = vld [vmem:[%s349 + $0x210] sm:$0xff]
                  %418 = vst [vmem:[%s350 + $0x108] sm:$0xff] %v417
                  %v419 = vld [vmem:[%s349 + $0x220] sm:$0xff]
                  %420 = vst [vmem:[%s350 + $0x110] sm:$0xff] %v419
                  %v421 = vld [vmem:[%s349 + $0x230] sm:$0xff]
                  %422 = vst [vmem:[%s350 + $0x118] sm:$0xff] %v421
                  %v423 = vld [vmem:[%s349 + $0x240] sm:$0xff]
                  %424 = vst [vmem:[%s350 + $0x120] sm:$0xff] %v423
                  %v425 = vld [vmem:[%s349 + $0x250] sm:$0xff]
                  %426 = vst [vmem:[%s350 + $0x128] sm:$0xff] %v425
                  %v427 = vld [vmem:[%s349 + $0x260] sm:$0xff]
                  %428 = vst [vmem:[%s350 + $0x130] sm:$0xff] %v427
                  %v429 = vld [vmem:[%s349 + $0x270] sm:$0xff]
                  %430 = vst [vmem:[%s350 + $0x138] sm:$0xff] %v429
                  %v431 = vld [vmem:[%s349 + $0x280] sm:$0xff]
                  %432 = vst [vmem:[%s350 + $0x140] sm:$0xff] %v431
                  %v433 = vld [vmem:[%s349 + $0x290] sm:$0xff]
                  %434 = vst [vmem:[%s350 + $0x148] sm:$0xff] %v433
                  %v435 = vld [vmem:[%s349 + $0x2a0] sm:$0xff]
                  %436 = vst [vmem:[%s350 + $0x150] sm:$0xff] %v435
                  %v437 = vld [vmem:[%s349 + $0x2b0] sm:$0xff]
                  %438 = vst [vmem:[%s350 + $0x158] sm:$0xff] %v437
                  %v439 = vld [vmem:[%s349 + $0x2c0] sm:$0xff]
                  %440 = vst [vmem:[%s350 + $0x160] sm:$0xff] %v439
                  %v441 = vld [vmem:[%s349 + $0x2d0] sm:$0xff]
                  %442 = vst [vmem:[%s350 + $0x168] sm:$0xff] %v441
                  %v443 = vld [vmem:[%s349 + $0x2e0] sm:$0xff]
                  %444 = vst [vmem:[%s350 + $0x170] sm:$0xff] %v443
                  %v445 = vld [vmem:[%s349 + $0x2f0] sm:$0xff]
                  %446 = vst [vmem:[%s350 + $0x178] sm:$0xff] %v445
                  %v447 = vld [vmem:[%s349 + $0x300] sm:$0xff]
                  %448 = vst [vmem:[%s350 + $0x180] sm:$0xff] %v447
                  %v449 = vld [vmem:[%s349 + $0x310] sm:$0xff]
                  %450 = vst [vmem:[%s350 + $0x188] sm:$0xff] %v449
                  %v451 = vld [vmem:[%s349 + $0x320] sm:$0xff]
                  %452 = vst [vmem:[%s350 + $0x190] sm:$0xff] %v451
                  %v453 = vld [vmem:[%s349 + $0x330] sm:$0xff]
                  %454 = vst [vmem:[%s350 + $0x198] sm:$0xff] %v453
                  %v455 = vld [vmem:[%s349 + $0x340] sm:$0xff]
                  %456 = vst [vmem:[%s350 + $0x1a0] sm:$0xff] %v455
                  %v457 = vld [vmem:[%s349 + $0x350] sm:$0xff]
                  %458 = vst [vmem:[%s350 + $0x1a8] sm:$0xff] %v457
                $region60: #{bottleneck_forward.42} parent=54 // loop_footer
                  %s348 = sadd.s32 1, %s344
                $region61: #{bottleneck_forward.42} parent=54 // loop_footer_branch
                  %343 = sbr.rel target = $region57
                $region62: #{bottleneck_forward.42} parent=54 // loop_exit
                  _
              $region55: #{bottleneck_forward.42} parent=39 // pred_fallthru
                _
              // Predicated region
              $region63: #{bottleneck_forward.42} parent=39 // pred_check
                _
              $region64: #{bottleneck_forward.42} parent=39 // pred_check_branch
                %460 = sbr.rel target = $region66
              $region65: #{bottleneck_forward.42} parent=39 // pred_region
                _
              $region66: #{bottleneck_forward.42} parent=39 // pred_fallthru
                _
            $region40: #{bottleneck_forward.42} parent=35 // pred_fallthru
              _
            // Predicated region
            $region41: #{bottleneck_forward.42} parent=35 // pred_check
              _
            $region42: #{bottleneck_forward.42} parent=35 // pred_check_branch
              %223 = sbr.rel target = $region44
            $region43: #{bottleneck_forward.42} parent=35 // pred_region
              loop: start=0, step=1, limit=1
              $region45: #{bottleneck_forward.42} parent=43 // loop_pre_header
                _
              $region46: #{bottleneck_forward.42} parent=43 // loop_header
                %s226 = sphi 0, %s230
                %p227 = scmp.ge.s32.totalorder %s226, 1
                %s231 = sphi %s217, %s217
                %s232 = sphi %s214, %s214
              $region47: #{bottleneck_forward.42} parent=43 // loop_header_branch
                %229 = sbr.rel (%p227) target = $region51
              $region48: #{bottleneck_forward.42} parent=43 // loop_body
                %v233 = vld [vmem:[%s231] sm:$0xff]
                %234 = vst [vmem:[%s232] sm:$0xff] %v233
                %v235 = vld [vmem:[%s231 + $0x10] sm:$0xff]
                %236 = vst [vmem:[%s232 + $0x8] sm:$0xff] %v235
                %v237 = vld [vmem:[%s231 + $0x20] sm:$0xff]
                %238 = vst [vmem:[%s232 + $0x10] sm:$0xff] %v237
                %v239 = vld [vmem:[%s231 + $0x30] sm:$0xff]
                %240 = vst [vmem:[%s232 + $0x18] sm:$0xff] %v239
                %v241 = vld [vmem:[%s231 + $0x40] sm:$0xff]
                %242 = vst [vmem:[%s232 + $0x20] sm:$0xff] %v241
                %v243 = vld [vmem:[%s231 + $0x50] sm:$0xff]
                %244 = vst [vmem:[%s232 + $0x28] sm:$0xff] %v243
                %v245 = vld [vmem:[%s231 + $0x60] sm:$0xff]
                %246 = vst [vmem:[%s232 + $0x30] sm:$0xff] %v245
                %v247 = vld [vmem:[%s231 + $0x70] sm:$0xff]
                %248 = vst [vmem:[%s232 + $0x38] sm:$0xff] %v247
                %v249 = vld [vmem:[%s231 + $0x80] sm:$0xff]
                %250 = vst [vmem:[%s232 + $0x40] sm:$0xff] %v249
                %v251 = vld [vmem:[%s231 + $0x90] sm:$0xff]
                %252 = vst [vmem:[%s232 + $0x48] sm:$0xff] %v251
                %v253 = vld [vmem:[%s231 + $0xa0] sm:$0xff]
                %254 = vst [vmem:[%s232 + $0x50] sm:$0xff] %v253
                %v255 = vld [vmem:[%s231 + $0xb0] sm:$0xff]
                %256 = vst [vmem:[%s232 + $0x58] sm:$0xff] %v255
                %v257 = vld [vmem:[%s231 + $0xc0] sm:$0xff]
                %258 = vst [vmem:[%s232 + $0x60] sm:$0xff] %v257
                %v259 = vld [vmem:[%s231 + $0xd0] sm:$0xff]
                %260 = vst [vmem:[%s232 + $0x68] sm:$0xff] %v259
                %v261 = vld [vmem:[%s231 + $0xe0] sm:$0xff]
                %262 = vst [vmem:[%s232 + $0x70] sm:$0xff] %v261
                %v263 = vld [vmem:[%s231 + $0xf0] sm:$0xff]
                %264 = vst [vmem:[%s232 + $0x78] sm:$0xff] %v263
                %v265 = vld [vmem:[%s231 + $0x100] sm:$0xff]
                %266 = vst [vmem:[%s232 + $0x80] sm:$0xff] %v265
                %v267 = vld [vmem:[%s231 + $0x110] sm:$0xff]
                %268 = vst [vmem:[%s232 + $0x88] sm:$0xff] %v267
                %v269 = vld [vmem:[%s231 + $0x120] sm:$0xff]
                %270 = vst [vmem:[%s232 + $0x90] sm:$0xff] %v269
                %v271 = vld [vmem:[%s231 + $0x130] sm:$0xff]
                %272 = vst [vmem:[%s232 + $0x98] sm:$0xff] %v271
                %v273 = vld [vmem:[%s231 + $0x140] sm:$0xff]
                %274 = vst [vmem:[%s232 + $0xa0] sm:$0xff] %v273
                %v275 = vld [vmem:[%s231 + $0x150] sm:$0xff]
                %276 = vst [vmem:[%s232 + $0xa8] sm:$0xff] %v275
                %v277 = vld [vmem:[%s231 + $0x160] sm:$0xff]
                %278 = vst [vmem:[%s232 + $0xb0] sm:$0xff] %v277
                %v279 = vld [vmem:[%s231 + $0x170] sm:$0xff]
                %280 = vst [vmem:[%s232 + $0xb8] sm:$0xff] %v279
                %v281 = vld [vmem:[%s231 + $0x180] sm:$0xff]
                %282 = vst [vmem:[%s232 + $0xc0] sm:$0xff] %v281
                %v283 = vld [vmem:[%s231 + $0x190] sm:$0xff]
                %284 = vst [vmem:[%s232 + $0xc8] sm:$0xff] %v283
                %v285 = vld [vmem:[%s231 + $0x1a0] sm:$0xff]
                %286 = vst [vmem:[%s232 + $0xd0] sm:$0xff] %v285
                %v287 = vld [vmem:[%s231 + $0x1b0] sm:$0xff]
                %288 = vst [vmem:[%s232 + $0xd8] sm:$0xff] %v287
                %v289 = vld [vmem:[%s231 + $0x1c0] sm:$0xff]
                %290 = vst [vmem:[%s232 + $0xe0] sm:$0xff] %v289
                %v291 = vld [vmem:[%s231 + $0x1d0] sm:$0xff]
                %292 = vst [vmem:[%s232 + $0xe8] sm:$0xff] %v291
                %v293 = vld [vmem:[%s231 + $0x1e0] sm:$0xff]
                %294 = vst [vmem:[%s232 + $0xf0] sm:$0xff] %v293
                %v295 = vld [vmem:[%s231 + $0x1f0] sm:$0xff]
                %296 = vst [vmem:[%s232 + $0xf8] sm:$0xff] %v295
                %v297 = vld [vmem:[%s231 + $0x200] sm:$0xff]
                %298 = vst [vmem:[%s232 + $0x100] sm:$0xff] %v297
                %v299 = vld [vmem:[%s231 + $0x210] sm:$0xff]
                %300 = vst [vmem:[%s232 + $0x108] sm:$0xff] %v299
                %v301 = vld [vmem:[%s231 + $0x220] sm:$0xff]
                %302 = vst [vmem:[%s232 + $0x110] sm:$0xff] %v301
                %v303 = vld [vmem:[%s231 + $0x230] sm:$0xff]
                %304 = vst [vmem:[%s232 + $0x118] sm:$0xff] %v303
                %v305 = vld [vmem:[%s231 + $0x240] sm:$0xff]
                %306 = vst [vmem:[%s232 + $0x120] sm:$0xff] %v305
                %v307 = vld [vmem:[%s231 + $0x250] sm:$0xff]
                %308 = vst [vmem:[%s232 + $0x128] sm:$0xff] %v307
                %v309 = vld [vmem:[%s231 + $0x260] sm:$0xff]
                %310 = vst [vmem:[%s232 + $0x130] sm:$0xff] %v309
                %v311 = vld [vmem:[%s231 + $0x270] sm:$0xff]
                %312 = vst [vmem:[%s232 + $0x138] sm:$0xff] %v311
                %v313 = vld [vmem:[%s231 + $0x280] sm:$0xff]
                %314 = vst [vmem:[%s232 + $0x140] sm:$0xff] %v313
                %v315 = vld [vmem:[%s231 + $0x290] sm:$0xff]
                %316 = vst [vmem:[%s232 + $0x148] sm:$0xff] %v315
                %v317 = vld [vmem:[%s231 + $0x2a0] sm:$0xff]
                %318 = vst [vmem:[%s232 + $0x150] sm:$0xff] %v317
                %v319 = vld [vmem:[%s231 + $0x2b0] sm:$0xff]
                %320 = vst [vmem:[%s232 + $0x158] sm:$0xff] %v319
                %v321 = vld [vmem:[%s231 + $0x2c0] sm:$0xff]
                %322 = vst [vmem:[%s232 + $0x160] sm:$0xff] %v321
                %v323 = vld [vmem:[%s231 + $0x2d0] sm:$0xff]
                %324 = vst [vmem:[%s232 + $0x168] sm:$0xff] %v323
                %v325 = vld [vmem:[%s231 + $0x2e0] sm:$0xff]
                %326 = vst [vmem:[%s232 + $0x170] sm:$0xff] %v325
                %v327 = vld [vmem:[%s231 + $0x2f0] sm:$0xff]
                %328 = vst [vmem:[%s232 + $0x178] sm:$0xff] %v327
                %v329 = vld [vmem:[%s231 + $0x300] sm:$0xff]
                %330 = vst [vmem:[%s232 + $0x180] sm:$0xff] %v329
                %v331 = vld [vmem:[%s231 + $0x310] sm:$0xff]
                %332 = vst [vmem:[%s232 + $0x188] sm:$0xff] %v331
                %v333 = vld [vmem:[%s231 + $0x320] sm:$0xff]
                %334 = vst [vmem:[%s232 + $0x190] sm:$0xff] %v333
                %v335 = vld [vmem:[%s231 + $0x330] sm:$0xff]
                %336 = vst [vmem:[%s232 + $0x198] sm:$0xff] %v335
                %v337 = vld [vmem:[%s231 + $0x340] sm:$0xff]
                %338 = vst [vmem:[%s232 + $0x1a0] sm:$0xff] %v337
                %v339 = vld [vmem:[%s231 + $0x350] sm:$0xff]
                %340 = vst [vmem:[%s232 + $0x1a8] sm:$0xff] %v339
              $region49: #{bottleneck_forward.42} parent=43 // loop_footer
                %s230 = sadd.s32 1, %s226
              $region50: #{bottleneck_forward.42} parent=43 // loop_footer_branch
                %225 = sbr.rel target = $region46
              $region51: #{bottleneck_forward.42} parent=43 // loop_exit
                _
            $region44: #{bottleneck_forward.42} parent=35 // pred_fallthru
              _
          $region36: #{bottleneck_forward.42} parent=31 // pred_fallthru
            _
          %461 = vnop
        $region32: #{bottleneck_forward.42} parent=27 // pred_fallthru
          _
        // Predicated region
        $region67: #{bottleneck_forward.42} parent=27 // pred_check
          %p462 = pneg %p122
        $region68: #{bottleneck_forward.42} parent=27 // pred_check_branch
          %464 = sbr.rel (%p462) target = $region70
        $region69: #{bottleneck_forward.42} parent=27 // pred_region
          %s465 = smul.u32 2, %s13
          %p466 = scmp.lt.s32.totalorder %s465, 3
          %s467 = scalar_select %p466, %s465, 3
          %s468 = smul.addr %s467, 8
          %s469 = scalar_lea.vmem %s4, %s468
          %s470 = smul.u32 2, %s13
        $region70: #{bottleneck_forward.42} parent=27 // pred_fallthru
          _
      $region28: #{bottleneck_forward.42} parent=5 // pred_fallthru
        _
      %p471 = scmp.le.s32.totalorder 1, %s13
      %p472 = scmp.lt.s32.totalorder %s13, 3
      %p473 = pnand %p471, %p472
      %p474 = pneg %p473
      // Predicated region
      $region71: #{bottleneck_forward.42} parent=5 // pred_check
        _
      $region72: #{bottleneck_forward.42} parent=5 // pred_check_branch
        %476 = sbr.rel (%p473) target = $region74
      $region73: #{bottleneck_forward.42} parent=5 // pred_region
        %s477 = ssub.s32 %s13, 1
        %s478 = sand.u32 %s26, 1
        %s479 = sand.u32 %s26, 1
        %s480 = smul.addr %s479, 432
        %s481 = scalar_lea.vmem [#allocation2], %s480
        // Predicated region
        $region75: #{bottleneck_forward.42} parent=73 // pred_check
          %p482 = pneg %p39
        $region76: #{bottleneck_forward.42} parent=73 // pred_check_branch
          %484 = sbr.rel (%p482) target = $region78
        $region77: #{bottleneck_forward.42} parent=73 // pred_region
          _
        $region78: #{bottleneck_forward.42} parent=73 // pred_fallthru
          _
        %s485 = sand.u32 %s26, 1
        %s486 = sand.u32 %s26, 1
        %s487 = smul.addr %s486, 432
        %s488 = scalar_lea.vmem [#allocation2], %s487
        %p489 = pneg %p39
        %p490 = pneg %p36
        %p491 = pneg %p60
        %p492 = pneg %p57
        %p493 = pneg %p81
        %p494 = pneg %p78
        %p495 = pneg %p102
        %p496 = pneg %p99
        %s497 = smul.u32 2, %s18
        %p498 = scmp.lt.s32.totalorder %s497, 3
        %s499 = scalar_select %p498, %s497, 3
        %s500 = smul.addr %s499, 8
        %s501 = scalar_lea.vmem %s4, %s500
        %p502 = pneg %p128
        %p503 = pneg %p125
        %p504 = pneg %p154
        %p505 = pneg %p151
        %s506 = smul.u32 2, %s18
        %p507 = scmp.lt.s32.totalorder %s506, 3
        %s508 = scalar_select %p507, %s506, 3
        %s509 = smul.addr %s508, 8
        %s510 = scalar_lea.vmem %s5, %s509
        %p511 = pneg %p180
        %p512 = pneg %p177
        %s513 = smul.u32 2, %s18
        %p514 = scmp.lt.s32.totalorder %s513, 3
        %s515 = scalar_select %p514, %s513, 3
        %s516 = smul.addr %s515, 8
        %s517 = scalar_lea.vmem %s6, %s516
        %s518 = smul.u32 2, %s18
        %s519 = smul.u32 2, %s18
        %p520 = scmp.lt.s32.totalorder %s519, 3
        %s521 = scalar_select %p520, %s519, 3
        %s522 = smul.addr %s521, 8
        %s523 = scalar_lea.vmem %s4, %s522
        %s524 = smul.u32 2, %s18
        %s525 = smul.u32 2, %s18
        %p526 = scmp.lt.s32.totalorder %s525, 3
        %s527 = scalar_select %p526, %s525, 3
        %s528 = smul.addr %s527, 8
        %s529 = scalar_lea.vmem %s5, %s528
        %s530 = smul.u32 2, %s18
        %s531 = smul.u32 2, %s18
        %p532 = scmp.lt.s32.totalorder %s531, 3
        %s533 = scalar_select %p532, %s531, 3
        %s534 = smul.addr %s533, 8
        %s535 = scalar_lea.vmem %s6, %s534
        %s536 = smul.u32 2, %s18
        %v538 = vld [vmem:[%s1] sm:$0xff]
        %v539 = vld [vmem:[%s1 + $0x8] sm:$0xff]
        %v540 = vld [vmem:[%s1 + $0x10] sm:$0xff]
        %v541 = vld [vmem:[%s1 + $0x18] sm:$0xff]
        %v542 = vld [vmem:[%s481] sm:$0xff]
        %v543 = vld [vmem:[%s481 + $0x8] sm:$0xff]
        %v544 = vld [vmem:[%s481 + $0x10] sm:$0xff]
        %v545 = vld [vmem:[%s481 + $0x18] sm:$0xff]
        %v546 = vld [vmem:[%s481 + $0x20] sm:$0xff]
        %v547 = vld [vmem:[%s481 + $0x28] sm:$0xff]
        %v548 = vld [vmem:[%s481 + $0x30] sm:$0xff]
        %v549 = vld [vmem:[%s481 + $0x38] sm:$0xff]
        %v550 = vld [vmem:[%s481 + $0x40] sm:$0xff]
        %v551 = vld [vmem:[%s481 + $0x48] sm:$0xff]
        %v552 = vld [vmem:[%s481 + $0x50] sm:$0xff]
        %v553 = vld [vmem:[%s481 + $0x58] sm:$0xff]
        %v554 = vld [vmem:[%s481 + $0x60] sm:$0xff]
        %v555 = vld [vmem:[%s481 + $0x68] sm:$0xff]
        %v556 = vld [vmem:[%s481 + $0x70] sm:$0xff]
        %v557 = vld [vmem:[%s481 + $0x78] sm:$0xff]
        %v558 = vld [vmem:[%s481 + $0x80] sm:$0xff]
        %v559 = vld [vmem:[%s481 + $0x88] sm:$0xff]
        %v560 = vld [vmem:[%s481 + $0x90] sm:$0xff]
        %v561 = vld [vmem:[%s481 + $0x98] sm:$0xff]
        %v562 = vld [vmem:[%s481 + $0xa0] sm:$0xff]
        %v563 = vld [vmem:[%s481 + $0xa8] sm:$0xff]
        %v564 = vld [vmem:[%s481 + $0xb0] sm:$0xff]
        %v565 = vld [vmem:[%s481 + $0xb8] sm:$0xff]
        %v566 = vld [vmem:[%s481 + $0xc0] sm:$0xff]
        %v567 = vld [vmem:[%s481 + $0xc8] sm:$0xff]
        %v568 = vld [vmem:[%s481 + $0xd0] sm:$0xff]
        %v569 = vld [vmem:[%s481 + $0xd8] sm:$0xff]
        %v570 = vld [vmem:[%s481 + $0xe0] sm:$0xff]
        %v571 = vld [vmem:[%s481 + $0xe8] sm:$0xff]
        %v572 = vld [vmem:[%s481 + $0xf0] sm:$0xff]
        %v573 = vld [vmem:[%s481 + $0xf8] sm:$0xff]
        %v574 = vld [vmem:[%s481 + $0x100] sm:$0xff]
        %v575 = vld [vmem:[%s481 + $0x108] sm:$0xff]
        %v576 = vld [vmem:[%s481 + $0x110] sm:$0xff]
        %v577 = vld [vmem:[%s481 + $0x118] sm:$0xff]
        %v578 = vld [vmem:[%s481 + $0x120] sm:$0xff]
        %v579 = vld [vmem:[%s481 + $0x128] sm:$0xff]
        %v580 = vld [vmem:[%s481 + $0x130] sm:$0xff]
        %v581 = vld [vmem:[%s481 + $0x138] sm:$0xff]
        %v582 = vld [vmem:[%s481 + $0x140] sm:$0xff]
        %v583 = vld [vmem:[%s481 + $0x148] sm:$0xff]
        %v584 = vld [vmem:[%s481 + $0x150] sm:$0xff]
        %v585 = vld [vmem:[%s481 + $0x158] sm:$0xff]
        %v586 = vld [vmem:[%s481 + $0x160] sm:$0xff]
        %v587 = vld [vmem:[%s481 + $0x168] sm:$0xff]
        %v588 = vld [vmem:[%s481 + $0x170] sm:$0xff]
        %v589 = vld [vmem:[%s481 + $0x178] sm:$0xff]
        %v590 = vld [vmem:[%s481 + $0x180] sm:$0xff]
        %v591 = vld [vmem:[%s481 + $0x188] sm:$0xff]
        %v592 = vld [vmem:[%s481 + $0x190] sm:$0xff]
        %v593 = vld [vmem:[%s481 + $0x198] sm:$0xff]
        %v594 = vld [vmem:[%s481 + $0x1a0] sm:$0xff]
        %v595 = vld [vmem:[%s481 + $0x1a8] sm:$0xff]
        %v600 = vunpack.c.l.b16 %v538
        %v601 = vunpack.c.h.b16 %v538
        %v602 = vunpack.c.l.b16 %v539
        %v603 = vunpack.c.h.b16 %v539
        %v604 = vunpack.c.l.b16 %v540
        %v605 = vunpack.c.h.b16 %v540
        %v606 = vunpack.c.l.b16 %v541
        %v607 = vunpack.c.h.b16 %v541
        %v608 = vpack.c.b16 %v604, %v600
        %v609 = vpack.c.b16 %v605, %v601
        %v610 = vpack.c.b16 %v606, %v602
        %v611 = vpack.c.b16 %v607, %v603
        %v669 = vunpack.c.l.b16 %v542
        %v670 = vunpack.c.h.b16 %v542
        %v671 = vunpack.c.l.b16 %v543
        %v672 = vunpack.c.h.b16 %v543
        %v673 = vunpack.c.l.b16 %v544
        %v674 = vunpack.c.h.b16 %v544
        %v675 = vunpack.c.l.b16 %v545
        %v676 = vunpack.c.h.b16 %v545
        %v677 = vunpack.c.l.b16 %v546
        %v678 = vunpack.c.h.b16 %v546
        %v679 = vunpack.c.l.b16 %v547
        %v680 = vunpack.c.h.b16 %v547
        %v681 = vunpack.c.l.b16 %v548
        %v682 = vunpack.c.h.b16 %v548
        %v683 = vunpack.c.l.b16 %v549
        %v684 = vunpack.c.h.b16 %v549
        %v685 = vunpack.c.l.b16 %v550
        %v686 = vunpack.c.h.b16 %v550
        %v687 = vunpack.c.l.b16 %v551
        %v688 = vunpack.c.h.b16 %v551
        %v689 = vunpack.c.l.b16 %v552
        %v690 = vunpack.c.h.b16 %v552
        %v691 = vunpack.c.l.b16 %v553
        %v692 = vunpack.c.h.b16 %v553
        %v693 = vunpack.c.l.b16 %v554
        %v694 = vunpack.c.h.b16 %v554
        %v695 = vunpack.c.l.b16 %v555
        %v696 = vunpack.c.h.b16 %v555
        %v697 = vunpack.c.l.b16 %v556
        %v698 = vunpack.c.h.b16 %v556
        %v699 = vunpack.c.l.b16 %v557
        %v700 = vunpack.c.h.b16 %v557
        %v701 = vunpack.c.l.b16 %v558
        %v702 = vunpack.c.h.b16 %v558
        %v703 = vunpack.c.l.b16 %v559
        %v704 = vunpack.c.h.b16 %v559
        %v705 = vunpack.c.l.b16 %v560
        %v706 = vunpack.c.h.b16 %v560
        %v707 = vunpack.c.l.b16 %v561
        %v708 = vunpack.c.h.b16 %v561
        %v709 = vunpack.c.l.b16 %v562
        %v710 = vunpack.c.h.b16 %v562
        %v711 = vunpack.c.l.b16 %v563
        %v712 = vunpack.c.h.b16 %v563
        %v713 = vunpack.c.l.b16 %v564
        %v714 = vunpack.c.h.b16 %v564
        %v715 = vunpack.c.l.b16 %v565
        %v716 = vunpack.c.h.b16 %v565
        %v717 = vunpack.c.l.b16 %v566
        %v718 = vunpack.c.h.b16 %v566
        %v719 = vunpack.c.l.b16 %v567
        %v720 = vunpack.c.h.b16 %v567
        %v721 = vunpack.c.l.b16 %v568
        %v722 = vunpack.c.h.b16 %v568
        %v723 = vunpack.c.l.b16 %v569
        %v724 = vunpack.c.h.b16 %v569
        %v725 = vunpack.c.l.b16 %v570
        %v726 = vunpack.c.h.b16 %v570
        %v727 = vunpack.c.l.b16 %v571
        %v728 = vunpack.c.h.b16 %v571
        %v729 = vunpack.c.l.b16 %v572
        %v730 = vunpack.c.h.b16 %v572
        %v731 = vunpack.c.l.b16 %v573
        %v732 = vunpack.c.h.b16 %v573
        %v733 = vunpack.c.l.b16 %v574
        %v734 = vunpack.c.h.b16 %v574
        %v735 = vunpack.c.l.b16 %v575
        %v736 = vunpack.c.h.b16 %v575
        %v737 = vunpack.c.l.b16 %v576
        %v738 = vunpack.c.h.b16 %v576
        %v739 = vunpack.c.l.b16 %v577
        %v740 = vunpack.c.h.b16 %v577
        %v741 = vunpack.c.l.b16 %v578
        %v742 = vunpack.c.h.b16 %v578
        %v743 = vunpack.c.l.b16 %v579
        %v744 = vunpack.c.h.b16 %v579
        %v745 = vunpack.c.l.b16 %v580
        %v746 = vunpack.c.h.b16 %v580
        %v747 = vunpack.c.l.b16 %v581
        %v748 = vunpack.c.h.b16 %v581
        %v749 = vunpack.c.l.b16 %v582
        %v750 = vunpack.c.h.b16 %v582
        %v751 = vunpack.c.l.b16 %v583
        %v752 = vunpack.c.h.b16 %v583
        %v753 = vunpack.c.l.b16 %v584
        %v754 = vunpack.c.h.b16 %v584
        %v755 = vunpack.c.l.b16 %v585
        %v756 = vunpack.c.h.b16 %v585
        %v757 = vunpack.c.l.b16 %v586
        %v758 = vunpack.c.h.b16 %v586
        %v759 = vunpack.c.l.b16 %v587
        %v760 = vunpack.c.h.b16 %v587
        %v761 = vunpack.c.l.b16 %v588
        %v762 = vunpack.c.h.b16 %v588
        %v763 = vunpack.c.l.b16 %v589
        %v764 = vunpack.c.h.b16 %v589
        %v765 = vunpack.c.l.b16 %v590
        %v766 = vunpack.c.h.b16 %v590
        %v767 = vunpack.c.l.b16 %v591
        %v768 = vunpack.c.h.b16 %v591
        %v769 = vunpack.c.l.b16 %v592
        %v770 = vunpack.c.h.b16 %v592
        %v771 = vunpack.c.l.b16 %v593
        %v772 = vunpack.c.h.b16 %v593
        %v773 = vunpack.c.l.b16 %v594
        %v774 = vunpack.c.h.b16 %v594
        %v775 = vunpack.c.l.b16 %v595
        %v776 = vunpack.c.h.b16 %v595
        %v777 = vpack.c.b16 %v671, %v669
        %v778 = vpack.c.b16 %v672, %v670
        %v779 = vpack.c.b16 %v675, %v673
        %v780 = vpack.c.b16 %v676, %v674
        %v781 = vpack.c.b16 %v679, %v677
        %v782 = vpack.c.b16 %v680, %v678
        %v783 = vpack.c.b16 %v683, %v681
        %v784 = vpack.c.b16 %v684, %v682
        %v785 = vpack.c.b16 %v687, %v685
        %v786 = vpack.c.b16 %v688, %v686
        %v787 = vpack.c.b16 %v691, %v689
        %v788 = vpack.c.b16 %v692, %v690
        %v789 = vpack.c.b16 %v695, %v693
        %v790 = vpack.c.b16 %v696, %v694
        %v791 = vpack.c.b16 %v699, %v697
        %v792 = vpack.c.b16 %v700, %v698
        %v793 = vpack.c.b16 %v703, %v701
        %v794 = vpack.c.b16 %v704, %v702
        %v795 = vpack.c.b16 %v707, %v705
        %v796 = vpack.c.b16 %v708, %v706
        %v797 = vpack.c.b16 %v711, %v709
        %v798 = vpack.c.b16 %v712, %v710
        %v799 = vpack.c.b16 %v715, %v713
        %v800 = vpack.c.b16 %v716, %v714
        %v801 = vpack.c.b16 %v719, %v717
        %v802 = vpack.c.b16 %v720, %v718
        %v803 = vpack.c.b16 %v723, %v721
        %v804 = vpack.c.b16 %v724, %v722
        %v805 = vpack.c.b16 %v727, %v725
        %v806 = vpack.c.b16 %v728, %v726
        %v807 = vpack.c.b16 %v731, %v729
        %v808 = vpack.c.b16 %v732, %v730
        %v809 = vpack.c.b16 %v735, %v733
        %v810 = vpack.c.b16 %v736, %v734
        %v811 = vpack.c.b16 %v739, %v737
        %v812 = vpack.c.b16 %v740, %v738
        %v813 = vpack.c.b16 %v743, %v741
        %v814 = vpack.c.b16 %v744, %v742
        %v815 = vpack.c.b16 %v747, %v745
        %v816 = vpack.c.b16 %v748, %v746
        %v817 = vpack.c.b16 %v751, %v749
        %v818 = vpack.c.b16 %v752, %v750
        %v819 = vpack.c.b16 %v755, %v753
        %v820 = vpack.c.b16 %v756, %v754
        %v821 = vpack.c.b16 %v759, %v757
        %v822 = vpack.c.b16 %v760, %v758
        %v823 = vpack.c.b16 %v763, %v761
        %v824 = vpack.c.b16 %v764, %v762
        %v825 = vpack.c.b16 %v767, %v765
        %v826 = vpack.c.b16 %v768, %v766
        %v827 = vpack.c.b16 %v771, %v769
        %v828 = vpack.c.b16 %v772, %v770
        %v829 = vpack.c.b16 %v775, %v773
        %v830 = vpack.c.b16 %v776, %v774
        %vm885 = vcmask 392192
        %v887 = vsel %vm885, %v611, 0
        %889 = vmatprep.subr.bf16.mxu0 %v778
        %890 = vmatpush1.bf16.msra.mxu0 %v777
        %891 = vmatprep.subr.bf16.mxu0 %v780
        %892 = vmatpush1.bf16.msra.mxu0 %v779
        %893 = vmatprep.subr.bf16.mxu0 %v782
        %894 = vmatpush1.bf16.msra.mxu0 %v781
        %895 = vmatprep.subr.bf16.mxu0 %v784
        %896 = vmatpush1.bf16.msra.mxu0 %v783
        %897 = vmatprep.subr.bf16.mxu0 %v786
        %898 = vmatpush1.bf16.msra.mxu0 %v785
        %899 = vmatprep.subr.bf16.mxu0 %v788
        %900 = vmatpush1.bf16.msra.mxu0 %v787
        %901 = vmatprep.subr.bf16.mxu0 %v790
        %902 = vmatpush1.bf16.msra.mxu0 %v789
        %903 = vmatprep.subr.bf16.mxu0 %v792
        %904 = vmatpush1.bf16.msra.mxu0 %v791
        %905 = vmatprep.subr.bf16.mxu0 %v794
        %906 = vmatpush1.bf16.msra.mxu0 %v793
        %907 = vmatprep.subr.bf16.mxu0 %v796
        %908 = vmatpush1.bf16.msra.mxu0 %v795
        %909 = vmatprep.subr.bf16.mxu0 %v798
        %910 = vmatpush1.bf16.msra.mxu0 %v797
        %911 = vmatprep.subr.bf16.mxu0 %v800
        %912 = vmatpush1.bf16.msra.mxu0 %v799
        %913 = vmatprep.subr.bf16.mxu0 %v802
        %914 = vmatpush1.bf16.msra.mxu0 %v801
        %915 = vmatprep.subr.bf16.mxu0 %v804
        %916 = vmatpush1.bf16.msra.mxu0 %v803
        %917 = vmatprep.subr.bf16.mxu0 %v806
        %918 = vmatpush1.bf16.msra.mxu0 %v805
        %919 = vmatprep.subr.bf16.mxu0 %v808
        %920 = vmatpush1.bf16.msra.mxu0 %v807
        %921 = vmatprep.mubr.bf16.mxu0 %v609
        %922 = vmatmul.mubr.bf16.gmra.mrb[0].mxu0 %v608
        %v923 = vpop.f32.mrb[0].mxu0
        %v924 = vadd.f32 0.0, %v923
        %v925 = vpop.f32.mrb[0].mxu0
        %v926 = vadd.f32 0.0, %v925
        %v927 = vpop.f32.mrb[0].mxu0
        %v928 = vadd.f32 0.0, %v927
        %v929 = vpop.f32.mrb[0].mxu0
        %v930 = vadd.f32 0.0, %v929
        %931 = vdwg.mxu0
        %932 = vmatprep.subr.bf16.mxu0 %v810
        %933 = vmatpush1.bf16.msra.mxu0 %v809
        %934 = vmatprep.subr.bf16.mxu0 %v812
        %935 = vmatpush1.bf16.msra.mxu0 %v811
        %936 = vmatprep.subr.bf16.mxu0 %v814
        %937 = vmatpush1.bf16.msra.mxu0 %v813
        %938 = vmatprep.subr.bf16.mxu0 %v816
        %939 = vmatpush1.bf16.msra.mxu0 %v815
        %940 = vmatprep.subr.bf16.mxu0 %v818
        %941 = vmatpush1.bf16.msra.mxu0 %v817
        %942 = vmatprep.subr.bf16.mxu0 %v820
        %943 = vmatpush1.bf16.msra.mxu0 %v819
        %944 = vmatprep.subr.bf16.mxu0 %v822
        %945 = vmatpush1.bf16.msra.mxu0 %v821
        %946 = vmatprep.subr.bf16.mxu0 %v824
        %947 = vmatpush1.bf16.msra.mxu0 %v823
        %948 = vmatprep.subr.bf16.mxu0 %v826
        %949 = vmatpush1.bf16.msra.mxu0 %v825
        %950 = vmatprep.subr.bf16.mxu0 %v828
        %951 = vmatpush1.bf16.msra.mxu0 %v827
        %952 = vmatprep.subr.bf16.mxu0 %v830
        %953 = vmatpush1.bf16.msra.mxu0 %v829
        %954 = vmatprep.subr.bf16.mxu0 0
        %955 = vmatpush1.bf16.msra.mxu0 0
        %956 = vmatprep.subr.bf16.mxu0 0
        %957 = vmatpush1.bf16.msra.mxu0 0
        %958 = vmatprep.subr.bf16.mxu0 0
        %959 = vmatpush1.bf16.msra.mxu0 0
        %960 = vmatprep.subr.bf16.mxu0 0
        %961 = vmatpush1.bf16.msra.mxu0 0
        %962 = vmatprep.subr.bf16.mxu0 0
        %963 = vmatpush1.bf16.msra.mxu0 0
        %964 = vmatprep.mubr.bf16.mxu0 %v887
        %965 = vmatmul.mubr.bf16.gmra.mrb[0].mxu0 %v610
        %v966 = vpop.f32.mrb[0].mxu0
        %v967 = vadd.f32 %v924, %v966
        %v968 = vpop.f32.mrb[0].mxu0
        %v969 = vadd.f32 %v926, %v968
        %v970 = vpop.f32.mrb[0].mxu0
        %v971 = vadd.f32 %v928, %v970
        %v972 = vpop.f32.mrb[0].mxu0
        %v973 = vadd.f32 %v930, %v972
        %974 = vdwg.mxu0
        %v975 = vld [vmem:[%s2] sm:$0xff]
        %977 = vset.pattern.permute.xlu0 0
        %978 = vperm.xlu0 %977, %v975
        %v979 = vpop.permute.xlu0 %978
        %v981 = vmul.f32 %v967, %v979
        %v982 = vmul.f32 %v969, %v979
        %v983 = vld [vmem:[%s3] sm:$0xff]
        %985 = vset.pattern.permute.xlu0 0
        %986 = vperm.xlu0 %985, %v983
        %v987 = vpop.permute.xlu0 %986
        %v989 = vadd.f32 %v981, %v987
        %v990 = vadd.f32 %v982, %v987
        %v991 = vmax.f32 %v989, 0.0
        %v992 = vmax.f32 %v990, 0.0
        %v993 = vld [vmem:[%s523] sm:$0xff]
        %v994 = vld [vmem:[%s523 + $0x8] sm:$0xff]
        %v995 = vadd.f32 %v991, %v993
        %v996 = vadd.f32 %v992, %v994
        %997 = vst [vmem:[%s529] sm:$0xff] %v995
        %998 = vst [vmem:[%s529 + $0x8] sm:$0xff] %v996
        %999 = vst [vmem:[%s535] sm:$0xff] %v971
        %1000 = vst [vmem:[%s535 + $0x8] sm:$0xff] %v973
        %s1001 = smul.u32 2, %s18
        %p1002 = scmp.lt.s32.totalorder %s1001, 3
        %s1003 = scalar_select %p1002, %s1001, 3
        %s1004 = smul.addr %s1003, 8
        %s1005 = scalar_lea.vmem %s5, %s1004
        %s1006 = smul.u32 2, %s18
        %p1007 = scmp.lt.s32.totalorder %s1006, 3
        %s1008 = scalar_select %p1007, %s1006, 3
        %s1009 = smul.addr %s1008, 8
        %s1010 = scalar_lea.vmem %s6, %s1009
        // Predicated region
        $region79: #{bottleneck_forward.42} parent=73 // pred_check
          %p1011 = pneg %p151
        $region80: #{bottleneck_forward.42} parent=73 // pred_check_branch
          %1013 = sbr.rel (%p1011) target = $region82
        $region81: #{bottleneck_forward.42} parent=73 // pred_region
          %s1014 = smul.u32 2, %s18
        $region82: #{bottleneck_forward.42} parent=73 // pred_fallthru
          _
        // Predicated region
        $region83: #{bottleneck_forward.42} parent=73 // pred_check
          %p1015 = pneg %p177
        $region84: #{bottleneck_forward.42} parent=73 // pred_check_branch
          %1017 = sbr.rel (%p1015) target = $region86
        $region85: #{bottleneck_forward.42} parent=73 // pred_region
          %s1018 = smul.u32 2, %s18
        $region86: #{bottleneck_forward.42} parent=73 // pred_fallthru
          _
      $region74: #{bottleneck_forward.42} parent=5 // pred_fallthru
        _
      %p1019 = scmp.le.s32.totalorder 2, %s13
      // Predicated region
      $region87: #{bottleneck_forward.42} parent=5 // pred_check
        %p1020 = pneg %p1019
      $region88: #{bottleneck_forward.42} parent=5 // pred_check_branch
        %1022 = sbr.rel (%p1020) target = $region90
      $region89: #{bottleneck_forward.42} parent=5 // pred_region
        %s1023 = ssub.s32 %s13, 2
        // Predicated region
        $region91: #{bottleneck_forward.42} parent=89 // pred_check
          %p1024 = pneg %p157
        $region92: #{bottleneck_forward.42} parent=89 // pred_check_branch
          %1026 = sbr.rel (%p1024) target = $region94
        $region93: #{bottleneck_forward.42} parent=89 // pred_region
          %s1027 = smul.u32 2, %s19
          %p1028 = scmp.lt.s32.totalorder %s1027, 3
          %s1029 = scalar_select %p1028, %s1027, 3
          %s1030 = smul.addr %s1029, 8
          %s1031 = scalar_lea.vmem %s5, %s1030
        $region94: #{bottleneck_forward.42} parent=89 // pred_fallthru
          _
        // Predicated region
        $region95: #{bottleneck_forward.42} parent=89 // pred_check
          %p1032 = pneg %p183
        $region96: #{bottleneck_forward.42} parent=89 // pred_check_branch
          %1034 = sbr.rel (%p1032) target = $region98
        $region97: #{bottleneck_forward.42} parent=89 // pred_region
          %s1035 = smul.u32 2, %s19
          %p1036 = scmp.lt.s32.totalorder %s1035, 3
          %s1037 = scalar_select %p1036, %s1035, 3
          %s1038 = smul.addr %s1037, 8
          %s1039 = scalar_lea.vmem %s6, %s1038
        $region98: #{bottleneck_forward.42} parent=89 // pred_fallthru
          _
      $region90: #{bottleneck_forward.42} parent=5 // pred_fallthru
        _
    $region6: #{bottleneck_forward.42} parent=1 // loop_footer
      %s17 = sadd.s32 1, %s13
    $region7: #{bottleneck_forward.42} parent=1 // loop_footer_branch
      %12 = sbr.rel target = $region3
    $region8: #{bottleneck_forward.42} parent=1 // loop_exit
      _

</llo_original>
